<compile_context>
chip_gen: v6e
topology: v6e:2x2x1
jax: 0.10.0
libtpu: 0.0.40
codegen_flags: <defaults>
</compile_context>

<pallas_src>
import functools

import numpy as np

import jax
import jax.numpy as jnp
from jax.experimental import pallas as pl
from jax.experimental.pallas import tpu as pltpu

BN_EPS = 1e-5
LRELU_SLOPE = 0.01
Z_DIMS = 64
HIDDEN = 784  # 16 * 7 * 7
VMEM_LIMIT = 32 * 1024 * 1024

# Tap descriptors: (out_plane, in_plane, row_offset, M_index)
#   stride-2 conv (row-parity planes): output row p reads padded rows
#   2p (even[p], kh=0), 2p+1 (odd[p], kh=1), 2p+2 (even[p+1], kh=2)
CONV_TAPS = ((0, 0, 0, 0), (0, 1, 0, 1), (0, 0, 1, 2))
#   stride-2 conv-transpose (subpixel output rows): plane0 = even rows (kh=1, in[p]),
#   plane1 = odd rows (kh=0 reads in[p+1], kh=2 reads in[p])
DECONV_TAPS = ((0, 0, 0, 0), (1, 0, 1, 1), (1, 0, 0, 2))


# ----------------------------------------------------------------------------
# Pallas kernels
# ----------------------------------------------------------------------------
def _full_spec(shape):
    n = len(shape)
    return pl.BlockSpec(shape, lambda i, _n=n: (0,) * _n)


def _conv_bn_act_kernel(taps, n_out_planes, act, inv_count,
                        x_ref, m_ref, b_ref, g_ref, gt_ref, gb_ref,
                        o_ref, acc_ref):
    """Fused conv(-transpose) + bias + training-mode BatchNorm + activation.

    x_ref : (B, n_in_planes, R_in, K)   bf16  phase-decomposed activation rows
    m_ref : (n_m, K, N)                 bf16  banded weight matrices (one per tap)
    b_ref : (1, N)                      f32   bias broadcast over output columns
    g_ref : (N, C)                      f32   column->channel 0/1 group matrix
    gt_ref: (C, N)                      f32   channel->column 0/1 group matrix
    gb_ref: (2, C)                      f32   [gamma; beta]
    o_ref : (B, n_out_planes, R_out, N) out   post-BN, post-activation output
    acc_ref: VMEM (B, n_out_planes, R_out, N) f32 scratch (pre-BN conv output)
    """
    bsz = x_ref.shape[0]
    r_out = o_ref.shape[2]
    n = o_ref.shape[3]

    # Pass 1: conv + bias into f32 scratch, accumulate per-column sum / sum-sq.
    csum = jnp.zeros((1, n), jnp.float32)
    csq = jnp.zeros((1, n), jnp.float32)
    for b in range(bsz):
        for p in range(n_out_planes):
            acc = jnp.zeros((r_out, n), jnp.float32)
            for (op, ip, off, mi) in taps:
                if op != p:
                    continue
                acc = acc + jnp.dot(x_ref[b, ip, off:off + r_out, :], m_ref[mi],
                                    preferred_element_type=jnp.float32)
            acc = acc + b_ref[...]
            acc_ref[b, p] = acc
            csum = csum + jnp.sum(acc, axis=0, keepdims=True)
            csq = csq + jnp.sum(acc * acc, axis=0, keepdims=True)

    # Per-channel (biased, training-mode) batch stats via tiny 0/1 group matmuls.
    chan_sum = jnp.dot(csum, g_ref[...], preferred_element_type=jnp.float32)
    chan_sq = jnp.dot(csq, g_ref[...], preferred_element_type=jnp.float32)
    mean = chan_sum * inv_count
    var = jnp.maximum(chan_sq * inv_count - mean * mean, 0.0)
    gamma = gb_ref[0:1, :]
    beta = gb_ref[1:2, :]
    scale_c = gamma * jax.lax.rsqrt(var + BN_EPS)
    shift_c = beta - mean * scale_c
    scale = jnp.dot(scale_c, gt_ref[...], preferred_element_type=jnp.float32)
    shift = jnp.dot(shift_c, gt_ref[...], preferred_element_type=jnp.float32)

    # Pass 2: apply BN affine + activation, lane-dense store.
    for b in range(bsz):
        for p in range(n_out_planes):
            y = acc_ref[b, p] * scale + shift
            if act == "leaky_relu":
                y = jnp.where(y >= 0, y, LRELU_SLOPE * y)
            else:  # sigmoid
                y = jax.nn.sigmoid(y)
            o_ref[b, p] = y.astype(o_ref.dtype)


def _latent_kernel(f_ref, wmv_ref, bmv_ref, wz_ref, bz_ref, eps_ref,
                   z_ref, mu_ref, var_ref, zc_ref):
    """Fused latent heads: [mu|logvar] matmul, exp, reparam, [clf|dec_init] matmul."""
    mv = jnp.dot(f_ref[...], wmv_ref[...],
                 preferred_element_type=jnp.float32) + bmv_ref[...]
    mu = mv[:, :Z_DIMS]
    var = jnp.exp(mv[:, Z_DIMS:])
    z = mu + var * eps_ref[...]                      # z = mu + stddev * eps
    zc = jnp.dot(z.astype(wz_ref.dtype), wz_ref[...],
                 preferred_element_type=jnp.float32) + bz_ref[...]
    z_ref[...] = z
    mu_ref[...] = mu
    var_ref[...] = var
    zc_ref[...] = zc


# ----------------------------------------------------------------------------
# pallas_call wrappers
# ----------------------------------------------------------------------------
def _conv_bn_act(x_planes, m, bias_cols, gmat, gmat_t, gb,
                 n_out_planes, r_out, taps, act, out_dtype):
    B = x_planes.shape[0]
    n = bias_cols.shape[1]
    cout = gmat.shape[1]
    wout = n // cout
    inv_count = 1.0 / float(B * n_out_planes * r_out * wout)   # B * H_out * W_out
    kern = functools.partial(_conv_bn_act_kernel, taps, n_out_planes, act, inv_count)
    ins = (x_planes, m, bias_cols, gmat, gmat_t, gb)
    return pl.pallas_call(
        kern,
        grid=(1,),
        in_specs=[_full_spec(a.shape) for a in ins],
        out_specs=_full_spec((B, n_out_planes, r_out, n)),
        out_shape=jax.ShapeDtypeStruct((B, n_out_planes, r_out, n), out_dtype),
        scratch_shapes=[pltpu.VMEM((B, n_out_planes, r_out, n), jnp.float32)],
        compiler_params=pltpu.CompilerParams(
            dimension_semantics=("arbitrary",), vmem_limit_bytes=VMEM_LIMIT),
    )(*ins)


def _latent(prep, flat_p, eps_p):
    Bp = flat_p.shape[0]
    ins = (flat_p, prep["w_mv"], prep["b_mv"], prep["w_z"], prep["b_z"], eps_p)
    out_shape = (jax.ShapeDtypeStruct((Bp, Z_DIMS), jnp.float32),      # z
                 jax.ShapeDtypeStruct((Bp, Z_DIMS), jnp.float32),      # mu
                 jax.ShapeDtypeStruct((Bp, Z_DIMS), jnp.float32),      # var
                 jax.ShapeDtypeStruct((Bp, 10 + HIDDEN), jnp.float32))  # [clf|dec]
    return pl.pallas_call(
        _latent_kernel,
        grid=(1,),
        in_specs=[_full_spec(a.shape) for a in ins],
        out_specs=[_full_spec(s.shape) for s in out_shape],
        out_shape=out_shape,
        compiler_params=pltpu.CompilerParams(
            dimension_semantics=("arbitrary",), vmem_limit_bytes=VMEM_LIMIT),
    )(*ins)


# ----------------------------------------------------------------------------
# Layout plumbing (pure permutations / padding, plain JAX outside the kernels)
# ----------------------------------------------------------------------------
def _phase_planes_s2(x_nhwc):
    """(B,H,W,C) -> (B,2,(H+2)//2,(W+2)*C): pad=1, split padded rows by parity.
    Width padding / width taps are folded into the banded weight matrices."""
    B, H, W, C = x_nhwc.shape
    xp = jnp.pad(x_nhwc, ((0, 0), (1, 1), (1, 1), (0, 0)))
    xp = xp.reshape(B, H + 2, (W + 2) * C)
    return jnp.stack([xp[:, 0::2], xp[:, 1::2]], axis=1)


def _rows_with_zero_pad(x_nhwc):
    """(B,H,W,C) -> (B,1,H+1,W*C): row-major rows + one zero row at the bottom
    (absorbs the out-of-range `in[p+1]` taps of the transposed conv)."""
    B, H, W, C = x_nhwc.shape
    r = x_nhwc.reshape(B, H, W * C)
    r = jnp.pad(r, ((0, 0), (0, 1), (0, 0)))
    return r[:, None]


def _interleave_rows(y):
    """(B,2,R,N) even/odd output-row planes -> (B,2R,N) full-resolution rows."""
    B, _, R, N = y.shape
    return jnp.transpose(y, (0, 2, 1, 3)).reshape(B, 2 * R, N)


# ----------------------------------------------------------------------------
# Weight preprocessing: banded matrices + fused/permuted linear weights
# ----------------------------------------------------------------------------
def _conv_s2_mats(w, win):
    """Conv2d(k=3,s=2,p=1) weights (Cout,Cin,3,3) -> 3 banded matrices (one per kh)
    of shape ((win+2)*Cin, (win//2)*Cout) acting on zero-padded input rows."""
    cout, cin, _, _ = w.shape
    wo = win // 2
    K, N = (win + 2) * cin, wo * cout
    t_idx, rows, cols, gi = [], [], [], []
    for kh in range(3):
        for kw in range(3):
            for q in range(wo):
                iw = 2 * q + kw                      # padded input column
                for ci in range(cin):
                    for co in range(cout):
                        t_idx.append(kh)
                        rows.append(iw * cin + ci)
                        cols.append(q * cout + co)
                        gi.append((co, ci, kh, kw))
    gi = np.array(gi)
    vals = w[gi[:, 0], gi[:, 1], gi[:, 2], gi[:, 3]]
    return jnp.zeros((3, K, N), jnp.float32).at[
        np.array(t_idx), np.array(rows), np.array(cols)].add(vals)


def _deconv_s2_mats(w, win):
    """ConvTranspose2d(k=3,s=2,p=1,op=1) weights (Cin,Cout,3,3) -> 3 banded matrices
    (Win*Cin, 2*Win*Cout): M0 even output rows (kh=1), M1 odd rows via in[p+1]
    (kh=0), M2 odd rows via in[p] (kh=2).  Width interleave & padding baked in."""
    cin, cout, _, _ = w.shape
    K, N = win * cin, 2 * win * cout
    t_idx, rows, cols, gi = [], [], [], []

    def wtaps(q):
        taps = [(0, 1, q)]               # even output col: kw=1, iw=q
        if q + 1 < win:
            taps.append((1, 0, q + 1))   # odd output col: kw=0, iw=q+1
        taps.append((1, 2, q))           # odd output col: kw=2, iw=q
        return taps

    for mi, kh in ((0, 1), (1, 0), (2, 2)):
        for q in range(win):
            for (bph, kw, iw) in wtaps(q):
                for ci in range(cin):
                    for co in range(cout):
                        t_idx.append(mi)
                        rows.append(iw * cin + ci)
                        cols.append((2 * q + bph) * cout + co)
                        gi.append((ci, co, kh, kw))
    gi = np.array(gi)
    vals = w[gi[:, 0], gi[:, 1], gi[:, 2], gi[:, 3]]
    return jnp.zeros((3, K, N), jnp.float32).at[
        np.array(t_idx), np.array(rows), np.array(cols)].add(vals)


def _group_mats(wout, cout):
    """0/1 matrices mapping output columns (w*cout + c) <-> channels c."""
    g = np.zeros((wout * cout, cout), np.float32)
    for w in range(wout):
        for c in range(cout):
            g[w * cout + c, c] = 1.0
    return jnp.asarray(g), jnp.asarray(g.T)


def prepare_params(params):
    """One-time weight preprocessing (banded conv matrices, BN group matrices,
    fused latent weights, flatten-order permutations, bf16 casts of matmul operands)."""
    prep = {}
    prep["m1"] = _conv_s2_mats(params["conv1_w"], 28).astype(jnp.bfloat16)
    prep["b1c"] = jnp.tile(params["conv1_b"], 14).reshape(1, -1)
    prep["m2"] = _conv_s2_mats(params["conv2_w"], 14).astype(jnp.bfloat16)
    prep["b2c"] = jnp.tile(params["conv2_b"], 7).reshape(1, -1)
    prep["m3"] = _deconv_s2_mats(params["deconv1_w"], 7).astype(jnp.bfloat16)
    prep["b3c"] = jnp.tile(params["deconv1_b"], 14).reshape(1, -1)
    prep["m4"] = _deconv_s2_mats(params["deconv2_w"], 14).astype(jnp.bfloat16)
    prep["b4c"] = jnp.tile(params["deconv2_b"], 28).reshape(1, -1)

    prep["g1"], prep["gt1"] = _group_mats(14, 8)
    prep["g2"], prep["gt2"] = _group_mats(7, 16)
    prep["g3"], prep["gt3"] = _group_mats(14, 8)
    prep["g4"], prep["gt4"] = _group_mats(28, 1)

    prep["gb1"] = jnp.stack([params["bn1_g"], params["bn1_b"]])
    prep["gb2"] = jnp.stack([params["bn2_g"], params["bn2_b"]])
    prep["gb3"] = jnp.stack([params["bn3_g"], params["bn3_b"]])
    prep["gb4"] = jnp.stack([params["bn4_g"], params["bn4_b"]])

    # Flatten-order permutation: our layout index (h*112 + w*16 + c) maps to the
    # PyTorch view(B,-1)-on-NCHW index (c*49 + h*7 + w); permute weight rows/cols
    # once instead of transposing activations at runtime.
    hh, ww, cc = np.meshgrid(np.arange(7), np.arange(7), np.arange(16), indexing="ij")
    perm = (cc * 49 + hh * 7 + ww).reshape(-1)

    prep["w_mv"] = jnp.concatenate(
        [params["mu_w"][perm], params["var_w"][perm]], axis=1).astype(jnp.bfloat16)
    prep["b_mv"] = jnp.concatenate([params["mu_b"], params["var_b"]]).reshape(1, -1)
    dec_w_ours = params["dec_w"][:, perm]
    dec_b_ours = params["dec_b"][perm]
    prep["w_z"] = jnp.concatenate(
        [params["clf_w"], dec_w_ours], axis=1).astype(jnp.bfloat16)
    prep["b_z"] = jnp.concatenate([params["clf_b"], dec_b_ours]).reshape(1, -1)
    return prep


# ----------------------------------------------------------------------------
# Parameters (deterministic synthetic init; Linear weights stored as (in, out))
# ----------------------------------------------------------------------------
def init_params(key):
    ks = jax.random.split(key, 16)

    def rnd(k, shape, scale=0.1):
        return jax.random.normal(k, shape, jnp.float32) * scale

    return dict(
        conv1_w=rnd(ks[0], (8, 1, 3, 3)),   conv1_b=rnd(ks[1], (8,)),
        conv2_w=rnd(ks[2], (16, 8, 3, 3)),  conv2_b=rnd(ks[3], (16,)),
        mu_w=rnd(ks[4], (HIDDEN, Z_DIMS), 0.05),  mu_b=rnd(ks[5], (Z_DIMS,)),
        var_w=rnd(ks[6], (HIDDEN, Z_DIMS), 0.05), var_b=rnd(ks[7], (Z_DIMS,)),
        clf_w=rnd(ks[8], (Z_DIMS, 10)),           clf_b=rnd(ks[9], (10,)),
        dec_w=rnd(ks[10], (Z_DIMS, HIDDEN), 0.05), dec_b=rnd(ks[11], (HIDDEN,)),
        deconv1_w=rnd(ks[12], (16, 8, 3, 3)), deconv1_b=rnd(ks[13], (8,)),
        deconv2_w=rnd(ks[14], (8, 1, 3, 3)),  deconv2_b=rnd(ks[15], (1,)),
        bn1_g=jnp.ones((8,)),  bn1_b=jnp.zeros((8,)),
        bn2_g=jnp.ones((16,)), bn2_b=jnp.zeros((16,)),
        bn3_g=jnp.ones((8,)),  bn3_b=jnp.zeros((8,)),
        bn4_g=jnp.ones((1,)),  bn4_b=jnp.zeros((1,)),
    )


# ----------------------------------------------------------------------------
# Forward pass (mirrors VAE.forward)
# ----------------------------------------------------------------------------
def vae_forward(prep, x_nchw, eps):
    B = x_nchw.shape[0]
    x = jnp.transpose(x_nchw, (0, 2, 3, 1))                       # NCHW -> NHWC

    # --- encoder: Conv(1->8,s2)+BN+LeakyReLU ; Conv(8->16,s2)+BN+LeakyReLU
    xin1 = _phase_planes_s2(x).astype(jnp.bfloat16)               # (B,2,15,30)
    a1 = _conv_bn_act(xin1, prep["m1"], prep["b1c"], prep["g1"], prep["gt1"],
                      prep["gb1"], 1, 14, CONV_TAPS, "leaky_relu",
                      jnp.bfloat16)                               # (B,1,14,112)
    y1 = a1[:, 0].reshape(B, 14, 14, 8)

    xin2 = _phase_planes_s2(y1)                                   # (B,2,8,128) bf16
    a2 = _conv_bn_act(xin2, prep["m2"], prep["b2c"], prep["g2"], prep["gt2"],
                      prep["gb2"], 1, 7, CONV_TAPS, "leaky_relu",
                      jnp.bfloat16)                               # (B,1,7,112)

    # --- fused latent heads (weights pre-permuted to our (h,w,c) flatten order)
    flat = a2[:, 0].reshape(B, HIDDEN)
    pad = (-B) % 8                                                # pad batch rows to x8
    flat_p = jnp.pad(flat, ((0, pad), (0, 0)))
    eps_p = jnp.pad(eps, ((0, pad), (0, 0)))
    z_p, mu_p, var_p, zc_p = _latent(prep, flat_p, eps_p)
    z, mu, var = z_p[:B], mu_p[:B], var_p[:B]
    cls_z_prob = zc_p[:B, :10]                                    # raw logits
    h = zc_p[:B, 10:]                                             # dec_init(z), (B,784)

    # --- decoder: ConvT(16->8,s2)+BN+LeakyReLU ; ConvT(8->1,s2)+BN+Sigmoid
    hin = _rows_with_zero_pad(h.reshape(B, 7, 7, 16)).astype(jnp.bfloat16)  # (B,1,8,112)
    a3 = _conv_bn_act(hin, prep["m3"], prep["b3c"], prep["g3"], prep["gt3"],
                      prep["gb3"], 2, 7, DECONV_TAPS, "leaky_relu",
                      jnp.bfloat16)                               # (B,2,7,112)
    y3 = _interleave_rows(a3)                                     # (B,14,112)

    din = _rows_with_zero_pad(y3.reshape(B, 14, 14, 8))           # (B,1,15,112)
    a4 = _conv_bn_act(din, prep["m4"], prep["b4c"], prep["g4"], prep["gt4"],
                      prep["gb4"], 2, 14, DECONV_TAPS, "sigmoid",
                      jnp.float32)                                # (B,2,14,28)
    x_hat = _interleave_rows(a4)[:, None, :, :]                   # (B,1,28,28) NCHW

    return x_hat, z, mu, var, None, cls_z_prob


# ----------------------------------------------------------------------------
if __name__ == "__main__":
    key = jax.random.PRNGKey(0)
    k_param, k_x, k_eps = jax.random.split(key, 3)

    params = init_params(k_param)
    prep = prepare_params(params)                                 # one-time weight prep
    x = jax.random.uniform(k_x, (2, 1, 28, 28), jnp.float32)      # NCHW input
    eps = jax.random.normal(k_eps, (2, Z_DIMS), jnp.float32)      # reparam noise

    fwd = jax.jit(vae_forward)
    x_hat, z, mu, var, _, cls_z_prob = fwd(prep, x, eps)
    jax.block_until_ready((x_hat, z, mu, var, cls_z_prob))

    assert x_hat.shape == (2, 1, 28, 28)
    assert z.shape == (2, Z_DIMS) and mu.shape == (2, Z_DIMS) and var.shape == (2, Z_DIMS)
    assert cls_z_prob.shape == (2, 10)
    assert bool(jnp.all(jnp.isfinite(x_hat)))
    assert bool(jnp.all(jnp.isfinite(z))) and bool(jnp.all(jnp.isfinite(cls_z_prob)))
    print("KERNEL_OK")
</pallas_src>

<mosaic_0001>
module attributes {stable_mosaic.version = 11 : i64} {
  func.func @_conv_bn_act_kernel(%arg0: i32, %arg1: memref<2x2x15x30xbf16, #tpu.memory_space<vmem>>, %arg2: memref<3x30x112xbf16, #tpu.memory_space<vmem>>, %arg3: memref<1x112xf32, #tpu.memory_space<vmem>>, %arg4: memref<112x8xf32, #tpu.memory_space<vmem>>, %arg5: memref<8x112xf32, #tpu.memory_space<vmem>>, %arg6: memref<2x8xf32, #tpu.memory_space<vmem>>, %arg7: memref<2x1x14x112xbf16, #tpu.memory_space<vmem>>, %arg8: memref<2x1x14x112xf32, #tpu.memory_space<vmem>>) attributes {dimension_semantics = [#tpu.dimension_semantics<arbitrary>], iteration_bounds = array<i64: 1>, scalar_prefetch = 0 : i64, scratch_operands = 1 : i64, tpu.core_type = #tpu.core_type<tc>, window_params = [{pipeline_mode = #tpu.pipeline_mode<synchronous>, transform_indices = @transform_0, window_bounds = array<i64: 2, 2, 15, 30>}, {pipeline_mode = #tpu.pipeline_mode<synchronous>, transform_indices = @transform_1, window_bounds = array<i64: 3, 30, 112>}, {pipeline_mode = #tpu.pipeline_mode<synchronous>, transform_indices = @transform_2, window_bounds = array<i64: 1, 112>}, {pipeline_mode = #tpu.pipeline_mode<synchronous>, transform_indices = @transform_3, window_bounds = array<i64: 112, 8>}, {pipeline_mode = #tpu.pipeline_mode<synchronous>, transform_indices = @transform_4, window_bounds = array<i64: 8, 112>}, {pipeline_mode = #tpu.pipeline_mode<synchronous>, transform_indices = @transform_5, window_bounds = array<i64: 2, 8>}, {pipeline_mode = #tpu.pipeline_mode<synchronous>, transform_indices = @transform_6, window_bounds = array<i64: 2, 1, 14, 112>}]} {
    %cst = arith.constant 0.000000e+00 : f32
    %0 = vector.broadcast %cst : f32 to vector<1x112xf32>
    %cst_0 = arith.constant 0.000000e+00 : f32
    %1 = vector.broadcast %cst_0 : f32 to vector<1x112xf32>
    %cst_1 = arith.constant 0.000000e+00 : f32
    %2 = vector.broadcast %cst_1 : f32 to vector<14x112xf32>
    %c0 = arith.constant 0 : index
    %c0_2 = arith.constant 0 : index
    %c0_3 = arith.constant 0 : index
    %c0_4 = arith.constant 0 : index
    %3 = vector.load %arg1[%c0, %c0_2, %c0_3, %c0_4] : memref<2x2x15x30xbf16, #tpu.memory_space<vmem>>, vector<1x1x14x30xbf16>
    %4 = vector.shape_cast %3 : vector<1x1x14x30xbf16> to vector<14x30xbf16>
    %c0_5 = arith.constant 0 : index
    %c0_6 = arith.constant 0 : index
    %c0_7 = arith.constant 0 : index
    %5 = vector.load %arg2[%c0_5, %c0_6, %c0_7] : memref<3x30x112xbf16, #tpu.memory_space<vmem>>, vector<1x30x112xbf16>
    %6 = vector.shape_cast %5 : vector<1x30x112xbf16> to vector<30x112xbf16>
    %cst_8 = arith.constant dense<0.000000e+00> : vector<14x112xf32>
    %7 = tpu.matmul %4, %6, %cst_8 {dimension_numbers = #tpu.dot_dimension_numbers<[1], [0], [0], [1], [0, 0, 1, 1], [], []>} : vector<14x30xbf16>, vector<30x112xbf16>, vector<14x112xf32> -> vector<14x112xf32>
    %8 = arith.addf %2, %7 : vector<14x112xf32>
    %c0_9 = arith.constant 0 : index
    %c1 = arith.constant 1 : index
    %c0_10 = arith.constant 0 : index
    %c0_11 = arith.constant 0 : index
    %9 = vector.load %arg1[%c0_9, %c1, %c0_10, %c0_11] : memref<2x2x15x30xbf16, #tpu.memory_space<vmem>>, vector<1x1x14x30xbf16>
    %10 = vector.shape_cast %9 : vector<1x1x14x30xbf16> to vector<14x30xbf16>
    %c1_12 = arith.constant 1 : index
    %c0_13 = arith.constant 0 : index
    %c0_14 = arith.constant 0 : index
    %11 = vector.load %arg2[%c1_12, %c0_13, %c0_14] : memref<3x30x112xbf16, #tpu.memory_space<vmem>>, vector<1x30x112xbf16>
    %12 = vector.shape_cast %11 : vector<1x30x112xbf16> to vector<30x112xbf16>
    %cst_15 = arith.constant dense<0.000000e+00> : vector<14x112xf32>
    %13 = tpu.matmul %10, %12, %cst_15 {dimension_numbers = #tpu.dot_dimension_numbers<[1], [0], [0], [1], [0, 0, 1, 1], [], []>} : vector<14x30xbf16>, vector<30x112xbf16>, vector<14x112xf32> -> vector<14x112xf32>
    %14 = arith.addf %8, %13 : vector<14x112xf32>
    %c0_16 = arith.constant 0 : index
    %c0_17 = arith.constant 0 : index
    %c1_18 = arith.constant 1 : index
    %c0_19 = arith.constant 0 : index
    %15 = vector.load %arg1[%c0_16, %c0_17, %c1_18, %c0_19] : memref<2x2x15x30xbf16, #tpu.memory_space<vmem>>, vector<1x1x14x30xbf16>
    %16 = vector.shape_cast %15 : vector<1x1x14x30xbf16> to vector<14x30xbf16>
    %c2 = arith.constant 2 : index
    %c0_20 = arith.constant 0 : index
    %c0_21 = arith.constant 0 : index
    %17 = vector.load %arg2[%c2, %c0_20, %c0_21] : memref<3x30x112xbf16, #tpu.memory_space<vmem>>, vector<1x30x112xbf16>
    %18 = vector.shape_cast %17 : vector<1x30x112xbf16> to vector<30x112xbf16>
    %cst_22 = arith.constant dense<0.000000e+00> : vector<14x112xf32>
    %19 = tpu.matmul %16, %18, %cst_22 {dimension_numbers = #tpu.dot_dimension_numbers<[1], [0], [0], [1], [0, 0, 1, 1], [], []>} : vector<14x30xbf16>, vector<30x112xbf16>, vector<14x112xf32> -> vector<14x112xf32>
    %20 = arith.addf %14, %19 : vector<14x112xf32>
    %c0_23 = arith.constant 0 : index
    %c0_24 = arith.constant 0 : index
    %21 = vector.load %arg3[%c0_23, %c0_24] : memref<1x112xf32, #tpu.memory_space<vmem>>, vector<1x112xf32>
    %22 = vector.broadcast %21 : vector<1x112xf32> to vector<14x112xf32>
    %23 = arith.addf %20, %22 : vector<14x112xf32>
    %c0_25 = arith.constant 0 : index
    %c0_26 = arith.constant 0 : index
    %c0_27 = arith.constant 0 : index
    %c0_28 = arith.constant 0 : index
    %24 = vector.load %arg8[%c0_25, %c0_26, %c0_27, %c0_28] : memref<2x1x14x112xf32, #tpu.memory_space<vmem>>, vector<1x1x14x112xf32>
    %25 = vector.shape_cast %24 : vector<1x1x14x112xf32> to vector<14x112xf32>
    %26 = vector.shape_cast %23 : vector<14x112xf32> to vector<1x1x14x112xf32>
    tpu.vector_store %arg8[%c0_25, %c0_26, %c0_27, %c0_28], %26 {strides = array<i32>} : memref<2x1x14x112xf32, #tpu.memory_space<vmem>>, vector<1x1x14x112xf32>,
    %cst_29 = arith.constant dense<0.000000e+00> : vector<112xf32>
    %27 = vector.multi_reduction <add>, %23, %cst_29 [0] : vector<14x112xf32> to vector<112xf32>
    %28 = vector.shape_cast %27 : vector<112xf32> to vector<1x112xf32>
    %29 = arith.addf %0, %28 : vector<1x112xf32>
    %30 = arith.mulf %23, %23 : vector<14x112xf32>
    %cst_30 = arith.constant dense<0.000000e+00> : vector<112xf32>
    %31 = vector.multi_reduction <add>, %30, %cst_30 [0] : vector<14x112xf32> to vector<112xf32>
    %32 = vector.shape_cast %31 : vector<112xf32> to vector<1x112xf32>
    %33 = arith.addf %1, %32 : vector<1x112xf32>
    %cst_31 = arith.constant 0.000000e+00 : f32
    %34 = vector.broadcast %cst_31 : f32 to vector<14x112xf32>
    %c1_32 = arith.constant 1 : index
    %c0_33 = arith.constant 0 : index
    %c0_34 = arith.constant 0 : index
    %c0_35 = arith.constant 0 : index
    %35 = vector.load %arg1[%c1_32, %c0_33, %c0_34, %c0_35] : memref<2x2x15x30xbf16, #tpu.memory_space<vmem>>, vector<1x1x14x30xbf16>
    %36 = vector.shape_cast %35 : vector<1x1x14x30xbf16> to vector<14x30xbf16>
    %c0_36 = arith.constant 0 : index
    %c0_37 = arith.constant 0 : index
    %c0_38 = arith.constant 0 : index
    %37 = vector.load %arg2[%c0_36, %c0_37, %c0_38] : memref<3x30x112xbf16, #tpu.memory_space<vmem>>, vector<1x30x112xbf16>
    %38 = vector.shape_cast %37 : vector<1x30x112xbf16> to vector<30x112xbf16>
    %cst_39 = arith.constant dense<0.000000e+00> : vector<14x112xf32>
    %39 = tpu.matmul %36, %38, %cst_39 {dimension_numbers = #tpu.dot_dimension_numbers<[1], [0], [0], [1], [0, 0, 1, 1], [], []>} : vector<14x30xbf16>, vector<30x112xbf16>, vector<14x112xf32> -> vector<14x112xf32>
    %40 = arith.addf %34, %39 : vector<14x112xf32>
    %c1_40 = arith.constant 1 : index
    %c1_41 = arith.constant 1 : index
    %c0_42 = arith.constant 0 : index
    %c0_43 = arith.constant 0 : index
    %41 = vector.load %arg1[%c1_40, %c1_41, %c0_42, %c0_43] : memref<2x2x15x30xbf16, #tpu.memory_space<vmem>>, vector<1x1x14x30xbf16>
    %42 = vector.shape_cast %41 : vector<1x1x14x30xbf16> to vector<14x30xbf16>
    %c1_44 = arith.constant 1 : index
    %c0_45 = arith.constant 0 : index
    %c0_46 = arith.constant 0 : index
    %43 = vector.load %arg2[%c1_44, %c0_45, %c0_46] : memref<3x30x112xbf16, #tpu.memory_space<vmem>>, vector<1x30x112xbf16>
    %44 = vector.shape_cast %43 : vector<1x30x112xbf16> to vector<30x112xbf16>
    %cst_47 = arith.constant dense<0.000000e+00> : vector<14x112xf32>
    %45 = tpu.matmul %42, %44, %cst_47 {dimension_numbers = #tpu.dot_dimension_numbers<[1], [0], [0], [1], [0, 0, 1, 1], [], []>} : vector<14x30xbf16>, vector<30x112xbf16>, vector<14x112xf32> -> vector<14x112xf32>
    %46 = arith.addf %40, %45 : vector<14x112xf32>
    %c1_48 = arith.constant 1 : index
    %c0_49 = arith.constant 0 : index
    %c1_50 = arith.constant 1 : index
    %c0_51 = arith.constant 0 : index
    %47 = vector.load %arg1[%c1_48, %c0_49, %c1_50, %c0_51] : memref<2x2x15x30xbf16, #tpu.memory_space<vmem>>, vector<1x1x14x30xbf16>
    %48 = vector.shape_cast %47 : vector<1x1x14x30xbf16> to vector<14x30xbf16>
    %c2_52 = arith.constant 2 : index
    %c0_53 = arith.constant 0 : index
    %c0_54 = arith.constant 0 : index
    %49 = vector.load %arg2[%c2_52, %c0_53, %c0_54] : memref<3x30x112xbf16, #tpu.memory_space<vmem>>, vector<1x30x112xbf16>
    %50 = vector.shape_cast %49 : vector<1x30x112xbf16> to vector<30x112xbf16>
    %cst_55 = arith.constant dense<0.000000e+00> : vector<14x112xf32>
    %51 = tpu.matmul %48, %50, %cst_55 {dimension_numbers = #tpu.dot_dimension_numbers<[1], [0], [0], [1], [0, 0, 1, 1], [], []>} : vector<14x30xbf16>, vector<30x112xbf16>, vector<14x112xf32> -> vector<14x112xf32>
    %52 = arith.addf %46, %51 : vector<14x112xf32>
    %c0_56 = arith.constant 0 : index
    %c0_57 = arith.constant 0 : index
    %53 = vector.load %arg3[%c0_56, %c0_57] : memref<1x112xf32, #tpu.memory_space<vmem>>, vector<1x112xf32>
    %54 = vector.broadcast %53 : vector<1x112xf32> to vector<14x112xf32>
    %55 = arith.addf %52, %54 : vector<14x112xf32>
    %c1_58 = arith.constant 1 : index
    %c0_59 = arith.constant 0 : index
    %c0_60 = arith.constant 0 : index
    %c0_61 = arith.constant 0 : index
    %56 = vector.load %arg8[%c1_58, %c0_59, %c0_60, %c0_61] : memref<2x1x14x112xf32, #tpu.memory_space<vmem>>, vector<1x1x14x112xf32>
    %57 = vector.shape_cast %56 : vector<1x1x14x112xf32> to vector<14x112xf32>
    %58 = vector.shape_cast %55 : vector<14x112xf32> to vector<1x1x14x112xf32>
    tpu.vector_store %arg8[%c1_58, %c0_59, %c0_60, %c0_61], %58 {strides = array<i32>} : memref<2x1x14x112xf32, #tpu.memory_space<vmem>>, vector<1x1x14x112xf32>,
    %cst_62 = arith.constant dense<0.000000e+00> : vector<112xf32>
    %59 = vector.multi_reduction <add>, %55, %cst_62 [0] : vector<14x112xf32> to vector<112xf32>
    %60 = vector.shape_cast %59 : vector<112xf32> to vector<1x112xf32>
    %61 = arith.addf %29, %60 : vector<1x112xf32>
    %62 = arith.mulf %55, %55 : vector<14x112xf32>
    %cst_63 = arith.constant dense<0.000000e+00> : vector<112xf32>
    %63 = vector.multi_reduction <add>, %62, %cst_63 [0] : vector<14x112xf32> to vector<112xf32>
    %64 = vector.shape_cast %63 : vector<112xf32> to vector<1x112xf32>
    %65 = arith.addf %33, %64 : vector<1x112xf32>
    %c0_64 = arith.constant 0 : index
    %c0_65 = arith.constant 0 : index
    %66 = vector.load %arg4[%c0_64, %c0_65] : memref<112x8xf32, #tpu.memory_space<vmem>>, vector<112x8xf32>
    %cst_66 = arith.constant dense<0.000000e+00> : vector<1x8xf32>
    %67 = tpu.matmul %61, %66, %cst_66 {dimension_numbers = #tpu.dot_dimension_numbers<[1], [0], [0], [1], [0, 0, 1, 1], [], []>} : vector<1x112xf32>, vector<112x8xf32>, vector<1x8xf32> -> vector<1x8xf32>
    %c0_67 = arith.constant 0 : index
    %c0_68 = arith.constant 0 : index
    %68 = vector.load %arg4[%c0_67, %c0_68] : memref<112x8xf32, #tpu.memory_space<vmem>>, vector<112x8xf32>
    %cst_69 = arith.constant dense<0.000000e+00> : vector<1x8xf32>
    %69 = tpu.matmul %65, %68, %cst_69 {dimension_numbers = #tpu.dot_dimension_numbers<[1], [0], [0], [1], [0, 0, 1, 1], [], []>} : vector<1x112xf32>, vector<112x8xf32>, vector<1x8xf32> -> vector<1x8xf32>
    %cst_70 = arith.constant 0.00255102036 : f32
    %70 = vector.broadcast %cst_70 : f32 to vector<1x8xf32>
    %71 = arith.mulf %67, %70 : vector<1x8xf32>
    %cst_71 = arith.constant 0.00255102036 : f32
    %72 = vector.broadcast %cst_71 : f32 to vector<1x8xf32>
    %73 = arith.mulf %69, %72 : vector<1x8xf32>
    %74 = arith.mulf %71, %71 : vector<1x8xf32>
    %75 = arith.subf %73, %74 : vector<1x8xf32>
    %cst_72 = arith.constant 0.000000e+00 : f32
    %76 = vector.broadcast %cst_72 : f32 to vector<1x8xf32>
    %77 = arith.maximumf %75, %76 : vector<1x8xf32>
    %c0_73 = arith.constant 0 : index
    %c0_74 = arith.constant 0 : index
    %78 = vector.load %arg6[%c0_73, %c0_74] : memref<2x8xf32, #tpu.memory_space<vmem>>, vector<1x8xf32>
    %c1_75 = arith.constant 1 : index
    %c0_76 = arith.constant 0 : index
    %79 = vector.load %arg6[%c1_75, %c0_76] : memref<2x8xf32, #tpu.memory_space<vmem>>, vector<1x8xf32>
    %cst_77 = arith.constant 9.99999974E-6 : f32
    %80 = vector.broadcast %cst_77 : f32 to vector<1x8xf32>
    %81 = arith.addf %77, %80 : vector<1x8xf32>
    %82 = math.rsqrt %81 : vector<1x8xf32>
    %83 = arith.mulf %78, %82 : vector<1x8xf32>
    %84 = arith.mulf %71, %83 : vector<1x8xf32>
    %85 = arith.subf %79, %84 : vector<1x8xf32>
    %c0_78 = arith.constant 0 : index
    %c0_79 = arith.constant 0 : index
    %86 = vector.load %arg5[%c0_78, %c0_79] : memref<8x112xf32, #tpu.memory_space<vmem>>, vector<8x112xf32>
    %cst_80 = arith.constant dense<0.000000e+00> : vector<1x112xf32>
    %87 = tpu.matmul %83, %86, %cst_80 {dimension_numbers = #tpu.dot_dimension_numbers<[1], [0], [0], [1], [0, 0, 1, 1], [], []>} : vector<1x8xf32>, vector<8x112xf32>, vector<1x112xf32> -> vector<1x112xf32>
    %c0_81 = arith.constant 0 : index
    %c0_82 = arith.constant 0 : index
    %88 = vector.load %arg5[%c0_81, %c0_82] : memref<8x112xf32, #tpu.memory_space<vmem>>, vector<8x112xf32>
    %cst_83 = arith.constant dense<0.000000e+00> : vector<1x112xf32>
    %89 = tpu.matmul %85, %88, %cst_83 {dimension_numbers = #tpu.dot_dimension_numbers<[1], [0], [0], [1], [0, 0, 1, 1], [], []>} : vector<1x8xf32>, vector<8x112xf32>, vector<1x112xf32> -> vector<1x112xf32>
    %c0_84 = arith.constant 0 : index
    %c0_85 = arith.constant 0 : index
    %c0_86 = arith.constant 0 : index
    %c0_87 = arith.constant 0 : index
    %90 = vector.load %arg8[%c0_84, %c0_85, %c0_86, %c0_87] : memref<2x1x14x112xf32, #tpu.memory_space<vmem>>, vector<1x1x14x112xf32>
    %91 = vector.shape_cast %90 : vector<1x1x14x112xf32> to vector<14x112xf32>
    %92 = vector.broadcast %87 : vector<1x112xf32> to vector<14x112xf32>
    %93 = arith.mulf %91, %92 : vector<14x112xf32>
    %94 = vector.broadcast %89 : vector<1x112xf32> to vector<14x112xf32>
    %95 = arith.addf %93, %94 : vector<14x112xf32>
    %cst_88 = arith.constant 0.000000e+00 : f32
    %96 = vector.broadcast %cst_88 : f32 to vector<14x112xf32>
    %97 = arith.cmpf oge, %95, %96 : vector<14x112xf32>
    %cst_89 = arith.constant 0.00999999977 : f32
    %98 = vector.broadcast %cst_89 : f32 to vector<14x112xf32>
    %99 = arith.mulf %98, %95 : vector<14x112xf32>
    %100 = arith.select %97, %95, %99 : vector<14x112xi1>, vector<14x112xf32>
    %101 = arith.truncf %100 : vector<14x112xf32> to vector<14x112xbf16>
    %c0_90 = arith.constant 0 : index
    %c0_91 = arith.constant 0 : index
    %c0_92 = arith.constant 0 : index
    %c0_93 = arith.constant 0 : index
    %102 = vector.load %arg7[%c0_90, %c0_91, %c0_92, %c0_93] : memref<2x1x14x112xbf16, #tpu.memory_space<vmem>>, vector<1x1x14x112xbf16>
    %103 = vector.shape_cast %102 : vector<1x1x14x112xbf16> to vector<14x112xbf16>
    %104 = vector.shape_cast %101 : vector<14x112xbf16> to vector<1x1x14x112xbf16>
    tpu.vector_store %arg7[%c0_90, %c0_91, %c0_92, %c0_93], %104 {strides = array<i32>} : memref<2x1x14x112xbf16, #tpu.memory_space<vmem>>, vector<1x1x14x112xbf16>,
    %c1_94 = arith.constant 1 : index
    %c0_95 = arith.constant 0 : index
    %c0_96 = arith.constant 0 : index
    %c0_97 = arith.constant 0 : index
    %105 = vector.load %arg8[%c1_94, %c0_95, %c0_96, %c0_97] : memref<2x1x14x112xf32, #tpu.memory_space<vmem>>, vector<1x1x14x112xf32>
    %106 = vector.shape_cast %105 : vector<1x1x14x112xf32> to vector<14x112xf32>
    %107 = vector.broadcast %87 : vector<1x112xf32> to vector<14x112xf32>
    %108 = arith.mulf %106, %107 : vector<14x112xf32>
    %109 = vector.broadcast %89 : vector<1x112xf32> to vector<14x112xf32>
    %110 = arith.addf %108, %109 : vector<14x112xf32>
    %cst_98 = arith.constant 0.000000e+00 : f32
    %111 = vector.broadcast %cst_98 : f32 to vector<14x112xf32>
    %112 = arith.cmpf oge, %110, %111 : vector<14x112xf32>
    %cst_99 = arith.constant 0.00999999977 : f32
    %113 = vector.broadcast %cst_99 : f32 to vector<14x112xf32>
    %114 = arith.mulf %113, %110 : vector<14x112xf32>
    %115 = arith.select %112, %110, %114 : vector<14x112xi1>, vector<14x112xf32>
    %116 = arith.truncf %115 : vector<14x112xf32> to vector<14x112xbf16>
    %c1_100 = arith.constant 1 : index
    %c0_101 = arith.constant 0 : index
    %c0_102 = arith.constant 0 : index
    %c0_103 = arith.constant 0 : index
    %117 = vector.load %arg7[%c1_100, %c0_101, %c0_102, %c0_103] : memref<2x1x14x112xbf16, #tpu.memory_space<vmem>>, vector<1x1x14x112xbf16>
    %118 = vector.shape_cast %117 : vector<1x1x14x112xbf16> to vector<14x112xbf16>
    %119 = vector.shape_cast %116 : vector<14x112xbf16> to vector<1x1x14x112xbf16>
    tpu.vector_store %arg7[%c1_100, %c0_101, %c0_102, %c0_103], %119 {strides = array<i32>} : memref<2x1x14x112xbf16, #tpu.memory_space<vmem>>, vector<1x1x14x112xbf16>,
    return
  }
  func.func @transform_0(%arg0: i32) -> (i32, i32, i32, i32) {
    %c0_i32 = arith.constant 0 : i32
    %c0_i32_0 = arith.constant 0 : i32
    %c0_i32_1 = arith.constant 0 : i32
    %c0_i32_2 = arith.constant 0 : i32
    %c0_i32_3 = arith.constant 0 : i32
    return %c0_i32, %c0_i32_0, %c0_i32_1, %c0_i32_2 : i32, i32, i32, i32
  }
  func.func @transform_1(%arg0: i32) -> (i32, i32, i32) {
    %c0_i32 = arith.constant 0 : i32
    %c0_i32_0 = arith.constant 0 : i32
    %c0_i32_1 = arith.constant 0 : i32
    %c0_i32_2 = arith.constant 0 : i32
    return %c0_i32, %c0_i32_0, %c0_i32_1 : i32, i32, i32
  }
  func.func @transform_2(%arg0: i32) -> (i32, i32) {
    %c0_i32 = arith.constant 0 : i32
    %c0_i32_0 = arith.constant 0 : i32
    %c0_i32_1 = arith.constant 0 : i32
    return %c0_i32, %c0_i32_0 : i32, i32
  }
  func.func @transform_3(%arg0: i32) -> (i32, i32) {
    %c0_i32 = arith.constant 0 : i32
    %c0_i32_0 = arith.constant 0 : i32
    %c0_i32_1 = arith.constant 0 : i32
    return %c0_i32, %c0_i32_0 : i32, i32
  }
  func.func @transform_4(%arg0: i32) -> (i32, i32) {
    %c0_i32 = arith.constant 0 : i32
    %c0_i32_0 = arith.constant 0 : i32
    %c0_i32_1 = arith.constant 0 : i32
    return %c0_i32, %c0_i32_0 : i32, i32
  }
  func.func @transform_5(%arg0: i32) -> (i32, i32) {
    %c0_i32 = arith.constant 0 : i32
    %c0_i32_0 = arith.constant 0 : i32
    %c0_i32_1 = arith.constant 0 : i32
    return %c0_i32, %c0_i32_0 : i32, i32
  }
  func.func @transform_6(%arg0: i32) -> (i32, i32, i32, i32) {
    %c0_i32 = arith.constant 0 : i32
    %c0_i32_0 = arith.constant 0 : i32
    %c0_i32_1 = arith.constant 0 : i32
    %c0_i32_2 = arith.constant 0 : i32
    %c0_i32_3 = arith.constant 0 : i32
    return %c0_i32, %c0_i32_0, %c0_i32_1, %c0_i32_2 : i32, i32, i32, i32
  }
}

module attributes {stable_mosaic.version = 11 : i64} {
  func.func @_conv_bn_act_kernel(%arg0: i32, %arg1: memref<2x2x8x128xbf16, #tpu.memory_space<vmem>>, %arg2: memref<3x128x112xbf16, #tpu.memory_space<vmem>>, %arg3: memref<1x112xf32, #tpu.memory_space<vmem>>, %arg4: memref<112x16xf32, #tpu.memory_space<vmem>>, %arg5: memref<16x112xf32, #tpu.memory_space<vmem>>, %arg6: memref<2x16xf32, #tpu.memory_space<vmem>>, %arg7: memref<2x1x7x112xbf16, #tpu.memory_space<vmem>>, %arg8: memref<2x1x7x112xf32, #tpu.memory_space<vmem>>) attributes {dimension_semantics = [#tpu.dimension_semantics<arbitrary>], iteration_bounds = array<i64: 1>, scalar_prefetch = 0 : i64, scratch_operands = 1 : i64, tpu.core_type = #tpu.core_type<tc>, window_params = [{pipeline_mode = #tpu.pipeline_mode<synchronous>, transform_indices = @transform_0, window_bounds = array<i64: 2, 2, 8, 128>}, {pipeline_mode = #tpu.pipeline_mode<synchronous>, transform_indices = @transform_1, window_bounds = array<i64: 3, 128, 112>}, {pipeline_mode = #tpu.pipeline_mode<synchronous>, transform_indices = @transform_2, window_bounds = array<i64: 1, 112>}, {pipeline_mode = #tpu.pipeline_mode<synchronous>, transform_indices = @transform_3, window_bounds = array<i64: 112, 16>}, {pipeline_mode = #tpu.pipeline_mode<synchronous>, transform_indices = @transform_4, window_bounds = array<i64: 16, 112>}, {pipeline_mode = #tpu.pipeline_mode<synchronous>, transform_indices = @transform_5, window_bounds = array<i64: 2, 16>}, {pipeline_mode = #tpu.pipeline_mode<synchronous>, transform_indices = @transform_6, window_bounds = array<i64: 2, 1, 7, 112>}]} {
    %cst = arith.constant 0.000000e+00 : f32
    %0 = vector.broadcast %cst : f32 to vector<1x112xf32>
    %cst_0 = arith.constant 0.000000e+00 : f32
    %1 = vector.broadcast %cst_0 : f32 to vector<1x112xf32>
    %cst_1 = arith.constant 0.000000e+00 : f32
    %2 = vector.broadcast %cst_1 : f32 to vector<7x112xf32>
    %c0 = arith.constant 0 : index
    %c0_2 = arith.constant 0 : index
    %c0_3 = arith.constant 0 : index
    %c0_4 = arith.constant 0 : index
    %3 = vector.load %arg1[%c0, %c0_2, %c0_3, %c0_4] : memref<2x2x8x128xbf16, #tpu.memory_space<vmem>>, vector<1x1x7x128xbf16>
    %4 = vector.shape_cast %3 : vector<1x1x7x128xbf16> to vector<7x128xbf16>
    %c0_5 = arith.constant 0 : index
    %c0_6 = arith.constant 0 : index
    %c0_7 = arith.constant 0 : index
    %5 = vector.load %arg2[%c0_5, %c0_6, %c0_7] : memref<3x128x112xbf16, #tpu.memory_space<vmem>>, vector<1x128x112xbf16>
    %6 = vector.shape_cast %5 : vector<1x128x112xbf16> to vector<128x112xbf16>
    %cst_8 = arith.constant dense<0.000000e+00> : vector<7x112xf32>
    %7 = tpu.matmul %4, %6, %cst_8 {dimension_numbers = #tpu.dot_dimension_numbers<[1], [0], [0], [1], [0, 0, 1, 1], [], []>} : vector<7x128xbf16>, vector<128x112xbf16>, vector<7x112xf32> -> vector<7x112xf32>
    %8 = arith.addf %2, %7 : vector<7x112xf32>
    %c0_9 = arith.constant 0 : index
    %c1 = arith.constant 1 : index
    %c0_10 = arith.constant 0 : index
    %c0_11 = arith.constant 0 : index
    %9 = vector.load %arg1[%c0_9, %c1, %c0_10, %c0_11] : memref<2x2x8x128xbf16, #tpu.memory_space<vmem>>, vector<1x1x7x128xbf16>
    %10 = vector.shape_cast %9 : vector<1x1x7x128xbf16> to vector<7x128xbf16>
    %c1_12 = arith.constant 1 : index
    %c0_13 = arith.constant 0 : index
    %c0_14 = arith.constant 0 : index
    %11 = vector.load %arg2[%c1_12, %c0_13, %c0_14] : memref<3x128x112xbf16, #tpu.memory_space<vmem>>, vector<1x128x112xbf16>
    %12 = vector.shape_cast %11 : vector<1x128x112xbf16> to vector<128x112xbf16>
    %cst_15 = arith.constant dense<0.000000e+00> : vector<7x112xf32>
    %13 = tpu.matmul %10, %12, %cst_15 {dimension_numbers = #tpu.dot_dimension_numbers<[1], [0], [0], [1], [0, 0, 1, 1], [], []>} : vector<7x128xbf16>, vector<128x112xbf16>, vector<7x112xf32> -> vector<7x112xf32>
    %14 = arith.addf %8, %13 : vector<7x112xf32>
    %c0_16 = arith.constant 0 : index
    %c0_17 = arith.constant 0 : index
    %c1_18 = arith.constant 1 : index
    %c0_19 = arith.constant 0 : index
    %15 = vector.load %arg1[%c0_16, %c0_17, %c1_18, %c0_19] : memref<2x2x8x128xbf16, #tpu.memory_space<vmem>>, vector<1x1x7x128xbf16>
    %16 = vector.shape_cast %15 : vector<1x1x7x128xbf16> to vector<7x128xbf16>
    %c2 = arith.constant 2 : index
    %c0_20 = arith.constant 0 : index
    %c0_21 = arith.constant 0 : index
    %17 = vector.load %arg2[%c2, %c0_20, %c0_21] : memref<3x128x112xbf16, #tpu.memory_space<vmem>>, vector<1x128x112xbf16>
    %18 = vector.shape_cast %17 : vector<1x128x112xbf16> to vector<128x112xbf16>
    %cst_22 = arith.constant dense<0.000000e+00> : vector<7x112xf32>
    %19 = tpu.matmul %16, %18, %cst_22 {dimension_numbers = #tpu.dot_dimension_numbers<[1], [0], [0], [1], [0, 0, 1, 1], [], []>} : vector<7x128xbf16>, vector<128x112xbf16>, vector<7x112xf32> -> vector<7x112xf32>
    %20 = arith.addf %14, %19 : vector<7x112xf32>
    %c0_23 = arith.constant 0 : index
    %c0_24 = arith.constant 0 : index
    %21 = vector.load %arg3[%c0_23, %c0_24] : memref<1x112xf32, #tpu.memory_space<vmem>>, vector<1x112xf32>
    %22 = vector.broadcast %21 : vector<1x112xf32> to vector<7x112xf32>
    %23 = arith.addf %20, %22 : vector<7x112xf32>
    %c0_25 = arith.constant 0 : index
    %c0_26 = arith.constant 0 : index
    %c0_27 = arith.constant 0 : index
    %c0_28 = arith.constant 0 : index
    %24 = vector.load %arg8[%c0_25, %c0_26, %c0_27, %c0_28] : memref<2x1x7x112xf32, #tpu.memory_space<vmem>>, vector<1x1x7x112xf32>
    %25 = vector.shape_cast %24 : vector<1x1x7x112xf32> to vector<7x112xf32>
    %26 = vector.shape_cast %23 : vector<7x112xf32> to vector<1x1x7x112xf32>
    tpu.vector_store %arg8[%c0_25, %c0_26, %c0_27, %c0_28], %26 {strides = array<i32>} : memref<2x1x7x112xf32, #tpu.memory_space<vmem>>, vector<1x1x7x112xf32>,
    %cst_29 = arith.constant dense<0.000000e+00> : vector<112xf32>
    %27 = vector.multi_reduction <add>, %23, %cst_29 [0] : vector<7x112xf32> to vector<112xf32>
    %28 = vector.shape_cast %27 : vector<112xf32> to vector<1x112xf32>
    %29 = arith.addf %0, %28 : vector<1x112xf32>
    %30 = arith.mulf %23, %23 : vector<7x112xf32>
    %cst_30 = arith.constant dense<0.000000e+00> : vector<112xf32>
    %31 = vector.multi_reduction <add>, %30, %cst_30 [0] : vector<7x112xf32> to vector<112xf32>
    %32 = vector.shape_cast %31 : vector<112xf32> to vector<1x112xf32>
    %33 = arith.addf %1, %32 : vector<1x112xf32>
    %cst_31 = arith.constant 0.000000e+00 : f32
    %34 = vector.broadcast %cst_31 : f32 to vector<7x112xf32>
    %c1_32 = arith.constant 1 : index
    %c0_33 = arith.constant 0 : index
    %c0_34 = arith.constant 0 : index
    %c0_35 = arith.constant 0 : index
    %35 = vector.load %arg1[%c1_32, %c0_33, %c0_34, %c0_35] : memref<2x2x8x128xbf16, #tpu.memory_space<vmem>>, vector<1x1x7x128xbf16>
    %36 = vector.shape_cast %35 : vector<1x1x7x128xbf16> to vector<7x128xbf16>
    %c0_36 = arith.constant 0 : index
    %c0_37 = arith.constant 0 : index
    %c0_38 = arith.constant 0 : index
    %37 = vector.load %arg2[%c0_36, %c0_37, %c0_38] : memref<3x128x112xbf16, #tpu.memory_space<vmem>>, vector<1x128x112xbf16>
    %38 = vector.shape_cast %37 : vector<1x128x112xbf16> to vector<128x112xbf16>
    %cst_39 = arith.constant dense<0.000000e+00> : vector<7x112xf32>
    %39 = tpu.matmul %36, %38, %cst_39 {dimension_numbers = #tpu.dot_dimension_numbers<[1], [0], [0], [1], [0, 0, 1, 1], [], []>} : vector<7x128xbf16>, vector<128x112xbf16>, vector<7x112xf32> -> vector<7x112xf32>
    %40 = arith.addf %34, %39 : vector<7x112xf32>
    %c1_40 = arith.constant 1 : index
    %c1_41 = arith.constant 1 : index
    %c0_42 = arith.constant 0 : index
    %c0_43 = arith.constant 0 : index
    %41 = vector.load %arg1[%c1_40, %c1_41, %c0_42, %c0_43] : memref<2x2x8x128xbf16, #tpu.memory_space<vmem>>, vector<1x1x7x128xbf16>
    %42 = vector.shape_cast %41 : vector<1x1x7x128xbf16> to vector<7x128xbf16>
    %c1_44 = arith.constant 1 : index
    %c0_45 = arith.constant 0 : index
    %c0_46 = arith.constant 0 : index
    %43 = vector.load %arg2[%c1_44, %c0_45, %c0_46] : memref<3x128x112xbf16, #tpu.memory_space<vmem>>, vector<1x128x112xbf16>
    %44 = vector.shape_cast %43 : vector<1x128x112xbf16> to vector<128x112xbf16>
    %cst_47 = arith.constant dense<0.000000e+00> : vector<7x112xf32>
    %45 = tpu.matmul %42, %44, %cst_47 {dimension_numbers = #tpu.dot_dimension_numbers<[1], [0], [0], [1], [0, 0, 1, 1], [], []>} : vector<7x128xbf16>, vector<128x112xbf16>, vector<7x112xf32> -> vector<7x112xf32>
    %46 = arith.addf %40, %45 : vector<7x112xf32>
    %c1_48 = arith.constant 1 : index
    %c0_49 = arith.constant 0 : index
    %c1_50 = arith.constant 1 : index
    %c0_51 = arith.constant 0 : index
    %47 = vector.load %arg1[%c1_48, %c0_49, %c1_50, %c0_51] : memref<2x2x8x128xbf16, #tpu.memory_space<vmem>>, vector<1x1x7x128xbf16>
    %48 = vector.shape_cast %47 : vector<1x1x7x128xbf16> to vector<7x128xbf16>
    %c2_52 = arith.constant 2 : index
    %c0_53 = arith.constant 0 : index
    %c0_54 = arith.constant 0 : index
    %49 = vector.load %arg2[%c2_52, %c0_53, %c0_54] : memref<3x128x112xbf16, #tpu.memory_space<vmem>>, vector<1x128x112xbf16>
    %50 = vector.shape_cast %49 : vector<1x128x112xbf16> to vector<128x112xbf16>
    %cst_55 = arith.constant dense<0.000000e+00> : vector<7x112xf32>
    %51 = tpu.matmul %48, %50, %cst_55 {dimension_numbers = #tpu.dot_dimension_numbers<[1], [0], [0], [1], [0, 0, 1, 1], [], []>} : vector<7x128xbf16>, vector<128x112xbf16>, vector<7x112xf32> -> vector<7x112xf32>
    %52 = arith.addf %46, %51 : vector<7x112xf32>
    %c0_56 = arith.constant 0 : index
    %c0_57 = arith.constant 0 : index
    %53 = vector.load %arg3[%c0_56, %c0_57] : memref<1x112xf32, #tpu.memory_space<vmem>>, vector<1x112xf32>
    %54 = vector.broadcast %53 : vector<1x112xf32> to vector<7x112xf32>
    %55 = arith.addf %52, %54 : vector<7x112xf32>
    %c1_58 = arith.constant 1 : index
    %c0_59 = arith.constant 0 : index
    %c0_60 = arith.constant 0 : index
    %c0_61 = arith.constant 0 : index
    %56 = vector.load %arg8[%c1_58, %c0_59, %c0_60, %c0_61] : memref<2x1x7x112xf32, #tpu.memory_space<vmem>>, vector<1x1x7x112xf32>
    %57 = vector.shape_cast %56 : vector<1x1x7x112xf32> to vector<7x112xf32>
    %58 = vector.shape_cast %55 : vector<7x112xf32> to vector<1x1x7x112xf32>
    tpu.vector_store %arg8[%c1_58, %c0_59, %c0_60, %c0_61], %58 {strides = array<i32>} : memref<2x1x7x112xf32, #tpu.memory_space<vmem>>, vector<1x1x7x112xf32>,
    %cst_62 = arith.constant dense<0.000000e+00> : vector<112xf32>
    %59 = vector.multi_reduction <add>, %55, %cst_62 [0] : vector<7x112xf32> to vector<112xf32>
    %60 = vector.shape_cast %59 : vector<112xf32> to vector<1x112xf32>
    %61 = arith.addf %29, %60 : vector<1x112xf32>
    %62 = arith.mulf %55, %55 : vector<7x112xf32>
    %cst_63 = arith.constant dense<0.000000e+00> : vector<112xf32>
    %63 = vector.multi_reduction <add>, %62, %cst_63 [0] : vector<7x112xf32> to vector<112xf32>
    %64 = vector.shape_cast %63 : vector<112xf32> to vector<1x112xf32>
    %65 = arith.addf %33, %64 : vector<1x112xf32>
    %c0_64 = arith.constant 0 : index
    %c0_65 = arith.constant 0 : index
    %66 = vector.load %arg4[%c0_64, %c0_65] : memref<112x16xf32, #tpu.memory_space<vmem>>, vector<112x16xf32>
    %cst_66 = arith.constant dense<0.000000e+00> : vector<1x16xf32>
    %67 = tpu.matmul %61, %66, %cst_66 {dimension_numbers = #tpu.dot_dimension_numbers<[1], [0], [0], [1], [0, 0, 1, 1], [], []>} : vector<1x112xf32>, vector<112x16xf32>, vector<1x16xf32> -> vector<1x16xf32>
    %c0_67 = arith.constant 0 : index
    %c0_68 = arith.constant 0 : index
    %68 = vector.load %arg4[%c0_67, %c0_68] : memref<112x16xf32, #tpu.memory_space<vmem>>, vector<112x16xf32>
    %cst_69 = arith.constant dense<0.000000e+00> : vector<1x16xf32>
    %69 = tpu.matmul %65, %68, %cst_69 {dimension_numbers = #tpu.dot_dimension_numbers<[1], [0], [0], [1], [0, 0, 1, 1], [], []>} : vector<1x112xf32>, vector<112x16xf32>, vector<1x16xf32> -> vector<1x16xf32>
    %cst_70 = arith.constant 0.0102040814 : f32
    %70 = vector.broadcast %cst_70 : f32 to vector<1x16xf32>
    %71 = arith.mulf %67, %70 : vector<1x16xf32>
    %cst_71 = arith.constant 0.0102040814 : f32
    %72 = vector.broadcast %cst_71 : f32 to vector<1x16xf32>
    %73 = arith.mulf %69, %72 : vector<1x16xf32>
    %74 = arith.mulf %71, %71 : vector<1x16xf32>
    %75 = arith.subf %73, %74 : vector<1x16xf32>
    %cst_72 = arith.constant 0.000000e+00 : f32
    %76 = vector.broadcast %cst_72 : f32 to vector<1x16xf32>
    %77 = arith.maximumf %75, %76 : vector<1x16xf32>
    %c0_73 = arith.constant 0 : index
    %c0_74 = arith.constant 0 : index
    %78 = vector.load %arg6[%c0_73, %c0_74] : memref<2x16xf32, #tpu.memory_space<vmem>>, vector<1x16xf32>
    %c1_75 = arith.constant 1 : index
    %c0_76 = arith.constant 0 : index
    %79 = vector.load %arg6[%c1_75, %c0_76] : memref<2x16xf32, #tpu.memory_space<vmem>>, vector<1x16xf32>
    %cst_77 = arith.constant 9.99999974E-6 : f32
    %80 = vector.broadcast %cst_77 : f32 to vector<1x16xf32>
    %81 = arith.addf %77, %80 : vector<1x16xf32>
    %82 = math.rsqrt %81 : vector<1x16xf32>
    %83 = arith.mulf %78, %82 : vector<1x16xf32>
    %84 = arith.mulf %71, %83 : vector<1x16xf32>
    %85 = arith.subf %79, %84 : vector<1x16xf32>
    %c0_78 = arith.constant 0 : index
    %c0_79 = arith.constant 0 : index
    %86 = vector.load %arg5[%c0_78, %c0_79] : memref<16x112xf32, #tpu.memory_space<vmem>>, vector<16x112xf32>
    %cst_80 = arith.constant dense<0.000000e+00> : vector<1x112xf32>
    %87 = tpu.matmul %83, %86, %cst_80 {dimension_numbers = #tpu.dot_dimension_numbers<[1], [0], [0], [1], [0, 0, 1, 1], [], []>} : vector<1x16xf32>, vector<16x112xf32>, vector<1x112xf32> -> vector<1x112xf32>
    %c0_81 = arith.constant 0 : index
    %c0_82 = arith.constant 0 : index
    %88 = vector.load %arg5[%c0_81, %c0_82] : memref<16x112xf32, #tpu.memory_space<vmem>>, vector<16x112xf32>
    %cst_83 = arith.constant dense<0.000000e+00> : vector<1x112xf32>
    %89 = tpu.matmul %85, %88, %cst_83 {dimension_numbers = #tpu.dot_dimension_numbers<[1], [0], [0], [1], [0, 0, 1, 1], [], []>} : vector<1x16xf32>, vector<16x112xf32>, vector<1x112xf32> -> vector<1x112xf32>
    %c0_84 = arith.constant 0 : index
    %c0_85 = arith.constant 0 : index
    %c0_86 = arith.constant 0 : index
    %c0_87 = arith.constant 0 : index
    %90 = vector.load %arg8[%c0_84, %c0_85, %c0_86, %c0_87] : memref<2x1x7x112xf32, #tpu.memory_space<vmem>>, vector<1x1x7x112xf32>
    %91 = vector.shape_cast %90 : vector<1x1x7x112xf32> to vector<7x112xf32>
    %92 = vector.broadcast %87 : vector<1x112xf32> to vector<7x112xf32>
    %93 = arith.mulf %91, %92 : vector<7x112xf32>
    %94 = vector.broadcast %89 : vector<1x112xf32> to vector<7x112xf32>
    %95 = arith.addf %93, %94 : vector<7x112xf32>
    %cst_88 = arith.constant 0.000000e+00 : f32
    %96 = vector.broadcast %cst_88 : f32 to vector<7x112xf32>
    %97 = arith.cmpf oge, %95, %96 : vector<7x112xf32>
    %cst_89 = arith.constant 0.00999999977 : f32
    %98 = vector.broadcast %cst_89 : f32 to vector<7x112xf32>
    %99 = arith.mulf %98, %95 : vector<7x112xf32>
    %100 = arith.select %97, %95, %99 : vector<7x112xi1>, vector<7x112xf32>
    %101 = arith.truncf %100 : vector<7x112xf32> to vector<7x112xbf16>
    %c0_90 = arith.constant 0 : index
    %c0_91 = arith.constant 0 : index
    %c0_92 = arith.constant 0 : index
    %c0_93 = arith.constant 0 : index
    %102 = vector.load %arg7[%c0_90, %c0_91, %c0_92, %c0_93] : memref<2x1x7x112xbf16, #tpu.memory_space<vmem>>, vector<1x1x7x112xbf16>
    %103 = vector.shape_cast %102 : vector<1x1x7x112xbf16> to vector<7x112xbf16>
    %104 = vector.shape_cast %101 : vector<7x112xbf16> to vector<1x1x7x112xbf16>
    tpu.vector_store %arg7[%c0_90, %c0_91, %c0_92, %c0_93], %104 {strides = array<i32>} : memref<2x1x7x112xbf16, #tpu.memory_space<vmem>>, vector<1x1x7x112xbf16>,
    %c1_94 = arith.constant 1 : index
    %c0_95 = arith.constant 0 : index
    %c0_96 = arith.constant 0 : index
    %c0_97 = arith.constant 0 : index
    %105 = vector.load %arg8[%c1_94, %c0_95, %c0_96, %c0_97] : memref<2x1x7x112xf32, #tpu.memory_space<vmem>>, vector<1x1x7x112xf32>
    %106 = vector.shape_cast %105 : vector<1x1x7x112xf32> to vector<7x112xf32>
    %107 = vector.broadcast %87 : vector<1x112xf32> to vector<7x112xf32>
    %108 = arith.mulf %106, %107 : vector<7x112xf32>
    %109 = vector.broadcast %89 : vector<1x112xf32> to vector<7x112xf32>
    %110 = arith.addf %108, %109 : vector<7x112xf32>
    %cst_98 = arith.constant 0.000000e+00 : f32
    %111 = vector.broadcast %cst_98 : f32 to vector<7x112xf32>
    %112 = arith.cmpf oge, %110, %111 : vector<7x112xf32>
    %cst_99 = arith.constant 0.00999999977 : f32
    %113 = vector.broadcast %cst_99 : f32 to vector<7x112xf32>
    %114 = arith.mulf %113, %110 : vector<7x112xf32>
    %115 = arith.select %112, %110, %114 : vector<7x112xi1>, vector<7x112xf32>
    %116 = arith.truncf %115 : vector<7x112xf32> to vector<7x112xbf16>
    %c1_100 = arith.constant 1 : index
    %c0_101 = arith.constant 0 : index
    %c0_102 = arith.constant 0 : index
    %c0_103 = arith.constant 0 : index
    %117 = vector.load %arg7[%c1_100, %c0_101, %c0_102, %c0_103] : memref<2x1x7x112xbf16, #tpu.memory_space<vmem>>, vector<1x1x7x112xbf16>
    %118 = vector.shape_cast %117 : vector<1x1x7x112xbf16> to vector<7x112xbf16>
    %119 = vector.shape_cast %116 : vector<7x112xbf16> to vector<1x1x7x112xbf16>
    tpu.vector_store %arg7[%c1_100, %c0_101, %c0_102, %c0_103], %119 {strides = array<i32>} : memref<2x1x7x112xbf16, #tpu.memory_space<vmem>>, vector<1x1x7x112xbf16>,
    return
  }
  func.func @transform_0(%arg0: i32) -> (i32, i32, i32, i32) {
    %c0_i32 = arith.constant 0 : i32
    %c0_i32_0 = arith.constant 0 : i32
    %c0_i32_1 = arith.constant 0 : i32
    %c0_i32_2 = arith.constant 0 : i32
    %c0_i32_3 = arith.constant 0 : i32
    return %c0_i32, %c0_i32_0, %c0_i32_1, %c0_i32_2 : i32, i32, i32, i32
  }
  func.func @transform_1(%arg0: i32) -> (i32, i32, i32) {
    %c0_i32 = arith.constant 0 : i32
    %c0_i32_0 = arith.constant 0 : i32
    %c0_i32_1 = arith.constant 0 : i32
    %c0_i32_2 = arith.constant 0 : i32
    return %c0_i32, %c0_i32_0, %c0_i32_1 : i32, i32, i32
  }
  func.func @transform_2(%arg0: i32) -> (i32, i32) {
    %c0_i32 = arith.constant 0 : i32
    %c0_i32_0 = arith.constant 0 : i32
    %c0_i32_1 = arith.constant 0 : i32
    return %c0_i32, %c0_i32_0 : i32, i32
  }
  func.func @transform_3(%arg0: i32) -> (i32, i32) {
    %c0_i32 = arith.constant 0 : i32
    %c0_i32_0 = arith.constant 0 : i32
    %c0_i32_1 = arith.constant 0 : i32
    return %c0_i32, %c0_i32_0 : i32, i32
  }
  func.func @transform_4(%arg0: i32) -> (i32, i32) {
    %c0_i32 = arith.constant 0 : i32
    %c0_i32_0 = arith.constant 0 : i32
    %c0_i32_1 = arith.constant 0 : i32
    return %c0_i32, %c0_i32_0 : i32, i32
  }
  func.func @transform_5(%arg0: i32) -> (i32, i32) {
    %c0_i32 = arith.constant 0 : i32
    %c0_i32_0 = arith.constant 0 : i32
    %c0_i32_1 = arith.constant 0 : i32
    return %c0_i32, %c0_i32_0 : i32, i32
  }
  func.func @transform_6(%arg0: i32) -> (i32, i32, i32, i32) {
    %c0_i32 = arith.constant 0 : i32
    %c0_i32_0 = arith.constant 0 : i32
    %c0_i32_1 = arith.constant 0 : i32
    %c0_i32_2 = arith.constant 0 : i32
    %c0_i32_3 = arith.constant 0 : i32
    return %c0_i32, %c0_i32_0, %c0_i32_1, %c0_i32_2 : i32, i32, i32, i32
  }
}

module attributes {stable_mosaic.version = 11 : i64} {
  func.func @_latent_kernel(%arg0: i32, %arg1: memref<8x784xbf16, #tpu.memory_space<vmem>>, %arg2: memref<784x128xbf16, #tpu.memory_space<vmem>>, %arg3: memref<1x128xf32, #tpu.memory_space<vmem>>, %arg4: memref<64x794xbf16, #tpu.memory_space<vmem>>, %arg5: memref<1x794xf32, #tpu.memory_space<vmem>>, %arg6: memref<8x64xf32, #tpu.memory_space<vmem>>, %arg7: memref<8x64xf32, #tpu.memory_space<vmem>>, %arg8: memref<8x64xf32, #tpu.memory_space<vmem>>, %arg9: memref<8x64xf32, #tpu.memory_space<vmem>>, %arg10: memref<8x794xf32, #tpu.memory_space<vmem>>) attributes {dimension_semantics = [#tpu.dimension_semantics<arbitrary>], iteration_bounds = array<i64: 1>, scalar_prefetch = 0 : i64, scratch_operands = 0 : i64, tpu.core_type = #tpu.core_type<tc>, window_params = [{pipeline_mode = #tpu.pipeline_mode<synchronous>, transform_indices = @transform_0, window_bounds = array<i64: 8, 784>}, {pipeline_mode = #tpu.pipeline_mode<synchronous>, transform_indices = @transform_1, window_bounds = array<i64: 784, 128>}, {pipeline_mode = #tpu.pipeline_mode<synchronous>, transform_indices = @transform_2, window_bounds = array<i64: 1, 128>}, {pipeline_mode = #tpu.pipeline_mode<synchronous>, transform_indices = @transform_3, window_bounds = array<i64: 64, 794>}, {pipeline_mode = #tpu.pipeline_mode<synchronous>, transform_indices = @transform_4, window_bounds = array<i64: 1, 794>}, {pipeline_mode = #tpu.pipeline_mode<synchronous>, transform_indices = @transform_5, window_bounds = array<i64: 8, 64>}, {pipeline_mode = #tpu.pipeline_mode<synchronous>, transform_indices = @transform_6, window_bounds = array<i64: 8, 64>}, {pipeline_mode = #tpu.pipeline_mode<synchronous>, transform_indices = @transform_7, window_bounds = array<i64: 8, 64>}, {pipeline_mode = #tpu.pipeline_mode<synchronous>, transform_indices = @transform_8, window_bounds = array<i64: 8, 64>}, {pipeline_mode = #tpu.pipeline_mode<synchronous>, transform_indices = @transform_9, window_bounds = array<i64: 8, 794>}]} {
    %c0 = arith.constant 0 : index
    %c0_0 = arith.constant 0 : index
    %0 = vector.load %arg1[%c0, %c0_0] : memref<8x784xbf16, #tpu.memory_space<vmem>>, vector<8x784xbf16>
    %c0_1 = arith.constant 0 : index
    %c0_2 = arith.constant 0 : index
    %1 = vector.load %arg2[%c0_1, %c0_2] : memref<784x128xbf16, #tpu.memory_space<vmem>>, vector<784x128xbf16>
    %cst = arith.constant dense<0.000000e+00> : vector<8x128xf32>
    %2 = tpu.matmul %0, %1, %cst {dimension_numbers = #tpu.dot_dimension_numbers<[1], [0], [0], [1], [0, 0, 1, 1], [], []>} : vector<8x784xbf16>, vector<784x128xbf16>, vector<8x128xf32> -> vector<8x128xf32>
    %c0_3 = arith.constant 0 : index
    %c0_4 = arith.constant 0 : index
    %3 = vector.load %arg3[%c0_3, %c0_4] : memref<1x128xf32, #tpu.memory_space<vmem>>, vector<1x128xf32>
    %4 = vector.broadcast %3 : vector<1x128xf32> to vector<8x128xf32>
    %5 = arith.addf %2, %4 : vector<8x128xf32>
    %6 = vector.extract_strided_slice %5 {offsets = [0, 0], sizes = [8, 64], strides = [1, 1]} : vector<8x128xf32> to vector<8x64xf32>
    %7 = vector.extract_strided_slice %5 {offsets = [0, 64], sizes = [8, 64], strides = [1, 1]} : vector<8x128xf32> to vector<8x64xf32>
    %8 = math.exp %7 : vector<8x64xf32>
    %c0_5 = arith.constant 0 : index
    %c0_6 = arith.constant 0 : index
    %9 = vector.load %arg6[%c0_5, %c0_6] : memref<8x64xf32, #tpu.memory_space<vmem>>, vector<8x64xf32>
    %10 = arith.mulf %8, %9 : vector<8x64xf32>
    %11 = arith.addf %6, %10 : vector<8x64xf32>
    %12 = arith.truncf %11 : vector<8x64xf32> to vector<8x64xbf16>
    %c0_7 = arith.constant 0 : index
    %c0_8 = arith.constant 0 : index
    %13 = vector.load %arg4[%c0_7, %c0_8] : memref<64x794xbf16, #tpu.memory_space<vmem>>, vector<64x794xbf16>
    %cst_9 = arith.constant dense<0.000000e+00> : vector<8x794xf32>
    %14 = tpu.matmul %12, %13, %cst_9 {dimension_numbers = #tpu.dot_dimension_numbers<[1], [0], [0], [1], [0, 0, 1, 1], [], []>} : vector<8x64xbf16>, vector<64x794xbf16>, vector<8x794xf32> -> vector<8x794xf32>
    %c0_10 = arith.constant 0 : index
    %c0_11 = arith.constant 0 : index
    %15 = vector.load %arg5[%c0_10, %c0_11] : memref<1x794xf32, #tpu.memory_space<vmem>>, vector<1x794xf32>
    %16 = vector.broadcast %15 : vector<1x794xf32> to vector<8x794xf32>
    %17 = arith.addf %14, %16 : vector<8x794xf32>
    %c0_12 = arith.constant 0 : index
    %c0_13 = arith.constant 0 : index
    %18 = vector.load %arg7[%c0_12, %c0_13] : memref<8x64xf32, #tpu.memory_space<vmem>>, vector<8x64xf32>
    tpu.vector_store %arg7[%c0_12, %c0_13], %11 {strides = array<i32>} : memref<8x64xf32, #tpu.memory_space<vmem>>, vector<8x64xf32>,
    %c0_14 = arith.constant 0 : index
    %c0_15 = arith.constant 0 : index
    %19 = vector.load %arg8[%c0_14, %c0_15] : memref<8x64xf32, #tpu.memory_space<vmem>>, vector<8x64xf32>
    tpu.vector_store %arg8[%c0_14, %c0_15], %6 {strides = array<i32>} : memref<8x64xf32, #tpu.memory_space<vmem>>, vector<8x64xf32>,
    %c0_16 = arith.constant 0 : index
    %c0_17 = arith.constant 0 : index
    %20 = vector.load %arg9[%c0_16, %c0_17] : memref<8x64xf32, #tpu.memory_space<vmem>>, vector<8x64xf32>
    tpu.vector_store %arg9[%c0_16, %c0_17], %8 {strides = array<i32>} : memref<8x64xf32, #tpu.memory_space<vmem>>, vector<8x64xf32>,
    %c0_18 = arith.constant 0 : index
    %c0_19 = arith.constant 0 : index
    %21 = vector.load %arg10[%c0_18, %c0_19] : memref<8x794xf32, #tpu.memory_space<vmem>>, vector<8x794xf32>
    tpu.vector_store %arg10[%c0_18, %c0_19], %17 {strides = array<i32>} : memref<8x794xf32, #tpu.memory_space<vmem>>, vector<8x794xf32>,
    return
  }
  func.func @transform_0(%arg0: i32) -> (i32, i32) {
    %c0_i32 = arith.constant 0 : i32
    %c0_i32_0 = arith.constant 0 : i32
    %c0_i32_1 = arith.constant 0 : i32
    return %c0_i32, %c0_i32_0 : i32, i32
  }
  func.func @transform_1(%arg0: i32) -> (i32, i32) {
    %c0_i32 = arith.constant 0 : i32
    %c0_i32_0 = arith.constant 0 : i32
    %c0_i32_1 = arith.constant 0 : i32
    return %c0_i32, %c0_i32_0 : i32, i32
  }
  func.func @transform_2(%arg0: i32) -> (i32, i32) {
    %c0_i32 = arith.constant 0 : i32
    %c0_i32_0 = arith.constant 0 : i32
    %c0_i32_1 = arith.constant 0 : i32
    return %c0_i32, %c0_i32_0 : i32, i32
  }
  func.func @transform_3(%arg0: i32) -> (i32, i32) {
    %c0_i32 = arith.constant 0 : i32
    %c0_i32_0 = arith.constant 0 : i32
    %c0_i32_1 = arith.constant 0 : i32
    return %c0_i32, %c0_i32_0 : i32, i32
  }
  func.func @transform_4(%arg0: i32) -> (i32, i32) {
    %c0_i32 = arith.constant 0 : i32
    %c0_i32_0 = arith.constant 0 : i32
    %c0_i32_1 = arith.constant 0 : i32
    return %c0_i32, %c0_i32_0 : i32, i32
  }
  func.func @transform_5(%arg0: i32) -> (i32, i32) {
    %c0_i32 = arith.constant 0 : i32
    %c0_i32_0 = arith.constant 0 : i32
    %c0_i32_1 = arith.constant 0 : i32
    return %c0_i32, %c0_i32_0 : i32, i32
  }
  func.func @transform_6(%arg0: i32) -> (i32, i32) {
    %c0_i32 = arith.constant 0 : i32
    %c0_i32_0 = arith.constant 0 : i32
    %c0_i32_1 = arith.constant 0 : i32
    return %c0_i32, %c0_i32_0 : i32, i32
  }
  func.func @transform_7(%arg0: i32) -> (i32, i32) {
    %c0_i32 = arith.constant 0 : i32
    %c0_i32_0 = arith.constant 0 : i32
    %c0_i32_1 = arith.constant 0 : i32
    return %c0_i32, %c0_i32_0 : i32, i32
  }
  func.func @transform_8(%arg0: i32) -> (i32, i32) {
    %c0_i32 = arith.constant 0 : i32
    %c0_i32_0 = arith.constant 0 : i32
    %c0_i32_1 = arith.constant 0 : i32
    return %c0_i32, %c0_i32_0 : i32, i32
  }
  func.func @transform_9(%arg0: i32) -> (i32, i32) {
    %c0_i32 = arith.constant 0 : i32
    %c0_i32_0 = arith.constant 0 : i32
    %c0_i32_1 = arith.constant 0 : i32
    return %c0_i32, %c0_i32_0 : i32, i32
  }
}

module attributes {stable_mosaic.version = 11 : i64} {
  func.func @_conv_bn_act_kernel(%arg0: i32, %arg1: memref<2x1x8x112xbf16, #tpu.memory_space<vmem>>, %arg2: memref<3x112x112xbf16, #tpu.memory_space<vmem>>, %arg3: memref<1x112xf32, #tpu.memory_space<vmem>>, %arg4: memref<112x8xf32, #tpu.memory_space<vmem>>, %arg5: memref<8x112xf32, #tpu.memory_space<vmem>>, %arg6: memref<2x8xf32, #tpu.memory_space<vmem>>, %arg7: memref<2x2x7x112xbf16, #tpu.memory_space<vmem>>, %arg8: memref<2x2x7x112xf32, #tpu.memory_space<vmem>>) attributes {dimension_semantics = [#tpu.dimension_semantics<arbitrary>], iteration_bounds = array<i64: 1>, scalar_prefetch = 0 : i64, scratch_operands = 1 : i64, tpu.core_type = #tpu.core_type<tc>, window_params = [{pipeline_mode = #tpu.pipeline_mode<synchronous>, transform_indices = @transform_0, window_bounds = array<i64: 2, 1, 8, 112>}, {pipeline_mode = #tpu.pipeline_mode<synchronous>, transform_indices = @transform_1, window_bounds = array<i64: 3, 112, 112>}, {pipeline_mode = #tpu.pipeline_mode<synchronous>, transform_indices = @transform_2, window_bounds = array<i64: 1, 112>}, {pipeline_mode = #tpu.pipeline_mode<synchronous>, transform_indices = @transform_3, window_bounds = array<i64: 112, 8>}, {pipeline_mode = #tpu.pipeline_mode<synchronous>, transform_indices = @transform_4, window_bounds = array<i64: 8, 112>}, {pipeline_mode = #tpu.pipeline_mode<synchronous>, transform_indices = @transform_5, window_bounds = array<i64: 2, 8>}, {pipeline_mode = #tpu.pipeline_mode<synchronous>, transform_indices = @transform_6, window_bounds = array<i64: 2, 2, 7, 112>}]} {
    %cst = arith.constant 0.000000e+00 : f32
    %0 = vector.broadcast %cst : f32 to vector<1x112xf32>
    %cst_0 = arith.constant 0.000000e+00 : f32
    %1 = vector.broadcast %cst_0 : f32 to vector<1x112xf32>
    %cst_1 = arith.constant 0.000000e+00 : f32
    %2 = vector.broadcast %cst_1 : f32 to vector<7x112xf32>
    %c0 = arith.constant 0 : index
    %c0_2 = arith.constant 0 : index
    %c0_3 = arith.constant 0 : index
    %c0_4 = arith.constant 0 : index
    %3 = vector.load %arg1[%c0, %c0_2, %c0_3, %c0_4] : memref<2x1x8x112xbf16, #tpu.memory_space<vmem>>, vector<1x1x7x112xbf16>
    %4 = vector.shape_cast %3 : vector<1x1x7x112xbf16> to vector<7x112xbf16>
    %c0_5 = arith.constant 0 : index
    %c0_6 = arith.constant 0 : index
    %c0_7 = arith.constant 0 : index
    %5 = vector.load %arg2[%c0_5, %c0_6, %c0_7] : memref<3x112x112xbf16, #tpu.memory_space<vmem>>, vector<1x112x112xbf16>
    %6 = vector.shape_cast %5 : vector<1x112x112xbf16> to vector<112x112xbf16>
    %cst_8 = arith.constant dense<0.000000e+00> : vector<7x112xf32>
    %7 = tpu.matmul %4, %6, %cst_8 {dimension_numbers = #tpu.dot_dimension_numbers<[1], [0], [0], [1], [0, 0, 1, 1], [], []>} : vector<7x112xbf16>, vector<112x112xbf16>, vector<7x112xf32> -> vector<7x112xf32>
    %8 = arith.addf %2, %7 : vector<7x112xf32>
    %c0_9 = arith.constant 0 : index
    %c0_10 = arith.constant 0 : index
    %9 = vector.load %arg3[%c0_9, %c0_10] : memref<1x112xf32, #tpu.memory_space<vmem>>, vector<1x112xf32>
    %10 = vector.broadcast %9 : vector<1x112xf32> to vector<7x112xf32>
    %11 = arith.addf %8, %10 : vector<7x112xf32>
    %c0_11 = arith.constant 0 : index
    %c0_12 = arith.constant 0 : index
    %c0_13 = arith.constant 0 : index
    %c0_14 = arith.constant 0 : index
    %12 = vector.load %arg8[%c0_11, %c0_12, %c0_13, %c0_14] : memref<2x2x7x112xf32, #tpu.memory_space<vmem>>, vector<1x1x7x112xf32>
    %13 = vector.shape_cast %12 : vector<1x1x7x112xf32> to vector<7x112xf32>
    %14 = vector.shape_cast %11 : vector<7x112xf32> to vector<1x1x7x112xf32>
    tpu.vector_store %arg8[%c0_11, %c0_12, %c0_13, %c0_14], %14 {strides = array<i32>} : memref<2x2x7x112xf32, #tpu.memory_space<vmem>>, vector<1x1x7x112xf32>,
    %cst_15 = arith.constant dense<0.000000e+00> : vector<112xf32>
    %15 = vector.multi_reduction <add>, %11, %cst_15 [0] : vector<7x112xf32> to vector<112xf32>
    %16 = vector.shape_cast %15 : vector<112xf32> to vector<1x112xf32>
    %17 = arith.addf %0, %16 : vector<1x112xf32>
    %18 = arith.mulf %11, %11 : vector<7x112xf32>
    %cst_16 = arith.constant dense<0.000000e+00> : vector<112xf32>
    %19 = vector.multi_reduction <add>, %18, %cst_16 [0] : vector<7x112xf32> to vector<112xf32>
    %20 = vector.shape_cast %19 : vector<112xf32> to vector<1x112xf32>
    %21 = arith.addf %1, %20 : vector<1x112xf32>
    %cst_17 = arith.constant 0.000000e+00 : f32
    %22 = vector.broadcast %cst_17 : f32 to vector<7x112xf32>
    %c0_18 = arith.constant 0 : index
    %c0_19 = arith.constant 0 : index
    %c1 = arith.constant 1 : index
    %c0_20 = arith.constant 0 : index
    %23 = vector.load %arg1[%c0_18, %c0_19, %c1, %c0_20] : memref<2x1x8x112xbf16, #tpu.memory_space<vmem>>, vector<1x1x7x112xbf16>
    %24 = vector.shape_cast %23 : vector<1x1x7x112xbf16> to vector<7x112xbf16>
    %c1_21 = arith.constant 1 : index
    %c0_22 = arith.constant 0 : index
    %c0_23 = arith.constant 0 : index
    %25 = vector.load %arg2[%c1_21, %c0_22, %c0_23] : memref<3x112x112xbf16, #tpu.memory_space<vmem>>, vector<1x112x112xbf16>
    %26 = vector.shape_cast %25 : vector<1x112x112xbf16> to vector<112x112xbf16>
    %cst_24 = arith.constant dense<0.000000e+00> : vector<7x112xf32>
    %27 = tpu.matmul %24, %26, %cst_24 {dimension_numbers = #tpu.dot_dimension_numbers<[1], [0], [0], [1], [0, 0, 1, 1], [], []>} : vector<7x112xbf16>, vector<112x112xbf16>, vector<7x112xf32> -> vector<7x112xf32>
    %28 = arith.addf %22, %27 : vector<7x112xf32>
    %c0_25 = arith.constant 0 : index
    %c0_26 = arith.constant 0 : index
    %c0_27 = arith.constant 0 : index
    %c0_28 = arith.constant 0 : index
    %29 = vector.load %arg1[%c0_25, %c0_26, %c0_27, %c0_28] : memref<2x1x8x112xbf16, #tpu.memory_space<vmem>>, vector<1x1x7x112xbf16>
    %30 = vector.shape_cast %29 : vector<1x1x7x112xbf16> to vector<7x112xbf16>
    %c2 = arith.constant 2 : index
    %c0_29 = arith.constant 0 : index
    %c0_30 = arith.constant 0 : index
    %31 = vector.load %arg2[%c2, %c0_29, %c0_30] : memref<3x112x112xbf16, #tpu.memory_space<vmem>>, vector<1x112x112xbf16>
    %32 = vector.shape_cast %31 : vector<1x112x112xbf16> to vector<112x112xbf16>
    %cst_31 = arith.constant dense<0.000000e+00> : vector<7x112xf32>
    %33 = tpu.matmul %30, %32, %cst_31 {dimension_numbers = #tpu.dot_dimension_numbers<[1], [0], [0], [1], [0, 0, 1, 1], [], []>} : vector<7x112xbf16>, vector<112x112xbf16>, vector<7x112xf32> -> vector<7x112xf32>
    %34 = arith.addf %28, %33 : vector<7x112xf32>
    %c0_32 = arith.constant 0 : index
    %c0_33 = arith.constant 0 : index
    %35 = vector.load %arg3[%c0_32, %c0_33] : memref<1x112xf32, #tpu.memory_space<vmem>>, vector<1x112xf32>
    %36 = vector.broadcast %35 : vector<1x112xf32> to vector<7x112xf32>
    %37 = arith.addf %34, %36 : vector<7x112xf32>
    %c0_34 = arith.constant 0 : index
    %c1_35 = arith.constant 1 : index
    %c0_36 = arith.constant 0 : index
    %c0_37 = arith.constant 0 : index
    %38 = vector.load %arg8[%c0_34, %c1_35, %c0_36, %c0_37] : memref<2x2x7x112xf32, #tpu.memory_space<vmem>>, vector<1x1x7x112xf32>
    %39 = vector.shape_cast %38 : vector<1x1x7x112xf32> to vector<7x112xf32>
    %40 = vector.shape_cast %37 : vector<7x112xf32> to vector<1x1x7x112xf32>
    tpu.vector_store %arg8[%c0_34, %c1_35, %c0_36, %c0_37], %40 {strides = array<i32>} : memref<2x2x7x112xf32, #tpu.memory_space<vmem>>, vector<1x1x7x112xf32>,
    %cst_38 = arith.constant dense<0.000000e+00> : vector<112xf32>
    %41 = vector.multi_reduction <add>, %37, %cst_38 [0] : vector<7x112xf32> to vector<112xf32>
    %42 = vector.shape_cast %41 : vector<112xf32> to vector<1x112xf32>
    %43 = arith.addf %17, %42 : vector<1x112xf32>
    %44 = arith.mulf %37, %37 : vector<7x112xf32>
    %cst_39 = arith.constant dense<0.000000e+00> : vector<112xf32>
    %45 = vector.multi_reduction <add>, %44, %cst_39 [0] : vector<7x112xf32> to vector<112xf32>
    %46 = vector.shape_cast %45 : vector<112xf32> to vector<1x112xf32>
    %47 = arith.addf %21, %46 : vector<1x112xf32>
    %cst_40 = arith.constant 0.000000e+00 : f32
    %48 = vector.broadcast %cst_40 : f32 to vector<7x112xf32>
    %c1_41 = arith.constant 1 : index
    %c0_42 = arith.constant 0 : index
    %c0_43 = arith.constant 0 : index
    %c0_44 = arith.constant 0 : index
    %49 = vector.load %arg1[%c1_41, %c0_42, %c0_43, %c0_44] : memref<2x1x8x112xbf16, #tpu.memory_space<vmem>>, vector<1x1x7x112xbf16>
    %50 = vector.shape_cast %49 : vector<1x1x7x112xbf16> to vector<7x112xbf16>
    %c0_45 = arith.constant 0 : index
    %c0_46 = arith.constant 0 : index
    %c0_47 = arith.constant 0 : index
    %51 = vector.load %arg2[%c0_45, %c0_46, %c0_47] : memref<3x112x112xbf16, #tpu.memory_space<vmem>>, vector<1x112x112xbf16>
    %52 = vector.shape_cast %51 : vector<1x112x112xbf16> to vector<112x112xbf16>
    %cst_48 = arith.constant dense<0.000000e+00> : vector<7x112xf32>
    %53 = tpu.matmul %50, %52, %cst_48 {dimension_numbers = #tpu.dot_dimension_numbers<[1], [0], [0], [1], [0, 0, 1, 1], [], []>} : vector<7x112xbf16>, vector<112x112xbf16>, vector<7x112xf32> -> vector<7x112xf32>
    %54 = arith.addf %48, %53 : vector<7x112xf32>
    %c0_49 = arith.constant 0 : index
    %c0_50 = arith.constant 0 : index
    %55 = vector.load %arg3[%c0_49, %c0_50] : memref<1x112xf32, #tpu.memory_space<vmem>>, vector<1x112xf32>
    %56 = vector.broadcast %55 : vector<1x112xf32> to vector<7x112xf32>
    %57 = arith.addf %54, %56 : vector<7x112xf32>
    %c1_51 = arith.constant 1 : index
    %c0_52 = arith.constant 0 : index
    %c0_53 = arith.constant 0 : index
    %c0_54 = arith.constant 0 : index
    %58 = vector.load %arg8[%c1_51, %c0_52, %c0_53, %c0_54] : memref<2x2x7x112xf32, #tpu.memory_space<vmem>>, vector<1x1x7x112xf32>
    %59 = vector.shape_cast %58 : vector<1x1x7x112xf32> to vector<7x112xf32>
    %60 = vector.shape_cast %57 : vector<7x112xf32> to vector<1x1x7x112xf32>
    tpu.vector_store %arg8[%c1_51, %c0_52, %c0_53, %c0_54], %60 {strides = array<i32>} : memref<2x2x7x112xf32, #tpu.memory_space<vmem>>, vector<1x1x7x112xf32>,
    %cst_55 = arith.constant dense<0.000000e+00> : vector<112xf32>
    %61 = vector.multi_reduction <add>, %57, %cst_55 [0] : vector<7x112xf32> to vector<112xf32>
    %62 = vector.shape_cast %61 : vector<112xf32> to vector<1x112xf32>
    %63 = arith.addf %43, %62 : vector<1x112xf32>
    %64 = arith.mulf %57, %57 : vector<7x112xf32>
    %cst_56 = arith.constant dense<0.000000e+00> : vector<112xf32>
    %65 = vector.multi_reduction <add>, %64, %cst_56 [0] : vector<7x112xf32> to vector<112xf32>
    %66 = vector.shape_cast %65 : vector<112xf32> to vector<1x112xf32>
    %67 = arith.addf %47, %66 : vector<1x112xf32>
    %cst_57 = arith.constant 0.000000e+00 : f32
    %68 = vector.broadcast %cst_57 : f32 to vector<7x112xf32>
    %c1_58 = arith.constant 1 : index
    %c0_59 = arith.constant 0 : index
    %c1_60 = arith.constant 1 : index
    %c0_61 = arith.constant 0 : index
    %69 = vector.load %arg1[%c1_58, %c0_59, %c1_60, %c0_61] : memref<2x1x8x112xbf16, #tpu.memory_space<vmem>>, vector<1x1x7x112xbf16>
    %70 = vector.shape_cast %69 : vector<1x1x7x112xbf16> to vector<7x112xbf16>
    %c1_62 = arith.constant 1 : index
    %c0_63 = arith.constant 0 : index
    %c0_64 = arith.constant 0 : index
    %71 = vector.load %arg2[%c1_62, %c0_63, %c0_64] : memref<3x112x112xbf16, #tpu.memory_space<vmem>>, vector<1x112x112xbf16>
    %72 = vector.shape_cast %71 : vector<1x112x112xbf16> to vector<112x112xbf16>
    %cst_65 = arith.constant dense<0.000000e+00> : vector<7x112xf32>
    %73 = tpu.matmul %70, %72, %cst_65 {dimension_numbers = #tpu.dot_dimension_numbers<[1], [0], [0], [1], [0, 0, 1, 1], [], []>} : vector<7x112xbf16>, vector<112x112xbf16>, vector<7x112xf32> -> vector<7x112xf32>
    %74 = arith.addf %68, %73 : vector<7x112xf32>
    %c1_66 = arith.constant 1 : index
    %c0_67 = arith.constant 0 : index
    %c0_68 = arith.constant 0 : index
    %c0_69 = arith.constant 0 : index
    %75 = vector.load %arg1[%c1_66, %c0_67, %c0_68, %c0_69] : memref<2x1x8x112xbf16, #tpu.memory_space<vmem>>, vector<1x1x7x112xbf16>
    %76 = vector.shape_cast %75 : vector<1x1x7x112xbf16> to vector<7x112xbf16>
    %c2_70 = arith.constant 2 : index
    %c0_71 = arith.constant 0 : index
    %c0_72 = arith.constant 0 : index
    %77 = vector.load %arg2[%c2_70, %c0_71, %c0_72] : memref<3x112x112xbf16, #tpu.memory_space<vmem>>, vector<1x112x112xbf16>
    %78 = vector.shape_cast %77 : vector<1x112x112xbf16> to vector<112x112xbf16>
    %cst_73 = arith.constant dense<0.000000e+00> : vector<7x112xf32>
    %79 = tpu.matmul %76, %78, %cst_73 {dimension_numbers = #tpu.dot_dimension_numbers<[1], [0], [0], [1], [0, 0, 1, 1], [], []>} : vector<7x112xbf16>, vector<112x112xbf16>, vector<7x112xf32> -> vector<7x112xf32>
    %80 = arith.addf %74, %79 : vector<7x112xf32>
    %c0_74 = arith.constant 0 : index
    %c0_75 = arith.constant 0 : index
    %81 = vector.load %arg3[%c0_74, %c0_75] : memref<1x112xf32, #tpu.memory_space<vmem>>, vector<1x112xf32>
    %82 = vector.broadcast %81 : vector<1x112xf32> to vector<7x112xf32>
    %83 = arith.addf %80, %82 : vector<7x112xf32>
    %c1_76 = arith.constant 1 : index
    %c1_77 = arith.constant 1 : index
    %c0_78 = arith.constant 0 : index
    %c0_79 = arith.constant 0 : index
    %84 = vector.load %arg8[%c1_76, %c1_77, %c0_78, %c0_79] : memref<2x2x7x112xf32, #tpu.memory_space<vmem>>, vector<1x1x7x112xf32>
    %85 = vector.shape_cast %84 : vector<1x1x7x112xf32> to vector<7x112xf32>
    %86 = vector.shape_cast %83 : vector<7x112xf32> to vector<1x1x7x112xf32>
    tpu.vector_store %arg8[%c1_76, %c1_77, %c0_78, %c0_79], %86 {strides = array<i32>} : memref<2x2x7x112xf32, #tpu.memory_space<vmem>>, vector<1x1x7x112xf32>,
    %cst_80 = arith.constant dense<0.000000e+00> : vector<112xf32>
    %87 = vector.multi_reduction <add>, %83, %cst_80 [0] : vector<7x112xf32> to vector<112xf32>
    %88 = vector.shape_cast %87 : vector<112xf32> to vector<1x112xf32>
    %89 = arith.addf %63, %88 : vector<1x112xf32>
    %90 = arith.mulf %83, %83 : vector<7x112xf32>
    %cst_81 = arith.constant dense<0.000000e+00> : vector<112xf32>
    %91 = vector.multi_reduction <add>, %90, %cst_81 [0] : vector<7x112xf32> to vector<112xf32>
    %92 = vector.shape_cast %91 : vector<112xf32> to vector<1x112xf32>
    %93 = arith.addf %67, %92 : vector<1x112xf32>
    %c0_82 = arith.constant 0 : index
    %c0_83 = arith.constant 0 : index
    %94 = vector.load %arg4[%c0_82, %c0_83] : memref<112x8xf32, #tpu.memory_space<vmem>>, vector<112x8xf32>
    %cst_84 = arith.constant dense<0.000000e+00> : vector<1x8xf32>
    %95 = tpu.matmul %89, %94, %cst_84 {dimension_numbers = #tpu.dot_dimension_numbers<[1], [0], [0], [1], [0, 0, 1, 1], [], []>} : vector<1x112xf32>, vector<112x8xf32>, vector<1x8xf32> -> vector<1x8xf32>
    %c0_85 = arith.constant 0 : index
    %c0_86 = arith.constant 0 : index
    %96 = vector.load %arg4[%c0_85, %c0_86] : memref<112x8xf32, #tpu.memory_space<vmem>>, vector<112x8xf32>
    %cst_87 = arith.constant dense<0.000000e+00> : vector<1x8xf32>
    %97 = tpu.matmul %93, %96, %cst_87 {dimension_numbers = #tpu.dot_dimension_numbers<[1], [0], [0], [1], [0, 0, 1, 1], [], []>} : vector<1x112xf32>, vector<112x8xf32>, vector<1x8xf32> -> vector<1x8xf32>
    %cst_88 = arith.constant 0.00255102036 : f32
    %98 = vector.broadcast %cst_88 : f32 to vector<1x8xf32>
    %99 = arith.mulf %95, %98 : vector<1x8xf32>
    %cst_89 = arith.constant 0.00255102036 : f32
    %100 = vector.broadcast %cst_89 : f32 to vector<1x8xf32>
    %101 = arith.mulf %97, %100 : vector<1x8xf32>
    %102 = arith.mulf %99, %99 : vector<1x8xf32>
    %103 = arith.subf %101, %102 : vector<1x8xf32>
    %cst_90 = arith.constant 0.000000e+00 : f32
    %104 = vector.broadcast %cst_90 : f32 to vector<1x8xf32>
    %105 = arith.maximumf %103, %104 : vector<1x8xf32>
    %c0_91 = arith.constant 0 : index
    %c0_92 = arith.constant 0 : index
    %106 = vector.load %arg6[%c0_91, %c0_92] : memref<2x8xf32, #tpu.memory_space<vmem>>, vector<1x8xf32>
    %c1_93 = arith.constant 1 : index
    %c0_94 = arith.constant 0 : index
    %107 = vector.load %arg6[%c1_93, %c0_94] : memref<2x8xf32, #tpu.memory_space<vmem>>, vector<1x8xf32>
    %cst_95 = arith.constant 9.99999974E-6 : f32
    %108 = vector.broadcast %cst_95 : f32 to vector<1x8xf32>
    %109 = arith.addf %105, %108 : vector<1x8xf32>
    %110 = math.rsqrt %109 : vector<1x8xf32>
    %111 = arith.mulf %106, %110 : vector<1x8xf32>
    %112 = arith.mulf %99, %111 : vector<1x8xf32>
    %113 = arith.subf %107, %112 : vector<1x8xf32>
    %c0_96 = arith.constant 0 : index
    %c0_97 = arith.constant 0 : index
    %114 = vector.load %arg5[%c0_96, %c0_97] : memref<8x112xf32, #tpu.memory_space<vmem>>, vector<8x112xf32>
    %cst_98 = arith.constant dense<0.000000e+00> : vector<1x112xf32>
    %115 = tpu.matmul %111, %114, %cst_98 {dimension_numbers = #tpu.dot_dimension_numbers<[1], [0], [0], [1], [0, 0, 1, 1], [], []>} : vector<1x8xf32>, vector<8x112xf32>, vector<1x112xf32> -> vector<1x112xf32>
    %c0_99 = arith.constant 0 : index
    %c0_100 = arith.constant 0 : index
    %116 = vector.load %arg5[%c0_99, %c0_100] : memref<8x112xf32, #tpu.memory_space<vmem>>, vector<8x112xf32>
    %cst_101 = arith.constant dense<0.000000e+00> : vector<1x112xf32>
    %117 = tpu.matmul %113, %116, %cst_101 {dimension_numbers = #tpu.dot_dimension_numbers<[1], [0], [0], [1], [0, 0, 1, 1], [], []>} : vector<1x8xf32>, vector<8x112xf32>, vector<1x112xf32> -> vector<1x112xf32>
    %c0_102 = arith.constant 0 : index
    %c0_103 = arith.constant 0 : index
    %c0_104 = arith.constant 0 : index
    %c0_105 = arith.constant 0 : index
    %118 = vector.load %arg8[%c0_102, %c0_103, %c0_104, %c0_105] : memref<2x2x7x112xf32, #tpu.memory_space<vmem>>, vector<1x1x7x112xf32>
    %119 = vector.shape_cast %118 : vector<1x1x7x112xf32> to vector<7x112xf32>
    %120 = vector.broadcast %115 : vector<1x112xf32> to vector<7x112xf32>
    %121 = arith.mulf %119, %120 : vector<7x112xf32>
    %122 = vector.broadcast %117 : vector<1x112xf32> to vector<7x112xf32>
    %123 = arith.addf %121, %122 : vector<7x112xf32>
    %cst_106 = arith.constant 0.000000e+00 : f32
    %124 = vector.broadcast %cst_106 : f32 to vector<7x112xf32>
    %125 = arith.cmpf oge, %123, %124 : vector<7x112xf32>
    %cst_107 = arith.constant 0.00999999977 : f32
    %126 = vector.broadcast %cst_107 : f32 to vector<7x112xf32>
    %127 = arith.mulf %126, %123 : vector<7x112xf32>
    %128 = arith.select %125, %123, %127 : vector<7x112xi1>, vector<7x112xf32>
    %129 = arith.truncf %128 : vector<7x112xf32> to vector<7x112xbf16>
    %c0_108 = arith.constant 0 : index
    %c0_109 = arith.constant 0 : index
    %c0_110 = arith.constant 0 : index
    %c0_111 = arith.constant 0 : index
    %130 = vector.load %arg7[%c0_108, %c0_109, %c0_110, %c0_111] : memref<2x2x7x112xbf16, #tpu.memory_space<vmem>>, vector<1x1x7x112xbf16>
    %131 = vector.shape_cast %130 : vector<1x1x7x112xbf16> to vector<7x112xbf16>
    %132 = vector.shape_cast %129 : vector<7x112xbf16> to vector<1x1x7x112xbf16>
    tpu.vector_store %arg7[%c0_108, %c0_109, %c0_110, %c0_111], %132 {strides = array<i32>} : memref<2x2x7x112xbf16, #tpu.memory_space<vmem>>, vector<1x1x7x112xbf16>,
    %c0_112 = arith.constant 0 : index
    %c1_113 = arith.constant 1 : index
    %c0_114 = arith.constant 0 : index
    %c0_115 = arith.constant 0 : index
    %133 = vector.load %arg8[%c0_112, %c1_113, %c0_114, %c0_115] : memref<2x2x7x112xf32, #tpu.memory_space<vmem>>, vector<1x1x7x112xf32>
    %134 = vector.shape_cast %133 : vector<1x1x7x112xf32> to vector<7x112xf32>
    %135 = vector.broadcast %115 : vector<1x112xf32> to vector<7x112xf32>
    %136 = arith.mulf %134, %135 : vector<7x112xf32>
    %137 = vector.broadcast %117 : vector<1x112xf32> to vector<7x112xf32>
    %138 = arith.addf %136, %137 : vector<7x112xf32>
    %cst_116 = arith.constant 0.000000e+00 : f32
    %139 = vector.broadcast %cst_116 : f32 to vector<7x112xf32>
    %140 = arith.cmpf oge, %138, %139 : vector<7x112xf32>
    %cst_117 = arith.constant 0.00999999977 : f32
    %141 = vector.broadcast %cst_117 : f32 to vector<7x112xf32>
    %142 = arith.mulf %141, %138 : vector<7x112xf32>
    %143 = arith.select %140, %138, %142 : vector<7x112xi1>, vector<7x112xf32>
    %144 = arith.truncf %143 : vector<7x112xf32> to vector<7x112xbf16>
    %c0_118 = arith.constant 0 : index
    %c1_119 = arith.constant 1 : index
    %c0_120 = arith.constant 0 : index
    %c0_121 = arith.constant 0 : index
    %145 = vector.load %arg7[%c0_118, %c1_119, %c0_120, %c0_121] : memref<2x2x7x112xbf16, #tpu.memory_space<vmem>>, vector<1x1x7x112xbf16>
    %146 = vector.shape_cast %145 : vector<1x1x7x112xbf16> to vector<7x112xbf16>
    %147 = vector.shape_cast %144 : vector<7x112xbf16> to vector<1x1x7x112xbf16>
    tpu.vector_store %arg7[%c0_118, %c1_119, %c0_120, %c0_121], %147 {strides = array<i32>} : memref<2x2x7x112xbf16, #tpu.memory_space<vmem>>, vector<1x1x7x112xbf16>,
    %c1_122 = arith.constant 1 : index
    %c0_123 = arith.constant 0 : index
    %c0_124 = arith.constant 0 : index
    %c0_125 = arith.constant 0 : index
    %148 = vector.load %arg8[%c1_122, %c0_123, %c0_124, %c0_125] : memref<2x2x7x112xf32, #tpu.memory_space<vmem>>, vector<1x1x7x112xf32>
    %149 = vector.shape_cast %148 : vector<1x1x7x112xf32> to vector<7x112xf32>
    %150 = vector.broadcast %115 : vector<1x112xf32> to vector<7x112xf32>
    %151 = arith.mulf %149, %150 : vector<7x112xf32>
    %152 = vector.broadcast %117 : vector<1x112xf32> to vector<7x112xf32>
    %153 = arith.addf %151, %152 : vector<7x112xf32>
    %cst_126 = arith.constant 0.000000e+00 : f32
    %154 = vector.broadcast %cst_126 : f32 to vector<7x112xf32>
    %155 = arith.cmpf oge, %153, %154 : vector<7x112xf32>
    %cst_127 = arith.constant 0.00999999977 : f32
    %156 = vector.broadcast %cst_127 : f32 to vector<7x112xf32>
    %157 = arith.mulf %156, %153 : vector<7x112xf32>
    %158 = arith.select %155, %153, %157 : vector<7x112xi1>, vector<7x112xf32>
    %159 = arith.truncf %158 : vector<7x112xf32> to vector<7x112xbf16>
    %c1_128 = arith.constant 1 : index
    %c0_129 = arith.constant 0 : index
    %c0_130 = arith.constant 0 : index
    %c0_131 = arith.constant 0 : index
    %160 = vector.load %arg7[%c1_128, %c0_129, %c0_130, %c0_131] : memref<2x2x7x112xbf16, #tpu.memory_space<vmem>>, vector<1x1x7x112xbf16>
    %161 = vector.shape_cast %160 : vector<1x1x7x112xbf16> to vector<7x112xbf16>
    %162 = vector.shape_cast %159 : vector<7x112xbf16> to vector<1x1x7x112xbf16>
    tpu.vector_store %arg7[%c1_128, %c0_129, %c0_130, %c0_131], %162 {strides = array<i32>} : memref<2x2x7x112xbf16, #tpu.memory_space<vmem>>, vector<1x1x7x112xbf16>,
    %c1_132 = arith.constant 1 : index
    %c1_133 = arith.constant 1 : index
    %c0_134 = arith.constant 0 : index
    %c0_135 = arith.constant 0 : index
    %163 = vector.load %arg8[%c1_132, %c1_133, %c0_134, %c0_135] : memref<2x2x7x112xf32, #tpu.memory_space<vmem>>, vector<1x1x7x112xf32>
    %164 = vector.shape_cast %163 : vector<1x1x7x112xf32> to vector<7x112xf32>
    %165 = vector.broadcast %115 : vector<1x112xf32> to vector<7x112xf32>
    %166 = arith.mulf %164, %165 : vector<7x112xf32>
    %167 = vector.broadcast %117 : vector<1x112xf32> to vector<7x112xf32>
    %168 = arith.addf %166, %167 : vector<7x112xf32>
    %cst_136 = arith.constant 0.000000e+00 : f32
    %169 = vector.broadcast %cst_136 : f32 to vector<7x112xf32>
    %170 = arith.cmpf oge, %168, %169 : vector<7x112xf32>
    %cst_137 = arith.constant 0.00999999977 : f32
    %171 = vector.broadcast %cst_137 : f32 to vector<7x112xf32>
    %172 = arith.mulf %171, %168 : vector<7x112xf32>
    %173 = arith.select %170, %168, %172 : vector<7x112xi1>, vector<7x112xf32>
    %174 = arith.truncf %173 : vector<7x112xf32> to vector<7x112xbf16>
    %c1_138 = arith.constant 1 : index
    %c1_139 = arith.constant 1 : index
    %c0_140 = arith.constant 0 : index
    %c0_141 = arith.constant 0 : index
    %175 = vector.load %arg7[%c1_138, %c1_139, %c0_140, %c0_141] : memref<2x2x7x112xbf16, #tpu.memory_space<vmem>>, vector<1x1x7x112xbf16>
    %176 = vector.shape_cast %175 : vector<1x1x7x112xbf16> to vector<7x112xbf16>
    %177 = vector.shape_cast %174 : vector<7x112xbf16> to vector<1x1x7x112xbf16>
    tpu.vector_store %arg7[%c1_138, %c1_139, %c0_140, %c0_141], %177 {strides = array<i32>} : memref<2x2x7x112xbf16, #tpu.memory_space<vmem>>, vector<1x1x7x112xbf16>,
    return
  }
  func.func @transform_0(%arg0: i32) -> (i32, i32, i32, i32) {
    %c0_i32 = arith.constant 0 : i32
    %c0_i32_0 = arith.constant 0 : i32
    %c0_i32_1 = arith.constant 0 : i32
    %c0_i32_2 = arith.constant 0 : i32
    %c0_i32_3 = arith.constant 0 : i32
    return %c0_i32, %c0_i32_0, %c0_i32_1, %c0_i32_2 : i32, i32, i32, i32
  }
  func.func @transform_1(%arg0: i32) -> (i32, i32, i32) {
    %c0_i32 = arith.constant 0 : i32
    %c0_i32_0 = arith.constant 0 : i32
    %c0_i32_1 = arith.constant 0 : i32
    %c0_i32_2 = arith.constant 0 : i32
    return %c0_i32, %c0_i32_0, %c0_i32_1 : i32, i32, i32
  }
  func.func @transform_2(%arg0: i32) -> (i32, i32) {
    %c0_i32 = arith.constant 0 : i32
    %c0_i32_0 = arith.constant 0 : i32
    %c0_i32_1 = arith.constant 0 : i32
    return %c0_i32, %c0_i32_0 : i32, i32
  }
  func.func @transform_3(%arg0: i32) -> (i32, i32) {
    %c0_i32 = arith.constant 0 : i32
    %c0_i32_0 = arith.constant 0 : i32
    %c0_i32_1 = arith.constant 0 : i32
    return %c0_i32, %c0_i32_0 : i32, i32
  }
  func.func @transform_4(%arg0: i32) -> (i32, i32) {
    %c0_i32 = arith.constant 0 : i32
    %c0_i32_0 = arith.constant 0 : i32
    %c0_i32_1 = arith.constant 0 : i32
    return %c0_i32, %c0_i32_0 : i32, i32
  }
  func.func @transform_5(%arg0: i32) -> (i32, i32) {
    %c0_i32 = arith.constant 0 : i32
    %c0_i32_0 = arith.constant 0 : i32
    %c0_i32_1 = arith.constant 0 : i32
    return %c0_i32, %c0_i32_0 : i32, i32
  }
  func.func @transform_6(%arg0: i32) -> (i32, i32, i32, i32) {
    %c0_i32 = arith.constant 0 : i32
    %c0_i32_0 = arith.constant 0 : i32
    %c0_i32_1 = arith.constant 0 : i32
    %c0_i32_2 = arith.constant 0 : i32
    %c0_i32_3 = arith.constant 0 : i32
    return %c0_i32, %c0_i32_0, %c0_i32_1, %c0_i32_2 : i32, i32, i32, i32
  }
}

module attributes {stable_mosaic.version = 11 : i64} {
  func.func @_conv_bn_act_kernel(%arg0: i32, %arg1: memref<2x1x15x112xbf16, #tpu.memory_space<vmem>>, %arg2: memref<3x112x28xbf16, #tpu.memory_space<vmem>>, %arg3: memref<1x28xf32, #tpu.memory_space<vmem>>, %arg4: memref<28x1xf32, #tpu.memory_space<vmem>>, %arg5: memref<1x28xf32, #tpu.memory_space<vmem>>, %arg6: memref<2x1xf32, #tpu.memory_space<vmem>>, %arg7: memref<2x2x14x28xf32, #tpu.memory_space<vmem>>, %arg8: memref<2x2x14x28xf32, #tpu.memory_space<vmem>>) attributes {dimension_semantics = [#tpu.dimension_semantics<arbitrary>], iteration_bounds = array<i64: 1>, scalar_prefetch = 0 : i64, scratch_operands = 1 : i64, tpu.core_type = #tpu.core_type<tc>, window_params = [{pipeline_mode = #tpu.pipeline_mode<synchronous>, transform_indices = @transform_0, window_bounds = array<i64: 2, 1, 15, 112>}, {pipeline_mode = #tpu.pipeline_mode<synchronous>, transform_indices = @transform_1, window_bounds = array<i64: 3, 112, 28>}, {pipeline_mode = #tpu.pipeline_mode<synchronous>, transform_indices = @transform_2, window_bounds = array<i64: 1, 28>}, {pipeline_mode = #tpu.pipeline_mode<synchronous>, transform_indices = @transform_3, window_bounds = array<i64: 28, 1>}, {pipeline_mode = #tpu.pipeline_mode<synchronous>, transform_indices = @transform_4, window_bounds = array<i64: 1, 28>}, {pipeline_mode = #tpu.pipeline_mode<synchronous>, transform_indices = @transform_5, window_bounds = array<i64: 2, 1>}, {pipeline_mode = #tpu.pipeline_mode<synchronous>, transform_indices = @transform_6, window_bounds = array<i64: 2, 2, 14, 28>}]} {
    %cst = arith.constant 0.000000e+00 : f32
    %0 = vector.broadcast %cst : f32 to vector<1x28xf32>
    %cst_0 = arith.constant 0.000000e+00 : f32
    %1 = vector.broadcast %cst_0 : f32 to vector<1x28xf32>
    %cst_1 = arith.constant 0.000000e+00 : f32
    %2 = vector.broadcast %cst_1 : f32 to vector<14x28xf32>
    %c0 = arith.constant 0 : index
    %c0_2 = arith.constant 0 : index
    %c0_3 = arith.constant 0 : index
    %c0_4 = arith.constant 0 : index
    %3 = vector.load %arg1[%c0, %c0_2, %c0_3, %c0_4] : memref<2x1x15x112xbf16, #tpu.memory_space<vmem>>, vector<1x1x14x112xbf16>
    %4 = vector.shape_cast %3 : vector<1x1x14x112xbf16> to vector<14x112xbf16>
    %c0_5 = arith.constant 0 : index
    %c0_6 = arith.constant 0 : index
    %c0_7 = arith.constant 0 : index
    %5 = vector.load %arg2[%c0_5, %c0_6, %c0_7] : memref<3x112x28xbf16, #tpu.memory_space<vmem>>, vector<1x112x28xbf16>
    %6 = vector.shape_cast %5 : vector<1x112x28xbf16> to vector<112x28xbf16>
    %cst_8 = arith.constant dense<0.000000e+00> : vector<14x28xf32>
    %7 = tpu.matmul %4, %6, %cst_8 {dimension_numbers = #tpu.dot_dimension_numbers<[1], [0], [0], [1], [0, 0, 1, 1], [], []>} : vector<14x112xbf16>, vector<112x28xbf16>, vector<14x28xf32> -> vector<14x28xf32>
    %8 = arith.addf %2, %7 : vector<14x28xf32>
    %c0_9 = arith.constant 0 : index
    %c0_10 = arith.constant 0 : index
    %9 = vector.load %arg3[%c0_9, %c0_10] : memref<1x28xf32, #tpu.memory_space<vmem>>, vector<1x28xf32>
    %10 = vector.broadcast %9 : vector<1x28xf32> to vector<14x28xf32>
    %11 = arith.addf %8, %10 : vector<14x28xf32>
    %c0_11 = arith.constant 0 : index
    %c0_12 = arith.constant 0 : index
    %c0_13 = arith.constant 0 : index
    %c0_14 = arith.constant 0 : index
    %12 = vector.load %arg8[%c0_11, %c0_12, %c0_13, %c0_14] : memref<2x2x14x28xf32, #tpu.memory_space<vmem>>, vector<1x1x14x28xf32>
    %13 = vector.shape_cast %12 : vector<1x1x14x28xf32> to vector<14x28xf32>
    %14 = vector.shape_cast %11 : vector<14x28xf32> to vector<1x1x14x28xf32>
    tpu.vector_store %arg8[%c0_11, %c0_12, %c0_13, %c0_14], %14 {strides = array<i32>} : memref<2x2x14x28xf32, #tpu.memory_space<vmem>>, vector<1x1x14x28xf32>,
    %cst_15 = arith.constant dense<0.000000e+00> : vector<28xf32>
    %15 = vector.multi_reduction <add>, %11, %cst_15 [0] : vector<14x28xf32> to vector<28xf32>
    %16 = vector.shape_cast %15 : vector<28xf32> to vector<1x28xf32>
    %17 = arith.addf %0, %16 : vector<1x28xf32>
    %18 = arith.mulf %11, %11 : vector<14x28xf32>
    %cst_16 = arith.constant dense<0.000000e+00> : vector<28xf32>
    %19 = vector.multi_reduction <add>, %18, %cst_16 [0] : vector<14x28xf32> to vector<28xf32>
    %20 = vector.shape_cast %19 : vector<28xf32> to vector<1x28xf32>
    %21 = arith.addf %1, %20 : vector<1x28xf32>
    %cst_17 = arith.constant 0.000000e+00 : f32
    %22 = vector.broadcast %cst_17 : f32 to vector<14x28xf32>
    %c0_18 = arith.constant 0 : index
    %c0_19 = arith.constant 0 : index
    %c1 = arith.constant 1 : index
    %c0_20 = arith.constant 0 : index
    %23 = vector.load %arg1[%c0_18, %c0_19, %c1, %c0_20] : memref<2x1x15x112xbf16, #tpu.memory_space<vmem>>, vector<1x1x14x112xbf16>
    %24 = vector.shape_cast %23 : vector<1x1x14x112xbf16> to vector<14x112xbf16>
    %c1_21 = arith.constant 1 : index
    %c0_22 = arith.constant 0 : index
    %c0_23 = arith.constant 0 : index
    %25 = vector.load %arg2[%c1_21, %c0_22, %c0_23] : memref<3x112x28xbf16, #tpu.memory_space<vmem>>, vector<1x112x28xbf16>
    %26 = vector.shape_cast %25 : vector<1x112x28xbf16> to vector<112x28xbf16>
    %cst_24 = arith.constant dense<0.000000e+00> : vector<14x28xf32>
    %27 = tpu.matmul %24, %26, %cst_24 {dimension_numbers = #tpu.dot_dimension_numbers<[1], [0], [0], [1], [0, 0, 1, 1], [], []>} : vector<14x112xbf16>, vector<112x28xbf16>, vector<14x28xf32> -> vector<14x28xf32>
    %28 = arith.addf %22, %27 : vector<14x28xf32>
    %c0_25 = arith.constant 0 : index
    %c0_26 = arith.constant 0 : index
    %c0_27 = arith.constant 0 : index
    %c0_28 = arith.constant 0 : index
    %29 = vector.load %arg1[%c0_25, %c0_26, %c0_27, %c0_28] : memref<2x1x15x112xbf16, #tpu.memory_space<vmem>>, vector<1x1x14x112xbf16>
    %30 = vector.shape_cast %29 : vector<1x1x14x112xbf16> to vector<14x112xbf16>
    %c2 = arith.constant 2 : index
    %c0_29 = arith.constant 0 : index
    %c0_30 = arith.constant 0 : index
    %31 = vector.load %arg2[%c2, %c0_29, %c0_30] : memref<3x112x28xbf16, #tpu.memory_space<vmem>>, vector<1x112x28xbf16>
    %32 = vector.shape_cast %31 : vector<1x112x28xbf16> to vector<112x28xbf16>
    %cst_31 = arith.constant dense<0.000000e+00> : vector<14x28xf32>
    %33 = tpu.matmul %30, %32, %cst_31 {dimension_numbers = #tpu.dot_dimension_numbers<[1], [0], [0], [1], [0, 0, 1, 1], [], []>} : vector<14x112xbf16>, vector<112x28xbf16>, vector<14x28xf32> -> vector<14x28xf32>
    %34 = arith.addf %28, %33 : vector<14x28xf32>
    %c0_32 = arith.constant 0 : index
    %c0_33 = arith.constant 0 : index
    %35 = vector.load %arg3[%c0_32, %c0_33] : memref<1x28xf32, #tpu.memory_space<vmem>>, vector<1x28xf32>
    %36 = vector.broadcast %35 : vector<1x28xf32> to vector<14x28xf32>
    %37 = arith.addf %34, %36 : vector<14x28xf32>
    %c0_34 = arith.constant 0 : index
    %c1_35 = arith.constant 1 : index
    %c0_36 = arith.constant 0 : index
    %c0_37 = arith.constant 0 : index
    %38 = vector.load %arg8[%c0_34, %c1_35, %c0_36, %c0_37] : memref<2x2x14x28xf32, #tpu.memory_space<vmem>>, vector<1x1x14x28xf32>
    %39 = vector.shape_cast %38 : vector<1x1x14x28xf32> to vector<14x28xf32>
    %40 = vector.shape_cast %37 : vector<14x28xf32> to vector<1x1x14x28xf32>
    tpu.vector_store %arg8[%c0_34, %c1_35, %c0_36, %c0_37], %40 {strides = array<i32>} : memref<2x2x14x28xf32, #tpu.memory_space<vmem>>, vector<1x1x14x28xf32>,
    %cst_38 = arith.constant dense<0.000000e+00> : vector<28xf32>
    %41 = vector.multi_reduction <add>, %37, %cst_38 [0] : vector<14x28xf32> to vector<28xf32>
    %42 = vector.shape_cast %41 : vector<28xf32> to vector<1x28xf32>
    %43 = arith.addf %17, %42 : vector<1x28xf32>
    %44 = arith.mulf %37, %37 : vector<14x28xf32>
    %cst_39 = arith.constant dense<0.000000e+00> : vector<28xf32>
    %45 = vector.multi_reduction <add>, %44, %cst_39 [0] : vector<14x28xf32> to vector<28xf32>
    %46 = vector.shape_cast %45 : vector<28xf32> to vector<1x28xf32>
    %47 = arith.addf %21, %46 : vector<1x28xf32>
    %cst_40 = arith.constant 0.000000e+00 : f32
    %48 = vector.broadcast %cst_40 : f32 to vector<14x28xf32>
    %c1_41 = arith.constant 1 : index
    %c0_42 = arith.constant 0 : index
    %c0_43 = arith.constant 0 : index
    %c0_44 = arith.constant 0 : index
    %49 = vector.load %arg1[%c1_41, %c0_42, %c0_43, %c0_44] : memref<2x1x15x112xbf16, #tpu.memory_space<vmem>>, vector<1x1x14x112xbf16>
    %50 = vector.shape_cast %49 : vector<1x1x14x112xbf16> to vector<14x112xbf16>
    %c0_45 = arith.constant 0 : index
    %c0_46 = arith.constant 0 : index
    %c0_47 = arith.constant 0 : index
    %51 = vector.load %arg2[%c0_45, %c0_46, %c0_47] : memref<3x112x28xbf16, #tpu.memory_space<vmem>>, vector<1x112x28xbf16>
    %52 = vector.shape_cast %51 : vector<1x112x28xbf16> to vector<112x28xbf16>
    %cst_48 = arith.constant dense<0.000000e+00> : vector<14x28xf32>
    %53 = tpu.matmul %50, %52, %cst_48 {dimension_numbers = #tpu.dot_dimension_numbers<[1], [0], [0], [1], [0, 0, 1, 1], [], []>} : vector<14x112xbf16>, vector<112x28xbf16>, vector<14x28xf32> -> vector<14x28xf32>
    %54 = arith.addf %48, %53 : vector<14x28xf32>
    %c0_49 = arith.constant 0 : index
    %c0_50 = arith.constant 0 : index
    %55 = vector.load %arg3[%c0_49, %c0_50] : memref<1x28xf32, #tpu.memory_space<vmem>>, vector<1x28xf32>
    %56 = vector.broadcast %55 : vector<1x28xf32> to vector<14x28xf32>
    %57 = arith.addf %54, %56 : vector<14x28xf32>
    %c1_51 = arith.constant 1 : index
    %c0_52 = arith.constant 0 : index
    %c0_53 = arith.constant 0 : index
    %c0_54 = arith.constant 0 : index
    %58 = vector.load %arg8[%c1_51, %c0_52, %c0_53, %c0_54] : memref<2x2x14x28xf32, #tpu.memory_space<vmem>>, vector<1x1x14x28xf32>
    %59 = vector.shape_cast %58 : vector<1x1x14x28xf32> to vector<14x28xf32>
    %60 = vector.shape_cast %57 : vector<14x28xf32> to vector<1x1x14x28xf32>
    tpu.vector_store %arg8[%c1_51, %c0_52, %c0_53, %c0_54], %60 {strides = array<i32>} : memref<2x2x14x28xf32, #tpu.memory_space<vmem>>, vector<1x1x14x28xf32>,
    %cst_55 = arith.constant dense<0.000000e+00> : vector<28xf32>
    %61 = vector.multi_reduction <add>, %57, %cst_55 [0] : vector<14x28xf32> to vector<28xf32>
    %62 = vector.shape_cast %61 : vector<28xf32> to vector<1x28xf32>
    %63 = arith.addf %43, %62 : vector<1x28xf32>
    %64 = arith.mulf %57, %57 : vector<14x28xf32>
    %cst_56 = arith.constant dense<0.000000e+00> : vector<28xf32>
    %65 = vector.multi_reduction <add>, %64, %cst_56 [0] : vector<14x28xf32> to vector<28xf32>
    %66 = vector.shape_cast %65 : vector<28xf32> to vector<1x28xf32>
    %67 = arith.addf %47, %66 : vector<1x28xf32>
    %cst_57 = arith.constant 0.000000e+00 : f32
    %68 = vector.broadcast %cst_57 : f32 to vector<14x28xf32>
    %c1_58 = arith.constant 1 : index
    %c0_59 = arith.constant 0 : index
    %c1_60 = arith.constant 1 : index
    %c0_61 = arith.constant 0 : index
    %69 = vector.load %arg1[%c1_58, %c0_59, %c1_60, %c0_61] : memref<2x1x15x112xbf16, #tpu.memory_space<vmem>>, vector<1x1x14x112xbf16>
    %70 = vector.shape_cast %69 : vector<1x1x14x112xbf16> to vector<14x112xbf16>
    %c1_62 = arith.constant 1 : index
    %c0_63 = arith.constant 0 : index
    %c0_64 = arith.constant 0 : index
    %71 = vector.load %arg2[%c1_62, %c0_63, %c0_64] : memref<3x112x28xbf16, #tpu.memory_space<vmem>>, vector<1x112x28xbf16>
    %72 = vector.shape_cast %71 : vector<1x112x28xbf16> to vector<112x28xbf16>
    %cst_65 = arith.constant dense<0.000000e+00> : vector<14x28xf32>
    %73 = tpu.matmul %70, %72, %cst_65 {dimension_numbers = #tpu.dot_dimension_numbers<[1], [0], [0], [1], [0, 0, 1, 1], [], []>} : vector<14x112xbf16>, vector<112x28xbf16>, vector<14x28xf32> -> vector<14x28xf32>
    %74 = arith.addf %68, %73 : vector<14x28xf32>
    %c1_66 = arith.constant 1 : index
    %c0_67 = arith.constant 0 : index
    %c0_68 = arith.constant 0 : index
    %c0_69 = arith.constant 0 : index
    %75 = vector.load %arg1[%c1_66, %c0_67, %c0_68, %c0_69] : memref<2x1x15x112xbf16, #tpu.memory_space<vmem>>, vector<1x1x14x112xbf16>
    %76 = vector.shape_cast %75 : vector<1x1x14x112xbf16> to vector<14x112xbf16>
    %c2_70 = arith.constant 2 : index
    %c0_71 = arith.constant 0 : index
    %c0_72 = arith.constant 0 : index
    %77 = vector.load %arg2[%c2_70, %c0_71, %c0_72] : memref<3x112x28xbf16, #tpu.memory_space<vmem>>, vector<1x112x28xbf16>
    %78 = vector.shape_cast %77 : vector<1x112x28xbf16> to vector<112x28xbf16>
    %cst_73 = arith.constant dense<0.000000e+00> : vector<14x28xf32>
    %79 = tpu.matmul %76, %78, %cst_73 {dimension_numbers = #tpu.dot_dimension_numbers<[1], [0], [0], [1], [0, 0, 1, 1], [], []>} : vector<14x112xbf16>, vector<112x28xbf16>, vector<14x28xf32> -> vector<14x28xf32>
    %80 = arith.addf %74, %79 : vector<14x28xf32>
    %c0_74 = arith.constant 0 : index
    %c0_75 = arith.constant 0 : index
    %81 = vector.load %arg3[%c0_74, %c0_75] : memref<1x28xf32, #tpu.memory_space<vmem>>, vector<1x28xf32>
    %82 = vector.broadcast %81 : vector<1x28xf32> to vector<14x28xf32>
    %83 = arith.addf %80, %82 : vector<14x28xf32>
    %c1_76 = arith.constant 1 : index
    %c1_77 = arith.constant 1 : index
    %c0_78 = arith.constant 0 : index
    %c0_79 = arith.constant 0 : index
    %84 = vector.load %arg8[%c1_76, %c1_77, %c0_78, %c0_79] : memref<2x2x14x28xf32, #tpu.memory_space<vmem>>, vector<1x1x14x28xf32>
    %85 = vector.shape_cast %84 : vector<1x1x14x28xf32> to vector<14x28xf32>
    %86 = vector.shape_cast %83 : vector<14x28xf32> to vector<1x1x14x28xf32>
    tpu.vector_store %arg8[%c1_76, %c1_77, %c0_78, %c0_79], %86 {strides = array<i32>} : memref<2x2x14x28xf32, #tpu.memory_space<vmem>>, vector<1x1x14x28xf32>,
    %cst_80 = arith.constant dense<0.000000e+00> : vector<28xf32>
    %87 = vector.multi_reduction <add>, %83, %cst_80 [0] : vector<14x28xf32> to vector<28xf32>
    %88 = vector.shape_cast %87 : vector<28xf32> to vector<1x28xf32>
    %89 = arith.addf %63, %88 : vector<1x28xf32>
    %90 = arith.mulf %83, %83 : vector<14x28xf32>
    %cst_81 = arith.constant dense<0.000000e+00> : vector<28xf32>
    %91 = vector.multi_reduction <add>, %90, %cst_81 [0] : vector<14x28xf32> to vector<28xf32>
    %92 = vector.shape_cast %91 : vector<28xf32> to vector<1x28xf32>
    %93 = arith.addf %67, %92 : vector<1x28xf32>
    %c0_82 = arith.constant 0 : index
    %c0_83 = arith.constant 0 : index
    %94 = vector.load %arg4[%c0_82, %c0_83] : memref<28x1xf32, #tpu.memory_space<vmem>>, vector<28x1xf32>
    %cst_84 = arith.constant dense<0.000000e+00> : vector<1x1xf32>
    %95 = tpu.matmul %89, %94, %cst_84 {dimension_numbers = #tpu.dot_dimension_numbers<[1], [0], [0], [1], [0, 0, 1, 1], [], []>} : vector<1x28xf32>, vector<28x1xf32>, vector<1x1xf32> -> vector<1x1xf32>
    %c0_85 = arith.constant 0 : index
    %c0_86 = arith.constant 0 : index
    %96 = vector.load %arg4[%c0_85, %c0_86] : memref<28x1xf32, #tpu.memory_space<vmem>>, vector<28x1xf32>
    %cst_87 = arith.constant dense<0.000000e+00> : vector<1x1xf32>
    %97 = tpu.matmul %93, %96, %cst_87 {dimension_numbers = #tpu.dot_dimension_numbers<[1], [0], [0], [1], [0, 0, 1, 1], [], []>} : vector<1x28xf32>, vector<28x1xf32>, vector<1x1xf32> -> vector<1x1xf32>
    %cst_88 = arith.constant 6.37755089E-4 : f32
    %98 = vector.broadcast %cst_88 : f32 to vector<1x1xf32>
    %99 = arith.mulf %95, %98 : vector<1x1xf32>
    %cst_89 = arith.constant 6.37755089E-4 : f32
    %100 = vector.broadcast %cst_89 : f32 to vector<1x1xf32>
    %101 = arith.mulf %97, %100 : vector<1x1xf32>
    %102 = arith.mulf %99, %99 : vector<1x1xf32>
    %103 = arith.subf %101, %102 : vector<1x1xf32>
    %cst_90 = arith.constant 0.000000e+00 : f32
    %104 = vector.broadcast %cst_90 : f32 to vector<1x1xf32>
    %105 = arith.maximumf %103, %104 : vector<1x1xf32>
    %c0_91 = arith.constant 0 : index
    %c0_92 = arith.constant 0 : index
    %106 = vector.load %arg6[%c0_91, %c0_92] : memref<2x1xf32, #tpu.memory_space<vmem>>, vector<1x1xf32>
    %c1_93 = arith.constant 1 : index
    %c0_94 = arith.constant 0 : index
    %107 = vector.load %arg6[%c1_93, %c0_94] : memref<2x1xf32, #tpu.memory_space<vmem>>, vector<1x1xf32>
    %cst_95 = arith.constant 9.99999974E-6 : f32
    %108 = vector.broadcast %cst_95 : f32 to vector<1x1xf32>
    %109 = arith.addf %105, %108 : vector<1x1xf32>
    %110 = math.rsqrt %109 : vector<1x1xf32>
    %111 = arith.mulf %106, %110 : vector<1x1xf32>
    %112 = arith.mulf %99, %111 : vector<1x1xf32>
    %113 = arith.subf %107, %112 : vector<1x1xf32>
    %c0_96 = arith.constant 0 : index
    %c0_97 = arith.constant 0 : index
    %114 = vector.load %arg5[%c0_96, %c0_97] : memref<1x28xf32, #tpu.memory_space<vmem>>, vector<1x28xf32>
    %cst_98 = arith.constant dense<0.000000e+00> : vector<1x28xf32>
    %115 = tpu.matmul %111, %114, %cst_98 {dimension_numbers = #tpu.dot_dimension_numbers<[1], [0], [0], [1], [0, 0, 1, 1], [], []>} : vector<1x1xf32>, vector<1x28xf32>, vector<1x28xf32> -> vector<1x28xf32>
    %c0_99 = arith.constant 0 : index
    %c0_100 = arith.constant 0 : index
    %116 = vector.load %arg5[%c0_99, %c0_100] : memref<1x28xf32, #tpu.memory_space<vmem>>, vector<1x28xf32>
    %cst_101 = arith.constant dense<0.000000e+00> : vector<1x28xf32>
    %117 = tpu.matmul %113, %116, %cst_101 {dimension_numbers = #tpu.dot_dimension_numbers<[1], [0], [0], [1], [0, 0, 1, 1], [], []>} : vector<1x1xf32>, vector<1x28xf32>, vector<1x28xf32> -> vector<1x28xf32>
    %c0_102 = arith.constant 0 : index
    %c0_103 = arith.constant 0 : index
    %c0_104 = arith.constant 0 : index
    %c0_105 = arith.constant 0 : index
    %118 = vector.load %arg8[%c0_102, %c0_103, %c0_104, %c0_105] : memref<2x2x14x28xf32, #tpu.memory_space<vmem>>, vector<1x1x14x28xf32>
    %119 = vector.shape_cast %118 : vector<1x1x14x28xf32> to vector<14x28xf32>
    %120 = vector.broadcast %115 : vector<1x28xf32> to vector<14x28xf32>
    %121 = arith.mulf %119, %120 : vector<14x28xf32>
    %122 = vector.broadcast %117 : vector<1x28xf32> to vector<14x28xf32>
    %123 = arith.addf %121, %122 : vector<14x28xf32>
    %124 = arith.negf %123 : vector<14x28xf32>
    %125 = math.exp %124 : vector<14x28xf32>
    %cst_106 = arith.constant 1.000000e+00 : f32
    %126 = vector.broadcast %cst_106 : f32 to vector<14x28xf32>
    %127 = arith.addf %126, %125 : vector<14x28xf32>
    %128 = arith.divf %126, %127 : vector<14x28xf32>
    %c0_107 = arith.constant 0 : index
    %c0_108 = arith.constant 0 : index
    %c0_109 = arith.constant 0 : index
    %c0_110 = arith.constant 0 : index
    %129 = vector.load %arg7[%c0_107, %c0_108, %c0_109, %c0_110] : memref<2x2x14x28xf32, #tpu.memory_space<vmem>>, vector<1x1x14x28xf32>
    %130 = vector.shape_cast %129 : vector<1x1x14x28xf32> to vector<14x28xf32>
    %131 = vector.shape_cast %128 : vector<14x28xf32> to vector<1x1x14x28xf32>
    tpu.vector_store %arg7[%c0_107, %c0_108, %c0_109, %c0_110], %131 {strides = array<i32>} : memref<2x2x14x28xf32, #tpu.memory_space<vmem>>, vector<1x1x14x28xf32>,
    %c0_111 = arith.constant 0 : index
    %c1_112 = arith.constant 1 : index
    %c0_113 = arith.constant 0 : index
    %c0_114 = arith.constant 0 : index
    %132 = vector.load %arg8[%c0_111, %c1_112, %c0_113, %c0_114] : memref<2x2x14x28xf32, #tpu.memory_space<vmem>>, vector<1x1x14x28xf32>
    %133 = vector.shape_cast %132 : vector<1x1x14x28xf32> to vector<14x28xf32>
    %134 = vector.broadcast %115 : vector<1x28xf32> to vector<14x28xf32>
    %135 = arith.mulf %133, %134 : vector<14x28xf32>
    %136 = vector.broadcast %117 : vector<1x28xf32> to vector<14x28xf32>
    %137 = arith.addf %135, %136 : vector<14x28xf32>
    %138 = arith.negf %137 : vector<14x28xf32>
    %139 = math.exp %138 : vector<14x28xf32>
    %cst_115 = arith.constant 1.000000e+00 : f32
    %140 = vector.broadcast %cst_115 : f32 to vector<14x28xf32>
    %141 = arith.addf %140, %139 : vector<14x28xf32>
    %142 = arith.divf %140, %141 : vector<14x28xf32>
    %c0_116 = arith.constant 0 : index
    %c1_117 = arith.constant 1 : index
    %c0_118 = arith.constant 0 : index
    %c0_119 = arith.constant 0 : index
    %143 = vector.load %arg7[%c0_116, %c1_117, %c0_118, %c0_119] : memref<2x2x14x28xf32, #tpu.memory_space<vmem>>, vector<1x1x14x28xf32>
    %144 = vector.shape_cast %143 : vector<1x1x14x28xf32> to vector<14x28xf32>
    %145 = vector.shape_cast %142 : vector<14x28xf32> to vector<1x1x14x28xf32>
    tpu.vector_store %arg7[%c0_116, %c1_117, %c0_118, %c0_119], %145 {strides = array<i32>} : memref<2x2x14x28xf32, #tpu.memory_space<vmem>>, vector<1x1x14x28xf32>,
    %c1_120 = arith.constant 1 : index
    %c0_121 = arith.constant 0 : index
    %c0_122 = arith.constant 0 : index
    %c0_123 = arith.constant 0 : index
    %146 = vector.load %arg8[%c1_120, %c0_121, %c0_122, %c0_123] : memref<2x2x14x28xf32, #tpu.memory_space<vmem>>, vector<1x1x14x28xf32>
    %147 = vector.shape_cast %146 : vector<1x1x14x28xf32> to vector<14x28xf32>
    %148 = vector.broadcast %115 : vector<1x28xf32> to vector<14x28xf32>
    %149 = arith.mulf %147, %148 : vector<14x28xf32>
    %150 = vector.broadcast %117 : vector<1x28xf32> to vector<14x28xf32>
    %151 = arith.addf %149, %150 : vector<14x28xf32>
    %152 = arith.negf %151 : vector<14x28xf32>
    %153 = math.exp %152 : vector<14x28xf32>
    %cst_124 = arith.constant 1.000000e+00 : f32
    %154 = vector.broadcast %cst_124 : f32 to vector<14x28xf32>
    %155 = arith.addf %154, %153 : vector<14x28xf32>
    %156 = arith.divf %154, %155 : vector<14x28xf32>
    %c1_125 = arith.constant 1 : index
    %c0_126 = arith.constant 0 : index
    %c0_127 = arith.constant 0 : index
    %c0_128 = arith.constant 0 : index
    %157 = vector.load %arg7[%c1_125, %c0_126, %c0_127, %c0_128] : memref<2x2x14x28xf32, #tpu.memory_space<vmem>>, vector<1x1x14x28xf32>
    %158 = vector.shape_cast %157 : vector<1x1x14x28xf32> to vector<14x28xf32>
    %159 = vector.shape_cast %156 : vector<14x28xf32> to vector<1x1x14x28xf32>
    tpu.vector_store %arg7[%c1_125, %c0_126, %c0_127, %c0_128], %159 {strides = array<i32>} : memref<2x2x14x28xf32, #tpu.memory_space<vmem>>, vector<1x1x14x28xf32>,
    %c1_129 = arith.constant 1 : index
    %c1_130 = arith.constant 1 : index
    %c0_131 = arith.constant 0 : index
    %c0_132 = arith.constant 0 : index
    %160 = vector.load %arg8[%c1_129, %c1_130, %c0_131, %c0_132] : memref<2x2x14x28xf32, #tpu.memory_space<vmem>>, vector<1x1x14x28xf32>
    %161 = vector.shape_cast %160 : vector<1x1x14x28xf32> to vector<14x28xf32>
    %162 = vector.broadcast %115 : vector<1x28xf32> to vector<14x28xf32>
    %163 = arith.mulf %161, %162 : vector<14x28xf32>
    %164 = vector.broadcast %117 : vector<1x28xf32> to vector<14x28xf32>
    %165 = arith.addf %163, %164 : vector<14x28xf32>
    %166 = arith.negf %165 : vector<14x28xf32>
    %167 = math.exp %166 : vector<14x28xf32>
    %cst_133 = arith.constant 1.000000e+00 : f32
    %168 = vector.broadcast %cst_133 : f32 to vector<14x28xf32>
    %169 = arith.addf %168, %167 : vector<14x28xf32>
    %170 = arith.divf %168, %169 : vector<14x28xf32>
    %c1_134 = arith.constant 1 : index
    %c1_135 = arith.constant 1 : index
    %c0_136 = arith.constant 0 : index
    %c0_137 = arith.constant 0 : index
    %171 = vector.load %arg7[%c1_134, %c1_135, %c0_136, %c0_137] : memref<2x2x14x28xf32, #tpu.memory_space<vmem>>, vector<1x1x14x28xf32>
    %172 = vector.shape_cast %171 : vector<1x1x14x28xf32> to vector<14x28xf32>
    %173 = vector.shape_cast %170 : vector<14x28xf32> to vector<1x1x14x28xf32>
    tpu.vector_store %arg7[%c1_134, %c1_135, %c0_136, %c0_137], %173 {strides = array<i32>} : memref<2x2x14x28xf32, #tpu.memory_space<vmem>>, vector<1x1x14x28xf32>,
    return
  }
  func.func @transform_0(%arg0: i32) -> (i32, i32, i32, i32) {
    %c0_i32 = arith.constant 0 : i32
    %c0_i32_0 = arith.constant 0 : i32
    %c0_i32_1 = arith.constant 0 : i32
    %c0_i32_2 = arith.constant 0 : i32
    %c0_i32_3 = arith.constant 0 : i32
    return %c0_i32, %c0_i32_0, %c0_i32_1, %c0_i32_2 : i32, i32, i32, i32
  }
  func.func @transform_1(%arg0: i32) -> (i32, i32, i32) {
    %c0_i32 = arith.constant 0 : i32
    %c0_i32_0 = arith.constant 0 : i32
    %c0_i32_1 = arith.constant 0 : i32
    %c0_i32_2 = arith.constant 0 : i32
    return %c0_i32, %c0_i32_0, %c0_i32_1 : i32, i32, i32
  }
  func.func @transform_2(%arg0: i32) -> (i32, i32) {
    %c0_i32 = arith.constant 0 : i32
    %c0_i32_0 = arith.constant 0 : i32
    %c0_i32_1 = arith.constant 0 : i32
    return %c0_i32, %c0_i32_0 : i32, i32
  }
  func.func @transform_3(%arg0: i32) -> (i32, i32) {
    %c0_i32 = arith.constant 0 : i32
    %c0_i32_0 = arith.constant 0 : i32
    %c0_i32_1 = arith.constant 0 : i32
    return %c0_i32, %c0_i32_0 : i32, i32
  }
  func.func @transform_4(%arg0: i32) -> (i32, i32) {
    %c0_i32 = arith.constant 0 : i32
    %c0_i32_0 = arith.constant 0 : i32
    %c0_i32_1 = arith.constant 0 : i32
    return %c0_i32, %c0_i32_0 : i32, i32
  }
  func.func @transform_5(%arg0: i32) -> (i32, i32) {
    %c0_i32 = arith.constant 0 : i32
    %c0_i32_0 = arith.constant 0 : i32
    %c0_i32_1 = arith.constant 0 : i32
    return %c0_i32, %c0_i32_0 : i32, i32
  }
  func.func @transform_6(%arg0: i32) -> (i32, i32, i32, i32) {
    %c0_i32 = arith.constant 0 : i32
    %c0_i32_0 = arith.constant 0 : i32
    %c0_i32_1 = arith.constant 0 : i32
    %c0_i32_2 = arith.constant 0 : i32
    %c0_i32_3 = arith.constant 0 : i32
    return %c0_i32, %c0_i32_0, %c0_i32_1, %c0_i32_2 : i32, i32, i32, i32
  }
}

</mosaic_0001>

<llo_original>
// kernel: squeeze.3
$region0: #{squeeze.3}
  %s0 = inlined_call_operand.vmem [shape: bf16[2,1,7,112], index: 0, kind: input, shape index: {}]
  %s1 = inlined_call_operand.vmem [shape: bf16[2,784], index: 1, kind: output, shape index: {}]
  $region1: #{squeeze.3} parent=0
    #allocation0 [shape = 'u8[28672]{0}', space=vmem, size = 0x7000, scoped, tag = 'scoped mem for output reshape']
    #allocation1 [shape = 'u8[8192]{0}', space=vmem, size = 0x2000, scoped, tag = 'scoped mem for input reshape']
    %s3 = smul.u32 4, 2
    %s4 = sshll.u32 1, %s3
    %s5 = ssub.s32 %s4, 1
    %s6 = scalar_lea.vmem %s0, 4
    %s7 = sshrl.u32 %s5, 1
    %s8 = sor.u32 %s5, %s7
    %s9 = sand.u32 %s8, 85
    %s10 = sshrl.u32 %s9, 1
    %s11 = sor.u32 %s9, %s10
    %s12 = sand.u32 51, %s11
    %s13 = sshrl.u32 %s12, 2
    %s14 = sor.u32 %s12, %s13
    %s15 = sand.u32 15, %s14
    %v16 = vld [vmem:[%s6] sm:%s15]
    %v17 = vunpack.c.l.bf16 %v16
    %v18 = vunpack.c.h.bf16 %v16
    %s19 = scalar_lea.vmem [#allocation1], 8
    %20 = vst [vmem:[%s19] sm:%s5] %v17
    %s21 = sshrl.u32 %s5, 1
    %s22 = sor.u32 %s5, %s21
    %s23 = sand.u32 %s22, 85
    %s24 = sshrl.u32 %s23, 1
    %s25 = sor.u32 %s23, %s24
    %s26 = sand.u32 51, %s25
    %s27 = sshrl.u32 %s26, 2
    %s28 = sor.u32 %s26, %s27
    %s29 = sand.u32 15, %s28
    %v30 = vld [vmem:[%s0] sm:%s29]
    %v31 = vunpack.c.l.bf16 %v30
    %v32 = vunpack.c.h.bf16 %v30
    %33 = vst [vmem:[#allocation1] sm:%s5] %v31
    %s34 = smov 3
    %v35 = vld [vmem:[#allocation1] ss:$8 sm:%s34]
    %vm36 = vcmask 916480
    %37 = vst.msk [vmem:[#allocation0] sm:$0x3] %vm36, %v35
    %s38 = scalar_lea.vmem [#allocation1], 1
    %s39 = smov 3
    %v40 = vld [vmem:[%s38] ss:$8 sm:%s39]
    %s41 = scalar_lea.vmem [#allocation1], 1
    %s42 = smov 3
    %v43 = vld [vmem:[%s41] ss:$8 sm:%s42]
    %vm44 = vcmask 130048
    %v45 = vsel %vm44, %v43, %v40
    %46 = vrot.lane.b32.xlu0 %v45, 112
    %v47 = vpop.permute.xlu0 %46
    %vm48 = vcmask 785408
    %s49 = scalar_lea.vmem [#allocation0], 8
    %50 = vst.msk [vmem:[%s49] sm:$0x3] %vm48, %v47
    %vm51 = vcmask 1048448
    %52 = vst.msk [vmem:[#allocation0] sm:$0x3] %vm51, %v47
    %s53 = scalar_lea.vmem [#allocation1], 2
    %s54 = smov 3
    %v55 = vld [vmem:[%s53] ss:$8 sm:%s54]
    %s56 = scalar_lea.vmem [#allocation1], 2
    %s57 = smov 3
    %v58 = vld [vmem:[%s56] ss:$8 sm:%s57]
    %vm59 = vcmask 261120
    %v60 = vsel %vm59, %v58, %v55
    %61 = vrot.lane.b32.xlu0 %v60, 96
    %v62 = vpop.permute.xlu0 %61
    %vm63 = vcmask 654336
    %s64 = scalar_lea.vmem [#allocation0], 16
    %65 = vst.msk [vmem:[%s64] sm:$0x3] %vm63, %v62
    %vm66 = vcmask 1048320
    %s67 = scalar_lea.vmem [#allocation0], 8
    %68 = vst.msk [vmem:[%s67] sm:$0x3] %vm66, %v62
    %s69 = scalar_lea.vmem [#allocation1], 3
    %s70 = smov 3
    %v71 = vld [vmem:[%s69] ss:$8 sm:%s70]
    %s72 = scalar_lea.vmem [#allocation1], 3
    %s73 = smov 3
    %v74 = vld [vmem:[%s72] ss:$8 sm:%s73]
    %vm75 = vcmask 392192
    %v76 = vsel %vm75, %v74, %v71
    %77 = vrot.lane.b32.xlu0 %v76, 80
    %v78 = vpop.permute.xlu0 %77
    %vm79 = vcmask 523264
    %s80 = scalar_lea.vmem [#allocation0], 24
    %81 = vst.msk [vmem:[%s80] sm:$0x3] %vm79, %v78
    %vm82 = vcmask 1048192
    %s83 = scalar_lea.vmem [#allocation0], 16
    %84 = vst.msk [vmem:[%s83] sm:$0x3] %vm82, %v78
    %s85 = scalar_lea.vmem [#allocation1], 4
    %s86 = smov 3
    %v87 = vld [vmem:[%s85] ss:$8 sm:%s86]
    %s88 = scalar_lea.vmem [#allocation1], 4
    %s89 = smov 3
    %v90 = vld [vmem:[%s88] ss:$8 sm:%s89]
    %vm91 = vcmask 523264
    %v92 = vsel %vm91, %v90, %v87
    %93 = vrot.lane.b32.xlu0 %v92, 64
    %v94 = vpop.permute.xlu0 %93
    %vm95 = vcmask 392192
    %s96 = scalar_lea.vmem [#allocation0], 32
    %97 = vst.msk [vmem:[%s96] sm:$0x3] %vm95, %v94
    %vm98 = vcmask 1048064
    %s99 = scalar_lea.vmem [#allocation0], 24
    %100 = vst.msk [vmem:[%s99] sm:$0x3] %vm98, %v94
    %s101 = scalar_lea.vmem [#allocation1], 5
    %s102 = smov 3
    %v103 = vld [vmem:[%s101] ss:$8 sm:%s102]
    %s104 = scalar_lea.vmem [#allocation1], 5
    %s105 = smov 3
    %v106 = vld [vmem:[%s104] ss:$8 sm:%s105]
    %vm107 = vcmask 654336
    %v108 = vsel %vm107, %v106, %v103
    %109 = vrot.lane.b32.xlu0 %v108, 48
    %v110 = vpop.permute.xlu0 %109
    %vm111 = vcmask 261120
    %s112 = scalar_lea.vmem [#allocation0], 40
    %113 = vst.msk [vmem:[%s112] sm:$0x3] %vm111, %v110
    %vm114 = vcmask 1047936
    %s115 = scalar_lea.vmem [#allocation0], 32
    %116 = vst.msk [vmem:[%s115] sm:$0x3] %vm114, %v110
    %s117 = scalar_lea.vmem [#allocation1], 6
    %s118 = smov 3
    %v119 = vld [vmem:[%s117] ss:$8 sm:%s118]
    %s120 = scalar_lea.vmem [#allocation1], 6
    %s121 = smov 3
    %v122 = vld [vmem:[%s120] ss:$8 sm:%s121]
    %vm123 = vcmask 785408
    %v124 = vsel %vm123, %v122, %v119
    %125 = vrot.lane.b32.xlu0 %v124, 32
    %v126 = vpop.permute.xlu0 %125
    %vm127 = vcmask 130048
    %s128 = scalar_lea.vmem [#allocation0], 48
    %129 = vst.msk [vmem:[%s128] sm:$0x3] %vm127, %v126
    %vm130 = vcmask 1047808
    %s131 = scalar_lea.vmem [#allocation0], 40
    %132 = vst.msk [vmem:[%s131] sm:$0x3] %vm130, %v126
    %s134 = smul.u32 1, 2
    %s135 = sshll.u32 1, %s134
    %s136 = ssub.s32 %s135, 1
    %s137 = sshrl.u32 %s134, 1
    %v138 = vld [vmem:[#allocation0] sm:%s136]
    %v139 = vpack.c.bf16 0.0, %v138
    %s140 = sshll.u32 1, %s137
    %s141 = ssub.s32 %s140, 1
    %142 = vst [vmem:[%s1] sm:%s141] %v139
    %s143 = scalar_lea.vmem [#allocation0], 8
    %v144 = vld [vmem:[%s143] sm:%s136]
    %v145 = vpack.c.bf16 0.0, %v144
    %s146 = sshll.u32 1, %s137
    %s147 = ssub.s32 %s146, 1
    %s148 = scalar_lea.vmem %s1, 1
    %149 = vst [vmem:[%s148] sm:%s147] %v145
    %s150 = scalar_lea.vmem [#allocation0], 16
    %v151 = vld [vmem:[%s150] sm:%s136]
    %v152 = vpack.c.bf16 0.0, %v151
    %s153 = sshll.u32 1, %s137
    %s154 = ssub.s32 %s153, 1
    %s155 = smul.addr 1, 2
    %s156 = scalar_lea.vmem %s1, %s155
    %157 = vst [vmem:[%s156] sm:%s154] %v152
    %s158 = scalar_lea.vmem [#allocation0], 24
    %v159 = vld [vmem:[%s158] sm:%s136]
    %v160 = vpack.c.bf16 0.0, %v159
    %s161 = sshll.u32 1, %s137
    %s162 = ssub.s32 %s161, 1
    %s163 = smul.addr 1, 3
    %s164 = scalar_lea.vmem %s1, %s163
    %165 = vst [vmem:[%s164] sm:%s162] %v160
    %s166 = scalar_lea.vmem [#allocation0], 32
    %v167 = vld [vmem:[%s166] sm:%s136]
    %v168 = vpack.c.bf16 0.0, %v167
    %s169 = sshll.u32 1, %s137
    %s170 = ssub.s32 %s169, 1
    %s171 = smul.addr 1, 4
    %s172 = scalar_lea.vmem %s1, %s171
    %173 = vst [vmem:[%s172] sm:%s170] %v168
    %s174 = scalar_lea.vmem [#allocation0], 40
    %v175 = vld [vmem:[%s174] sm:%s136]
    %v176 = vpack.c.bf16 0.0, %v175
    %s177 = sshll.u32 1, %s137
    %s178 = ssub.s32 %s177, 1
    %s179 = smul.addr 1, 5
    %s180 = scalar_lea.vmem %s1, %s179
    %181 = vst [vmem:[%s180] sm:%s178] %v176
    %s182 = scalar_lea.vmem [#allocation0], 48
    %v183 = vld [vmem:[%s182] sm:%s136]
    %v184 = vpack.c.bf16 0.0, %v183
    %s185 = sshll.u32 1, %s137
    %s186 = ssub.s32 %s185, 1
    %s187 = smul.addr 1, 6
    %s188 = scalar_lea.vmem %s1, %s187
    %189 = vst [vmem:[%s188] sm:%s186] %v184

// kernel: vae_forward.5
$region0: #{vae_forward.5}
  #allocation0 [shape = 'u32[]', space=smem, size = 0x4, offset = 0x4, fixed_abs, tag = 'smem constant byte address 0x4 - core index']
  #allocation1 [shape = 'u32[144,128]{1,0:T(1,128)}', space=vmem, size = 0x12000, scoped, tag = 'internal scratch']
  #allocation2 [shape = 'f32[2,1,14,112]{3,2,1,0:T(8,128)}', space=vmem, size = 0x4000, scoped, tag = 'scratch operand']
  %s0 = inlined_call_operand.vmem [shape: bf16[2,2,15,30], index: 0, kind: input, shape index: {}]
  %s1 = inlined_call_operand.vmem [shape: bf16[3,30,112], index: 1, kind: input, shape index: {}]
  %s2 = inlined_call_operand.vmem [shape: f32[1,112], index: 2, kind: input, shape index: {}]
  %s3 = inlined_call_operand.vmem [shape: f32[112,8], index: 3, kind: input, shape index: {}]
  %s4 = inlined_call_operand.vmem [shape: f32[8,112], index: 4, kind: input, shape index: {}]
  %s5 = inlined_call_operand.vmem [shape: f32[2,8], index: 5, kind: input, shape index: {}]
  %s6 = inlined_call_operand.vmem [shape: bf16[2,1,14,112], index: 6, kind: output, shape index: {}]
  %s7 = sld [smem:[#allocation0]]
  $region34: #{vae_forward.5} parent=0
    _
  %s9 = ssub.s32 1, %s7
  %s10 = scalar_select 0, %s9, %s7
  // Predicated region
  $region2: #{vae_forward.5} parent=0 // pred_check
    _
  $region3: #{vae_forward.5} parent=0 // pred_check_branch
    %12 = sbr.rel (0) target = $region5
  $region4: #{vae_forward.5} parent=0 // pred_region
    _
  $region5: #{vae_forward.5} parent=0 // pred_fallthru
    _
  // Predicated region
  $region6: #{vae_forward.5} parent=0 // pred_check
    _
  $region7: #{vae_forward.5} parent=0 // pred_check_branch
    %14 = sbr.rel (0) target = $region9
  $region8: #{vae_forward.5} parent=0 // pred_region
    _
  $region9: #{vae_forward.5} parent=0 // pred_fallthru
    _
  // Predicated region
  $region10: #{vae_forward.5} parent=0 // pred_check
    _
  $region11: #{vae_forward.5} parent=0 // pred_check_branch
    %16 = sbr.rel (0) target = $region13
  $region12: #{vae_forward.5} parent=0 // pred_region
    _
  $region13: #{vae_forward.5} parent=0 // pred_fallthru
    _
  // Predicated region
  $region14: #{vae_forward.5} parent=0 // pred_check
    _
  $region15: #{vae_forward.5} parent=0 // pred_check_branch
    %18 = sbr.rel (0) target = $region17
  $region16: #{vae_forward.5} parent=0 // pred_region
    _
  $region17: #{vae_forward.5} parent=0 // pred_fallthru
    _
  // Predicated region
  $region18: #{vae_forward.5} parent=0 // pred_check
    _
  $region19: #{vae_forward.5} parent=0 // pred_check_branch
    %20 = sbr.rel (0) target = $region21
  $region20: #{vae_forward.5} parent=0 // pred_region
    _
  $region21: #{vae_forward.5} parent=0 // pred_fallthru
    _
  // Predicated region
  $region22: #{vae_forward.5} parent=0 // pred_check
    _
  $region23: #{vae_forward.5} parent=0 // pred_check_branch
    %22 = sbr.rel (0) target = $region25
  $region24: #{vae_forward.5} parent=0 // pred_region
    _
  $region25: #{vae_forward.5} parent=0 // pred_fallthru
    _
  %v24 = vld [vmem:[%s0] sm:$0xf]
  %v25 = vld [vmem:[%s0 + $0x4] sm:$0x7]
  %v26 = vld [vmem:[%s1] sm:$0xf]
  %v27 = vld [vmem:[%s1 + $0x4] sm:$0xf]
  %v28 = vld [vmem:[%s1 + $0x8] sm:$0xf]
  %v29 = vld [vmem:[%s1 + $0xc] sm:$0x7]
  %s30 = scalar_lea.vmem %s0, 8
  %v31 = vld [vmem:[%s30] sm:$0xf]
  %v32 = vld [vmem:[%s30 + $0x4] sm:$0x7]
  %s33 = scalar_lea.vmem %s1, 16
  %v34 = vld [vmem:[%s33] sm:$0xf]
  %v35 = vld [vmem:[%s33 + $0x4] sm:$0xf]
  %v36 = vld [vmem:[%s33 + $0x8] sm:$0xf]
  %v37 = vld [vmem:[%s33 + $0xc] sm:$0x7]
  %v40 = vunpack.c.l.b16 %v31
  %v41 = vunpack.c.l.b16 %v32
  %v42 = vpack.c.b16 %v41, %v40
  %v47 = vunpack.c.l.b16 %v34
  %v48 = vunpack.c.l.b16 %v35
  %v49 = vunpack.c.l.b16 %v36
  %v50 = vunpack.c.l.b16 %v37
  %v51 = vpack.c.b16 %v48, %v47
  %v52 = vpack.c.b16 %v50, %v49
  %vm54 = vcmask 244736
  %v56 = vsel %vm54, %v42, 0
  %vm58 = vcmask 1046528
  %v60 = vsel %vm58, %v52, 0
  %62 = vmatprep.subr.bf16.mxu0 0
  %63 = vmatpush1.bf16.msra.mxu0 0
  %64 = vmatprep.subr.bf16.mxu0 0
  %65 = vmatpush1.bf16.msra.mxu0 0
  %66 = vmatprep.subr.bf16.mxu0 0
  %67 = vmatpush1.bf16.msra.mxu0 0
  %68 = vmatprep.subr.bf16.mxu0 0
  %69 = vmatpush1.bf16.msra.mxu0 0
  %70 = vmatprep.subr.bf16.mxu0 0
  %71 = vmatpush1.bf16.msra.mxu0 0
  %72 = vmatprep.subr.bf16.mxu0 0
  %73 = vmatpush1.bf16.msra.mxu0 0
  %74 = vmatprep.subr.bf16.mxu0 0
  %75 = vmatpush1.bf16.msra.mxu0 %v60
  %76 = vmatprep.subr.bf16.mxu0 0
  %77 = vmatpush1.bf16.msra.mxu0 %v51
  %78 = vmatprep.subr.bf16.mxu0 0
  %79 = vmatpush2.bf16.msra.mxu0 0
  %80 = vmatprep.subr.bf16.mxu0 0
  %81 = vmatpush2.bf16.msra.mxu0 0
  %82 = vmatprep.subr.bf16.mxu0 0
  %83 = vmatpush2.bf16.msra.mxu0 0
  %84 = vmatprep.subr.bf16.mxu0 0
  %85 = vmatpush2.bf16.msra.mxu0 0
  %86 = vmatprep.subr.bf16.mxu0 0
  %87 = vmatpush2.bf16.msra.mxu0 0
  %88 = vmatprep.subr.bf16.mxu0 0
  %89 = vmatpush2.bf16.msra.mxu0 0
  %90 = vmatprep.subr.bf16.mxu0 0
  %91 = vmatpush2.bf16.msra.mxu0 0
  %92 = vmatprep.subr.bf16.mxu0 0
  %93 = vmatpush2.bf16.msra.mxu0 0
  %94 = vmatprep.mubr.bf16.mxu0 0
  %95 = vmatmul.mubr.bf16.gmra.mxu0 %v56
  %v96 = vpop.f32.mrf.mxu0
  %v97 = vadd.f32 0.0, %v96
  %v98 = vpop.f32.mrf.mxu0
  %v99 = vpop.f32.mrf.mxu0
  %v100 = vadd.f32 0.0, %v99
  %v101 = vpop.f32.mrf.mxu0
  %102 = vdwg.mxu0
  %v105 = vunpack.c.l.b16 %v24
  %v106 = vunpack.c.l.b16 %v25
  %v107 = vpack.c.b16 %v106, %v105
  %v112 = vunpack.c.l.b16 %v26
  %v113 = vunpack.c.l.b16 %v27
  %v114 = vunpack.c.l.b16 %v28
  %v115 = vunpack.c.l.b16 %v29
  %v116 = vpack.c.b16 %v113, %v112
  %v117 = vpack.c.b16 %v115, %v114
  %v120 = vsel %vm54, %v107, 0
  %v123 = vsel %vm58, %v117, 0
  %125 = vmatprep.subr.bf16.mxu0 0
  %126 = vmatpush1.bf16.msra.mxu0 0
  %127 = vmatprep.subr.bf16.mxu0 0
  %128 = vmatpush1.bf16.msra.mxu0 0
  %129 = vmatprep.subr.bf16.mxu0 0
  %130 = vmatpush1.bf16.msra.mxu0 0
  %131 = vmatprep.subr.bf16.mxu0 0
  %132 = vmatpush1.bf16.msra.mxu0 0
  %133 = vmatprep.subr.bf16.mxu0 0
  %134 = vmatpush1.bf16.msra.mxu0 0
  %135 = vmatprep.subr.bf16.mxu0 0
  %136 = vmatpush1.bf16.msra.mxu0 0
  %137 = vmatprep.subr.bf16.mxu0 0
  %138 = vmatpush1.bf16.msra.mxu0 %v123
  %139 = vmatprep.subr.bf16.mxu0 0
  %140 = vmatpush1.bf16.msra.mxu0 %v116
  %141 = vmatprep.subr.bf16.mxu0 0
  %142 = vmatpush2.bf16.msra.mxu0 0
  %143 = vmatprep.subr.bf16.mxu0 0
  %144 = vmatpush2.bf16.msra.mxu0 0
  %145 = vmatprep.subr.bf16.mxu0 0
  %146 = vmatpush2.bf16.msra.mxu0 0
  %147 = vmatprep.subr.bf16.mxu0 0
  %148 = vmatpush2.bf16.msra.mxu0 0
  %149 = vmatprep.subr.bf16.mxu0 0
  %150 = vmatpush2.bf16.msra.mxu0 0
  %151 = vmatprep.subr.bf16.mxu0 0
  %152 = vmatpush2.bf16.msra.mxu0 0
  %153 = vmatprep.subr.bf16.mxu0 0
  %154 = vmatpush2.bf16.msra.mxu0 0
  %155 = vmatprep.subr.bf16.mxu0 0
  %156 = vmatpush2.bf16.msra.mxu0 0
  %157 = vmatprep.mubr.bf16.mxu0 0
  %158 = vmatmul.mubr.bf16.gmra.mxu0 %v120
  %v159 = vpop.f32.mrf.mxu0
  %v160 = vadd.f32 %v97, %v159
  %v161 = vpop.f32.mrf.mxu0
  %v162 = vpop.f32.mrf.mxu0
  %v163 = vadd.f32 %v100, %v162
  %v164 = vpop.f32.mrf.mxu0
  %165 = vdwg.mxu0
  %v166 = vld [vmem:[%s0 + $0x4] sm:$0xf]
  %s167 = scalar_lea.vmem %s1, 32
  %v168 = vld [vmem:[%s167] sm:$0xf]
  %v169 = vld [vmem:[%s167 + $0x4] sm:$0xf]
  %v170 = vld [vmem:[%s167 + $0x8] sm:$0xf]
  %v171 = vld [vmem:[%s167 + $0xc] sm:$0x7]
  %v173 = vunpack.c.l.b16 %v166
  %v174 = vpack.c.b16 %v173, %v105
  %v176 = vshrl.u32 %v174, 16
  %v178 = vshll.u32 %v174, 16
  %v180 = vrot.slane %v178, 1
  %v181 = vor.u32 %v176, %v180
  %v186 = vunpack.c.l.b16 %v168
  %v187 = vunpack.c.l.b16 %v169
  %v188 = vunpack.c.l.b16 %v170
  %v189 = vunpack.c.l.b16 %v171
  %v190 = vpack.c.b16 %v187, %v186
  %v191 = vpack.c.b16 %v189, %v188
  %v194 = vsel %vm54, %v181, 0
  %v197 = vsel %vm58, %v191, 0
  %199 = vmatprep.subr.bf16.mxu0 0
  %200 = vmatpush1.bf16.msra.mxu0 0
  %201 = vmatprep.subr.bf16.mxu0 0
  %202 = vmatpush1.bf16.msra.mxu0 0
  %203 = vmatprep.subr.bf16.mxu0 0
  %204 = vmatpush1.bf16.msra.mxu0 0
  %205 = vmatprep.subr.bf16.mxu0 0
  %206 = vmatpush1.bf16.msra.mxu0 0
  %207 = vmatprep.subr.bf16.mxu0 0
  %208 = vmatpush1.bf16.msra.mxu0 0
  %209 = vmatprep.subr.bf16.mxu0 0
  %210 = vmatpush1.bf16.msra.mxu0 0
  %211 = vmatprep.subr.bf16.mxu0 0
  %212 = vmatpush1.bf16.msra.mxu0 %v197
  %213 = vmatprep.subr.bf16.mxu0 0
  %214 = vmatpush1.bf16.msra.mxu0 %v190
  %215 = vmatprep.subr.bf16.mxu0 0
  %216 = vmatpush2.bf16.msra.mxu0 0
  %217 = vmatprep.subr.bf16.mxu0 0
  %218 = vmatpush2.bf16.msra.mxu0 0
  %219 = vmatprep.subr.bf16.mxu0 0
  %220 = vmatpush2.bf16.msra.mxu0 0
  %221 = vmatprep.subr.bf16.mxu0 0
  %222 = vmatpush2.bf16.msra.mxu0 0
  %223 = vmatprep.subr.bf16.mxu0 0
  %224 = vmatpush2.bf16.msra.mxu0 0
  %225 = vmatprep.subr.bf16.mxu0 0
  %226 = vmatpush2.bf16.msra.mxu0 0
  %227 = vmatprep.subr.bf16.mxu0 0
  %228 = vmatpush2.bf16.msra.mxu0 0
  %229 = vmatprep.subr.bf16.mxu0 0
  %230 = vmatpush2.bf16.msra.mxu0 0
  %231 = vmatprep.mubr.bf16.mxu0 0
  %232 = vmatmul.mubr.bf16.gmra.mxu0 %v194
  %v233 = vpop.f32.mrf.mxu0
  %v234 = vadd.f32 0.0, %v233
  %v235 = vpop.f32.mrf.mxu0
  %v236 = vpop.f32.mrf.mxu0
  %v237 = vadd.f32 0.0, %v236
  %v238 = vpop.f32.mrf.mxu0
  %239 = vdwg.mxu0
  %v240 = vadd.f32 %v160, %v234
  %v241 = vadd.f32 %v163, %v237
  %v242 = vld [vmem:[%s2] sm:$0x1]
  %v244 = vlaneseq
  %v245 = vshrl.u32 %v244, 7
  %v246 = vsub.s32 0, %v245
  %v247 = vrot.slane %v242, %v246
  %v249 = vadd.f32 %v240, %v247
  %v250 = vadd.f32 %v241, %v247
  %vm251 = vcmask 916480
  %252 = vst.msk [vmem:[#allocation2] sm:$0xff] %vm251, %v249
  %vm253 = vcmask 914432
  %254 = vst.msk [vmem:[#allocation2 + $0x8] sm:$0x3f] %vm253, %v250
  %v255 = vsel %vm251, %v249, 0.0
  %v256 = vsel %vm253, %v250, 0.0
  %v257 = vadd.f32 %v255, %v256
  %v258 = vrot.slane %v257, 4
  %v259 = vadd.f32 %v257, %v258
  %v260 = vrot.slane %v259, 2
  %v261 = vadd.f32 %v259, %v260
  %v262 = vrot.slane %v261, 1
  %v263 = vadd.f32 %v261, %v262
  %v264 = vadd.f32 %v263, 0.0
  %v265 = vmul.f32 %v249, %v249
  %v266 = vmul.f32 %v250, %v250
  %v267 = vsel %vm251, %v265, 0.0
  %v268 = vsel %vm253, %v266, 0.0
  %v269 = vadd.f32 %v267, %v268
  %v270 = vrot.slane %v269, 4
  %v271 = vadd.f32 %v269, %v270
  %v272 = vrot.slane %v271, 2
  %v273 = vadd.f32 %v271, %v272
  %v274 = vrot.slane %v273, 1
  %v275 = vadd.f32 %v273, %v274
  %v276 = vadd.f32 %v275, 0.0
  %s277 = scalar_lea.vmem %s0, 16
  %v278 = vld [vmem:[%s277] sm:$0xf]
  %v279 = vld [vmem:[%s277 + $0x4] sm:$0x7]
  %v280 = vld [vmem:[%s1] sm:$0xf]
  %v281 = vld [vmem:[%s1 + $0x4] sm:$0xf]
  %v282 = vld [vmem:[%s1 + $0x8] sm:$0xf]
  %v283 = vld [vmem:[%s1 + $0xc] sm:$0x7]
  %s284 = scalar_lea.vmem %s0, 24
  %v285 = vld [vmem:[%s284] sm:$0xf]
  %v286 = vld [vmem:[%s284 + $0x4] sm:$0x7]
  %v287 = vld [vmem:[%s33] sm:$0xf]
  %v288 = vld [vmem:[%s33 + $0x4] sm:$0xf]
  %v289 = vld [vmem:[%s33 + $0x8] sm:$0xf]
  %v290 = vld [vmem:[%s33 + $0xc] sm:$0x7]
  %v293 = vunpack.c.l.b16 %v285
  %v294 = vunpack.c.l.b16 %v286
  %v295 = vpack.c.b16 %v294, %v293
  %v300 = vunpack.c.l.b16 %v287
  %v301 = vunpack.c.l.b16 %v288
  %v302 = vunpack.c.l.b16 %v289
  %v303 = vunpack.c.l.b16 %v290
  %v304 = vpack.c.b16 %v301, %v300
  %v305 = vpack.c.b16 %v303, %v302
  %v308 = vsel %vm54, %v295, 0
  %v311 = vsel %vm58, %v305, 0
  %313 = vmatprep.subr.bf16.mxu0 0
  %314 = vmatpush1.bf16.msra.mxu0 0
  %315 = vmatprep.subr.bf16.mxu0 0
  %316 = vmatpush1.bf16.msra.mxu0 0
  %317 = vmatprep.subr.bf16.mxu0 0
  %318 = vmatpush1.bf16.msra.mxu0 0
  %319 = vmatprep.subr.bf16.mxu0 0
  %320 = vmatpush1.bf16.msra.mxu0 0
  %321 = vmatprep.subr.bf16.mxu0 0
  %322 = vmatpush1.bf16.msra.mxu0 0
  %323 = vmatprep.subr.bf16.mxu0 0
  %324 = vmatpush1.bf16.msra.mxu0 0
  %325 = vmatprep.subr.bf16.mxu0 0
  %326 = vmatpush1.bf16.msra.mxu0 %v311
  %327 = vmatprep.subr.bf16.mxu0 0
  %328 = vmatpush1.bf16.msra.mxu0 %v304
  %329 = vmatprep.subr.bf16.mxu0 0
  %330 = vmatpush2.bf16.msra.mxu0 0
  %331 = vmatprep.subr.bf16.mxu0 0
  %332 = vmatpush2.bf16.msra.mxu0 0
  %333 = vmatprep.subr.bf16.mxu0 0
  %334 = vmatpush2.bf16.msra.mxu0 0
  %335 = vmatprep.subr.bf16.mxu0 0
  %336 = vmatpush2.bf16.msra.mxu0 0
  %337 = vmatprep.subr.bf16.mxu0 0
  %338 = vmatpush2.bf16.msra.mxu0 0
  %339 = vmatprep.subr.bf16.mxu0 0
  %340 = vmatpush2.bf16.msra.mxu0 0
  %341 = vmatprep.subr.bf16.mxu0 0
  %342 = vmatpush2.bf16.msra.mxu0 0
  %343 = vmatprep.subr.bf16.mxu0 0
  %344 = vmatpush2.bf16.msra.mxu0 0
  %345 = vmatprep.mubr.bf16.mxu0 0
  %346 = vmatmul.mubr.bf16.gmra.mxu0 %v308
  %v347 = vpop.f32.mrf.mxu0
  %v348 = vadd.f32 0.0, %v347
  %v349 = vpop.f32.mrf.mxu0
  %v350 = vpop.f32.mrf.mxu0
  %v351 = vadd.f32 0.0, %v350
  %v352 = vpop.f32.mrf.mxu0
  %353 = vdwg.mxu0
  %v356 = vunpack.c.l.b16 %v278
  %v357 = vunpack.c.l.b16 %v279
  %v358 = vpack.c.b16 %v357, %v356
  %v363 = vunpack.c.l.b16 %v280
  %v364 = vunpack.c.l.b16 %v281
  %v365 = vunpack.c.l.b16 %v282
  %v366 = vunpack.c.l.b16 %v283
  %v367 = vpack.c.b16 %v364, %v363
  %v368 = vpack.c.b16 %v366, %v365
  %v371 = vsel %vm54, %v358, 0
  %v374 = vsel %vm58, %v368, 0
  %376 = vmatprep.subr.bf16.mxu0 0
  %377 = vmatpush1.bf16.msra.mxu0 0
  %378 = vmatprep.subr.bf16.mxu0 0
  %379 = vmatpush1.bf16.msra.mxu0 0
  %380 = vmatprep.subr.bf16.mxu0 0
  %381 = vmatpush1.bf16.msra.mxu0 0
  %382 = vmatprep.subr.bf16.mxu0 0
  %383 = vmatpush1.bf16.msra.mxu0 0
  %384 = vmatprep.subr.bf16.mxu0 0
  %385 = vmatpush1.bf16.msra.mxu0 0
  %386 = vmatprep.subr.bf16.mxu0 0
  %387 = vmatpush1.bf16.msra.mxu0 0
  %388 = vmatprep.subr.bf16.mxu0 0
  %389 = vmatpush1.bf16.msra.mxu0 %v374
  %390 = vmatprep.subr.bf16.mxu0 0
  %391 = vmatpush1.bf16.msra.mxu0 %v367
  %392 = vmatprep.subr.bf16.mxu0 0
  %393 = vmatpush2.bf16.msra.mxu0 0
  %394 = vmatprep.subr.bf16.mxu0 0
  %395 = vmatpush2.bf16.msra.mxu0 0
  %396 = vmatprep.subr.bf16.mxu0 0
  %397 = vmatpush2.bf16.msra.mxu0 0
  %398 = vmatprep.subr.bf16.mxu0 0
  %399 = vmatpush2.bf16.msra.mxu0 0
  %400 = vmatprep.subr.bf16.mxu0 0
  %401 = vmatpush2.bf16.msra.mxu0 0
  %402 = vmatprep.subr.bf16.mxu0 0
  %403 = vmatpush2.bf16.msra.mxu0 0
  %404 = vmatprep.subr.bf16.mxu0 0
  %405 = vmatpush2.bf16.msra.mxu0 0
  %406 = vmatprep.subr.bf16.mxu0 0
  %407 = vmatpush2.bf16.msra.mxu0 0
  %408 = vmatprep.mubr.bf16.mxu0 0
  %409 = vmatmul.mubr.bf16.gmra.mxu0 %v371
  %v410 = vpop.f32.mrf.mxu0
  %v411 = vadd.f32 %v348, %v410
  %v412 = vpop.f32.mrf.mxu0
  %v413 = vpop.f32.mrf.mxu0
  %v414 = vadd.f32 %v351, %v413
  %v415 = vpop.f32.mrf.mxu0
  %416 = vdwg.mxu0
  %v417 = vld [vmem:[%s277 + $0x4] sm:$0xf]
  %v418 = vld [vmem:[%s167] sm:$0xf]
  %v419 = vld [vmem:[%s167 + $0x4] sm:$0xf]
  %v420 = vld [vmem:[%s167 + $0x8] sm:$0xf]
  %v421 = vld [vmem:[%s167 + $0xc] sm:$0x7]
  %v423 = vunpack.c.l.b16 %v417
  %v424 = vpack.c.b16 %v423, %v356
  %v426 = vshrl.u32 %v424, 16
  %v428 = vshll.u32 %v424, 16
  %v430 = vrot.slane %v428, 1
  %v431 = vor.u32 %v426, %v430
  %v436 = vunpack.c.l.b16 %v418
  %v437 = vunpack.c.l.b16 %v419
  %v438 = vunpack.c.l.b16 %v420
  %v439 = vunpack.c.l.b16 %v421
  %v440 = vpack.c.b16 %v437, %v436
  %v441 = vpack.c.b16 %v439, %v438
  %v444 = vsel %vm54, %v431, 0
  %v447 = vsel %vm58, %v441, 0
  %449 = vmatprep.subr.bf16.mxu0 0
  %450 = vmatpush1.bf16.msra.mxu0 0
  %451 = vmatprep.subr.bf16.mxu0 0
  %452 = vmatpush1.bf16.msra.mxu0 0
  %453 = vmatprep.subr.bf16.mxu0 0
  %454 = vmatpush1.bf16.msra.mxu0 0
  %455 = vmatprep.subr.bf16.mxu0 0
  %456 = vmatpush1.bf16.msra.mxu0 0
  %457 = vmatprep.subr.bf16.mxu0 0
  %458 = vmatpush1.bf16.msra.mxu0 0
  %459 = vmatprep.subr.bf16.mxu0 0
  %460 = vmatpush1.bf16.msra.mxu0 0
  %461 = vmatprep.subr.bf16.mxu0 0
  %462 = vmatpush1.bf16.msra.mxu0 %v447
  %463 = vmatprep.subr.bf16.mxu0 0
  %464 = vmatpush1.bf16.msra.mxu0 %v440
  %465 = vmatprep.subr.bf16.mxu0 0
  %466 = vmatpush2.bf16.msra.mxu0 0
  %467 = vmatprep.subr.bf16.mxu0 0
  %468 = vmatpush2.bf16.msra.mxu0 0
  %469 = vmatprep.subr.bf16.mxu0 0
  %470 = vmatpush2.bf16.msra.mxu0 0
  %471 = vmatprep.subr.bf16.mxu0 0
  %472 = vmatpush2.bf16.msra.mxu0 0
  %473 = vmatprep.subr.bf16.mxu0 0
  %474 = vmatpush2.bf16.msra.mxu0 0
  %475 = vmatprep.subr.bf16.mxu0 0
  %476 = vmatpush2.bf16.msra.mxu0 0
  %477 = vmatprep.subr.bf16.mxu0 0
  %478 = vmatpush2.bf16.msra.mxu0 0
  %479 = vmatprep.subr.bf16.mxu0 0
  %480 = vmatpush2.bf16.msra.mxu0 0
  %481 = vmatprep.mubr.bf16.mxu0 0
  %482 = vmatmul.mubr.bf16.gmra.mxu0 %v444
  %v483 = vpop.f32.mrf.mxu0
  %v484 = vadd.f32 0.0, %v483
  %v485 = vpop.f32.mrf.mxu0
  %v486 = vpop.f32.mrf.mxu0
  %v487 = vadd.f32 0.0, %v486
  %v488 = vpop.f32.mrf.mxu0
  %489 = vdwg.mxu0
  %v490 = vadd.f32 %v411, %v484
  %v491 = vadd.f32 %v414, %v487
  %v492 = vld [vmem:[%s2] sm:$0x1]
  %v494 = vlaneseq
  %v495 = vshrl.u32 %v494, 7
  %v496 = vsub.s32 0, %v495
  %v497 = vrot.slane %v492, %v496
  %v499 = vadd.f32 %v490, %v497
  %v500 = vadd.f32 %v491, %v497
  %s501 = scalar_lea.vmem [#allocation2], 16
  %502 = vst.msk [vmem:[%s501] sm:$0xff] %vm251, %v499
  %503 = vst.msk [vmem:[%s501 + $0x8] sm:$0x3f] %vm253, %v500
  %v504 = vsel %vm251, %v499, 0.0
  %v505 = vsel %vm253, %v500, 0.0
  %v506 = vadd.f32 %v504, %v505
  %v507 = vrot.slane %v506, 4
  %v508 = vadd.f32 %v506, %v507
  %v509 = vrot.slane %v508, 2
  %v510 = vadd.f32 %v508, %v509
  %v511 = vrot.slane %v510, 1
  %v512 = vadd.f32 %v510, %v511
  %v513 = vadd.f32 %v264, %v512
  %v514 = vmul.f32 %v499, %v499
  %v515 = vmul.f32 %v500, %v500
  %v516 = vsel %vm251, %v514, 0.0
  %v517 = vsel %vm253, %v515, 0.0
  %v518 = vadd.f32 %v516, %v517
  %v519 = vrot.slane %v518, 4
  %v520 = vadd.f32 %v518, %v519
  %v521 = vrot.slane %v520, 2
  %v522 = vadd.f32 %v520, %v521
  %v523 = vrot.slane %v522, 1
  %v524 = vadd.f32 %v522, %v523
  %v525 = vadd.f32 %v276, %v524
  %v526 = vld [vmem:[%s3] sm:$0xff]
  %v527 = vld [vmem:[%s3 + $0x8] sm:$0xff]
  %v528 = vld [vmem:[%s3 + $0x10] sm:$0xff]
  %v529 = vld [vmem:[%s3 + $0x18] sm:$0xff]
  %v530 = vld [vmem:[%s3 + $0x20] sm:$0xff]
  %v531 = vld [vmem:[%s3 + $0x28] sm:$0xff]
  %v532 = vld [vmem:[%s3 + $0x30] sm:$0xff]
  %v533 = vld [vmem:[%s3 + $0x38] sm:$0xff]
  %v534 = vld [vmem:[%s3 + $0x40] sm:$0xff]
  %v535 = vld [vmem:[%s3 + $0x48] sm:$0xff]
  %v536 = vld [vmem:[%s3 + $0x50] sm:$0xff]
  %v537 = vld [vmem:[%s3 + $0x58] sm:$0xff]
  %v538 = vld [vmem:[%s3 + $0x60] sm:$0xff]
  %v539 = vld [vmem:[%s3 + $0x68] sm:$0xff]
  %v541 = vsel %vm251, %v513, 0
  %543 = vmatprep.subr.mxu0 0.0
  %544 = vmatpush1.msra.mxu0 0.0
  %545 = vmatprep.subr.mxu0 0.0
  %546 = vmatpush1.msra.mxu0 0.0
  %547 = vmatprep.subr.mxu0 0.0
  %548 = vmatpush1.msra.mxu0 %v539
  %549 = vmatprep.subr.mxu0 0.0
  %550 = vmatpush1.msra.mxu0 %v538
  %551 = vmatprep.subr.mxu0 0.0
  %552 = vmatpush1.msra.mxu0 %v537
  %553 = vmatprep.subr.mxu0 0.0
  %554 = vmatpush1.msra.mxu0 %v536
  %555 = vmatprep.subr.mxu0 0.0
  %556 = vmatpush1.msra.mxu0 %v535
  %557 = vmatprep.subr.mxu0 0.0
  %558 = vmatpush1.msra.mxu0 %v534
  %559 = vmatprep.subr.mxu0 0.0
  %560 = vmatpush1.msra.mxu0 %v533
  %561 = vmatprep.subr.mxu0 0.0
  %562 = vmatpush1.msra.mxu0 %v532
  %563 = vmatprep.subr.mxu0 0.0
  %564 = vmatpush1.msra.mxu0 %v531
  %565 = vmatprep.subr.mxu0 0.0
  %566 = vmatpush1.msra.mxu0 %v530
  %567 = vmatprep.subr.mxu0 0.0
  %568 = vmatpush1.msra.mxu0 %v529
  %569 = vmatprep.subr.mxu0 0.0
  %570 = vmatpush1.msra.mxu0 %v528
  %571 = vmatprep.subr.mxu0 0.0
  %572 = vmatpush1.msra.mxu0 %v527
  %573 = vmatprep.subr.mxu0 0.0
  %574 = vmatpush1.msra.mxu0 %v526
  %575 = vmatprep.subr.mxu0 0.0
  %576 = vmatpush2.msra.mxu0 0.0
  %577 = vmatprep.subr.mxu0 0.0
  %578 = vmatpush2.msra.mxu0 0.0
  %579 = vmatprep.subr.mxu0 0.0
  %580 = vmatpush2.msra.mxu0 0.0
  %581 = vmatprep.subr.mxu0 0.0
  %582 = vmatpush2.msra.mxu0 0.0
  %583 = vmatprep.subr.mxu0 0.0
  %584 = vmatpush2.msra.mxu0 0.0
  %585 = vmatprep.subr.mxu0 0.0
  %586 = vmatpush2.msra.mxu0 0.0
  %587 = vmatprep.subr.mxu0 0.0
  %588 = vmatpush2.msra.mxu0 0.0
  %589 = vmatprep.subr.mxu0 0.0
  %590 = vmatpush2.msra.mxu0 0.0
  %591 = vmatprep.subr.mxu0 0.0
  %592 = vmatpush2.msra.mxu0 0.0
  %593 = vmatprep.subr.mxu0 0.0
  %594 = vmatpush2.msra.mxu0 0.0
  %595 = vmatprep.subr.mxu0 0.0
  %596 = vmatpush2.msra.mxu0 0.0
  %597 = vmatprep.subr.mxu0 0.0
  %598 = vmatpush2.msra.mxu0 0.0
  %599 = vmatprep.subr.mxu0 0.0
  %600 = vmatpush2.msra.mxu0 0.0
  %601 = vmatprep.subr.mxu0 0.0
  %602 = vmatpush2.msra.mxu0 0.0
  %603 = vmatprep.subr.mxu0 0.0
  %604 = vmatpush2.msra.mxu0 0.0
  %605 = vmatprep.subr.mxu0 0.0
  %606 = vmatpush2.msra.mxu0 0.0
  %607 = vmatprep.mubr.f32.mxu0 0.0
  %608 = vmatmul.mubr.f32.gmra.mxu0 %v541
  %v609 = vpop.f32.mrf.mxu0
  %v610 = vadd.f32 0.0, %v609
  %v611 = vpop.f32.mrf.mxu0
  %612 = vdwg.mxu0
  %v614 = vsel %vm251, %v525, 0
  %616 = vmatprep.subr.mxu0 0.0
  %617 = vmatpush1.msra.mxu0 0.0
  %618 = vmatprep.subr.mxu0 0.0
  %619 = vmatpush1.msra.mxu0 0.0
  %620 = vmatprep.subr.mxu0 0.0
  %621 = vmatpush1.msra.mxu0 %v539
  %622 = vmatprep.subr.mxu0 0.0
  %623 = vmatpush1.msra.mxu0 %v538
  %624 = vmatprep.subr.mxu0 0.0
  %625 = vmatpush1.msra.mxu0 %v537
  %626 = vmatprep.subr.mxu0 0.0
  %627 = vmatpush1.msra.mxu0 %v536
  %628 = vmatprep.subr.mxu0 0.0
  %629 = vmatpush1.msra.mxu0 %v535
  %630 = vmatprep.subr.mxu0 0.0
  %631 = vmatpush1.msra.mxu0 %v534
  %632 = vmatprep.subr.mxu0 0.0
  %633 = vmatpush1.msra.mxu0 %v533
  %634 = vmatprep.subr.mxu0 0.0
  %635 = vmatpush1.msra.mxu0 %v532
  %636 = vmatprep.subr.mxu0 0.0
  %637 = vmatpush1.msra.mxu0 %v531
  %638 = vmatprep.subr.mxu0 0.0
  %639 = vmatpush1.msra.mxu0 %v530
  %640 = vmatprep.subr.mxu0 0.0
  %641 = vmatpush1.msra.mxu0 %v529
  %642 = vmatprep.subr.mxu0 0.0
  %643 = vmatpush1.msra.mxu0 %v528
  %644 = vmatprep.subr.mxu0 0.0
  %645 = vmatpush1.msra.mxu0 %v527
  %646 = vmatprep.subr.mxu0 0.0
  %647 = vmatpush1.msra.mxu0 %v526
  %648 = vmatprep.subr.mxu0 0.0
  %649 = vmatpush2.msra.mxu0 0.0
  %650 = vmatprep.subr.mxu0 0.0
  %651 = vmatpush2.msra.mxu0 0.0
  %652 = vmatprep.subr.mxu0 0.0
  %653 = vmatpush2.msra.mxu0 0.0
  %654 = vmatprep.subr.mxu0 0.0
  %655 = vmatpush2.msra.mxu0 0.0
  %656 = vmatprep.subr.mxu0 0.0
  %657 = vmatpush2.msra.mxu0 0.0
  %658 = vmatprep.subr.mxu0 0.0
  %659 = vmatpush2.msra.mxu0 0.0
  %660 = vmatprep.subr.mxu0 0.0
  %661 = vmatpush2.msra.mxu0 0.0
  %662 = vmatprep.subr.mxu0 0.0
  %663 = vmatpush2.msra.mxu0 0.0
  %664 = vmatprep.subr.mxu0 0.0
  %665 = vmatpush2.msra.mxu0 0.0
  %666 = vmatprep.subr.mxu0 0.0
  %667 = vmatpush2.msra.mxu0 0.0
  %668 = vmatprep.subr.mxu0 0.0
  %669 = vmatpush2.msra.mxu0 0.0
  %670 = vmatprep.subr.mxu0 0.0
  %671 = vmatpush2.msra.mxu0 0.0
  %672 = vmatprep.subr.mxu0 0.0
  %673 = vmatpush2.msra.mxu0 0.0
  %674 = vmatprep.subr.mxu0 0.0
  %675 = vmatpush2.msra.mxu0 0.0
  %676 = vmatprep.subr.mxu0 0.0
  %677 = vmatpush2.msra.mxu0 0.0
  %678 = vmatprep.subr.mxu0 0.0
  %679 = vmatpush2.msra.mxu0 0.0
  %680 = vmatprep.mubr.f32.mxu0 0.0
  %681 = vmatmul.mubr.f32.gmra.mxu0 %v614
  %v682 = vpop.f32.mrf.mxu0
  %v683 = vadd.f32 0.0, %v682
  %v684 = vpop.f32.mrf.mxu0
  %685 = vdwg.mxu0
  %v686 = vmul.f32 %v610, 0.0025510204
  %v687 = vmul.f32 %v683, 0.0025510204
  %v688 = vmul.f32 %v686, %v686
  %v689 = vsub.f32 %v687, %v688
  %v690 = vmax.f32 %v689, 0.0
  %v691 = vld [vmem:[%s5] sm:$0x1]
  %v692 = vld [vmem:[%s5 + $0x1] sm:$0x1]
  %v693 = vadd.f32 %v690, 1e-05
  %v694 = vrsqrt.pop %v693
  %v695 = vmul.f32 %v691, %v694
  %v696 = vmul.f32 %v686, %v695
  %v697 = vsub.f32 %v692, %v696
  %v698 = vld [vmem:[%s4] sm:$0xff]
  %vm699 = vcmask 64512
  %v701 = vsel %vm699, %v695, 0
  %703 = vmatprep.subr.mxu0 0.0
  %704 = vmatpush1.msra.mxu0 0.0
  %705 = vmatprep.subr.mxu0 0.0
  %706 = vmatpush1.msra.mxu0 0.0
  %707 = vmatprep.subr.mxu0 0.0
  %708 = vmatpush1.msra.mxu0 0.0
  %709 = vmatprep.subr.mxu0 0.0
  %710 = vmatpush1.msra.mxu0 0.0
  %711 = vmatprep.subr.mxu0 0.0
  %712 = vmatpush1.msra.mxu0 0.0
  %713 = vmatprep.subr.mxu0 0.0
  %714 = vmatpush1.msra.mxu0 0.0
  %715 = vmatprep.subr.mxu0 0.0
  %716 = vmatpush1.msra.mxu0 0.0
  %717 = vmatprep.subr.mxu0 0.0
  %718 = vmatpush1.msra.mxu0 0.0
  %719 = vmatprep.subr.mxu0 0.0
  %720 = vmatpush1.msra.mxu0 0.0
  %721 = vmatprep.subr.mxu0 0.0
  %722 = vmatpush1.msra.mxu0 0.0
  %723 = vmatprep.subr.mxu0 0.0
  %724 = vmatpush1.msra.mxu0 0.0
  %725 = vmatprep.subr.mxu0 0.0
  %726 = vmatpush1.msra.mxu0 0.0
  %727 = vmatprep.subr.mxu0 0.0
  %728 = vmatpush1.msra.mxu0 0.0
  %729 = vmatprep.subr.mxu0 0.0
  %730 = vmatpush1.msra.mxu0 0.0
  %731 = vmatprep.subr.mxu0 0.0
  %732 = vmatpush1.msra.mxu0 0.0
  %733 = vmatprep.subr.mxu0 0.0
  %734 = vmatpush1.msra.mxu0 %v698
  %735 = vmatprep.subr.mxu0 0.0
  %736 = vmatpush2.msra.mxu0 0.0
  %737 = vmatprep.subr.mxu0 0.0
  %738 = vmatpush2.msra.mxu0 0.0
  %739 = vmatprep.subr.mxu0 0.0
  %740 = vmatpush2.msra.mxu0 0.0
  %741 = vmatprep.subr.mxu0 0.0
  %742 = vmatpush2.msra.mxu0 0.0
  %743 = vmatprep.subr.mxu0 0.0
  %744 = vmatpush2.msra.mxu0 0.0
  %745 = vmatprep.subr.mxu0 0.0
  %746 = vmatpush2.msra.mxu0 0.0
  %747 = vmatprep.subr.mxu0 0.0
  %748 = vmatpush2.msra.mxu0 0.0
  %749 = vmatprep.subr.mxu0 0.0
  %750 = vmatpush2.msra.mxu0 0.0
  %751 = vmatprep.subr.mxu0 0.0
  %752 = vmatpush2.msra.mxu0 0.0
  %753 = vmatprep.subr.mxu0 0.0
  %754 = vmatpush2.msra.mxu0 0.0
  %755 = vmatprep.subr.mxu0 0.0
  %756 = vmatpush2.msra.mxu0 0.0
  %757 = vmatprep.subr.mxu0 0.0
  %758 = vmatpush2.msra.mxu0 0.0
  %759 = vmatprep.subr.mxu0 0.0
  %760 = vmatpush2.msra.mxu0 0.0
  %761 = vmatprep.subr.mxu0 0.0
  %762 = vmatpush2.msra.mxu0 0.0
  %763 = vmatprep.subr.mxu0 0.0
  %764 = vmatpush2.msra.mxu0 0.0
  %765 = vmatprep.subr.mxu0 0.0
  %766 = vmatpush2.msra.mxu0 0.0
  %767 = vmatprep.mubr.f32.mxu0 0.0
  %768 = vmatmul.mubr.f32.gmra.mxu0 %v701
  %v769 = vpop.f32.mrf.mxu0
  %v770 = vadd.f32 0.0, %v769
  %v771 = vpop.f32.mrf.mxu0
  %772 = vdwg.mxu0
  %v774 = vsel %vm699, %v697, 0
  %776 = vmatprep.subr.mxu0 0.0
  %777 = vmatpush1.msra.mxu0 0.0
  %778 = vmatprep.subr.mxu0 0.0
  %779 = vmatpush1.msra.mxu0 0.0
  %780 = vmatprep.subr.mxu0 0.0
  %781 = vmatpush1.msra.mxu0 0.0
  %782 = vmatprep.subr.mxu0 0.0
  %783 = vmatpush1.msra.mxu0 0.0
  %784 = vmatprep.subr.mxu0 0.0
  %785 = vmatpush1.msra.mxu0 0.0
  %786 = vmatprep.subr.mxu0 0.0
  %787 = vmatpush1.msra.mxu0 0.0
  %788 = vmatprep.subr.mxu0 0.0
  %789 = vmatpush1.msra.mxu0 0.0
  %790 = vmatprep.subr.mxu0 0.0
  %791 = vmatpush1.msra.mxu0 0.0
  %792 = vmatprep.subr.mxu0 0.0
  %793 = vmatpush1.msra.mxu0 0.0
  %794 = vmatprep.subr.mxu0 0.0
  %795 = vmatpush1.msra.mxu0 0.0
  %796 = vmatprep.subr.mxu0 0.0
  %797 = vmatpush1.msra.mxu0 0.0
  %798 = vmatprep.subr.mxu0 0.0
  %799 = vmatpush1.msra.mxu0 0.0
  %800 = vmatprep.subr.mxu0 0.0
  %801 = vmatpush1.msra.mxu0 0.0
  %802 = vmatprep.subr.mxu0 0.0
  %803 = vmatpush1.msra.mxu0 0.0
  %804 = vmatprep.subr.mxu0 0.0
  %805 = vmatpush1.msra.mxu0 0.0
  %806 = vmatprep.subr.mxu0 0.0
  %807 = vmatpush1.msra.mxu0 %v698
  %808 = vmatprep.subr.mxu0 0.0
  %809 = vmatpush2.msra.mxu0 0.0
  %810 = vmatprep.subr.mxu0 0.0
  %811 = vmatpush2.msra.mxu0 0.0
  %812 = vmatprep.subr.mxu0 0.0
  %813 = vmatpush2.msra.mxu0 0.0
  %814 = vmatprep.subr.mxu0 0.0
  %815 = vmatpush2.msra.mxu0 0.0
  %816 = vmatprep.subr.mxu0 0.0
  %817 = vmatpush2.msra.mxu0 0.0
  %818 = vmatprep.subr.mxu0 0.0
  %819 = vmatpush2.msra.mxu0 0.0
  %820 = vmatprep.subr.mxu0 0.0
  %821 = vmatpush2.msra.mxu0 0.0
  %822 = vmatprep.subr.mxu0 0.0
  %823 = vmatpush2.msra.mxu0 0.0
  %824 = vmatprep.subr.mxu0 0.0
  %825 = vmatpush2.msra.mxu0 0.0
  %826 = vmatprep.subr.mxu0 0.0
  %827 = vmatpush2.msra.mxu0 0.0
  %828 = vmatprep.subr.mxu0 0.0
  %829 = vmatpush2.msra.mxu0 0.0
  %830 = vmatprep.subr.mxu0 0.0
  %831 = vmatpush2.msra.mxu0 0.0
  %832 = vmatprep.subr.mxu0 0.0
  %833 = vmatpush2.msra.mxu0 0.0
  %834 = vmatprep.subr.mxu0 0.0
  %835 = vmatpush2.msra.mxu0 0.0
  %836 = vmatprep.subr.mxu0 0.0
  %837 = vmatpush2.msra.mxu0 0.0
  %838 = vmatprep.subr.mxu0 0.0
  %839 = vmatpush2.msra.mxu0 0.0
  %840 = vmatprep.mubr.f32.mxu0 0.0
  %841 = vmatmul.mubr.f32.gmra.mxu0 %v774
  %v842 = vpop.f32.mrf.mxu0
  %v843 = vadd.f32 0.0, %v842
  %v844 = vpop.f32.mrf.mxu0
  %845 = vdwg.mxu0
  %v846 = vld [vmem:[#allocation2] sm:$0xff]
  %v847 = vld [vmem:[#allocation2 + $0x8] sm:$0x3f]
  %v848 = vlaneseq
  %v849 = vshrl.u32 %v848, 7
  %v850 = vsub.s32 0, %v849
  %v851 = vrot.slane %v770, %v850
  %v852 = vmul.f32 %v846, %v851
  %v853 = vmul.f32 %v847, %v851
  %v854 = vlaneseq
  %v855 = vshrl.u32 %v854, 7
  %v856 = vsub.s32 0, %v855
  %v857 = vrot.slane %v843, %v856
  %v858 = vadd.f32 %v852, %v857
  %v859 = vadd.f32 %v853, %v857
  %vm860 = vcmp.ge.f32.partialorder %v858, 0.0
  %vm861 = vcmp.ge.f32.partialorder %v859, 0.0
  %v862 = vmul.f32 %v858, 0.01
  %v863 = vmul.f32 %v859, 0.01
  %v864 = vsel %vm860, %v858, %v862
  %v865 = vsel %vm861, %v859, %v863
  %v866 = vpack.c.bf16 %v865, %v864
  %v868 = vunpack.c.l.b16 %v866
  %v869 = vunpack.c.h.b16 %v866
  %v870 = vpack.c.b16 %v868, %v868
  %v871 = vpack.c.b16 %v869, %v869
  %vm874 = vcmask 912384
  %875 = vst.msk [vmem:[%s6] sm:$0xf] %vm874, %v870
  %vm876 = vcmask 911360
  %877 = vst.msk [vmem:[%s6 + $0x4] sm:$0x7] %vm876, %v871
  %v878 = vld [vmem:[%s501] sm:$0xff]
  %v879 = vld [vmem:[%s501 + $0x8] sm:$0x3f]
  %v880 = vmul.f32 %v878, %v851
  %v881 = vmul.f32 %v879, %v851
  %v882 = vadd.f32 %v880, %v857
  %v883 = vadd.f32 %v881, %v857
  %vm884 = vcmp.ge.f32.partialorder %v882, 0.0
  %vm885 = vcmp.ge.f32.partialorder %v883, 0.0
  %v886 = vmul.f32 %v882, 0.01
  %v887 = vmul.f32 %v883, 0.01
  %v888 = vsel %vm884, %v882, %v886
  %v889 = vsel %vm885, %v883, %v887
  %v890 = vpack.c.bf16 %v889, %v888
  %v892 = vunpack.c.l.b16 %v890
  %v893 = vunpack.c.h.b16 %v890
  %v894 = vpack.c.b16 %v892, %v892
  %v895 = vpack.c.b16 %v893, %v893
  %s898 = scalar_lea.vmem %s6, 8
  %899 = vst.msk [vmem:[%s898] sm:$0xf] %vm874, %v894
  %900 = vst.msk [vmem:[%s898 + $0x4] sm:$0x7] %vm876, %v895
  // Predicated region
  $region26: #{vae_forward.5} parent=0 // pred_check
    _
  $region27: #{vae_forward.5} parent=0 // pred_check_branch
    %902 = sbr.rel (0) target = $region29
  $region28: #{vae_forward.5} parent=0 // pred_region
    _
  $region29: #{vae_forward.5} parent=0 // pred_fallthru
    _
  // Predicated region
  $region30: #{vae_forward.5} parent=0 // pred_check
    _
  $region31: #{vae_forward.5} parent=0 // pred_check_branch
    %904 = sbr.rel (0) target = $region33
  $region32: #{vae_forward.5} parent=0 // pred_region
    _
  $region33: #{vae_forward.5} parent=0 // pred_fallthru
    _

// kernel: vae_forward.6
$region0: #{vae_forward.6}
  #allocation0 [shape = 'u32[]', space=smem, size = 0x4, offset = 0x4, fixed_abs, tag = 'smem constant byte address 0x4 - core index']
  #allocation1 [shape = 'u32[144,128]{1,0:T(1,128)}', space=vmem, size = 0x12000, scoped, tag = 'internal scratch']
  #allocation2 [shape = 'f32[2,1,7,112]{3,2,1,0:T(8,128)}', space=vmem, size = 0x2000, scoped, tag = 'scratch operand']
  %s0 = inlined_call_operand.vmem [shape: bf16[2,2,8,128], index: 0, kind: input, shape index: {}]
  %s1 = inlined_call_operand.vmem [shape: bf16[3,128,112], index: 1, kind: input, shape index: {}]
  %s2 = inlined_call_operand.vmem [shape: f32[1,112], index: 2, kind: input, shape index: {}]
  %s3 = inlined_call_operand.vmem [shape: f32[112,16], index: 3, kind: input, shape index: {}]
  %s4 = inlined_call_operand.vmem [shape: f32[16,112], index: 4, kind: input, shape index: {}]
  %s5 = inlined_call_operand.vmem [shape: f32[2,16], index: 5, kind: input, shape index: {}]
  %s6 = inlined_call_operand.vmem [shape: bf16[2,1,7,112], index: 6, kind: output, shape index: {}]
  %s7 = sld [smem:[#allocation0]]
  $region34: #{vae_forward.6} parent=0
    _
  %s9 = ssub.s32 1, %s7
  %s10 = scalar_select 0, %s9, %s7
  // Predicated region
  $region2: #{vae_forward.6} parent=0 // pred_check
    _
  $region3: #{vae_forward.6} parent=0 // pred_check_branch
    %12 = sbr.rel (0) target = $region5
  $region4: #{vae_forward.6} parent=0 // pred_region
    _
  $region5: #{vae_forward.6} parent=0 // pred_fallthru
    _
  // Predicated region
  $region6: #{vae_forward.6} parent=0 // pred_check
    _
  $region7: #{vae_forward.6} parent=0 // pred_check_branch
    %14 = sbr.rel (0) target = $region9
  $region8: #{vae_forward.6} parent=0 // pred_region
    _
  $region9: #{vae_forward.6} parent=0 // pred_fallthru
    _
  // Predicated region
  $region10: #{vae_forward.6} parent=0 // pred_check
    _
  $region11: #{vae_forward.6} parent=0 // pred_check_branch
    %16 = sbr.rel (0) target = $region13
  $region12: #{vae_forward.6} parent=0 // pred_region
    _
  $region13: #{vae_forward.6} parent=0 // pred_fallthru
    _
  // Predicated region
  $region14: #{vae_forward.6} parent=0 // pred_check
    _
  $region15: #{vae_forward.6} parent=0 // pred_check_branch
    %18 = sbr.rel (0) target = $region17
  $region16: #{vae_forward.6} parent=0 // pred_region
    _
  $region17: #{vae_forward.6} parent=0 // pred_fallthru
    _
  // Predicated region
  $region18: #{vae_forward.6} parent=0 // pred_check
    _
  $region19: #{vae_forward.6} parent=0 // pred_check_branch
    %20 = sbr.rel (0) target = $region21
  $region20: #{vae_forward.6} parent=0 // pred_region
    _
  $region21: #{vae_forward.6} parent=0 // pred_fallthru
    _
  // Predicated region
  $region22: #{vae_forward.6} parent=0 // pred_check
    _
  $region23: #{vae_forward.6} parent=0 // pred_check_branch
    %22 = sbr.rel (0) target = $region25
  $region24: #{vae_forward.6} parent=0 // pred_region
    _
  $region25: #{vae_forward.6} parent=0 // pred_fallthru
    _
  %v24 = vld [vmem:[%s0] sm:$0xf]
  %v25 = vld [vmem:[%s1] sm:$0xf]
  %v26 = vld [vmem:[%s1 + $0x4] sm:$0xf]
  %v27 = vld [vmem:[%s1 + $0x8] sm:$0xf]
  %v28 = vld [vmem:[%s1 + $0xc] sm:$0xf]
  %v29 = vld [vmem:[%s1 + $0x10] sm:$0xf]
  %v30 = vld [vmem:[%s1 + $0x14] sm:$0xf]
  %v31 = vld [vmem:[%s1 + $0x18] sm:$0xf]
  %v32 = vld [vmem:[%s1 + $0x1c] sm:$0xf]
  %v33 = vld [vmem:[%s1 + $0x20] sm:$0xf]
  %v34 = vld [vmem:[%s1 + $0x24] sm:$0xf]
  %v35 = vld [vmem:[%s1 + $0x28] sm:$0xf]
  %v36 = vld [vmem:[%s1 + $0x2c] sm:$0xf]
  %v37 = vld [vmem:[%s1 + $0x30] sm:$0xf]
  %v38 = vld [vmem:[%s1 + $0x34] sm:$0xf]
  %v39 = vld [vmem:[%s1 + $0x38] sm:$0xf]
  %v40 = vld [vmem:[%s1 + $0x3c] sm:$0xf]
  %s41 = scalar_lea.vmem %s0, 4
  %v42 = vld [vmem:[%s41] sm:$0xf]
  %s43 = scalar_lea.vmem %s1, 64
  %v44 = vld [vmem:[%s43] sm:$0xf]
  %v45 = vld [vmem:[%s43 + $0x4] sm:$0xf]
  %v46 = vld [vmem:[%s43 + $0x8] sm:$0xf]
  %v47 = vld [vmem:[%s43 + $0xc] sm:$0xf]
  %v48 = vld [vmem:[%s43 + $0x10] sm:$0xf]
  %v49 = vld [vmem:[%s43 + $0x14] sm:$0xf]
  %v50 = vld [vmem:[%s43 + $0x18] sm:$0xf]
  %v51 = vld [vmem:[%s43 + $0x1c] sm:$0xf]
  %v52 = vld [vmem:[%s43 + $0x20] sm:$0xf]
  %v53 = vld [vmem:[%s43 + $0x24] sm:$0xf]
  %v54 = vld [vmem:[%s43 + $0x28] sm:$0xf]
  %v55 = vld [vmem:[%s43 + $0x2c] sm:$0xf]
  %v56 = vld [vmem:[%s43 + $0x30] sm:$0xf]
  %v57 = vld [vmem:[%s43 + $0x34] sm:$0xf]
  %v58 = vld [vmem:[%s43 + $0x38] sm:$0xf]
  %v59 = vld [vmem:[%s43 + $0x3c] sm:$0xf]
  %v76 = vunpack.c.l.b16 %v44
  %v77 = vunpack.c.l.b16 %v45
  %v78 = vunpack.c.l.b16 %v46
  %v79 = vunpack.c.l.b16 %v47
  %v80 = vunpack.c.l.b16 %v48
  %v81 = vunpack.c.l.b16 %v49
  %v82 = vunpack.c.l.b16 %v50
  %v83 = vunpack.c.l.b16 %v51
  %v84 = vunpack.c.l.b16 %v52
  %v85 = vunpack.c.l.b16 %v53
  %v86 = vunpack.c.l.b16 %v54
  %v87 = vunpack.c.l.b16 %v55
  %v88 = vunpack.c.l.b16 %v56
  %v89 = vunpack.c.l.b16 %v57
  %v90 = vunpack.c.l.b16 %v58
  %v91 = vunpack.c.l.b16 %v59
  %v92 = vpack.c.b16 %v77, %v76
  %v93 = vpack.c.b16 %v79, %v78
  %v94 = vpack.c.b16 %v81, %v80
  %v95 = vpack.c.b16 %v83, %v82
  %v96 = vpack.c.b16 %v85, %v84
  %v97 = vpack.c.b16 %v87, %v86
  %v98 = vpack.c.b16 %v89, %v88
  %v99 = vpack.c.b16 %v91, %v90
  %108 = vmatprep.subr.bf16.mxu0 0
  %109 = vmatpush1.bf16.msra.mxu0 %v99
  %110 = vmatprep.subr.bf16.mxu0 0
  %111 = vmatpush1.bf16.msra.mxu0 %v98
  %112 = vmatprep.subr.bf16.mxu0 0
  %113 = vmatpush1.bf16.msra.mxu0 %v97
  %114 = vmatprep.subr.bf16.mxu0 0
  %115 = vmatpush1.bf16.msra.mxu0 %v96
  %116 = vmatprep.subr.bf16.mxu0 0
  %117 = vmatpush1.bf16.msra.mxu0 %v95
  %118 = vmatprep.subr.bf16.mxu0 0
  %119 = vmatpush1.bf16.msra.mxu0 %v94
  %120 = vmatprep.subr.bf16.mxu0 0
  %121 = vmatpush1.bf16.msra.mxu0 %v93
  %122 = vmatprep.subr.bf16.mxu0 0
  %123 = vmatpush1.bf16.msra.mxu0 %v92
  %124 = vmatprep.subr.bf16.mxu0 0
  %125 = vmatpush2.bf16.msra.mxu0 0
  %126 = vmatprep.subr.bf16.mxu0 0
  %127 = vmatpush2.bf16.msra.mxu0 0
  %128 = vmatprep.subr.bf16.mxu0 0
  %129 = vmatpush2.bf16.msra.mxu0 0
  %130 = vmatprep.subr.bf16.mxu0 0
  %131 = vmatpush2.bf16.msra.mxu0 0
  %132 = vmatprep.subr.bf16.mxu0 0
  %133 = vmatpush2.bf16.msra.mxu0 0
  %134 = vmatprep.subr.bf16.mxu0 0
  %135 = vmatpush2.bf16.msra.mxu0 0
  %136 = vmatprep.subr.bf16.mxu0 0
  %137 = vmatpush2.bf16.msra.mxu0 0
  %138 = vmatprep.subr.bf16.mxu0 0
  %139 = vmatpush2.bf16.msra.mxu0 0
  %140 = vmatprep.mubr.bf16.mxu0 0
  %141 = vmatmul.mubr.bf16.gmra.mxu0 %v42
  %v142 = vpop.f32.mrf.mxu0
  %v143 = vadd.f32 0.0, %v142
  %v144 = vpop.f32.mrf.mxu0
  %v145 = vpop.f32.mrf.mxu0
  %v146 = vpop.f32.mrf.mxu0
  %147 = vdwg.mxu0
  %v164 = vunpack.c.l.b16 %v25
  %v165 = vunpack.c.l.b16 %v26
  %v166 = vunpack.c.l.b16 %v27
  %v167 = vunpack.c.l.b16 %v28
  %v168 = vunpack.c.l.b16 %v29
  %v169 = vunpack.c.l.b16 %v30
  %v170 = vunpack.c.l.b16 %v31
  %v171 = vunpack.c.l.b16 %v32
  %v172 = vunpack.c.l.b16 %v33
  %v173 = vunpack.c.l.b16 %v34
  %v174 = vunpack.c.l.b16 %v35
  %v175 = vunpack.c.l.b16 %v36
  %v176 = vunpack.c.l.b16 %v37
  %v177 = vunpack.c.l.b16 %v38
  %v178 = vunpack.c.l.b16 %v39
  %v179 = vunpack.c.l.b16 %v40
  %v180 = vpack.c.b16 %v165, %v164
  %v181 = vpack.c.b16 %v167, %v166
  %v182 = vpack.c.b16 %v169, %v168
  %v183 = vpack.c.b16 %v171, %v170
  %v184 = vpack.c.b16 %v173, %v172
  %v185 = vpack.c.b16 %v175, %v174
  %v186 = vpack.c.b16 %v177, %v176
  %v187 = vpack.c.b16 %v179, %v178
  %196 = vmatprep.subr.bf16.mxu0 0
  %197 = vmatpush1.bf16.msra.mxu0 %v187
  %198 = vmatprep.subr.bf16.mxu0 0
  %199 = vmatpush1.bf16.msra.mxu0 %v186
  %200 = vmatprep.subr.bf16.mxu0 0
  %201 = vmatpush1.bf16.msra.mxu0 %v185
  %202 = vmatprep.subr.bf16.mxu0 0
  %203 = vmatpush1.bf16.msra.mxu0 %v184
  %204 = vmatprep.subr.bf16.mxu0 0
  %205 = vmatpush1.bf16.msra.mxu0 %v183
  %206 = vmatprep.subr.bf16.mxu0 0
  %207 = vmatpush1.bf16.msra.mxu0 %v182
  %208 = vmatprep.subr.bf16.mxu0 0
  %209 = vmatpush1.bf16.msra.mxu0 %v181
  %210 = vmatprep.subr.bf16.mxu0 0
  %211 = vmatpush1.bf16.msra.mxu0 %v180
  %212 = vmatprep.subr.bf16.mxu0 0
  %213 = vmatpush2.bf16.msra.mxu0 0
  %214 = vmatprep.subr.bf16.mxu0 0
  %215 = vmatpush2.bf16.msra.mxu0 0
  %216 = vmatprep.subr.bf16.mxu0 0
  %217 = vmatpush2.bf16.msra.mxu0 0
  %218 = vmatprep.subr.bf16.mxu0 0
  %219 = vmatpush2.bf16.msra.mxu0 0
  %220 = vmatprep.subr.bf16.mxu0 0
  %221 = vmatpush2.bf16.msra.mxu0 0
  %222 = vmatprep.subr.bf16.mxu0 0
  %223 = vmatpush2.bf16.msra.mxu0 0
  %224 = vmatprep.subr.bf16.mxu0 0
  %225 = vmatpush2.bf16.msra.mxu0 0
  %226 = vmatprep.subr.bf16.mxu0 0
  %227 = vmatpush2.bf16.msra.mxu0 0
  %228 = vmatprep.mubr.bf16.mxu0 0
  %229 = vmatmul.mubr.bf16.gmra.mxu0 %v24
  %v230 = vpop.f32.mrf.mxu0
  %v231 = vadd.f32 %v143, %v230
  %v232 = vpop.f32.mrf.mxu0
  %v233 = vpop.f32.mrf.mxu0
  %v234 = vpop.f32.mrf.mxu0
  %235 = vdwg.mxu0
  %s236 = scalar_lea.vmem %s1, 128
  %v237 = vld [vmem:[%s236] sm:$0xf]
  %v238 = vld [vmem:[%s236 + $0x4] sm:$0xf]
  %v239 = vld [vmem:[%s236 + $0x8] sm:$0xf]
  %v240 = vld [vmem:[%s236 + $0xc] sm:$0xf]
  %v241 = vld [vmem:[%s236 + $0x10] sm:$0xf]
  %v242 = vld [vmem:[%s236 + $0x14] sm:$0xf]
  %v243 = vld [vmem:[%s236 + $0x18] sm:$0xf]
  %v244 = vld [vmem:[%s236 + $0x1c] sm:$0xf]
  %v245 = vld [vmem:[%s236 + $0x20] sm:$0xf]
  %v246 = vld [vmem:[%s236 + $0x24] sm:$0xf]
  %v247 = vld [vmem:[%s236 + $0x28] sm:$0xf]
  %v248 = vld [vmem:[%s236 + $0x2c] sm:$0xf]
  %v249 = vld [vmem:[%s236 + $0x30] sm:$0xf]
  %v250 = vld [vmem:[%s236 + $0x34] sm:$0xf]
  %v251 = vld [vmem:[%s236 + $0x38] sm:$0xf]
  %v252 = vld [vmem:[%s236 + $0x3c] sm:$0xf]
  %v254 = vunpack.c.l.b16 %v24
  %v255 = vpack.c.b16 %v254, %v254
  %v257 = vshrl.u32 %v255, 16
  %v259 = vshll.u32 %v255, 16
  %v261 = vrot.slane %v259, 1
  %v262 = vor.u32 %v257, %v261
  %v280 = vunpack.c.l.b16 %v237
  %v281 = vunpack.c.l.b16 %v238
  %v282 = vunpack.c.l.b16 %v239
  %v283 = vunpack.c.l.b16 %v240
  %v284 = vunpack.c.l.b16 %v241
  %v285 = vunpack.c.l.b16 %v242
  %v286 = vunpack.c.l.b16 %v243
  %v287 = vunpack.c.l.b16 %v244
  %v288 = vunpack.c.l.b16 %v245
  %v289 = vunpack.c.l.b16 %v246
  %v290 = vunpack.c.l.b16 %v247
  %v291 = vunpack.c.l.b16 %v248
  %v292 = vunpack.c.l.b16 %v249
  %v293 = vunpack.c.l.b16 %v250
  %v294 = vunpack.c.l.b16 %v251
  %v295 = vunpack.c.l.b16 %v252
  %v296 = vpack.c.b16 %v281, %v280
  %v297 = vpack.c.b16 %v283, %v282
  %v298 = vpack.c.b16 %v285, %v284
  %v299 = vpack.c.b16 %v287, %v286
  %v300 = vpack.c.b16 %v289, %v288
  %v301 = vpack.c.b16 %v291, %v290
  %v302 = vpack.c.b16 %v293, %v292
  %v303 = vpack.c.b16 %v295, %v294
  %312 = vmatprep.subr.bf16.mxu0 0
  %313 = vmatpush1.bf16.msra.mxu0 %v303
  %314 = vmatprep.subr.bf16.mxu0 0
  %315 = vmatpush1.bf16.msra.mxu0 %v302
  %316 = vmatprep.subr.bf16.mxu0 0
  %317 = vmatpush1.bf16.msra.mxu0 %v301
  %318 = vmatprep.subr.bf16.mxu0 0
  %319 = vmatpush1.bf16.msra.mxu0 %v300
  %320 = vmatprep.subr.bf16.mxu0 0
  %321 = vmatpush1.bf16.msra.mxu0 %v299
  %322 = vmatprep.subr.bf16.mxu0 0
  %323 = vmatpush1.bf16.msra.mxu0 %v298
  %324 = vmatprep.subr.bf16.mxu0 0
  %325 = vmatpush1.bf16.msra.mxu0 %v297
  %326 = vmatprep.subr.bf16.mxu0 0
  %327 = vmatpush1.bf16.msra.mxu0 %v296
  %328 = vmatprep.subr.bf16.mxu0 0
  %329 = vmatpush2.bf16.msra.mxu0 0
  %330 = vmatprep.subr.bf16.mxu0 0
  %331 = vmatpush2.bf16.msra.mxu0 0
  %332 = vmatprep.subr.bf16.mxu0 0
  %333 = vmatpush2.bf16.msra.mxu0 0
  %334 = vmatprep.subr.bf16.mxu0 0
  %335 = vmatpush2.bf16.msra.mxu0 0
  %336 = vmatprep.subr.bf16.mxu0 0
  %337 = vmatpush2.bf16.msra.mxu0 0
  %338 = vmatprep.subr.bf16.mxu0 0
  %339 = vmatpush2.bf16.msra.mxu0 0
  %340 = vmatprep.subr.bf16.mxu0 0
  %341 = vmatpush2.bf16.msra.mxu0 0
  %342 = vmatprep.subr.bf16.mxu0 0
  %343 = vmatpush2.bf16.msra.mxu0 0
  %344 = vmatprep.mubr.bf16.mxu0 0
  %345 = vmatmul.mubr.bf16.gmra.mxu0 %v262
  %v346 = vpop.f32.mrf.mxu0
  %v347 = vadd.f32 0.0, %v346
  %v348 = vpop.f32.mrf.mxu0
  %v349 = vpop.f32.mrf.mxu0
  %v350 = vpop.f32.mrf.mxu0
  %351 = vdwg.mxu0
  %v352 = vadd.f32 %v231, %v347
  %v353 = vld [vmem:[%s2] sm:$0x1]
  %v355 = vlaneseq
  %v356 = vshrl.u32 %v355, 7
  %v357 = vsub.s32 0, %v356
  %v358 = vrot.slane %v353, %v357
  %v360 = vadd.f32 %v352, %v358
  %vm361 = vcmask 915456
  %362 = vst.msk [vmem:[#allocation2] sm:$0x7f] %vm361, %v360
  %v363 = vsel %vm361, %v360, 0.0
  %v364 = vrot.slane %v363, 4
  %v365 = vadd.f32 %v363, %v364
  %v366 = vrot.slane %v365, 2
  %v367 = vadd.f32 %v365, %v366
  %v368 = vrot.slane %v367, 1
  %v369 = vadd.f32 %v367, %v368
  %v370 = vadd.f32 %v369, 0.0
  %v371 = vmul.f32 %v360, %v360
  %v372 = vsel %vm361, %v371, 0.0
  %v373 = vrot.slane %v372, 4
  %v374 = vadd.f32 %v372, %v373
  %v375 = vrot.slane %v374, 2
  %v376 = vadd.f32 %v374, %v375
  %v377 = vrot.slane %v376, 1
  %v378 = vadd.f32 %v376, %v377
  %v379 = vadd.f32 %v378, 0.0
  %s380 = scalar_lea.vmem %s0, 8
  %v381 = vld [vmem:[%s380] sm:$0xf]
  %v382 = vld [vmem:[%s1] sm:$0xf]
  %v383 = vld [vmem:[%s1 + $0x4] sm:$0xf]
  %v384 = vld [vmem:[%s1 + $0x8] sm:$0xf]
  %v385 = vld [vmem:[%s1 + $0xc] sm:$0xf]
  %v386 = vld [vmem:[%s1 + $0x10] sm:$0xf]
  %v387 = vld [vmem:[%s1 + $0x14] sm:$0xf]
  %v388 = vld [vmem:[%s1 + $0x18] sm:$0xf]
  %v389 = vld [vmem:[%s1 + $0x1c] sm:$0xf]
  %v390 = vld [vmem:[%s1 + $0x20] sm:$0xf]
  %v391 = vld [vmem:[%s1 + $0x24] sm:$0xf]
  %v392 = vld [vmem:[%s1 + $0x28] sm:$0xf]
  %v393 = vld [vmem:[%s1 + $0x2c] sm:$0xf]
  %v394 = vld [vmem:[%s1 + $0x30] sm:$0xf]
  %v395 = vld [vmem:[%s1 + $0x34] sm:$0xf]
  %v396 = vld [vmem:[%s1 + $0x38] sm:$0xf]
  %v397 = vld [vmem:[%s1 + $0x3c] sm:$0xf]
  %s398 = scalar_lea.vmem %s0, 12
  %v399 = vld [vmem:[%s398] sm:$0xf]
  %v400 = vld [vmem:[%s43] sm:$0xf]
  %v401 = vld [vmem:[%s43 + $0x4] sm:$0xf]
  %v402 = vld [vmem:[%s43 + $0x8] sm:$0xf]
  %v403 = vld [vmem:[%s43 + $0xc] sm:$0xf]
  %v404 = vld [vmem:[%s43 + $0x10] sm:$0xf]
  %v405 = vld [vmem:[%s43 + $0x14] sm:$0xf]
  %v406 = vld [vmem:[%s43 + $0x18] sm:$0xf]
  %v407 = vld [vmem:[%s43 + $0x1c] sm:$0xf]
  %v408 = vld [vmem:[%s43 + $0x20] sm:$0xf]
  %v409 = vld [vmem:[%s43 + $0x24] sm:$0xf]
  %v410 = vld [vmem:[%s43 + $0x28] sm:$0xf]
  %v411 = vld [vmem:[%s43 + $0x2c] sm:$0xf]
  %v412 = vld [vmem:[%s43 + $0x30] sm:$0xf]
  %v413 = vld [vmem:[%s43 + $0x34] sm:$0xf]
  %v414 = vld [vmem:[%s43 + $0x38] sm:$0xf]
  %v415 = vld [vmem:[%s43 + $0x3c] sm:$0xf]
  %v432 = vunpack.c.l.b16 %v400
  %v433 = vunpack.c.l.b16 %v401
  %v434 = vunpack.c.l.b16 %v402
  %v435 = vunpack.c.l.b16 %v403
  %v436 = vunpack.c.l.b16 %v404
  %v437 = vunpack.c.l.b16 %v405
  %v438 = vunpack.c.l.b16 %v406
  %v439 = vunpack.c.l.b16 %v407
  %v440 = vunpack.c.l.b16 %v408
  %v441 = vunpack.c.l.b16 %v409
  %v442 = vunpack.c.l.b16 %v410
  %v443 = vunpack.c.l.b16 %v411
  %v444 = vunpack.c.l.b16 %v412
  %v445 = vunpack.c.l.b16 %v413
  %v446 = vunpack.c.l.b16 %v414
  %v447 = vunpack.c.l.b16 %v415
  %v448 = vpack.c.b16 %v433, %v432
  %v449 = vpack.c.b16 %v435, %v434
  %v450 = vpack.c.b16 %v437, %v436
  %v451 = vpack.c.b16 %v439, %v438
  %v452 = vpack.c.b16 %v441, %v440
  %v453 = vpack.c.b16 %v443, %v442
  %v454 = vpack.c.b16 %v445, %v444
  %v455 = vpack.c.b16 %v447, %v446
  %464 = vmatprep.subr.bf16.mxu0 0
  %465 = vmatpush1.bf16.msra.mxu0 %v455
  %466 = vmatprep.subr.bf16.mxu0 0
  %467 = vmatpush1.bf16.msra.mxu0 %v454
  %468 = vmatprep.subr.bf16.mxu0 0
  %469 = vmatpush1.bf16.msra.mxu0 %v453
  %470 = vmatprep.subr.bf16.mxu0 0
  %471 = vmatpush1.bf16.msra.mxu0 %v452
  %472 = vmatprep.subr.bf16.mxu0 0
  %473 = vmatpush1.bf16.msra.mxu0 %v451
  %474 = vmatprep.subr.bf16.mxu0 0
  %475 = vmatpush1.bf16.msra.mxu0 %v450
  %476 = vmatprep.subr.bf16.mxu0 0
  %477 = vmatpush1.bf16.msra.mxu0 %v449
  %478 = vmatprep.subr.bf16.mxu0 0
  %479 = vmatpush1.bf16.msra.mxu0 %v448
  %480 = vmatprep.subr.bf16.mxu0 0
  %481 = vmatpush2.bf16.msra.mxu0 0
  %482 = vmatprep.subr.bf16.mxu0 0
  %483 = vmatpush2.bf16.msra.mxu0 0
  %484 = vmatprep.subr.bf16.mxu0 0
  %485 = vmatpush2.bf16.msra.mxu0 0
  %486 = vmatprep.subr.bf16.mxu0 0
  %487 = vmatpush2.bf16.msra.mxu0 0
  %488 = vmatprep.subr.bf16.mxu0 0
  %489 = vmatpush2.bf16.msra.mxu0 0
  %490 = vmatprep.subr.bf16.mxu0 0
  %491 = vmatpush2.bf16.msra.mxu0 0
  %492 = vmatprep.subr.bf16.mxu0 0
  %493 = vmatpush2.bf16.msra.mxu0 0
  %494 = vmatprep.subr.bf16.mxu0 0
  %495 = vmatpush2.bf16.msra.mxu0 0
  %496 = vmatprep.mubr.bf16.mxu0 0
  %497 = vmatmul.mubr.bf16.gmra.mxu0 %v399
  %v498 = vpop.f32.mrf.mxu0
  %v499 = vadd.f32 0.0, %v498
  %v500 = vpop.f32.mrf.mxu0
  %v501 = vpop.f32.mrf.mxu0
  %v502 = vpop.f32.mrf.mxu0
  %503 = vdwg.mxu0
  %v520 = vunpack.c.l.b16 %v382
  %v521 = vunpack.c.l.b16 %v383
  %v522 = vunpack.c.l.b16 %v384
  %v523 = vunpack.c.l.b16 %v385
  %v524 = vunpack.c.l.b16 %v386
  %v525 = vunpack.c.l.b16 %v387
  %v526 = vunpack.c.l.b16 %v388
  %v527 = vunpack.c.l.b16 %v389
  %v528 = vunpack.c.l.b16 %v390
  %v529 = vunpack.c.l.b16 %v391
  %v530 = vunpack.c.l.b16 %v392
  %v531 = vunpack.c.l.b16 %v393
  %v532 = vunpack.c.l.b16 %v394
  %v533 = vunpack.c.l.b16 %v395
  %v534 = vunpack.c.l.b16 %v396
  %v535 = vunpack.c.l.b16 %v397
  %v536 = vpack.c.b16 %v521, %v520
  %v537 = vpack.c.b16 %v523, %v522
  %v538 = vpack.c.b16 %v525, %v524
  %v539 = vpack.c.b16 %v527, %v526
  %v540 = vpack.c.b16 %v529, %v528
  %v541 = vpack.c.b16 %v531, %v530
  %v542 = vpack.c.b16 %v533, %v532
  %v543 = vpack.c.b16 %v535, %v534
  %552 = vmatprep.subr.bf16.mxu0 0
  %553 = vmatpush1.bf16.msra.mxu0 %v543
  %554 = vmatprep.subr.bf16.mxu0 0
  %555 = vmatpush1.bf16.msra.mxu0 %v542
  %556 = vmatprep.subr.bf16.mxu0 0
  %557 = vmatpush1.bf16.msra.mxu0 %v541
  %558 = vmatprep.subr.bf16.mxu0 0
  %559 = vmatpush1.bf16.msra.mxu0 %v540
  %560 = vmatprep.subr.bf16.mxu0 0
  %561 = vmatpush1.bf16.msra.mxu0 %v539
  %562 = vmatprep.subr.bf16.mxu0 0
  %563 = vmatpush1.bf16.msra.mxu0 %v538
  %564 = vmatprep.subr.bf16.mxu0 0
  %565 = vmatpush1.bf16.msra.mxu0 %v537
  %566 = vmatprep.subr.bf16.mxu0 0
  %567 = vmatpush1.bf16.msra.mxu0 %v536
  %568 = vmatprep.subr.bf16.mxu0 0
  %569 = vmatpush2.bf16.msra.mxu0 0
  %570 = vmatprep.subr.bf16.mxu0 0
  %571 = vmatpush2.bf16.msra.mxu0 0
  %572 = vmatprep.subr.bf16.mxu0 0
  %573 = vmatpush2.bf16.msra.mxu0 0
  %574 = vmatprep.subr.bf16.mxu0 0
  %575 = vmatpush2.bf16.msra.mxu0 0
  %576 = vmatprep.subr.bf16.mxu0 0
  %577 = vmatpush2.bf16.msra.mxu0 0
  %578 = vmatprep.subr.bf16.mxu0 0
  %579 = vmatpush2.bf16.msra.mxu0 0
  %580 = vmatprep.subr.bf16.mxu0 0
  %581 = vmatpush2.bf16.msra.mxu0 0
  %582 = vmatprep.subr.bf16.mxu0 0
  %583 = vmatpush2.bf16.msra.mxu0 0
  %584 = vmatprep.mubr.bf16.mxu0 0
  %585 = vmatmul.mubr.bf16.gmra.mxu0 %v381
  %v586 = vpop.f32.mrf.mxu0
  %v587 = vadd.f32 %v499, %v586
  %v588 = vpop.f32.mrf.mxu0
  %v589 = vpop.f32.mrf.mxu0
  %v590 = vpop.f32.mrf.mxu0
  %591 = vdwg.mxu0
  %v592 = vld [vmem:[%s236] sm:$0xf]
  %v593 = vld [vmem:[%s236 + $0x4] sm:$0xf]
  %v594 = vld [vmem:[%s236 + $0x8] sm:$0xf]
  %v595 = vld [vmem:[%s236 + $0xc] sm:$0xf]
  %v596 = vld [vmem:[%s236 + $0x10] sm:$0xf]
  %v597 = vld [vmem:[%s236 + $0x14] sm:$0xf]
  %v598 = vld [vmem:[%s236 + $0x18] sm:$0xf]
  %v599 = vld [vmem:[%s236 + $0x1c] sm:$0xf]
  %v600 = vld [vmem:[%s236 + $0x20] sm:$0xf]
  %v601 = vld [vmem:[%s236 + $0x24] sm:$0xf]
  %v602 = vld [vmem:[%s236 + $0x28] sm:$0xf]
  %v603 = vld [vmem:[%s236 + $0x2c] sm:$0xf]
  %v604 = vld [vmem:[%s236 + $0x30] sm:$0xf]
  %v605 = vld [vmem:[%s236 + $0x34] sm:$0xf]
  %v606 = vld [vmem:[%s236 + $0x38] sm:$0xf]
  %v607 = vld [vmem:[%s236 + $0x3c] sm:$0xf]
  %v609 = vunpack.c.l.b16 %v381
  %v610 = vpack.c.b16 %v609, %v609
  %v612 = vshrl.u32 %v610, 16
  %v614 = vshll.u32 %v610, 16
  %v616 = vrot.slane %v614, 1
  %v617 = vor.u32 %v612, %v616
  %v635 = vunpack.c.l.b16 %v592
  %v636 = vunpack.c.l.b16 %v593
  %v637 = vunpack.c.l.b16 %v594
  %v638 = vunpack.c.l.b16 %v595
  %v639 = vunpack.c.l.b16 %v596
  %v640 = vunpack.c.l.b16 %v597
  %v641 = vunpack.c.l.b16 %v598
  %v642 = vunpack.c.l.b16 %v599
  %v643 = vunpack.c.l.b16 %v600
  %v644 = vunpack.c.l.b16 %v601
  %v645 = vunpack.c.l.b16 %v602
  %v646 = vunpack.c.l.b16 %v603
  %v647 = vunpack.c.l.b16 %v604
  %v648 = vunpack.c.l.b16 %v605
  %v649 = vunpack.c.l.b16 %v606
  %v650 = vunpack.c.l.b16 %v607
  %v651 = vpack.c.b16 %v636, %v635
  %v652 = vpack.c.b16 %v638, %v637
  %v653 = vpack.c.b16 %v640, %v639
  %v654 = vpack.c.b16 %v642, %v641
  %v655 = vpack.c.b16 %v644, %v643
  %v656 = vpack.c.b16 %v646, %v645
  %v657 = vpack.c.b16 %v648, %v647
  %v658 = vpack.c.b16 %v650, %v649
  %667 = vmatprep.subr.bf16.mxu0 0
  %668 = vmatpush1.bf16.msra.mxu0 %v658
  %669 = vmatprep.subr.bf16.mxu0 0
  %670 = vmatpush1.bf16.msra.mxu0 %v657
  %671 = vmatprep.subr.bf16.mxu0 0
  %672 = vmatpush1.bf16.msra.mxu0 %v656
  %673 = vmatprep.subr.bf16.mxu0 0
  %674 = vmatpush1.bf16.msra.mxu0 %v655
  %675 = vmatprep.subr.bf16.mxu0 0
  %676 = vmatpush1.bf16.msra.mxu0 %v654
  %677 = vmatprep.subr.bf16.mxu0 0
  %678 = vmatpush1.bf16.msra.mxu0 %v653
  %679 = vmatprep.subr.bf16.mxu0 0
  %680 = vmatpush1.bf16.msra.mxu0 %v652
  %681 = vmatprep.subr.bf16.mxu0 0
  %682 = vmatpush1.bf16.msra.mxu0 %v651
  %683 = vmatprep.subr.bf16.mxu0 0
  %684 = vmatpush2.bf16.msra.mxu0 0
  %685 = vmatprep.subr.bf16.mxu0 0
  %686 = vmatpush2.bf16.msra.mxu0 0
  %687 = vmatprep.subr.bf16.mxu0 0
  %688 = vmatpush2.bf16.msra.mxu0 0
  %689 = vmatprep.subr.bf16.mxu0 0
  %690 = vmatpush2.bf16.msra.mxu0 0
  %691 = vmatprep.subr.bf16.mxu0 0
  %692 = vmatpush2.bf16.msra.mxu0 0
  %693 = vmatprep.subr.bf16.mxu0 0
  %694 = vmatpush2.bf16.msra.mxu0 0
  %695 = vmatprep.subr.bf16.mxu0 0
  %696 = vmatpush2.bf16.msra.mxu0 0
  %697 = vmatprep.subr.bf16.mxu0 0
  %698 = vmatpush2.bf16.msra.mxu0 0
  %699 = vmatprep.mubr.bf16.mxu0 0
  %700 = vmatmul.mubr.bf16.gmra.mxu0 %v617
  %v701 = vpop.f32.mrf.mxu0
  %v702 = vadd.f32 0.0, %v701
  %v703 = vpop.f32.mrf.mxu0
  %v704 = vpop.f32.mrf.mxu0
  %v705 = vpop.f32.mrf.mxu0
  %706 = vdwg.mxu0
  %v707 = vadd.f32 %v587, %v702
  %v708 = vld [vmem:[%s2] sm:$0x1]
  %v710 = vlaneseq
  %v711 = vshrl.u32 %v710, 7
  %v712 = vsub.s32 0, %v711
  %v713 = vrot.slane %v708, %v712
  %v715 = vadd.f32 %v707, %v713
  %s716 = scalar_lea.vmem [#allocation2], 8
  %717 = vst.msk [vmem:[%s716] sm:$0x7f] %vm361, %v715
  %v718 = vsel %vm361, %v715, 0.0
  %v719 = vrot.slane %v718, 4
  %v720 = vadd.f32 %v718, %v719
  %v721 = vrot.slane %v720, 2
  %v722 = vadd.f32 %v720, %v721
  %v723 = vrot.slane %v722, 1
  %v724 = vadd.f32 %v722, %v723
  %v725 = vadd.f32 %v370, %v724
  %v726 = vmul.f32 %v715, %v715
  %v727 = vsel %vm361, %v726, 0.0
  %v728 = vrot.slane %v727, 4
  %v729 = vadd.f32 %v727, %v728
  %v730 = vrot.slane %v729, 2
  %v731 = vadd.f32 %v729, %v730
  %v732 = vrot.slane %v731, 1
  %v733 = vadd.f32 %v731, %v732
  %v734 = vadd.f32 %v379, %v733
  %v735 = vld [vmem:[%s3] sm:$0xff]
  %v736 = vld [vmem:[%s3 + $0x8] sm:$0xff]
  %v737 = vld [vmem:[%s3 + $0x10] sm:$0xff]
  %v738 = vld [vmem:[%s3 + $0x18] sm:$0xff]
  %v739 = vld [vmem:[%s3 + $0x20] sm:$0xff]
  %v740 = vld [vmem:[%s3 + $0x28] sm:$0xff]
  %v741 = vld [vmem:[%s3 + $0x30] sm:$0xff]
  %v742 = vld [vmem:[%s3 + $0x38] sm:$0xff]
  %v743 = vld [vmem:[%s3 + $0x40] sm:$0xff]
  %v744 = vld [vmem:[%s3 + $0x48] sm:$0xff]
  %v745 = vld [vmem:[%s3 + $0x50] sm:$0xff]
  %v746 = vld [vmem:[%s3 + $0x58] sm:$0xff]
  %v747 = vld [vmem:[%s3 + $0x60] sm:$0xff]
  %v748 = vld [vmem:[%s3 + $0x68] sm:$0xff]
  %vm749 = vcmask 916480
  %v751 = vsel %vm749, %v725, 0
  %753 = vmatprep.subr.mxu0 0.0
  %754 = vmatpush1.msra.mxu0 0.0
  %755 = vmatprep.subr.mxu0 0.0
  %756 = vmatpush1.msra.mxu0 0.0
  %757 = vmatprep.subr.mxu0 0.0
  %758 = vmatpush1.msra.mxu0 %v748
  %759 = vmatprep.subr.mxu0 0.0
  %760 = vmatpush1.msra.mxu0 %v747
  %761 = vmatprep.subr.mxu0 0.0
  %762 = vmatpush1.msra.mxu0 %v746
  %763 = vmatprep.subr.mxu0 0.0
  %764 = vmatpush1.msra.mxu0 %v745
  %765 = vmatprep.subr.mxu0 0.0
  %766 = vmatpush1.msra.mxu0 %v744
  %767 = vmatprep.subr.mxu0 0.0
  %768 = vmatpush1.msra.mxu0 %v743
  %769 = vmatprep.subr.mxu0 0.0
  %770 = vmatpush1.msra.mxu0 %v742
  %771 = vmatprep.subr.mxu0 0.0
  %772 = vmatpush1.msra.mxu0 %v741
  %773 = vmatprep.subr.mxu0 0.0
  %774 = vmatpush1.msra.mxu0 %v740
  %775 = vmatprep.subr.mxu0 0.0
  %776 = vmatpush1.msra.mxu0 %v739
  %777 = vmatprep.subr.mxu0 0.0
  %778 = vmatpush1.msra.mxu0 %v738
  %779 = vmatprep.subr.mxu0 0.0
  %780 = vmatpush1.msra.mxu0 %v737
  %781 = vmatprep.subr.mxu0 0.0
  %782 = vmatpush1.msra.mxu0 %v736
  %783 = vmatprep.subr.mxu0 0.0
  %784 = vmatpush1.msra.mxu0 %v735
  %785 = vmatprep.subr.mxu0 0.0
  %786 = vmatpush2.msra.mxu0 0.0
  %787 = vmatprep.subr.mxu0 0.0
  %788 = vmatpush2.msra.mxu0 0.0
  %789 = vmatprep.subr.mxu0 0.0
  %790 = vmatpush2.msra.mxu0 0.0
  %791 = vmatprep.subr.mxu0 0.0
  %792 = vmatpush2.msra.mxu0 0.0
  %793 = vmatprep.subr.mxu0 0.0
  %794 = vmatpush2.msra.mxu0 0.0
  %795 = vmatprep.subr.mxu0 0.0
  %796 = vmatpush2.msra.mxu0 0.0
  %797 = vmatprep.subr.mxu0 0.0
  %798 = vmatpush2.msra.mxu0 0.0
  %799 = vmatprep.subr.mxu0 0.0
  %800 = vmatpush2.msra.mxu0 0.0
  %801 = vmatprep.subr.mxu0 0.0
  %802 = vmatpush2.msra.mxu0 0.0
  %803 = vmatprep.subr.mxu0 0.0
  %804 = vmatpush2.msra.mxu0 0.0
  %805 = vmatprep.subr.mxu0 0.0
  %806 = vmatpush2.msra.mxu0 0.0
  %807 = vmatprep.subr.mxu0 0.0
  %808 = vmatpush2.msra.mxu0 0.0
  %809 = vmatprep.subr.mxu0 0.0
  %810 = vmatpush2.msra.mxu0 0.0
  %811 = vmatprep.subr.mxu0 0.0
  %812 = vmatpush2.msra.mxu0 0.0
  %813 = vmatprep.subr.mxu0 0.0
  %814 = vmatpush2.msra.mxu0 0.0
  %815 = vmatprep.subr.mxu0 0.0
  %816 = vmatpush2.msra.mxu0 0.0
  %817 = vmatprep.mubr.f32.mxu0 0.0
  %818 = vmatmul.mubr.f32.gmra.mxu0 %v751
  %v819 = vpop.f32.mrf.mxu0
  %v820 = vadd.f32 0.0, %v819
  %v821 = vpop.f32.mrf.mxu0
  %822 = vdwg.mxu0
  %v824 = vsel %vm749, %v734, 0
  %826 = vmatprep.subr.mxu0 0.0
  %827 = vmatpush1.msra.mxu0 0.0
  %828 = vmatprep.subr.mxu0 0.0
  %829 = vmatpush1.msra.mxu0 0.0
  %830 = vmatprep.subr.mxu0 0.0
  %831 = vmatpush1.msra.mxu0 %v748
  %832 = vmatprep.subr.mxu0 0.0
  %833 = vmatpush1.msra.mxu0 %v747
  %834 = vmatprep.subr.mxu0 0.0
  %835 = vmatpush1.msra.mxu0 %v746
  %836 = vmatprep.subr.mxu0 0.0
  %837 = vmatpush1.msra.mxu0 %v745
  %838 = vmatprep.subr.mxu0 0.0
  %839 = vmatpush1.msra.mxu0 %v744
  %840 = vmatprep.subr.mxu0 0.0
  %841 = vmatpush1.msra.mxu0 %v743
  %842 = vmatprep.subr.mxu0 0.0
  %843 = vmatpush1.msra.mxu0 %v742
  %844 = vmatprep.subr.mxu0 0.0
  %845 = vmatpush1.msra.mxu0 %v741
  %846 = vmatprep.subr.mxu0 0.0
  %847 = vmatpush1.msra.mxu0 %v740
  %848 = vmatprep.subr.mxu0 0.0
  %849 = vmatpush1.msra.mxu0 %v739
  %850 = vmatprep.subr.mxu0 0.0
  %851 = vmatpush1.msra.mxu0 %v738
  %852 = vmatprep.subr.mxu0 0.0
  %853 = vmatpush1.msra.mxu0 %v737
  %854 = vmatprep.subr.mxu0 0.0
  %855 = vmatpush1.msra.mxu0 %v736
  %856 = vmatprep.subr.mxu0 0.0
  %857 = vmatpush1.msra.mxu0 %v735
  %858 = vmatprep.subr.mxu0 0.0
  %859 = vmatpush2.msra.mxu0 0.0
  %860 = vmatprep.subr.mxu0 0.0
  %861 = vmatpush2.msra.mxu0 0.0
  %862 = vmatprep.subr.mxu0 0.0
  %863 = vmatpush2.msra.mxu0 0.0
  %864 = vmatprep.subr.mxu0 0.0
  %865 = vmatpush2.msra.mxu0 0.0
  %866 = vmatprep.subr.mxu0 0.0
  %867 = vmatpush2.msra.mxu0 0.0
  %868 = vmatprep.subr.mxu0 0.0
  %869 = vmatpush2.msra.mxu0 0.0
  %870 = vmatprep.subr.mxu0 0.0
  %871 = vmatpush2.msra.mxu0 0.0
  %872 = vmatprep.subr.mxu0 0.0
  %873 = vmatpush2.msra.mxu0 0.0
  %874 = vmatprep.subr.mxu0 0.0
  %875 = vmatpush2.msra.mxu0 0.0
  %876 = vmatprep.subr.mxu0 0.0
  %877 = vmatpush2.msra.mxu0 0.0
  %878 = vmatprep.subr.mxu0 0.0
  %879 = vmatpush2.msra.mxu0 0.0
  %880 = vmatprep.subr.mxu0 0.0
  %881 = vmatpush2.msra.mxu0 0.0
  %882 = vmatprep.subr.mxu0 0.0
  %883 = vmatpush2.msra.mxu0 0.0
  %884 = vmatprep.subr.mxu0 0.0
  %885 = vmatpush2.msra.mxu0 0.0
  %886 = vmatprep.subr.mxu0 0.0
  %887 = vmatpush2.msra.mxu0 0.0
  %888 = vmatprep.subr.mxu0 0.0
  %889 = vmatpush2.msra.mxu0 0.0
  %890 = vmatprep.mubr.f32.mxu0 0.0
  %891 = vmatmul.mubr.f32.gmra.mxu0 %v824
  %v892 = vpop.f32.mrf.mxu0
  %v893 = vadd.f32 0.0, %v892
  %v894 = vpop.f32.mrf.mxu0
  %895 = vdwg.mxu0
  %v896 = vmul.f32 %v820, 0.010204081
  %v897 = vmul.f32 %v893, 0.010204081
  %v898 = vmul.f32 %v896, %v896
  %v899 = vsub.f32 %v897, %v898
  %v900 = vmax.f32 %v899, 0.0
  %v901 = vld [vmem:[%s5] sm:$0x1]
  %v902 = vld [vmem:[%s5 + $0x1] sm:$0x1]
  %v903 = vadd.f32 %v900, 1e-05
  %v904 = vrsqrt.pop %v903
  %v905 = vmul.f32 %v901, %v904
  %v906 = vmul.f32 %v896, %v905
  %v907 = vsub.f32 %v902, %v906
  %v908 = vld [vmem:[%s4] sm:$0xff]
  %v909 = vld [vmem:[%s4 + $0x8] sm:$0xff]
  %vm910 = vcmask 130048
  %v912 = vsel %vm910, %v905, 0
  %914 = vmatprep.subr.mxu0 0.0
  %915 = vmatpush1.msra.mxu0 0.0
  %916 = vmatprep.subr.mxu0 0.0
  %917 = vmatpush1.msra.mxu0 0.0
  %918 = vmatprep.subr.mxu0 0.0
  %919 = vmatpush1.msra.mxu0 0.0
  %920 = vmatprep.subr.mxu0 0.0
  %921 = vmatpush1.msra.mxu0 0.0
  %922 = vmatprep.subr.mxu0 0.0
  %923 = vmatpush1.msra.mxu0 0.0
  %924 = vmatprep.subr.mxu0 0.0
  %925 = vmatpush1.msra.mxu0 0.0
  %926 = vmatprep.subr.mxu0 0.0
  %927 = vmatpush1.msra.mxu0 0.0
  %928 = vmatprep.subr.mxu0 0.0
  %929 = vmatpush1.msra.mxu0 0.0
  %930 = vmatprep.subr.mxu0 0.0
  %931 = vmatpush1.msra.mxu0 0.0
  %932 = vmatprep.subr.mxu0 0.0
  %933 = vmatpush1.msra.mxu0 0.0
  %934 = vmatprep.subr.mxu0 0.0
  %935 = vmatpush1.msra.mxu0 0.0
  %936 = vmatprep.subr.mxu0 0.0
  %937 = vmatpush1.msra.mxu0 0.0
  %938 = vmatprep.subr.mxu0 0.0
  %939 = vmatpush1.msra.mxu0 0.0
  %940 = vmatprep.subr.mxu0 0.0
  %941 = vmatpush1.msra.mxu0 0.0
  %942 = vmatprep.subr.mxu0 0.0
  %943 = vmatpush1.msra.mxu0 %v909
  %944 = vmatprep.subr.mxu0 0.0
  %945 = vmatpush1.msra.mxu0 %v908
  %946 = vmatprep.subr.mxu0 0.0
  %947 = vmatpush2.msra.mxu0 0.0
  %948 = vmatprep.subr.mxu0 0.0
  %949 = vmatpush2.msra.mxu0 0.0
  %950 = vmatprep.subr.mxu0 0.0
  %951 = vmatpush2.msra.mxu0 0.0
  %952 = vmatprep.subr.mxu0 0.0
  %953 = vmatpush2.msra.mxu0 0.0
  %954 = vmatprep.subr.mxu0 0.0
  %955 = vmatpush2.msra.mxu0 0.0
  %956 = vmatprep.subr.mxu0 0.0
  %957 = vmatpush2.msra.mxu0 0.0
  %958 = vmatprep.subr.mxu0 0.0
  %959 = vmatpush2.msra.mxu0 0.0
  %960 = vmatprep.subr.mxu0 0.0
  %961 = vmatpush2.msra.mxu0 0.0
  %962 = vmatprep.subr.mxu0 0.0
  %963 = vmatpush2.msra.mxu0 0.0
  %964 = vmatprep.subr.mxu0 0.0
  %965 = vmatpush2.msra.mxu0 0.0
  %966 = vmatprep.subr.mxu0 0.0
  %967 = vmatpush2.msra.mxu0 0.0
  %968 = vmatprep.subr.mxu0 0.0
  %969 = vmatpush2.msra.mxu0 0.0
  %970 = vmatprep.subr.mxu0 0.0
  %971 = vmatpush2.msra.mxu0 0.0
  %972 = vmatprep.subr.mxu0 0.0
  %973 = vmatpush2.msra.mxu0 0.0
  %974 = vmatprep.subr.mxu0 0.0
  %975 = vmatpush2.msra.mxu0 0.0
  %976 = vmatprep.subr.mxu0 0.0
  %977 = vmatpush2.msra.mxu0 0.0
  %978 = vmatprep.mubr.f32.mxu0 0.0
  %979 = vmatmul.mubr.f32.gmra.mxu0 %v912
  %v980 = vpop.f32.mrf.mxu0
  %v981 = vadd.f32 0.0, %v980
  %v982 = vpop.f32.mrf.mxu0
  %983 = vdwg.mxu0
  %v985 = vsel %vm910, %v907, 0
  %987 = vmatprep.subr.mxu0 0.0
  %988 = vmatpush1.msra.mxu0 0.0
  %989 = vmatprep.subr.mxu0 0.0
  %990 = vmatpush1.msra.mxu0 0.0
  %991 = vmatprep.subr.mxu0 0.0
  %992 = vmatpush1.msra.mxu0 0.0
  %993 = vmatprep.subr.mxu0 0.0
  %994 = vmatpush1.msra.mxu0 0.0
  %995 = vmatprep.subr.mxu0 0.0
  %996 = vmatpush1.msra.mxu0 0.0
  %997 = vmatprep.subr.mxu0 0.0
  %998 = vmatpush1.msra.mxu0 0.0
  %999 = vmatprep.subr.mxu0 0.0
  %1000 = vmatpush1.msra.mxu0 0.0
  %1001 = vmatprep.subr.mxu0 0.0
  %1002 = vmatpush1.msra.mxu0 0.0
  %1003 = vmatprep.subr.mxu0 0.0
  %1004 = vmatpush1.msra.mxu0 0.0
  %1005 = vmatprep.subr.mxu0 0.0
  %1006 = vmatpush1.msra.mxu0 0.0
  %1007 = vmatprep.subr.mxu0 0.0
  %1008 = vmatpush1.msra.mxu0 0.0
  %1009 = vmatprep.subr.mxu0 0.0
  %1010 = vmatpush1.msra.mxu0 0.0
  %1011 = vmatprep.subr.mxu0 0.0
  %1012 = vmatpush1.msra.mxu0 0.0
  %1013 = vmatprep.subr.mxu0 0.0
  %1014 = vmatpush1.msra.mxu0 0.0
  %1015 = vmatprep.subr.mxu0 0.0
  %1016 = vmatpush1.msra.mxu0 %v909
  %1017 = vmatprep.subr.mxu0 0.0
  %1018 = vmatpush1.msra.mxu0 %v908
  %1019 = vmatprep.subr.mxu0 0.0
  %1020 = vmatpush2.msra.mxu0 0.0
  %1021 = vmatprep.subr.mxu0 0.0
  %1022 = vmatpush2.msra.mxu0 0.0
  %1023 = vmatprep.subr.mxu0 0.0
  %1024 = vmatpush2.msra.mxu0 0.0
  %1025 = vmatprep.subr.mxu0 0.0
  %1026 = vmatpush2.msra.mxu0 0.0
  %1027 = vmatprep.subr.mxu0 0.0
  %1028 = vmatpush2.msra.mxu0 0.0
  %1029 = vmatprep.subr.mxu0 0.0
  %1030 = vmatpush2.msra.mxu0 0.0
  %1031 = vmatprep.subr.mxu0 0.0
  %1032 = vmatpush2.msra.mxu0 0.0
  %1033 = vmatprep.subr.mxu0 0.0
  %1034 = vmatpush2.msra.mxu0 0.0
  %1035 = vmatprep.subr.mxu0 0.0
  %1036 = vmatpush2.msra.mxu0 0.0
  %1037 = vmatprep.subr.mxu0 0.0
  %1038 = vmatpush2.msra.mxu0 0.0
  %1039 = vmatprep.subr.mxu0 0.0
  %1040 = vmatpush2.msra.mxu0 0.0
  %1041 = vmatprep.subr.mxu0 0.0
  %1042 = vmatpush2.msra.mxu0 0.0
  %1043 = vmatprep.subr.mxu0 0.0
  %1044 = vmatpush2.msra.mxu0 0.0
  %1045 = vmatprep.subr.mxu0 0.0
  %1046 = vmatpush2.msra.mxu0 0.0
  %1047 = vmatprep.subr.mxu0 0.0
  %1048 = vmatpush2.msra.mxu0 0.0
  %1049 = vmatprep.subr.mxu0 0.0
  %1050 = vmatpush2.msra.mxu0 0.0
  %1051 = vmatprep.mubr.f32.mxu0 0.0
  %1052 = vmatmul.mubr.f32.gmra.mxu0 %v985
  %v1053 = vpop.f32.mrf.mxu0
  %v1054 = vadd.f32 0.0, %v1053
  %v1055 = vpop.f32.mrf.mxu0
  %1056 = vdwg.mxu0
  %v1057 = vld [vmem:[#allocation2] sm:$0x7f]
  %v1058 = vlaneseq
  %v1059 = vshrl.u32 %v1058, 7
  %v1060 = vsub.s32 0, %v1059
  %v1061 = vrot.slane %v981, %v1060
  %v1062 = vmul.f32 %v1057, %v1061
  %v1063 = vlaneseq
  %v1064 = vshrl.u32 %v1063, 7
  %v1065 = vsub.s32 0, %v1064
  %v1066 = vrot.slane %v1054, %v1065
  %v1067 = vadd.f32 %v1062, %v1066
  %vm1068 = vcmp.ge.f32.partialorder %v1067, 0.0
  %v1069 = vmul.f32 %v1067, 0.01
  %v1070 = vsel %vm1068, %v1067, %v1069
  %v1071 = vpack.c.bf16 %v1070, %v1070
  %vm1072 = vcmask 912384
  %vm1073 = vsmask.f32 3328
  %vm1074 = vmand %vm1072, %vm1073
  %v1075 = vld [vmem:[%s6] sm:$0xf]
  %v1076 = vsel %vm1074, %v1071, %v1075
  %1077 = vst [vmem:[%s6] sm:$0xf] %v1076
  %v1078 = vld [vmem:[%s716] sm:$0x7f]
  %v1079 = vmul.f32 %v1078, %v1061
  %v1080 = vadd.f32 %v1079, %v1066
  %vm1081 = vcmp.ge.f32.partialorder %v1080, 0.0
  %v1082 = vmul.f32 %v1080, 0.01
  %v1083 = vsel %vm1081, %v1080, %v1082
  %v1084 = vpack.c.bf16 %v1083, %v1083
  %s1085 = scalar_lea.vmem %s6, 4
  %v1086 = vld [vmem:[%s1085] sm:$0xf]
  %v1087 = vsel %vm1074, %v1084, %v1086
  %1088 = vst [vmem:[%s1085] sm:$0xf] %v1087
  // Predicated region
  $region26: #{vae_forward.6} parent=0 // pred_check
    _
  $region27: #{vae_forward.6} parent=0 // pred_check_branch
    %1090 = sbr.rel (0) target = $region29
  $region28: #{vae_forward.6} parent=0 // pred_region
    _
  $region29: #{vae_forward.6} parent=0 // pred_fallthru
    _
  // Predicated region
  $region30: #{vae_forward.6} parent=0 // pred_check
    _
  $region31: #{vae_forward.6} parent=0 // pred_check_branch
    %1092 = sbr.rel (0) target = $region33
  $region32: #{vae_forward.6} parent=0 // pred_region
    _
  $region33: #{vae_forward.6} parent=0 // pred_fallthru
    _

// kernel: vae_forward.7
$region0: #{vae_forward.7}
  #allocation0 [shape = 'u32[]', space=smem, size = 0x4, offset = 0x4, fixed_abs, tag = 'smem constant byte address 0x4 - core index']
  #allocation1 [shape = 'u32[144,128]{1,0:T(1,128)}', space=vmem, size = 0x12000, scoped, tag = 'internal scratch']
  %s0 = inlined_call_operand.vmem [shape: bf16[8,784], index: 0, kind: input, shape index: {}]
  %s1 = inlined_call_operand.vmem [shape: bf16[784,128], index: 1, kind: input, shape index: {}]
  %s2 = inlined_call_operand.vmem [shape: f32[1,128], index: 2, kind: input, shape index: {}]
  %s3 = inlined_call_operand.vmem [shape: bf16[64,794], index: 3, kind: input, shape index: {}]
  %s4 = inlined_call_operand.vmem [shape: f32[1,794], index: 4, kind: input, shape index: {}]
  %s5 = inlined_call_operand.vmem [shape: f32[8,64], index: 5, kind: input, shape index: {}]
  %s6 = inlined_call_operand.vmem [shape: f32[8,64], index: 6, kind: output, shape index: {0}]
  %s7 = inlined_call_operand.vmem [shape: f32[8,64], index: 7, kind: output, shape index: {1}]
  %s8 = inlined_call_operand.vmem [shape: f32[8,64], index: 8, kind: output, shape index: {2}]
  %s9 = inlined_call_operand.vmem [shape: f32[8,794], index: 9, kind: output, shape index: {3}]
  %10 = xla_tuple %s6, %s7, %s8, %s9
  %s11 = sld [smem:[#allocation0]]
  $region58: #{vae_forward.7} parent=0
    _
  %s13 = ssub.s32 1, %s11
  %s14 = scalar_select 0, %s13, %s11
  // Predicated region
  $region2: #{vae_forward.7} parent=0 // pred_check
    _
  $region3: #{vae_forward.7} parent=0 // pred_check_branch
    %16 = sbr.rel (0) target = $region5
  $region4: #{vae_forward.7} parent=0 // pred_region
    _
  $region5: #{vae_forward.7} parent=0 // pred_fallthru
    _
  // Predicated region
  $region6: #{vae_forward.7} parent=0 // pred_check
    _
  $region7: #{vae_forward.7} parent=0 // pred_check_branch
    %18 = sbr.rel (0) target = $region9
  $region8: #{vae_forward.7} parent=0 // pred_region
    _
  $region9: #{vae_forward.7} parent=0 // pred_fallthru
    _
  // Predicated region
  $region10: #{vae_forward.7} parent=0 // pred_check
    _
  $region11: #{vae_forward.7} parent=0 // pred_check_branch
    %20 = sbr.rel (0) target = $region13
  $region12: #{vae_forward.7} parent=0 // pred_region
    _
  $region13: #{vae_forward.7} parent=0 // pred_fallthru
    _
  // Predicated region
  $region14: #{vae_forward.7} parent=0 // pred_check
    _
  $region15: #{vae_forward.7} parent=0 // pred_check_branch
    %22 = sbr.rel (0) target = $region17
  $region16: #{vae_forward.7} parent=0 // pred_region
    _
  $region17: #{vae_forward.7} parent=0 // pred_fallthru
    _
  // Predicated region
  $region18: #{vae_forward.7} parent=0 // pred_check
    _
  $region19: #{vae_forward.7} parent=0 // pred_check_branch
    %24 = sbr.rel (0) target = $region21
  $region20: #{vae_forward.7} parent=0 // pred_region
    _
  $region21: #{vae_forward.7} parent=0 // pred_fallthru
    _
  // Predicated region
  $region22: #{vae_forward.7} parent=0 // pred_check
    _
  $region23: #{vae_forward.7} parent=0 // pred_check_branch
    %26 = sbr.rel (0) target = $region25
  $region24: #{vae_forward.7} parent=0 // pred_region
    _
  $region25: #{vae_forward.7} parent=0 // pred_fallthru
    _
  %v28 = vld [vmem:[%s0] sm:$0xff]
  %v29 = vld [vmem:[%s0 + $0x8] sm:$0xff]
  %v30 = vld [vmem:[%s0 + $0x10] sm:$0xff]
  %v31 = vld [vmem:[%s0 + $0x18] sm:$0xf]
  %v32 = vld [vmem:[%s1] sm:$0xf]
  %v33 = vld [vmem:[%s1 + $0x4] sm:$0xf]
  %v34 = vld [vmem:[%s1 + $0x8] sm:$0xf]
  %v35 = vld [vmem:[%s1 + $0xc] sm:$0xf]
  %v36 = vld [vmem:[%s1 + $0x10] sm:$0xf]
  %v37 = vld [vmem:[%s1 + $0x14] sm:$0xf]
  %v38 = vld [vmem:[%s1 + $0x18] sm:$0xf]
  %v39 = vld [vmem:[%s1 + $0x1c] sm:$0xf]
  %v40 = vld [vmem:[%s1 + $0x20] sm:$0xf]
  %v41 = vld [vmem:[%s1 + $0x24] sm:$0xf]
  %v42 = vld [vmem:[%s1 + $0x28] sm:$0xf]
  %v43 = vld [vmem:[%s1 + $0x2c] sm:$0xf]
  %v44 = vld [vmem:[%s1 + $0x30] sm:$0xf]
  %v45 = vld [vmem:[%s1 + $0x34] sm:$0xf]
  %v46 = vld [vmem:[%s1 + $0x38] sm:$0xf]
  %v47 = vld [vmem:[%s1 + $0x3c] sm:$0xf]
  %v48 = vld [vmem:[%s1 + $0x40] sm:$0xf]
  %v49 = vld [vmem:[%s1 + $0x44] sm:$0xf]
  %v50 = vld [vmem:[%s1 + $0x48] sm:$0xf]
  %v51 = vld [vmem:[%s1 + $0x4c] sm:$0xf]
  %v52 = vld [vmem:[%s1 + $0x50] sm:$0xf]
  %v53 = vld [vmem:[%s1 + $0x54] sm:$0xf]
  %v54 = vld [vmem:[%s1 + $0x58] sm:$0xf]
  %v55 = vld [vmem:[%s1 + $0x5c] sm:$0xf]
  %v56 = vld [vmem:[%s1 + $0x60] sm:$0xf]
  %v57 = vld [vmem:[%s1 + $0x64] sm:$0xf]
  %v58 = vld [vmem:[%s1 + $0x68] sm:$0xf]
  %v59 = vld [vmem:[%s1 + $0x6c] sm:$0xf]
  %v60 = vld [vmem:[%s1 + $0x70] sm:$0xf]
  %v61 = vld [vmem:[%s1 + $0x74] sm:$0xf]
  %v62 = vld [vmem:[%s1 + $0x78] sm:$0xf]
  %v63 = vld [vmem:[%s1 + $0x7c] sm:$0xf]
  %v64 = vld [vmem:[%s1 + $0x80] sm:$0xf]
  %v65 = vld [vmem:[%s1 + $0x84] sm:$0xf]
  %v66 = vld [vmem:[%s1 + $0x88] sm:$0xf]
  %v67 = vld [vmem:[%s1 + $0x8c] sm:$0xf]
  %v68 = vld [vmem:[%s1 + $0x90] sm:$0xf]
  %v69 = vld [vmem:[%s1 + $0x94] sm:$0xf]
  %v70 = vld [vmem:[%s1 + $0x98] sm:$0xf]
  %v71 = vld [vmem:[%s1 + $0x9c] sm:$0xf]
  %v72 = vld [vmem:[%s1 + $0xa0] sm:$0xf]
  %v73 = vld [vmem:[%s1 + $0xa4] sm:$0xf]
  %v74 = vld [vmem:[%s1 + $0xa8] sm:$0xf]
  %v75 = vld [vmem:[%s1 + $0xac] sm:$0xf]
  %v76 = vld [vmem:[%s1 + $0xb0] sm:$0xf]
  %v77 = vld [vmem:[%s1 + $0xb4] sm:$0xf]
  %v78 = vld [vmem:[%s1 + $0xb8] sm:$0xf]
  %v79 = vld [vmem:[%s1 + $0xbc] sm:$0xf]
  %v80 = vld [vmem:[%s1 + $0xc0] sm:$0xf]
  %v81 = vld [vmem:[%s1 + $0xc4] sm:$0xf]
  %v82 = vld [vmem:[%s1 + $0xc8] sm:$0xf]
  %v83 = vld [vmem:[%s1 + $0xcc] sm:$0xf]
  %v84 = vld [vmem:[%s1 + $0xd0] sm:$0xf]
  %v85 = vld [vmem:[%s1 + $0xd4] sm:$0xf]
  %v86 = vld [vmem:[%s1 + $0xd8] sm:$0xf]
  %v87 = vld [vmem:[%s1 + $0xdc] sm:$0xf]
  %v88 = vld [vmem:[%s1 + $0xe0] sm:$0xf]
  %v89 = vld [vmem:[%s1 + $0xe4] sm:$0xf]
  %v90 = vld [vmem:[%s1 + $0xe8] sm:$0xf]
  %v91 = vld [vmem:[%s1 + $0xec] sm:$0xf]
  %v92 = vld [vmem:[%s1 + $0xf0] sm:$0xf]
  %v93 = vld [vmem:[%s1 + $0xf4] sm:$0xf]
  %v94 = vld [vmem:[%s1 + $0xf8] sm:$0xf]
  %v95 = vld [vmem:[%s1 + $0xfc] sm:$0xf]
  %v96 = vld [vmem:[%s1 + $0x100] sm:$0xf]
  %v97 = vld [vmem:[%s1 + $0x104] sm:$0xf]
  %v98 = vld [vmem:[%s1 + $0x108] sm:$0xf]
  %v99 = vld [vmem:[%s1 + $0x10c] sm:$0xf]
  %v100 = vld [vmem:[%s1 + $0x110] sm:$0xf]
  %v101 = vld [vmem:[%s1 + $0x114] sm:$0xf]
  %v102 = vld [vmem:[%s1 + $0x118] sm:$0xf]
  %v103 = vld [vmem:[%s1 + $0x11c] sm:$0xf]
  %v104 = vld [vmem:[%s1 + $0x120] sm:$0xf]
  %v105 = vld [vmem:[%s1 + $0x124] sm:$0xf]
  %v106 = vld [vmem:[%s1 + $0x128] sm:$0xf]
  %v107 = vld [vmem:[%s1 + $0x12c] sm:$0xf]
  %v108 = vld [vmem:[%s1 + $0x130] sm:$0xf]
  %v109 = vld [vmem:[%s1 + $0x134] sm:$0xf]
  %v110 = vld [vmem:[%s1 + $0x138] sm:$0xf]
  %v111 = vld [vmem:[%s1 + $0x13c] sm:$0xf]
  %v112 = vld [vmem:[%s1 + $0x140] sm:$0xf]
  %v113 = vld [vmem:[%s1 + $0x144] sm:$0xf]
  %v114 = vld [vmem:[%s1 + $0x148] sm:$0xf]
  %v115 = vld [vmem:[%s1 + $0x14c] sm:$0xf]
  %v116 = vld [vmem:[%s1 + $0x150] sm:$0xf]
  %v117 = vld [vmem:[%s1 + $0x154] sm:$0xf]
  %v118 = vld [vmem:[%s1 + $0x158] sm:$0xf]
  %v119 = vld [vmem:[%s1 + $0x15c] sm:$0xf]
  %v120 = vld [vmem:[%s1 + $0x160] sm:$0xf]
  %v121 = vld [vmem:[%s1 + $0x164] sm:$0xf]
  %v122 = vld [vmem:[%s1 + $0x168] sm:$0xf]
  %v123 = vld [vmem:[%s1 + $0x16c] sm:$0xf]
  %v124 = vld [vmem:[%s1 + $0x170] sm:$0xf]
  %v125 = vld [vmem:[%s1 + $0x174] sm:$0xf]
  %v126 = vld [vmem:[%s1 + $0x178] sm:$0xf]
  %v127 = vld [vmem:[%s1 + $0x17c] sm:$0xf]
  %v128 = vld [vmem:[%s1 + $0x180] sm:$0xf]
  %v129 = vld [vmem:[%s1 + $0x184] sm:$0xf]
  %v130 = vld [vmem:[%s2] sm:$0x1]
  %v132 = vlaneseq
  %v133 = vshrl.u32 %v132, 7
  %v134 = vsub.s32 0, %v133
  %v135 = vrot.slane %v130, %v134
  %v141 = vunpack.c.l.b16 %v28
  %v142 = vunpack.c.h.b16 %v28
  %v143 = vunpack.c.l.b16 %v29
  %v144 = vunpack.c.h.b16 %v29
  %v145 = vunpack.c.l.b16 %v30
  %v146 = vunpack.c.h.b16 %v30
  %v147 = vunpack.c.l.b16 %v31
  %v148 = vpack.c.b16 %v141, %v141
  %v149 = vpack.c.b16 %v142, %v142
  %v150 = vpack.c.b16 %v143, %v143
  %v151 = vpack.c.b16 %v144, %v144
  %v152 = vpack.c.b16 %v145, %v145
  %v153 = vpack.c.b16 %v146, %v146
  %v154 = vpack.c.b16 %v147, %v147
  %v259 = vunpack.c.l.b16 %v32
  %v260 = vunpack.c.l.b16 %v33
  %v261 = vunpack.c.l.b16 %v34
  %v262 = vunpack.c.l.b16 %v35
  %v263 = vunpack.c.l.b16 %v36
  %v264 = vunpack.c.l.b16 %v37
  %v265 = vunpack.c.l.b16 %v38
  %v266 = vunpack.c.l.b16 %v39
  %v267 = vunpack.c.l.b16 %v40
  %v268 = vunpack.c.l.b16 %v41
  %v269 = vunpack.c.l.b16 %v42
  %v270 = vunpack.c.l.b16 %v43
  %v271 = vunpack.c.l.b16 %v44
  %v272 = vunpack.c.l.b16 %v45
  %v273 = vunpack.c.l.b16 %v46
  %v274 = vunpack.c.l.b16 %v47
  %v275 = vunpack.c.l.b16 %v48
  %v276 = vunpack.c.l.b16 %v49
  %v277 = vunpack.c.l.b16 %v50
  %v278 = vunpack.c.l.b16 %v51
  %v279 = vunpack.c.l.b16 %v52
  %v280 = vunpack.c.l.b16 %v53
  %v281 = vunpack.c.l.b16 %v54
  %v282 = vunpack.c.l.b16 %v55
  %v283 = vunpack.c.l.b16 %v56
  %v284 = vunpack.c.l.b16 %v57
  %v285 = vunpack.c.l.b16 %v58
  %v286 = vunpack.c.l.b16 %v59
  %v287 = vunpack.c.l.b16 %v60
  %v288 = vunpack.c.l.b16 %v61
  %v289 = vunpack.c.l.b16 %v62
  %v290 = vunpack.c.l.b16 %v63
  %v291 = vunpack.c.l.b16 %v64
  %v292 = vunpack.c.l.b16 %v65
  %v293 = vunpack.c.l.b16 %v66
  %v294 = vunpack.c.l.b16 %v67
  %v295 = vunpack.c.l.b16 %v68
  %v296 = vunpack.c.l.b16 %v69
  %v297 = vunpack.c.l.b16 %v70
  %v298 = vunpack.c.l.b16 %v71
  %v299 = vunpack.c.l.b16 %v72
  %v300 = vunpack.c.l.b16 %v73
  %v301 = vunpack.c.l.b16 %v74
  %v302 = vunpack.c.l.b16 %v75
  %v303 = vunpack.c.l.b16 %v76
  %v304 = vunpack.c.l.b16 %v77
  %v305 = vunpack.c.l.b16 %v78
  %v306 = vunpack.c.l.b16 %v79
  %v307 = vunpack.c.l.b16 %v80
  %v308 = vunpack.c.l.b16 %v81
  %v309 = vunpack.c.l.b16 %v82
  %v310 = vunpack.c.l.b16 %v83
  %v311 = vunpack.c.l.b16 %v84
  %v312 = vunpack.c.l.b16 %v85
  %v313 = vunpack.c.l.b16 %v86
  %v314 = vunpack.c.l.b16 %v87
  %v315 = vunpack.c.l.b16 %v88
  %v316 = vunpack.c.l.b16 %v89
  %v317 = vunpack.c.l.b16 %v90
  %v318 = vunpack.c.l.b16 %v91
  %v319 = vunpack.c.l.b16 %v92
  %v320 = vunpack.c.l.b16 %v93
  %v321 = vunpack.c.l.b16 %v94
  %v322 = vunpack.c.l.b16 %v95
  %v323 = vunpack.c.l.b16 %v96
  %v324 = vunpack.c.l.b16 %v97
  %v325 = vunpack.c.l.b16 %v98
  %v326 = vunpack.c.l.b16 %v99
  %v327 = vunpack.c.l.b16 %v100
  %v328 = vunpack.c.l.b16 %v101
  %v329 = vunpack.c.l.b16 %v102
  %v330 = vunpack.c.l.b16 %v103
  %v331 = vunpack.c.l.b16 %v104
  %v332 = vunpack.c.l.b16 %v105
  %v333 = vunpack.c.l.b16 %v106
  %v334 = vunpack.c.l.b16 %v107
  %v335 = vunpack.c.l.b16 %v108
  %v336 = vunpack.c.l.b16 %v109
  %v337 = vunpack.c.l.b16 %v110
  %v338 = vunpack.c.l.b16 %v111
  %v339 = vunpack.c.l.b16 %v112
  %v340 = vunpack.c.l.b16 %v113
  %v341 = vunpack.c.l.b16 %v114
  %v342 = vunpack.c.l.b16 %v115
  %v343 = vunpack.c.l.b16 %v116
  %v344 = vunpack.c.l.b16 %v117
  %v345 = vunpack.c.l.b16 %v118
  %v346 = vunpack.c.l.b16 %v119
  %v347 = vunpack.c.l.b16 %v120
  %v348 = vunpack.c.l.b16 %v121
  %v349 = vunpack.c.l.b16 %v122
  %v350 = vunpack.c.l.b16 %v123
  %v351 = vunpack.c.l.b16 %v124
  %v352 = vunpack.c.l.b16 %v125
  %v353 = vunpack.c.l.b16 %v126
  %v354 = vunpack.c.l.b16 %v127
  %v355 = vunpack.c.l.b16 %v128
  %v356 = vunpack.c.l.b16 %v129
  %v357 = vpack.c.b16 %v260, %v259
  %v358 = vpack.c.b16 %v262, %v261
  %v359 = vpack.c.b16 %v264, %v263
  %v360 = vpack.c.b16 %v266, %v265
  %v361 = vpack.c.b16 %v268, %v267
  %v362 = vpack.c.b16 %v270, %v269
  %v363 = vpack.c.b16 %v272, %v271
  %v364 = vpack.c.b16 %v274, %v273
  %v365 = vpack.c.b16 %v276, %v275
  %v366 = vpack.c.b16 %v278, %v277
  %v367 = vpack.c.b16 %v280, %v279
  %v368 = vpack.c.b16 %v282, %v281
  %v369 = vpack.c.b16 %v284, %v283
  %v370 = vpack.c.b16 %v286, %v285
  %v371 = vpack.c.b16 %v288, %v287
  %v372 = vpack.c.b16 %v290, %v289
  %v373 = vpack.c.b16 %v292, %v291
  %v374 = vpack.c.b16 %v294, %v293
  %v375 = vpack.c.b16 %v296, %v295
  %v376 = vpack.c.b16 %v298, %v297
  %v377 = vpack.c.b16 %v300, %v299
  %v378 = vpack.c.b16 %v302, %v301
  %v379 = vpack.c.b16 %v304, %v303
  %v380 = vpack.c.b16 %v306, %v305
  %v381 = vpack.c.b16 %v308, %v307
  %v382 = vpack.c.b16 %v310, %v309
  %v383 = vpack.c.b16 %v312, %v311
  %v384 = vpack.c.b16 %v314, %v313
  %v385 = vpack.c.b16 %v316, %v315
  %v386 = vpack.c.b16 %v318, %v317
  %v387 = vpack.c.b16 %v320, %v319
  %v388 = vpack.c.b16 %v322, %v321
  %v389 = vpack.c.b16 %v324, %v323
  %v390 = vpack.c.b16 %v326, %v325
  %v391 = vpack.c.b16 %v328, %v327
  %v392 = vpack.c.b16 %v330, %v329
  %v393 = vpack.c.b16 %v332, %v331
  %v394 = vpack.c.b16 %v334, %v333
  %v395 = vpack.c.b16 %v336, %v335
  %v396 = vpack.c.b16 %v338, %v337
  %v397 = vpack.c.b16 %v340, %v339
  %v398 = vpack.c.b16 %v342, %v341
  %v399 = vpack.c.b16 %v344, %v343
  %v400 = vpack.c.b16 %v346, %v345
  %v401 = vpack.c.b16 %v348, %v347
  %v402 = vpack.c.b16 %v350, %v349
  %v403 = vpack.c.b16 %v352, %v351
  %v404 = vpack.c.b16 %v354, %v353
  %v405 = vpack.c.b16 %v356, %v355
  %vm455 = vcmask 130048
  %v457 = vsel %vm455, %v154, 0
  %459 = vmatprep.subr.bf16.mxu0 0
  %460 = vmatpush1.bf16.msra.mxu0 %v364
  %461 = vmatprep.subr.bf16.mxu0 0
  %462 = vmatpush1.bf16.msra.mxu0 %v363
  %463 = vmatprep.subr.bf16.mxu0 0
  %464 = vmatpush1.bf16.msra.mxu0 %v362
  %465 = vmatprep.subr.bf16.mxu0 0
  %466 = vmatpush1.bf16.msra.mxu0 %v361
  %467 = vmatprep.subr.bf16.mxu0 0
  %468 = vmatpush1.bf16.msra.mxu0 %v360
  %469 = vmatprep.subr.bf16.mxu0 0
  %470 = vmatpush1.bf16.msra.mxu0 %v359
  %471 = vmatprep.subr.bf16.mxu0 0
  %472 = vmatpush1.bf16.msra.mxu0 %v358
  %473 = vmatprep.subr.bf16.mxu0 0
  %474 = vmatpush1.bf16.msra.mxu0 %v357
  %475 = vmatprep.subr.bf16.mxu0 0
  %476 = vmatpush2.bf16.msra.mxu0 %v372
  %477 = vmatprep.subr.bf16.mxu0 0
  %478 = vmatpush2.bf16.msra.mxu0 %v371
  %479 = vmatprep.subr.bf16.mxu0 0
  %480 = vmatpush2.bf16.msra.mxu0 %v370
  %481 = vmatprep.subr.bf16.mxu0 0
  %482 = vmatpush2.bf16.msra.mxu0 %v369
  %483 = vmatprep.subr.bf16.mxu0 0
  %484 = vmatpush2.bf16.msra.mxu0 %v368
  %485 = vmatprep.subr.bf16.mxu0 0
  %486 = vmatpush2.bf16.msra.mxu0 %v367
  %487 = vmatprep.subr.bf16.mxu0 0
  %488 = vmatpush2.bf16.msra.mxu0 %v366
  %489 = vmatprep.subr.bf16.mxu0 0
  %490 = vmatpush2.bf16.msra.mxu0 %v365
  %491 = vmatprep.mubr.bf16.mxu0 %v149
  %492 = vmatmul.mubr.bf16.gmra.mxu0 %v148
  %v493 = vpop.f32.mrf.mxu0
  %v494 = vadd.f32 %v135, %v493
  %v495 = vpop.f32.mrf.mxu0
  %v496 = vpop.f32.mrf.mxu0
  %v497 = vpop.f32.mrf.mxu0
  %498 = vdwg.mxu0
  %499 = vmatprep.subr.bf16.mxu0 0
  %500 = vmatpush1.bf16.msra.mxu0 %v380
  %501 = vmatprep.subr.bf16.mxu0 0
  %502 = vmatpush1.bf16.msra.mxu0 %v379
  %503 = vmatprep.subr.bf16.mxu0 0
  %504 = vmatpush1.bf16.msra.mxu0 %v378
  %505 = vmatprep.subr.bf16.mxu0 0
  %506 = vmatpush1.bf16.msra.mxu0 %v377
  %507 = vmatprep.subr.bf16.mxu0 0
  %508 = vmatpush1.bf16.msra.mxu0 %v376
  %509 = vmatprep.subr.bf16.mxu0 0
  %510 = vmatpush1.bf16.msra.mxu0 %v375
  %511 = vmatprep.subr.bf16.mxu0 0
  %512 = vmatpush1.bf16.msra.mxu0 %v374
  %513 = vmatprep.subr.bf16.mxu0 0
  %514 = vmatpush1.bf16.msra.mxu0 %v373
  %515 = vmatprep.subr.bf16.mxu0 0
  %516 = vmatpush2.bf16.msra.mxu0 %v388
  %517 = vmatprep.subr.bf16.mxu0 0
  %518 = vmatpush2.bf16.msra.mxu0 %v387
  %519 = vmatprep.subr.bf16.mxu0 0
  %520 = vmatpush2.bf16.msra.mxu0 %v386
  %521 = vmatprep.subr.bf16.mxu0 0
  %522 = vmatpush2.bf16.msra.mxu0 %v385
  %523 = vmatprep.subr.bf16.mxu0 0
  %524 = vmatpush2.bf16.msra.mxu0 %v384
  %525 = vmatprep.subr.bf16.mxu0 0
  %526 = vmatpush2.bf16.msra.mxu0 %v383
  %527 = vmatprep.subr.bf16.mxu0 0
  %528 = vmatpush2.bf16.msra.mxu0 %v382
  %529 = vmatprep.subr.bf16.mxu0 0
  %530 = vmatpush2.bf16.msra.mxu0 %v381
  %531 = vmatprep.mubr.bf16.mxu0 %v151
  %532 = vmatmul.mubr.bf16.gmra.mxu0 %v150
  %v533 = vpop.f32.mrf.mxu0
  %v534 = vadd.f32 %v494, %v533
  %v535 = vpop.f32.mrf.mxu0
  %v536 = vpop.f32.mrf.mxu0
  %v537 = vpop.f32.mrf.mxu0
  %538 = vdwg.mxu0
  %539 = vmatprep.subr.bf16.mxu0 0
  %540 = vmatpush1.bf16.msra.mxu0 %v396
  %541 = vmatprep.subr.bf16.mxu0 0
  %542 = vmatpush1.bf16.msra.mxu0 %v395
  %543 = vmatprep.subr.bf16.mxu0 0
  %544 = vmatpush1.bf16.msra.mxu0 %v394
  %545 = vmatprep.subr.bf16.mxu0 0
  %546 = vmatpush1.bf16.msra.mxu0 %v393
  %547 = vmatprep.subr.bf16.mxu0 0
  %548 = vmatpush1.bf16.msra.mxu0 %v392
  %549 = vmatprep.subr.bf16.mxu0 0
  %550 = vmatpush1.bf16.msra.mxu0 %v391
  %551 = vmatprep.subr.bf16.mxu0 0
  %552 = vmatpush1.bf16.msra.mxu0 %v390
  %553 = vmatprep.subr.bf16.mxu0 0
  %554 = vmatpush1.bf16.msra.mxu0 %v389
  %555 = vmatprep.subr.bf16.mxu0 0
  %556 = vmatpush2.bf16.msra.mxu0 %v404
  %557 = vmatprep.subr.bf16.mxu0 0
  %558 = vmatpush2.bf16.msra.mxu0 %v403
  %559 = vmatprep.subr.bf16.mxu0 0
  %560 = vmatpush2.bf16.msra.mxu0 %v402
  %561 = vmatprep.subr.bf16.mxu0 0
  %562 = vmatpush2.bf16.msra.mxu0 %v401
  %563 = vmatprep.subr.bf16.mxu0 0
  %564 = vmatpush2.bf16.msra.mxu0 %v400
  %565 = vmatprep.subr.bf16.mxu0 0
  %566 = vmatpush2.bf16.msra.mxu0 %v399
  %567 = vmatprep.subr.bf16.mxu0 0
  %568 = vmatpush2.bf16.msra.mxu0 %v398
  %569 = vmatprep.subr.bf16.mxu0 0
  %570 = vmatpush2.bf16.msra.mxu0 %v397
  %571 = vmatprep.mubr.bf16.mxu0 %v153
  %572 = vmatmul.mubr.bf16.gmra.mxu0 %v152
  %v573 = vpop.f32.mrf.mxu0
  %v574 = vadd.f32 %v534, %v573
  %v575 = vpop.f32.mrf.mxu0
  %v576 = vpop.f32.mrf.mxu0
  %v577 = vpop.f32.mrf.mxu0
  %578 = vdwg.mxu0
  %579 = vmatprep.subr.bf16.mxu0 0
  %580 = vmatpush1.bf16.msra.mxu0 0
  %581 = vmatprep.subr.bf16.mxu0 0
  %582 = vmatpush1.bf16.msra.mxu0 0
  %583 = vmatprep.subr.bf16.mxu0 0
  %584 = vmatpush1.bf16.msra.mxu0 0
  %585 = vmatprep.subr.bf16.mxu0 0
  %586 = vmatpush1.bf16.msra.mxu0 0
  %587 = vmatprep.subr.bf16.mxu0 0
  %588 = vmatpush1.bf16.msra.mxu0 0
  %589 = vmatprep.subr.bf16.mxu0 0
  %590 = vmatpush1.bf16.msra.mxu0 0
  %591 = vmatprep.subr.bf16.mxu0 0
  %592 = vmatpush1.bf16.msra.mxu0 0
  %593 = vmatprep.subr.bf16.mxu0 0
  %594 = vmatpush1.bf16.msra.mxu0 %v405
  %595 = vmatprep.subr.bf16.mxu0 0
  %596 = vmatpush2.bf16.msra.mxu0 0
  %597 = vmatprep.subr.bf16.mxu0 0
  %598 = vmatpush2.bf16.msra.mxu0 0
  %599 = vmatprep.subr.bf16.mxu0 0
  %600 = vmatpush2.bf16.msra.mxu0 0
  %601 = vmatprep.subr.bf16.mxu0 0
  %602 = vmatpush2.bf16.msra.mxu0 0
  %603 = vmatprep.subr.bf16.mxu0 0
  %604 = vmatpush2.bf16.msra.mxu0 0
  %605 = vmatprep.subr.bf16.mxu0 0
  %606 = vmatpush2.bf16.msra.mxu0 0
  %607 = vmatprep.subr.bf16.mxu0 0
  %608 = vmatpush2.bf16.msra.mxu0 0
  %609 = vmatprep.subr.bf16.mxu0 0
  %610 = vmatpush2.bf16.msra.mxu0 0
  %611 = vmatprep.mubr.bf16.mxu0 0
  %612 = vmatmul.mubr.bf16.gmra.mxu0 %v457
  %v613 = vpop.f32.mrf.mxu0
  %v614 = vadd.f32 %v574, %v613
  %v615 = vpop.f32.mrf.mxu0
  %v616 = vpop.f32.mrf.mxu0
  %v617 = vpop.f32.mrf.mxu0
  %618 = vdwg.mxu0
  %v619 = vmul.f32 %v614, 1.442695
  %v620 = vpow.pop %v619
  %v621 = vld [vmem:[%s5] sm:$0xff]
  %623 = vrot.lane.b32.xlu0 %v621, 64
  %v624 = vpop.permute.xlu0 %623
  %v626 = vmul.f32 %v620, %v624
  %628 = vrot.lane.b32.xlu0 %v626, 64
  %v629 = vpop.permute.xlu0 %628
  %v631 = vadd.f32 %v614, %v629
  %v632 = vpack.c.bf16 %v631, %v631
  %v633 = vld [vmem:[%s3] sm:$0xff]
  %v634 = vld [vmem:[%s3 + $0x8] sm:$0xff]
  %v635 = vld [vmem:[%s3 + $0x10] sm:$0xff]
  %v636 = vld [vmem:[%s3 + $0x18] sm:$0xf]
  %v637 = vld [vmem:[%s3 + $0x1c] sm:$0xff]
  %v638 = vld [vmem:[%s3 + $0x24] sm:$0xff]
  %v639 = vld [vmem:[%s3 + $0x2c] sm:$0xff]
  %v640 = vld [vmem:[%s3 + $0x34] sm:$0xf]
  %v641 = vld [vmem:[%s3 + $0x38] sm:$0xff]
  %v642 = vld [vmem:[%s3 + $0x40] sm:$0xff]
  %v643 = vld [vmem:[%s3 + $0x48] sm:$0xff]
  %v644 = vld [vmem:[%s3 + $0x50] sm:$0xf]
  %v645 = vld [vmem:[%s3 + $0x54] sm:$0xff]
  %v646 = vld [vmem:[%s3 + $0x5c] sm:$0xff]
  %v647 = vld [vmem:[%s3 + $0x64] sm:$0xff]
  %v648 = vld [vmem:[%s3 + $0x6c] sm:$0xf]
  %v649 = vld [vmem:[%s3 + $0x70] sm:$0xff]
  %v650 = vld [vmem:[%s3 + $0x78] sm:$0xff]
  %v651 = vld [vmem:[%s3 + $0x80] sm:$0xff]
  %v652 = vld [vmem:[%s3 + $0x88] sm:$0xf]
  %v653 = vld [vmem:[%s3 + $0x8c] sm:$0xff]
  %v654 = vld [vmem:[%s3 + $0x94] sm:$0xff]
  %v655 = vld [vmem:[%s3 + $0x9c] sm:$0xff]
  %v656 = vld [vmem:[%s3 + $0xa4] sm:$0xf]
  %v657 = vld [vmem:[%s3 + $0xa8] sm:$0xff]
  %v658 = vld [vmem:[%s3 + $0xb0] sm:$0xff]
  %v659 = vld [vmem:[%s3 + $0xb8] sm:$0xff]
  %v660 = vld [vmem:[%s3 + $0xc0] sm:$0xf]
  %v661 = vld [vmem:[%s3 + $0xc4] sm:$0xff]
  %v662 = vld [vmem:[%s3 + $0xcc] sm:$0xff]
  %v663 = vld [vmem:[%s3 + $0xd4] sm:$0xff]
  %v664 = vld [vmem:[%s3 + $0xdc] sm:$0xf]
  %v665 = vld [vmem:[%s4] sm:$0x7f]
  %v667 = vlaneseq
  %v668 = vshrl.u32 %v667, 7
  %v669 = vsub.s32 0, %v668
  %v670 = vrot.slane %v665, %v669
  %v671 = vlaneseq
  %v672 = vshrl.u32 %v671, 7
  %v673 = vsub.s32 1, %v672
  %v674 = vrot.slane %v665, %v673
  %v675 = vlaneseq
  %v676 = vshrl.u32 %v675, 7
  %v677 = vsub.s32 2, %v676
  %v678 = vrot.slane %v665, %v677
  %v679 = vlaneseq
  %v680 = vshrl.u32 %v679, 7
  %v681 = vsub.s32 3, %v680
  %v682 = vrot.slane %v665, %v681
  %v683 = vlaneseq
  %v684 = vshrl.u32 %v683, 7
  %v685 = vsub.s32 4, %v684
  %v686 = vrot.slane %v665, %v685
  %v687 = vlaneseq
  %v688 = vshrl.u32 %v687, 7
  %v689 = vsub.s32 5, %v688
  %v690 = vrot.slane %v665, %v689
  %v691 = vlaneseq
  %v692 = vshrl.u32 %v691, 7
  %v693 = vsub.s32 6, %v692
  %v694 = vrot.slane %v665, %v693
  %v734 = vunpack.c.l.b16 %v633
  %v735 = vunpack.c.h.b16 %v633
  %v736 = vunpack.c.l.b16 %v634
  %v737 = vunpack.c.h.b16 %v634
  %v738 = vunpack.c.l.b16 %v635
  %v739 = vunpack.c.h.b16 %v635
  %v740 = vunpack.c.l.b16 %v636
  %v741 = vunpack.c.l.b16 %v637
  %v742 = vunpack.c.h.b16 %v637
  %v743 = vunpack.c.l.b16 %v638
  %v744 = vunpack.c.h.b16 %v638
  %v745 = vunpack.c.l.b16 %v639
  %v746 = vunpack.c.h.b16 %v639
  %v747 = vunpack.c.l.b16 %v640
  %v748 = vunpack.c.l.b16 %v641
  %v749 = vunpack.c.h.b16 %v641
  %v750 = vunpack.c.l.b16 %v642
  %v751 = vunpack.c.h.b16 %v642
  %v752 = vunpack.c.l.b16 %v643
  %v753 = vunpack.c.h.b16 %v643
  %v754 = vunpack.c.l.b16 %v644
  %v755 = vunpack.c.l.b16 %v645
  %v756 = vunpack.c.h.b16 %v645
  %v757 = vunpack.c.l.b16 %v646
  %v758 = vunpack.c.h.b16 %v646
  %v759 = vunpack.c.l.b16 %v647
  %v760 = vunpack.c.h.b16 %v647
  %v761 = vunpack.c.l.b16 %v648
  %v762 = vunpack.c.l.b16 %v649
  %v763 = vunpack.c.h.b16 %v649
  %v764 = vunpack.c.l.b16 %v650
  %v765 = vunpack.c.h.b16 %v650
  %v766 = vunpack.c.l.b16 %v651
  %v767 = vunpack.c.h.b16 %v651
  %v768 = vunpack.c.l.b16 %v652
  %v769 = vunpack.c.l.b16 %v653
  %v770 = vunpack.c.h.b16 %v653
  %v771 = vunpack.c.l.b16 %v654
  %v772 = vunpack.c.h.b16 %v654
  %v773 = vunpack.c.l.b16 %v655
  %v774 = vunpack.c.h.b16 %v655
  %v775 = vunpack.c.l.b16 %v656
  %v776 = vunpack.c.l.b16 %v657
  %v777 = vunpack.c.h.b16 %v657
  %v778 = vunpack.c.l.b16 %v658
  %v779 = vunpack.c.h.b16 %v658
  %v780 = vunpack.c.l.b16 %v659
  %v781 = vunpack.c.h.b16 %v659
  %v782 = vunpack.c.l.b16 %v660
  %v783 = vunpack.c.l.b16 %v661
  %v784 = vunpack.c.h.b16 %v661
  %v785 = vunpack.c.l.b16 %v662
  %v786 = vunpack.c.h.b16 %v662
  %v787 = vunpack.c.l.b16 %v663
  %v788 = vunpack.c.h.b16 %v663
  %v789 = vunpack.c.l.b16 %v664
  %v790 = vpack.c.b16 %v741, %v734
  %v791 = vpack.c.b16 %v742, %v735
  %v792 = vpack.c.b16 %v743, %v736
  %v793 = vpack.c.b16 %v744, %v737
  %v794 = vpack.c.b16 %v745, %v738
  %v795 = vpack.c.b16 %v746, %v739
  %v796 = vpack.c.b16 %v747, %v740
  %v797 = vpack.c.b16 %v755, %v748
  %v798 = vpack.c.b16 %v756, %v749
  %v799 = vpack.c.b16 %v757, %v750
  %v800 = vpack.c.b16 %v758, %v751
  %v801 = vpack.c.b16 %v759, %v752
  %v802 = vpack.c.b16 %v760, %v753
  %v803 = vpack.c.b16 %v761, %v754
  %v804 = vpack.c.b16 %v769, %v762
  %v805 = vpack.c.b16 %v770, %v763
  %v806 = vpack.c.b16 %v771, %v764
  %v807 = vpack.c.b16 %v772, %v765
  %v808 = vpack.c.b16 %v773, %v766
  %v809 = vpack.c.b16 %v774, %v767
  %v810 = vpack.c.b16 %v775, %v768
  %v811 = vpack.c.b16 %v783, %v776
  %v812 = vpack.c.b16 %v784, %v777
  %v813 = vpack.c.b16 %v785, %v778
  %v814 = vpack.c.b16 %v786, %v779
  %v815 = vpack.c.b16 %v787, %v780
  %v816 = vpack.c.b16 %v788, %v781
  %v817 = vpack.c.b16 %v789, %v782
  %vm846 = vcmask 523264
  %v848 = vsel %vm846, %v632, 0
  %850 = vmatprep.subr.bf16.mxu0 0
  %851 = vmatpush1.bf16.msra.mxu0 0
  %852 = vmatprep.subr.bf16.mxu0 0
  %853 = vmatpush1.bf16.msra.mxu0 0
  %854 = vmatprep.subr.bf16.mxu0 0
  %855 = vmatpush1.bf16.msra.mxu0 0
  %856 = vmatprep.subr.bf16.mxu0 0
  %857 = vmatpush1.bf16.msra.mxu0 0
  %858 = vmatprep.subr.bf16.mxu0 %v812
  %859 = vmatpush1.bf16.msra.mxu0 %v811
  %860 = vmatprep.subr.bf16.mxu0 %v805
  %861 = vmatpush1.bf16.msra.mxu0 %v804
  %862 = vmatprep.subr.bf16.mxu0 %v798
  %863 = vmatpush1.bf16.msra.mxu0 %v797
  %864 = vmatprep.subr.bf16.mxu0 %v791
  %865 = vmatpush1.bf16.msra.mxu0 %v790
  %866 = vmatprep.subr.bf16.mxu0 0
  %867 = vmatpush2.bf16.msra.mxu0 0
  %868 = vmatprep.subr.bf16.mxu0 0
  %869 = vmatpush2.bf16.msra.mxu0 0
  %870 = vmatprep.subr.bf16.mxu0 0
  %871 = vmatpush2.bf16.msra.mxu0 0
  %872 = vmatprep.subr.bf16.mxu0 0
  %873 = vmatpush2.bf16.msra.mxu0 0
  %874 = vmatprep.subr.bf16.mxu0 0
  %875 = vmatpush2.bf16.msra.mxu0 0
  %876 = vmatprep.subr.bf16.mxu0 0
  %877 = vmatpush2.bf16.msra.mxu0 0
  %878 = vmatprep.subr.bf16.mxu0 0
  %879 = vmatpush2.bf16.msra.mxu0 0
  %880 = vmatprep.subr.bf16.mxu0 0
  %881 = vmatpush2.bf16.msra.mxu0 0
  %882 = vmatprep.mubr.bf16.mxu0 0
  %883 = vmatmul.mubr.bf16.gmra.mxu0 %v848
  %v884 = vpop.f32.mrf.mxu0
  %v885 = vadd.f32 %v670, %v884
  %v886 = vpop.f32.mrf.mxu0
  %v887 = vadd.f32 %v674, %v886
  %v888 = vpop.f32.mrf.mxu0
  %v889 = vpop.f32.mrf.mxu0
  %890 = vdwg.mxu0
  %891 = vmatprep.subr.bf16.mxu0 0
  %892 = vmatpush1.bf16.msra.mxu0 0
  %893 = vmatprep.subr.bf16.mxu0 0
  %894 = vmatpush1.bf16.msra.mxu0 0
  %895 = vmatprep.subr.bf16.mxu0 0
  %896 = vmatpush1.bf16.msra.mxu0 0
  %897 = vmatprep.subr.bf16.mxu0 0
  %898 = vmatpush1.bf16.msra.mxu0 0
  %899 = vmatprep.subr.bf16.mxu0 %v814
  %900 = vmatpush1.bf16.msra.mxu0 %v813
  %901 = vmatprep.subr.bf16.mxu0 %v807
  %902 = vmatpush1.bf16.msra.mxu0 %v806
  %903 = vmatprep.subr.bf16.mxu0 %v800
  %904 = vmatpush1.bf16.msra.mxu0 %v799
  %905 = vmatprep.subr.bf16.mxu0 %v793
  %906 = vmatpush1.bf16.msra.mxu0 %v792
  %907 = vmatprep.subr.bf16.mxu0 0
  %908 = vmatpush2.bf16.msra.mxu0 0
  %909 = vmatprep.subr.bf16.mxu0 0
  %910 = vmatpush2.bf16.msra.mxu0 0
  %911 = vmatprep.subr.bf16.mxu0 0
  %912 = vmatpush2.bf16.msra.mxu0 0
  %913 = vmatprep.subr.bf16.mxu0 0
  %914 = vmatpush2.bf16.msra.mxu0 0
  %915 = vmatprep.subr.bf16.mxu0 0
  %916 = vmatpush2.bf16.msra.mxu0 0
  %917 = vmatprep.subr.bf16.mxu0 0
  %918 = vmatpush2.bf16.msra.mxu0 0
  %919 = vmatprep.subr.bf16.mxu0 0
  %920 = vmatpush2.bf16.msra.mxu0 0
  %921 = vmatprep.subr.bf16.mxu0 0
  %922 = vmatpush2.bf16.msra.mxu0 0
  %923 = vmatprep.mubr.bf16.mxu0 0
  %924 = vmatmul.mubr.bf16.gmra.mxu0 %v848
  %v925 = vpop.f32.mrf.mxu0
  %v926 = vadd.f32 %v678, %v925
  %v927 = vpop.f32.mrf.mxu0
  %v928 = vadd.f32 %v682, %v927
  %v929 = vpop.f32.mrf.mxu0
  %v930 = vpop.f32.mrf.mxu0
  %931 = vdwg.mxu0
  %932 = vmatprep.subr.bf16.mxu0 0
  %933 = vmatpush1.bf16.msra.mxu0 0
  %934 = vmatprep.subr.bf16.mxu0 0
  %935 = vmatpush1.bf16.msra.mxu0 0
  %936 = vmatprep.subr.bf16.mxu0 0
  %937 = vmatpush1.bf16.msra.mxu0 0
  %938 = vmatprep.subr.bf16.mxu0 0
  %939 = vmatpush1.bf16.msra.mxu0 0
  %940 = vmatprep.subr.bf16.mxu0 %v816
  %941 = vmatpush1.bf16.msra.mxu0 %v815
  %942 = vmatprep.subr.bf16.mxu0 %v809
  %943 = vmatpush1.bf16.msra.mxu0 %v808
  %944 = vmatprep.subr.bf16.mxu0 %v802
  %945 = vmatpush1.bf16.msra.mxu0 %v801
  %946 = vmatprep.subr.bf16.mxu0 %v795
  %947 = vmatpush1.bf16.msra.mxu0 %v794
  %948 = vmatprep.subr.bf16.mxu0 0
  %949 = vmatpush2.bf16.msra.mxu0 0
  %950 = vmatprep.subr.bf16.mxu0 0
  %951 = vmatpush2.bf16.msra.mxu0 0
  %952 = vmatprep.subr.bf16.mxu0 0
  %953 = vmatpush2.bf16.msra.mxu0 0
  %954 = vmatprep.subr.bf16.mxu0 0
  %955 = vmatpush2.bf16.msra.mxu0 0
  %956 = vmatprep.subr.bf16.mxu0 0
  %957 = vmatpush2.bf16.msra.mxu0 0
  %958 = vmatprep.subr.bf16.mxu0 0
  %959 = vmatpush2.bf16.msra.mxu0 0
  %960 = vmatprep.subr.bf16.mxu0 0
  %961 = vmatpush2.bf16.msra.mxu0 0
  %962 = vmatprep.subr.bf16.mxu0 0
  %963 = vmatpush2.bf16.msra.mxu0 0
  %964 = vmatprep.mubr.bf16.mxu0 0
  %965 = vmatmul.mubr.bf16.gmra.mxu0 %v848
  %v966 = vpop.f32.mrf.mxu0
  %v967 = vadd.f32 %v686, %v966
  %v968 = vpop.f32.mrf.mxu0
  %v969 = vadd.f32 %v690, %v968
  %v970 = vpop.f32.mrf.mxu0
  %v971 = vpop.f32.mrf.mxu0
  %972 = vdwg.mxu0
  %973 = vmatprep.subr.bf16.mxu0 0
  %974 = vmatpush1.bf16.msra.mxu0 0
  %975 = vmatprep.subr.bf16.mxu0 0
  %976 = vmatpush1.bf16.msra.mxu0 0
  %977 = vmatprep.subr.bf16.mxu0 0
  %978 = vmatpush1.bf16.msra.mxu0 0
  %979 = vmatprep.subr.bf16.mxu0 0
  %980 = vmatpush1.bf16.msra.mxu0 0
  %981 = vmatprep.subr.bf16.mxu0 0
  %982 = vmatpush1.bf16.msra.mxu0 %v817
  %983 = vmatprep.subr.bf16.mxu0 0
  %984 = vmatpush1.bf16.msra.mxu0 %v810
  %985 = vmatprep.subr.bf16.mxu0 0
  %986 = vmatpush1.bf16.msra.mxu0 %v803
  %987 = vmatprep.subr.bf16.mxu0 0
  %988 = vmatpush1.bf16.msra.mxu0 %v796
  %989 = vmatprep.subr.bf16.mxu0 0
  %990 = vmatpush2.bf16.msra.mxu0 0
  %991 = vmatprep.subr.bf16.mxu0 0
  %992 = vmatpush2.bf16.msra.mxu0 0
  %993 = vmatprep.subr.bf16.mxu0 0
  %994 = vmatpush2.bf16.msra.mxu0 0
  %995 = vmatprep.subr.bf16.mxu0 0
  %996 = vmatpush2.bf16.msra.mxu0 0
  %997 = vmatprep.subr.bf16.mxu0 0
  %998 = vmatpush2.bf16.msra.mxu0 0
  %999 = vmatprep.subr.bf16.mxu0 0
  %1000 = vmatpush2.bf16.msra.mxu0 0
  %1001 = vmatprep.subr.bf16.mxu0 0
  %1002 = vmatpush2.bf16.msra.mxu0 0
  %1003 = vmatprep.subr.bf16.mxu0 0
  %1004 = vmatpush2.bf16.msra.mxu0 0
  %1005 = vmatprep.mubr.bf16.mxu0 0
  %1006 = vmatmul.mubr.bf16.gmra.mxu0 %v848
  %v1007 = vpop.f32.mrf.mxu0
  %v1008 = vadd.f32 %v694, %v1007
  %v1009 = vpop.f32.mrf.mxu0
  %v1010 = vpop.f32.mrf.mxu0
  %v1011 = vpop.f32.mrf.mxu0
  %1012 = vdwg.mxu0
  %1013 = vst.msk [vmem:[%s6] sm:$0xff] %vm846, %v631
  %1014 = vst.msk [vmem:[%s7] sm:$0xff] %vm846, %v614
  %1016 = vrot.lane.b32.xlu0 %v620, 64
  %v1017 = vpop.permute.xlu0 %1016
  %1019 = vst.msk [vmem:[%s8] sm:$0xff] %vm846, %v1017
  %1020 = vst [vmem:[%s9] sm:$0xff] %v885
  %1021 = vst [vmem:[%s9 + $0x8] sm:$0xff] %v887
  %1022 = vst [vmem:[%s9 + $0x10] sm:$0xff] %v926
  %1023 = vst [vmem:[%s9 + $0x18] sm:$0xff] %v928
  %1024 = vst [vmem:[%s9 + $0x20] sm:$0xff] %v967
  %1025 = vst [vmem:[%s9 + $0x28] sm:$0xff] %v969
  %vm1026 = vcmask 211968
  %1027 = vst.msk [vmem:[%s9 + $0x30] sm:$0xff] %vm1026, %v1008
  // Predicated region
  $region26: #{vae_forward.7} parent=0 // pred_check
    _
  $region27: #{vae_forward.7} parent=0 // pred_check_branch
    %1029 = sbr.rel (0) target = $region29
  $region28: #{vae_forward.7} parent=0 // pred_region
    _
  $region29: #{vae_forward.7} parent=0 // pred_fallthru
    _
  // Predicated region
  $region30: #{vae_forward.7} parent=0 // pred_check
    _
  $region31: #{vae_forward.7} parent=0 // pred_check_branch
    %1031 = sbr.rel (0) target = $region33
  $region32: #{vae_forward.7} parent=0 // pred_region
    _
  $region33: #{vae_forward.7} parent=0 // pred_fallthru
    _
  // Predicated region
  $region34: #{vae_forward.7} parent=0 // pred_check
    _
  $region35: #{vae_forward.7} parent=0 // pred_check_branch
    %1033 = sbr.rel (0) target = $region37
  $region36: #{vae_forward.7} parent=0 // pred_region
    _
  $region37: #{vae_forward.7} parent=0 // pred_fallthru
    _
  // Predicated region
  $region38: #{vae_forward.7} parent=0 // pred_check
    _
  $region39: #{vae_forward.7} parent=0 // pred_check_branch
    %1035 = sbr.rel (0) target = $region41
  $region40: #{vae_forward.7} parent=0 // pred_region
    _
  $region41: #{vae_forward.7} parent=0 // pred_fallthru
    _
  // Predicated region
  $region42: #{vae_forward.7} parent=0 // pred_check
    _
  $region43: #{vae_forward.7} parent=0 // pred_check_branch
    %1037 = sbr.rel (0) target = $region45
  $region44: #{vae_forward.7} parent=0 // pred_region
    _
  $region45: #{vae_forward.7} parent=0 // pred_fallthru
    _
  // Predicated region
  $region46: #{vae_forward.7} parent=0 // pred_check
    _
  $region47: #{vae_forward.7} parent=0 // pred_check_branch
    %1039 = sbr.rel (0) target = $region49
  $region48: #{vae_forward.7} parent=0 // pred_region
    _
  $region49: #{vae_forward.7} parent=0 // pred_fallthru
    _
  // Predicated region
  $region50: #{vae_forward.7} parent=0 // pred_check
    _
  $region51: #{vae_forward.7} parent=0 // pred_check_branch
    %1041 = sbr.rel (0) target = $region53
  $region52: #{vae_forward.7} parent=0 // pred_region
    _
  $region53: #{vae_forward.7} parent=0 // pred_fallthru
    _
  // Predicated region
  $region54: #{vae_forward.7} parent=0 // pred_check
    _
  $region55: #{vae_forward.7} parent=0 // pred_check_branch
    %1043 = sbr.rel (0) target = $region57
  $region56: #{vae_forward.7} parent=0 // pred_region
    _
  $region57: #{vae_forward.7} parent=0 // pred_fallthru
    _

// kernel: vae_forward.8
$region0: #{vae_forward.8}
  #allocation0 [shape = 'u32[]', space=smem, size = 0x4, offset = 0x4, fixed_abs, tag = 'smem constant byte address 0x4 - core index']
  #allocation1 [shape = 'u32[144,128]{1,0:T(1,128)}', space=vmem, size = 0x12000, scoped, tag = 'internal scratch']
  #allocation2 [shape = 'f32[2,2,7,112]{3,2,1,0:T(8,128)}', space=vmem, size = 0x4000, scoped, tag = 'scratch operand']
  %s0 = inlined_call_operand.vmem [shape: bf16[2,1,8,112], index: 0, kind: input, shape index: {}]
  %s1 = inlined_call_operand.vmem [shape: bf16[3,112,112], index: 1, kind: input, shape index: {}]
  %s2 = inlined_call_operand.vmem [shape: f32[1,112], index: 2, kind: input, shape index: {}]
  %s3 = inlined_call_operand.vmem [shape: f32[112,8], index: 3, kind: input, shape index: {}]
  %s4 = inlined_call_operand.vmem [shape: f32[8,112], index: 4, kind: input, shape index: {}]
  %s5 = inlined_call_operand.vmem [shape: f32[2,8], index: 5, kind: input, shape index: {}]
  %s6 = inlined_call_operand.vmem [shape: bf16[2,2,7,112], index: 6, kind: output, shape index: {}]
  %s7 = sld [smem:[#allocation0]]
  $region34: #{vae_forward.8} parent=0
    _
  %s9 = ssub.s32 1, %s7
  %s10 = scalar_select 0, %s9, %s7
  // Predicated region
  $region2: #{vae_forward.8} parent=0 // pred_check
    _
  $region3: #{vae_forward.8} parent=0 // pred_check_branch
    %12 = sbr.rel (0) target = $region5
  $region4: #{vae_forward.8} parent=0 // pred_region
    _
  $region5: #{vae_forward.8} parent=0 // pred_fallthru
    _
  // Predicated region
  $region6: #{vae_forward.8} parent=0 // pred_check
    _
  $region7: #{vae_forward.8} parent=0 // pred_check_branch
    %14 = sbr.rel (0) target = $region9
  $region8: #{vae_forward.8} parent=0 // pred_region
    _
  $region9: #{vae_forward.8} parent=0 // pred_fallthru
    _
  // Predicated region
  $region10: #{vae_forward.8} parent=0 // pred_check
    _
  $region11: #{vae_forward.8} parent=0 // pred_check_branch
    %16 = sbr.rel (0) target = $region13
  $region12: #{vae_forward.8} parent=0 // pred_region
    _
  $region13: #{vae_forward.8} parent=0 // pred_fallthru
    _
  // Predicated region
  $region14: #{vae_forward.8} parent=0 // pred_check
    _
  $region15: #{vae_forward.8} parent=0 // pred_check_branch
    %18 = sbr.rel (0) target = $region17
  $region16: #{vae_forward.8} parent=0 // pred_region
    _
  $region17: #{vae_forward.8} parent=0 // pred_fallthru
    _
  // Predicated region
  $region18: #{vae_forward.8} parent=0 // pred_check
    _
  $region19: #{vae_forward.8} parent=0 // pred_check_branch
    %20 = sbr.rel (0) target = $region21
  $region20: #{vae_forward.8} parent=0 // pred_region
    _
  $region21: #{vae_forward.8} parent=0 // pred_fallthru
    _
  // Predicated region
  $region22: #{vae_forward.8} parent=0 // pred_check
    _
  $region23: #{vae_forward.8} parent=0 // pred_check_branch
    %22 = sbr.rel (0) target = $region25
  $region24: #{vae_forward.8} parent=0 // pred_region
    _
  $region25: #{vae_forward.8} parent=0 // pred_fallthru
    _
  %v24 = vld [vmem:[%s0] sm:$0xf]
  %v25 = vld [vmem:[%s1] sm:$0xf]
  %v26 = vld [vmem:[%s1 + $0x4] sm:$0xf]
  %v27 = vld [vmem:[%s1 + $0x8] sm:$0xf]
  %v28 = vld [vmem:[%s1 + $0xc] sm:$0xf]
  %v29 = vld [vmem:[%s1 + $0x10] sm:$0xf]
  %v30 = vld [vmem:[%s1 + $0x14] sm:$0xf]
  %v31 = vld [vmem:[%s1 + $0x18] sm:$0xf]
  %v32 = vld [vmem:[%s1 + $0x1c] sm:$0xf]
  %v33 = vld [vmem:[%s1 + $0x20] sm:$0xf]
  %v34 = vld [vmem:[%s1 + $0x24] sm:$0xf]
  %v35 = vld [vmem:[%s1 + $0x28] sm:$0xf]
  %v36 = vld [vmem:[%s1 + $0x2c] sm:$0xf]
  %v37 = vld [vmem:[%s1 + $0x30] sm:$0xf]
  %v38 = vld [vmem:[%s1 + $0x34] sm:$0xf]
  %v39 = vld [vmem:[%s2] sm:$0x1]
  %v41 = vlaneseq
  %v42 = vshrl.u32 %v41, 7
  %v43 = vsub.s32 0, %v42
  %v44 = vrot.slane %v39, %v43
  %v60 = vunpack.c.l.b16 %v25
  %v61 = vunpack.c.l.b16 %v26
  %v62 = vunpack.c.l.b16 %v27
  %v63 = vunpack.c.l.b16 %v28
  %v64 = vunpack.c.l.b16 %v29
  %v65 = vunpack.c.l.b16 %v30
  %v66 = vunpack.c.l.b16 %v31
  %v67 = vunpack.c.l.b16 %v32
  %v68 = vunpack.c.l.b16 %v33
  %v69 = vunpack.c.l.b16 %v34
  %v70 = vunpack.c.l.b16 %v35
  %v71 = vunpack.c.l.b16 %v36
  %v72 = vunpack.c.l.b16 %v37
  %v73 = vunpack.c.l.b16 %v38
  %v74 = vpack.c.b16 %v61, %v60
  %v75 = vpack.c.b16 %v63, %v62
  %v76 = vpack.c.b16 %v65, %v64
  %v77 = vpack.c.b16 %v67, %v66
  %v78 = vpack.c.b16 %v69, %v68
  %v79 = vpack.c.b16 %v71, %v70
  %v80 = vpack.c.b16 %v73, %v72
  %vm88 = vcmask 916480
  %v90 = vsel %vm88, %v24, 0
  %92 = vmatprep.subr.bf16.mxu0 0
  %93 = vmatpush1.bf16.msra.mxu0 0
  %94 = vmatprep.subr.bf16.mxu0 0
  %95 = vmatpush1.bf16.msra.mxu0 %v80
  %96 = vmatprep.subr.bf16.mxu0 0
  %97 = vmatpush1.bf16.msra.mxu0 %v79
  %98 = vmatprep.subr.bf16.mxu0 0
  %99 = vmatpush1.bf16.msra.mxu0 %v78
  %100 = vmatprep.subr.bf16.mxu0 0
  %101 = vmatpush1.bf16.msra.mxu0 %v77
  %102 = vmatprep.subr.bf16.mxu0 0
  %103 = vmatpush1.bf16.msra.mxu0 %v76
  %104 = vmatprep.subr.bf16.mxu0 0
  %105 = vmatpush1.bf16.msra.mxu0 %v75
  %106 = vmatprep.subr.bf16.mxu0 0
  %107 = vmatpush1.bf16.msra.mxu0 %v74
  %108 = vmatprep.subr.bf16.mxu0 0
  %109 = vmatpush2.bf16.msra.mxu0 0
  %110 = vmatprep.subr.bf16.mxu0 0
  %111 = vmatpush2.bf16.msra.mxu0 0
  %112 = vmatprep.subr.bf16.mxu0 0
  %113 = vmatpush2.bf16.msra.mxu0 0
  %114 = vmatprep.subr.bf16.mxu0 0
  %115 = vmatpush2.bf16.msra.mxu0 0
  %116 = vmatprep.subr.bf16.mxu0 0
  %117 = vmatpush2.bf16.msra.mxu0 0
  %118 = vmatprep.subr.bf16.mxu0 0
  %119 = vmatpush2.bf16.msra.mxu0 0
  %120 = vmatprep.subr.bf16.mxu0 0
  %121 = vmatpush2.bf16.msra.mxu0 0
  %122 = vmatprep.subr.bf16.mxu0 0
  %123 = vmatpush2.bf16.msra.mxu0 0
  %124 = vmatprep.mubr.bf16.mxu0 0
  %125 = vmatmul.mubr.bf16.gmra.mxu0 %v90
  %v126 = vpop.f32.mrf.mxu0
  %v127 = vadd.f32 %v44, %v126
  %v128 = vpop.f32.mrf.mxu0
  %v129 = vpop.f32.mrf.mxu0
  %v130 = vpop.f32.mrf.mxu0
  %131 = vdwg.mxu0
  %vm132 = vcmask 915456
  %133 = vst.msk [vmem:[#allocation2] sm:$0x7f] %vm132, %v127
  %v134 = vsel %vm132, %v127, 0.0
  %v135 = vrot.slane %v134, 4
  %v136 = vadd.f32 %v134, %v135
  %v137 = vrot.slane %v136, 2
  %v138 = vadd.f32 %v136, %v137
  %v139 = vrot.slane %v138, 1
  %v140 = vadd.f32 %v138, %v139
  %v141 = vadd.f32 %v140, 0.0
  %v142 = vmul.f32 %v127, %v127
  %v143 = vsel %vm132, %v142, 0.0
  %v144 = vrot.slane %v143, 4
  %v145 = vadd.f32 %v143, %v144
  %v146 = vrot.slane %v145, 2
  %v147 = vadd.f32 %v145, %v146
  %v148 = vrot.slane %v147, 1
  %v149 = vadd.f32 %v147, %v148
  %v150 = vadd.f32 %v149, 0.0
  %v151 = vld [vmem:[%s0] sm:$0xf]
  %s152 = scalar_lea.vmem %s1, 56
  %v153 = vld [vmem:[%s152] sm:$0xf]
  %v154 = vld [vmem:[%s152 + $0x4] sm:$0xf]
  %v155 = vld [vmem:[%s152 + $0x8] sm:$0xf]
  %v156 = vld [vmem:[%s152 + $0xc] sm:$0xf]
  %v157 = vld [vmem:[%s152 + $0x10] sm:$0xf]
  %v158 = vld [vmem:[%s152 + $0x14] sm:$0xf]
  %v159 = vld [vmem:[%s152 + $0x18] sm:$0xf]
  %v160 = vld [vmem:[%s152 + $0x1c] sm:$0xf]
  %v161 = vld [vmem:[%s152 + $0x20] sm:$0xf]
  %v162 = vld [vmem:[%s152 + $0x24] sm:$0xf]
  %v163 = vld [vmem:[%s152 + $0x28] sm:$0xf]
  %v164 = vld [vmem:[%s152 + $0x2c] sm:$0xf]
  %v165 = vld [vmem:[%s152 + $0x30] sm:$0xf]
  %v166 = vld [vmem:[%s152 + $0x34] sm:$0xf]
  %s167 = scalar_lea.vmem %s1, 112
  %v168 = vld [vmem:[%s167] sm:$0xf]
  %v169 = vld [vmem:[%s167 + $0x4] sm:$0xf]
  %v170 = vld [vmem:[%s167 + $0x8] sm:$0xf]
  %v171 = vld [vmem:[%s167 + $0xc] sm:$0xf]
  %v172 = vld [vmem:[%s167 + $0x10] sm:$0xf]
  %v173 = vld [vmem:[%s167 + $0x14] sm:$0xf]
  %v174 = vld [vmem:[%s167 + $0x18] sm:$0xf]
  %v175 = vld [vmem:[%s167 + $0x1c] sm:$0xf]
  %v176 = vld [vmem:[%s167 + $0x20] sm:$0xf]
  %v177 = vld [vmem:[%s167 + $0x24] sm:$0xf]
  %v178 = vld [vmem:[%s167 + $0x28] sm:$0xf]
  %v179 = vld [vmem:[%s167 + $0x2c] sm:$0xf]
  %v180 = vld [vmem:[%s167 + $0x30] sm:$0xf]
  %v181 = vld [vmem:[%s167 + $0x34] sm:$0xf]
  %v196 = vunpack.c.l.b16 %v168
  %v197 = vunpack.c.l.b16 %v169
  %v198 = vunpack.c.l.b16 %v170
  %v199 = vunpack.c.l.b16 %v171
  %v200 = vunpack.c.l.b16 %v172
  %v201 = vunpack.c.l.b16 %v173
  %v202 = vunpack.c.l.b16 %v174
  %v203 = vunpack.c.l.b16 %v175
  %v204 = vunpack.c.l.b16 %v176
  %v205 = vunpack.c.l.b16 %v177
  %v206 = vunpack.c.l.b16 %v178
  %v207 = vunpack.c.l.b16 %v179
  %v208 = vunpack.c.l.b16 %v180
  %v209 = vunpack.c.l.b16 %v181
  %v210 = vpack.c.b16 %v197, %v196
  %v211 = vpack.c.b16 %v199, %v198
  %v212 = vpack.c.b16 %v201, %v200
  %v213 = vpack.c.b16 %v203, %v202
  %v214 = vpack.c.b16 %v205, %v204
  %v215 = vpack.c.b16 %v207, %v206
  %v216 = vpack.c.b16 %v209, %v208
  %v225 = vsel %vm88, %v151, 0
  %227 = vmatprep.subr.bf16.mxu0 0
  %228 = vmatpush1.bf16.msra.mxu0 0
  %229 = vmatprep.subr.bf16.mxu0 0
  %230 = vmatpush1.bf16.msra.mxu0 %v216
  %231 = vmatprep.subr.bf16.mxu0 0
  %232 = vmatpush1.bf16.msra.mxu0 %v215
  %233 = vmatprep.subr.bf16.mxu0 0
  %234 = vmatpush1.bf16.msra.mxu0 %v214
  %235 = vmatprep.subr.bf16.mxu0 0
  %236 = vmatpush1.bf16.msra.mxu0 %v213
  %237 = vmatprep.subr.bf16.mxu0 0
  %238 = vmatpush1.bf16.msra.mxu0 %v212
  %239 = vmatprep.subr.bf16.mxu0 0
  %240 = vmatpush1.bf16.msra.mxu0 %v211
  %241 = vmatprep.subr.bf16.mxu0 0
  %242 = vmatpush1.bf16.msra.mxu0 %v210
  %243 = vmatprep.subr.bf16.mxu0 0
  %244 = vmatpush2.bf16.msra.mxu0 0
  %245 = vmatprep.subr.bf16.mxu0 0
  %246 = vmatpush2.bf16.msra.mxu0 0
  %247 = vmatprep.subr.bf16.mxu0 0
  %248 = vmatpush2.bf16.msra.mxu0 0
  %249 = vmatprep.subr.bf16.mxu0 0
  %250 = vmatpush2.bf16.msra.mxu0 0
  %251 = vmatprep.subr.bf16.mxu0 0
  %252 = vmatpush2.bf16.msra.mxu0 0
  %253 = vmatprep.subr.bf16.mxu0 0
  %254 = vmatpush2.bf16.msra.mxu0 0
  %255 = vmatprep.subr.bf16.mxu0 0
  %256 = vmatpush2.bf16.msra.mxu0 0
  %257 = vmatprep.subr.bf16.mxu0 0
  %258 = vmatpush2.bf16.msra.mxu0 0
  %259 = vmatprep.mubr.bf16.mxu0 0
  %260 = vmatmul.mubr.bf16.gmra.mxu0 %v225
  %v261 = vpop.f32.mrf.mxu0
  %v262 = vadd.f32 0.0, %v261
  %v263 = vpop.f32.mrf.mxu0
  %v264 = vpop.f32.mrf.mxu0
  %v265 = vpop.f32.mrf.mxu0
  %266 = vdwg.mxu0
  %v268 = vunpack.c.l.b16 %v151
  %v269 = vpack.c.b16 %v268, %v268
  %v271 = vshrl.u32 %v269, 16
  %v273 = vshll.u32 %v269, 16
  %v275 = vrot.slane %v273, 1
  %v276 = vor.u32 %v271, %v275
  %v291 = vunpack.c.l.b16 %v153
  %v292 = vunpack.c.l.b16 %v154
  %v293 = vunpack.c.l.b16 %v155
  %v294 = vunpack.c.l.b16 %v156
  %v295 = vunpack.c.l.b16 %v157
  %v296 = vunpack.c.l.b16 %v158
  %v297 = vunpack.c.l.b16 %v159
  %v298 = vunpack.c.l.b16 %v160
  %v299 = vunpack.c.l.b16 %v161
  %v300 = vunpack.c.l.b16 %v162
  %v301 = vunpack.c.l.b16 %v163
  %v302 = vunpack.c.l.b16 %v164
  %v303 = vunpack.c.l.b16 %v165
  %v304 = vunpack.c.l.b16 %v166
  %v305 = vpack.c.b16 %v292, %v291
  %v306 = vpack.c.b16 %v294, %v293
  %v307 = vpack.c.b16 %v296, %v295
  %v308 = vpack.c.b16 %v298, %v297
  %v309 = vpack.c.b16 %v300, %v299
  %v310 = vpack.c.b16 %v302, %v301
  %v311 = vpack.c.b16 %v304, %v303
  %v320 = vsel %vm88, %v276, 0
  %322 = vmatprep.subr.bf16.mxu0 0
  %323 = vmatpush1.bf16.msra.mxu0 0
  %324 = vmatprep.subr.bf16.mxu0 0
  %325 = vmatpush1.bf16.msra.mxu0 %v311
  %326 = vmatprep.subr.bf16.mxu0 0
  %327 = vmatpush1.bf16.msra.mxu0 %v310
  %328 = vmatprep.subr.bf16.mxu0 0
  %329 = vmatpush1.bf16.msra.mxu0 %v309
  %330 = vmatprep.subr.bf16.mxu0 0
  %331 = vmatpush1.bf16.msra.mxu0 %v308
  %332 = vmatprep.subr.bf16.mxu0 0
  %333 = vmatpush1.bf16.msra.mxu0 %v307
  %334 = vmatprep.subr.bf16.mxu0 0
  %335 = vmatpush1.bf16.msra.mxu0 %v306
  %336 = vmatprep.subr.bf16.mxu0 0
  %337 = vmatpush1.bf16.msra.mxu0 %v305
  %338 = vmatprep.subr.bf16.mxu0 0
  %339 = vmatpush2.bf16.msra.mxu0 0
  %340 = vmatprep.subr.bf16.mxu0 0
  %341 = vmatpush2.bf16.msra.mxu0 0
  %342 = vmatprep.subr.bf16.mxu0 0
  %343 = vmatpush2.bf16.msra.mxu0 0
  %344 = vmatprep.subr.bf16.mxu0 0
  %345 = vmatpush2.bf16.msra.mxu0 0
  %346 = vmatprep.subr.bf16.mxu0 0
  %347 = vmatpush2.bf16.msra.mxu0 0
  %348 = vmatprep.subr.bf16.mxu0 0
  %349 = vmatpush2.bf16.msra.mxu0 0
  %350 = vmatprep.subr.bf16.mxu0 0
  %351 = vmatpush2.bf16.msra.mxu0 0
  %352 = vmatprep.subr.bf16.mxu0 0
  %353 = vmatpush2.bf16.msra.mxu0 0
  %354 = vmatprep.mubr.bf16.mxu0 0
  %355 = vmatmul.mubr.bf16.gmra.mxu0 %v320
  %v356 = vpop.f32.mrf.mxu0
  %v357 = vadd.f32 %v262, %v356
  %v358 = vpop.f32.mrf.mxu0
  %v359 = vpop.f32.mrf.mxu0
  %v360 = vpop.f32.mrf.mxu0
  %361 = vdwg.mxu0
  %v362 = vld [vmem:[%s2] sm:$0x1]
  %v364 = vlaneseq
  %v365 = vshrl.u32 %v364, 7
  %v366 = vsub.s32 0, %v365
  %v367 = vrot.slane %v362, %v366
  %v369 = vadd.f32 %v357, %v367
  %s370 = scalar_lea.vmem [#allocation2], 8
  %371 = vst.msk [vmem:[%s370] sm:$0x7f] %vm132, %v369
  %v372 = vsel %vm132, %v369, 0.0
  %v373 = vrot.slane %v372, 4
  %v374 = vadd.f32 %v372, %v373
  %v375 = vrot.slane %v374, 2
  %v376 = vadd.f32 %v374, %v375
  %v377 = vrot.slane %v376, 1
  %v378 = vadd.f32 %v376, %v377
  %v379 = vadd.f32 %v141, %v378
  %v380 = vmul.f32 %v369, %v369
  %v381 = vsel %vm132, %v380, 0.0
  %v382 = vrot.slane %v381, 4
  %v383 = vadd.f32 %v381, %v382
  %v384 = vrot.slane %v383, 2
  %v385 = vadd.f32 %v383, %v384
  %v386 = vrot.slane %v385, 1
  %v387 = vadd.f32 %v385, %v386
  %v388 = vadd.f32 %v150, %v387
  %s389 = scalar_lea.vmem %s0, 4
  %v390 = vld [vmem:[%s389] sm:$0xf]
  %v391 = vld [vmem:[%s1] sm:$0xf]
  %v392 = vld [vmem:[%s1 + $0x4] sm:$0xf]
  %v393 = vld [vmem:[%s1 + $0x8] sm:$0xf]
  %v394 = vld [vmem:[%s1 + $0xc] sm:$0xf]
  %v395 = vld [vmem:[%s1 + $0x10] sm:$0xf]
  %v396 = vld [vmem:[%s1 + $0x14] sm:$0xf]
  %v397 = vld [vmem:[%s1 + $0x18] sm:$0xf]
  %v398 = vld [vmem:[%s1 + $0x1c] sm:$0xf]
  %v399 = vld [vmem:[%s1 + $0x20] sm:$0xf]
  %v400 = vld [vmem:[%s1 + $0x24] sm:$0xf]
  %v401 = vld [vmem:[%s1 + $0x28] sm:$0xf]
  %v402 = vld [vmem:[%s1 + $0x2c] sm:$0xf]
  %v403 = vld [vmem:[%s1 + $0x30] sm:$0xf]
  %v404 = vld [vmem:[%s1 + $0x34] sm:$0xf]
  %v405 = vld [vmem:[%s2] sm:$0x1]
  %v407 = vlaneseq
  %v408 = vshrl.u32 %v407, 7
  %v409 = vsub.s32 0, %v408
  %v410 = vrot.slane %v405, %v409
  %v426 = vunpack.c.l.b16 %v391
  %v427 = vunpack.c.l.b16 %v392
  %v428 = vunpack.c.l.b16 %v393
  %v429 = vunpack.c.l.b16 %v394
  %v430 = vunpack.c.l.b16 %v395
  %v431 = vunpack.c.l.b16 %v396
  %v432 = vunpack.c.l.b16 %v397
  %v433 = vunpack.c.l.b16 %v398
  %v434 = vunpack.c.l.b16 %v399
  %v435 = vunpack.c.l.b16 %v400
  %v436 = vunpack.c.l.b16 %v401
  %v437 = vunpack.c.l.b16 %v402
  %v438 = vunpack.c.l.b16 %v403
  %v439 = vunpack.c.l.b16 %v404
  %v440 = vpack.c.b16 %v427, %v426
  %v441 = vpack.c.b16 %v429, %v428
  %v442 = vpack.c.b16 %v431, %v430
  %v443 = vpack.c.b16 %v433, %v432
  %v444 = vpack.c.b16 %v435, %v434
  %v445 = vpack.c.b16 %v437, %v436
  %v446 = vpack.c.b16 %v439, %v438
  %v455 = vsel %vm88, %v390, 0
  %457 = vmatprep.subr.bf16.mxu0 0
  %458 = vmatpush1.bf16.msra.mxu0 0
  %459 = vmatprep.subr.bf16.mxu0 0
  %460 = vmatpush1.bf16.msra.mxu0 %v446
  %461 = vmatprep.subr.bf16.mxu0 0
  %462 = vmatpush1.bf16.msra.mxu0 %v445
  %463 = vmatprep.subr.bf16.mxu0 0
  %464 = vmatpush1.bf16.msra.mxu0 %v444
  %465 = vmatprep.subr.bf16.mxu0 0
  %466 = vmatpush1.bf16.msra.mxu0 %v443
  %467 = vmatprep.subr.bf16.mxu0 0
  %468 = vmatpush1.bf16.msra.mxu0 %v442
  %469 = vmatprep.subr.bf16.mxu0 0
  %470 = vmatpush1.bf16.msra.mxu0 %v441
  %471 = vmatprep.subr.bf16.mxu0 0
  %472 = vmatpush1.bf16.msra.mxu0 %v440
  %473 = vmatprep.subr.bf16.mxu0 0
  %474 = vmatpush2.bf16.msra.mxu0 0
  %475 = vmatprep.subr.bf16.mxu0 0
  %476 = vmatpush2.bf16.msra.mxu0 0
  %477 = vmatprep.subr.bf16.mxu0 0
  %478 = vmatpush2.bf16.msra.mxu0 0
  %479 = vmatprep.subr.bf16.mxu0 0
  %480 = vmatpush2.bf16.msra.mxu0 0
  %481 = vmatprep.subr.bf16.mxu0 0
  %482 = vmatpush2.bf16.msra.mxu0 0
  %483 = vmatprep.subr.bf16.mxu0 0
  %484 = vmatpush2.bf16.msra.mxu0 0
  %485 = vmatprep.subr.bf16.mxu0 0
  %486 = vmatpush2.bf16.msra.mxu0 0
  %487 = vmatprep.subr.bf16.mxu0 0
  %488 = vmatpush2.bf16.msra.mxu0 0
  %489 = vmatprep.mubr.bf16.mxu0 0
  %490 = vmatmul.mubr.bf16.gmra.mxu0 %v455
  %v491 = vpop.f32.mrf.mxu0
  %v492 = vadd.f32 %v410, %v491
  %v493 = vpop.f32.mrf.mxu0
  %v494 = vpop.f32.mrf.mxu0
  %v495 = vpop.f32.mrf.mxu0
  %496 = vdwg.mxu0
  %s497 = scalar_lea.vmem [#allocation2], 16
  %498 = vst.msk [vmem:[%s497] sm:$0x7f] %vm132, %v492
  %v499 = vsel %vm132, %v492, 0.0
  %v500 = vrot.slane %v499, 4
  %v501 = vadd.f32 %v499, %v500
  %v502 = vrot.slane %v501, 2
  %v503 = vadd.f32 %v501, %v502
  %v504 = vrot.slane %v503, 1
  %v505 = vadd.f32 %v503, %v504
  %v506 = vadd.f32 %v379, %v505
  %v507 = vmul.f32 %v492, %v492
  %v508 = vsel %vm132, %v507, 0.0
  %v509 = vrot.slane %v508, 4
  %v510 = vadd.f32 %v508, %v509
  %v511 = vrot.slane %v510, 2
  %v512 = vadd.f32 %v510, %v511
  %v513 = vrot.slane %v512, 1
  %v514 = vadd.f32 %v512, %v513
  %v515 = vadd.f32 %v388, %v514
  %v516 = vld [vmem:[%s389] sm:$0xf]
  %v517 = vld [vmem:[%s152] sm:$0xf]
  %v518 = vld [vmem:[%s152 + $0x4] sm:$0xf]
  %v519 = vld [vmem:[%s152 + $0x8] sm:$0xf]
  %v520 = vld [vmem:[%s152 + $0xc] sm:$0xf]
  %v521 = vld [vmem:[%s152 + $0x10] sm:$0xf]
  %v522 = vld [vmem:[%s152 + $0x14] sm:$0xf]
  %v523 = vld [vmem:[%s152 + $0x18] sm:$0xf]
  %v524 = vld [vmem:[%s152 + $0x1c] sm:$0xf]
  %v525 = vld [vmem:[%s152 + $0x20] sm:$0xf]
  %v526 = vld [vmem:[%s152 + $0x24] sm:$0xf]
  %v527 = vld [vmem:[%s152 + $0x28] sm:$0xf]
  %v528 = vld [vmem:[%s152 + $0x2c] sm:$0xf]
  %v529 = vld [vmem:[%s152 + $0x30] sm:$0xf]
  %v530 = vld [vmem:[%s152 + $0x34] sm:$0xf]
  %v531 = vld [vmem:[%s167] sm:$0xf]
  %v532 = vld [vmem:[%s167 + $0x4] sm:$0xf]
  %v533 = vld [vmem:[%s167 + $0x8] sm:$0xf]
  %v534 = vld [vmem:[%s167 + $0xc] sm:$0xf]
  %v535 = vld [vmem:[%s167 + $0x10] sm:$0xf]
  %v536 = vld [vmem:[%s167 + $0x14] sm:$0xf]
  %v537 = vld [vmem:[%s167 + $0x18] sm:$0xf]
  %v538 = vld [vmem:[%s167 + $0x1c] sm:$0xf]
  %v539 = vld [vmem:[%s167 + $0x20] sm:$0xf]
  %v540 = vld [vmem:[%s167 + $0x24] sm:$0xf]
  %v541 = vld [vmem:[%s167 + $0x28] sm:$0xf]
  %v542 = vld [vmem:[%s167 + $0x2c] sm:$0xf]
  %v543 = vld [vmem:[%s167 + $0x30] sm:$0xf]
  %v544 = vld [vmem:[%s167 + $0x34] sm:$0xf]
  %v559 = vunpack.c.l.b16 %v531
  %v560 = vunpack.c.l.b16 %v532
  %v561 = vunpack.c.l.b16 %v533
  %v562 = vunpack.c.l.b16 %v534
  %v563 = vunpack.c.l.b16 %v535
  %v564 = vunpack.c.l.b16 %v536
  %v565 = vunpack.c.l.b16 %v537
  %v566 = vunpack.c.l.b16 %v538
  %v567 = vunpack.c.l.b16 %v539
  %v568 = vunpack.c.l.b16 %v540
  %v569 = vunpack.c.l.b16 %v541
  %v570 = vunpack.c.l.b16 %v542
  %v571 = vunpack.c.l.b16 %v543
  %v572 = vunpack.c.l.b16 %v544
  %v573 = vpack.c.b16 %v560, %v559
  %v574 = vpack.c.b16 %v562, %v561
  %v575 = vpack.c.b16 %v564, %v563
  %v576 = vpack.c.b16 %v566, %v565
  %v577 = vpack.c.b16 %v568, %v567
  %v578 = vpack.c.b16 %v570, %v569
  %v579 = vpack.c.b16 %v572, %v571
  %v588 = vsel %vm88, %v516, 0
  %590 = vmatprep.subr.bf16.mxu0 0
  %591 = vmatpush1.bf16.msra.mxu0 0
  %592 = vmatprep.subr.bf16.mxu0 0
  %593 = vmatpush1.bf16.msra.mxu0 %v579
  %594 = vmatprep.subr.bf16.mxu0 0
  %595 = vmatpush1.bf16.msra.mxu0 %v578
  %596 = vmatprep.subr.bf16.mxu0 0
  %597 = vmatpush1.bf16.msra.mxu0 %v577
  %598 = vmatprep.subr.bf16.mxu0 0
  %599 = vmatpush1.bf16.msra.mxu0 %v576
  %600 = vmatprep.subr.bf16.mxu0 0
  %601 = vmatpush1.bf16.msra.mxu0 %v575
  %602 = vmatprep.subr.bf16.mxu0 0
  %603 = vmatpush1.bf16.msra.mxu0 %v574
  %604 = vmatprep.subr.bf16.mxu0 0
  %605 = vmatpush1.bf16.msra.mxu0 %v573
  %606 = vmatprep.subr.bf16.mxu0 0
  %607 = vmatpush2.bf16.msra.mxu0 0
  %608 = vmatprep.subr.bf16.mxu0 0
  %609 = vmatpush2.bf16.msra.mxu0 0
  %610 = vmatprep.subr.bf16.mxu0 0
  %611 = vmatpush2.bf16.msra.mxu0 0
  %612 = vmatprep.subr.bf16.mxu0 0
  %613 = vmatpush2.bf16.msra.mxu0 0
  %614 = vmatprep.subr.bf16.mxu0 0
  %615 = vmatpush2.bf16.msra.mxu0 0
  %616 = vmatprep.subr.bf16.mxu0 0
  %617 = vmatpush2.bf16.msra.mxu0 0
  %618 = vmatprep.subr.bf16.mxu0 0
  %619 = vmatpush2.bf16.msra.mxu0 0
  %620 = vmatprep.subr.bf16.mxu0 0
  %621 = vmatpush2.bf16.msra.mxu0 0
  %622 = vmatprep.mubr.bf16.mxu0 0
  %623 = vmatmul.mubr.bf16.gmra.mxu0 %v588
  %v624 = vpop.f32.mrf.mxu0
  %v625 = vadd.f32 0.0, %v624
  %v626 = vpop.f32.mrf.mxu0
  %v627 = vpop.f32.mrf.mxu0
  %v628 = vpop.f32.mrf.mxu0
  %629 = vdwg.mxu0
  %v631 = vunpack.c.l.b16 %v516
  %v632 = vpack.c.b16 %v631, %v631
  %v634 = vshrl.u32 %v632, 16
  %v636 = vshll.u32 %v632, 16
  %v638 = vrot.slane %v636, 1
  %v639 = vor.u32 %v634, %v638
  %v654 = vunpack.c.l.b16 %v517
  %v655 = vunpack.c.l.b16 %v518
  %v656 = vunpack.c.l.b16 %v519
  %v657 = vunpack.c.l.b16 %v520
  %v658 = vunpack.c.l.b16 %v521
  %v659 = vunpack.c.l.b16 %v522
  %v660 = vunpack.c.l.b16 %v523
  %v661 = vunpack.c.l.b16 %v524
  %v662 = vunpack.c.l.b16 %v525
  %v663 = vunpack.c.l.b16 %v526
  %v664 = vunpack.c.l.b16 %v527
  %v665 = vunpack.c.l.b16 %v528
  %v666 = vunpack.c.l.b16 %v529
  %v667 = vunpack.c.l.b16 %v530
  %v668 = vpack.c.b16 %v655, %v654
  %v669 = vpack.c.b16 %v657, %v656
  %v670 = vpack.c.b16 %v659, %v658
  %v671 = vpack.c.b16 %v661, %v660
  %v672 = vpack.c.b16 %v663, %v662
  %v673 = vpack.c.b16 %v665, %v664
  %v674 = vpack.c.b16 %v667, %v666
  %v683 = vsel %vm88, %v639, 0
  %685 = vmatprep.subr.bf16.mxu0 0
  %686 = vmatpush1.bf16.msra.mxu0 0
  %687 = vmatprep.subr.bf16.mxu0 0
  %688 = vmatpush1.bf16.msra.mxu0 %v674
  %689 = vmatprep.subr.bf16.mxu0 0
  %690 = vmatpush1.bf16.msra.mxu0 %v673
  %691 = vmatprep.subr.bf16.mxu0 0
  %692 = vmatpush1.bf16.msra.mxu0 %v672
  %693 = vmatprep.subr.bf16.mxu0 0
  %694 = vmatpush1.bf16.msra.mxu0 %v671
  %695 = vmatprep.subr.bf16.mxu0 0
  %696 = vmatpush1.bf16.msra.mxu0 %v670
  %697 = vmatprep.subr.bf16.mxu0 0
  %698 = vmatpush1.bf16.msra.mxu0 %v669
  %699 = vmatprep.subr.bf16.mxu0 0
  %700 = vmatpush1.bf16.msra.mxu0 %v668
  %701 = vmatprep.subr.bf16.mxu0 0
  %702 = vmatpush2.bf16.msra.mxu0 0
  %703 = vmatprep.subr.bf16.mxu0 0
  %704 = vmatpush2.bf16.msra.mxu0 0
  %705 = vmatprep.subr.bf16.mxu0 0
  %706 = vmatpush2.bf16.msra.mxu0 0
  %707 = vmatprep.subr.bf16.mxu0 0
  %708 = vmatpush2.bf16.msra.mxu0 0
  %709 = vmatprep.subr.bf16.mxu0 0
  %710 = vmatpush2.bf16.msra.mxu0 0
  %711 = vmatprep.subr.bf16.mxu0 0
  %712 = vmatpush2.bf16.msra.mxu0 0
  %713 = vmatprep.subr.bf16.mxu0 0
  %714 = vmatpush2.bf16.msra.mxu0 0
  %715 = vmatprep.subr.bf16.mxu0 0
  %716 = vmatpush2.bf16.msra.mxu0 0
  %717 = vmatprep.mubr.bf16.mxu0 0
  %718 = vmatmul.mubr.bf16.gmra.mxu0 %v683
  %v719 = vpop.f32.mrf.mxu0
  %v720 = vadd.f32 %v625, %v719
  %v721 = vpop.f32.mrf.mxu0
  %v722 = vpop.f32.mrf.mxu0
  %v723 = vpop.f32.mrf.mxu0
  %724 = vdwg.mxu0
  %v725 = vld [vmem:[%s2] sm:$0x1]
  %v727 = vlaneseq
  %v728 = vshrl.u32 %v727, 7
  %v729 = vsub.s32 0, %v728
  %v730 = vrot.slane %v725, %v729
  %v732 = vadd.f32 %v720, %v730
  %s733 = scalar_lea.vmem [#allocation2], 24
  %734 = vst.msk [vmem:[%s733] sm:$0x7f] %vm132, %v732
  %v735 = vsel %vm132, %v732, 0.0
  %v736 = vrot.slane %v735, 4
  %v737 = vadd.f32 %v735, %v736
  %v738 = vrot.slane %v737, 2
  %v739 = vadd.f32 %v737, %v738
  %v740 = vrot.slane %v739, 1
  %v741 = vadd.f32 %v739, %v740
  %v742 = vadd.f32 %v506, %v741
  %v743 = vmul.f32 %v732, %v732
  %v744 = vsel %vm132, %v743, 0.0
  %v745 = vrot.slane %v744, 4
  %v746 = vadd.f32 %v744, %v745
  %v747 = vrot.slane %v746, 2
  %v748 = vadd.f32 %v746, %v747
  %v749 = vrot.slane %v748, 1
  %v750 = vadd.f32 %v748, %v749
  %v751 = vadd.f32 %v515, %v750
  %v752 = vld [vmem:[%s3] sm:$0xff]
  %v753 = vld [vmem:[%s3 + $0x8] sm:$0xff]
  %v754 = vld [vmem:[%s3 + $0x10] sm:$0xff]
  %v755 = vld [vmem:[%s3 + $0x18] sm:$0xff]
  %v756 = vld [vmem:[%s3 + $0x20] sm:$0xff]
  %v757 = vld [vmem:[%s3 + $0x28] sm:$0xff]
  %v758 = vld [vmem:[%s3 + $0x30] sm:$0xff]
  %v759 = vld [vmem:[%s3 + $0x38] sm:$0xff]
  %v760 = vld [vmem:[%s3 + $0x40] sm:$0xff]
  %v761 = vld [vmem:[%s3 + $0x48] sm:$0xff]
  %v762 = vld [vmem:[%s3 + $0x50] sm:$0xff]
  %v763 = vld [vmem:[%s3 + $0x58] sm:$0xff]
  %v764 = vld [vmem:[%s3 + $0x60] sm:$0xff]
  %v765 = vld [vmem:[%s3 + $0x68] sm:$0xff]
  %v767 = vsel %vm88, %v742, 0
  %769 = vmatprep.subr.mxu0 0.0
  %770 = vmatpush1.msra.mxu0 0.0
  %771 = vmatprep.subr.mxu0 0.0
  %772 = vmatpush1.msra.mxu0 0.0
  %773 = vmatprep.subr.mxu0 0.0
  %774 = vmatpush1.msra.mxu0 %v765
  %775 = vmatprep.subr.mxu0 0.0
  %776 = vmatpush1.msra.mxu0 %v764
  %777 = vmatprep.subr.mxu0 0.0
  %778 = vmatpush1.msra.mxu0 %v763
  %779 = vmatprep.subr.mxu0 0.0
  %780 = vmatpush1.msra.mxu0 %v762
  %781 = vmatprep.subr.mxu0 0.0
  %782 = vmatpush1.msra.mxu0 %v761
  %783 = vmatprep.subr.mxu0 0.0
  %784 = vmatpush1.msra.mxu0 %v760
  %785 = vmatprep.subr.mxu0 0.0
  %786 = vmatpush1.msra.mxu0 %v759
  %787 = vmatprep.subr.mxu0 0.0
  %788 = vmatpush1.msra.mxu0 %v758
  %789 = vmatprep.subr.mxu0 0.0
  %790 = vmatpush1.msra.mxu0 %v757
  %791 = vmatprep.subr.mxu0 0.0
  %792 = vmatpush1.msra.mxu0 %v756
  %793 = vmatprep.subr.mxu0 0.0
  %794 = vmatpush1.msra.mxu0 %v755
  %795 = vmatprep.subr.mxu0 0.0
  %796 = vmatpush1.msra.mxu0 %v754
  %797 = vmatprep.subr.mxu0 0.0
  %798 = vmatpush1.msra.mxu0 %v753
  %799 = vmatprep.subr.mxu0 0.0
  %800 = vmatpush1.msra.mxu0 %v752
  %801 = vmatprep.subr.mxu0 0.0
  %802 = vmatpush2.msra.mxu0 0.0
  %803 = vmatprep.subr.mxu0 0.0
  %804 = vmatpush2.msra.mxu0 0.0
  %805 = vmatprep.subr.mxu0 0.0
  %806 = vmatpush2.msra.mxu0 0.0
  %807 = vmatprep.subr.mxu0 0.0
  %808 = vmatpush2.msra.mxu0 0.0
  %809 = vmatprep.subr.mxu0 0.0
  %810 = vmatpush2.msra.mxu0 0.0
  %811 = vmatprep.subr.mxu0 0.0
  %812 = vmatpush2.msra.mxu0 0.0
  %813 = vmatprep.subr.mxu0 0.0
  %814 = vmatpush2.msra.mxu0 0.0
  %815 = vmatprep.subr.mxu0 0.0
  %816 = vmatpush2.msra.mxu0 0.0
  %817 = vmatprep.subr.mxu0 0.0
  %818 = vmatpush2.msra.mxu0 0.0
  %819 = vmatprep.subr.mxu0 0.0
  %820 = vmatpush2.msra.mxu0 0.0
  %821 = vmatprep.subr.mxu0 0.0
  %822 = vmatpush2.msra.mxu0 0.0
  %823 = vmatprep.subr.mxu0 0.0
  %824 = vmatpush2.msra.mxu0 0.0
  %825 = vmatprep.subr.mxu0 0.0
  %826 = vmatpush2.msra.mxu0 0.0
  %827 = vmatprep.subr.mxu0 0.0
  %828 = vmatpush2.msra.mxu0 0.0
  %829 = vmatprep.subr.mxu0 0.0
  %830 = vmatpush2.msra.mxu0 0.0
  %831 = vmatprep.subr.mxu0 0.0
  %832 = vmatpush2.msra.mxu0 0.0
  %833 = vmatprep.mubr.f32.mxu0 0.0
  %834 = vmatmul.mubr.f32.gmra.mxu0 %v767
  %v835 = vpop.f32.mrf.mxu0
  %v836 = vadd.f32 0.0, %v835
  %v837 = vpop.f32.mrf.mxu0
  %838 = vdwg.mxu0
  %v840 = vsel %vm88, %v751, 0
  %842 = vmatprep.subr.mxu0 0.0
  %843 = vmatpush1.msra.mxu0 0.0
  %844 = vmatprep.subr.mxu0 0.0
  %845 = vmatpush1.msra.mxu0 0.0
  %846 = vmatprep.subr.mxu0 0.0
  %847 = vmatpush1.msra.mxu0 %v765
  %848 = vmatprep.subr.mxu0 0.0
  %849 = vmatpush1.msra.mxu0 %v764
  %850 = vmatprep.subr.mxu0 0.0
  %851 = vmatpush1.msra.mxu0 %v763
  %852 = vmatprep.subr.mxu0 0.0
  %853 = vmatpush1.msra.mxu0 %v762
  %854 = vmatprep.subr.mxu0 0.0
  %855 = vmatpush1.msra.mxu0 %v761
  %856 = vmatprep.subr.mxu0 0.0
  %857 = vmatpush1.msra.mxu0 %v760
  %858 = vmatprep.subr.mxu0 0.0
  %859 = vmatpush1.msra.mxu0 %v759
  %860 = vmatprep.subr.mxu0 0.0
  %861 = vmatpush1.msra.mxu0 %v758
  %862 = vmatprep.subr.mxu0 0.0
  %863 = vmatpush1.msra.mxu0 %v757
  %864 = vmatprep.subr.mxu0 0.0
  %865 = vmatpush1.msra.mxu0 %v756
  %866 = vmatprep.subr.mxu0 0.0
  %867 = vmatpush1.msra.mxu0 %v755
  %868 = vmatprep.subr.mxu0 0.0
  %869 = vmatpush1.msra.mxu0 %v754
  %870 = vmatprep.subr.mxu0 0.0
  %871 = vmatpush1.msra.mxu0 %v753
  %872 = vmatprep.subr.mxu0 0.0
  %873 = vmatpush1.msra.mxu0 %v752
  %874 = vmatprep.subr.mxu0 0.0
  %875 = vmatpush2.msra.mxu0 0.0
  %876 = vmatprep.subr.mxu0 0.0
  %877 = vmatpush2.msra.mxu0 0.0
  %878 = vmatprep.subr.mxu0 0.0
  %879 = vmatpush2.msra.mxu0 0.0
  %880 = vmatprep.subr.mxu0 0.0
  %881 = vmatpush2.msra.mxu0 0.0
  %882 = vmatprep.subr.mxu0 0.0
  %883 = vmatpush2.msra.mxu0 0.0
  %884 = vmatprep.subr.mxu0 0.0
  %885 = vmatpush2.msra.mxu0 0.0
  %886 = vmatprep.subr.mxu0 0.0
  %887 = vmatpush2.msra.mxu0 0.0
  %888 = vmatprep.subr.mxu0 0.0
  %889 = vmatpush2.msra.mxu0 0.0
  %890 = vmatprep.subr.mxu0 0.0
  %891 = vmatpush2.msra.mxu0 0.0
  %892 = vmatprep.subr.mxu0 0.0
  %893 = vmatpush2.msra.mxu0 0.0
  %894 = vmatprep.subr.mxu0 0.0
  %895 = vmatpush2.msra.mxu0 0.0
  %896 = vmatprep.subr.mxu0 0.0
  %897 = vmatpush2.msra.mxu0 0.0
  %898 = vmatprep.subr.mxu0 0.0
  %899 = vmatpush2.msra.mxu0 0.0
  %900 = vmatprep.subr.mxu0 0.0
  %901 = vmatpush2.msra.mxu0 0.0
  %902 = vmatprep.subr.mxu0 0.0
  %903 = vmatpush2.msra.mxu0 0.0
  %904 = vmatprep.subr.mxu0 0.0
  %905 = vmatpush2.msra.mxu0 0.0
  %906 = vmatprep.mubr.f32.mxu0 0.0
  %907 = vmatmul.mubr.f32.gmra.mxu0 %v840
  %v908 = vpop.f32.mrf.mxu0
  %v909 = vadd.f32 0.0, %v908
  %v910 = vpop.f32.mrf.mxu0
  %911 = vdwg.mxu0
  %v912 = vmul.f32 %v836, 0.0025510204
  %v913 = vmul.f32 %v909, 0.0025510204
  %v914 = vmul.f32 %v912, %v912
  %v915 = vsub.f32 %v913, %v914
  %v916 = vmax.f32 %v915, 0.0
  %v917 = vld [vmem:[%s5] sm:$0x1]
  %v918 = vld [vmem:[%s5 + $0x1] sm:$0x1]
  %v919 = vadd.f32 %v916, 1e-05
  %v920 = vrsqrt.pop %v919
  %v921 = vmul.f32 %v917, %v920
  %v922 = vmul.f32 %v912, %v921
  %v923 = vsub.f32 %v918, %v922
  %v924 = vld [vmem:[%s4] sm:$0xff]
  %vm925 = vcmask 64512
  %v927 = vsel %vm925, %v921, 0
  %929 = vmatprep.subr.mxu0 0.0
  %930 = vmatpush1.msra.mxu0 0.0
  %931 = vmatprep.subr.mxu0 0.0
  %932 = vmatpush1.msra.mxu0 0.0
  %933 = vmatprep.subr.mxu0 0.0
  %934 = vmatpush1.msra.mxu0 0.0
  %935 = vmatprep.subr.mxu0 0.0
  %936 = vmatpush1.msra.mxu0 0.0
  %937 = vmatprep.subr.mxu0 0.0
  %938 = vmatpush1.msra.mxu0 0.0
  %939 = vmatprep.subr.mxu0 0.0
  %940 = vmatpush1.msra.mxu0 0.0
  %941 = vmatprep.subr.mxu0 0.0
  %942 = vmatpush1.msra.mxu0 0.0
  %943 = vmatprep.subr.mxu0 0.0
  %944 = vmatpush1.msra.mxu0 0.0
  %945 = vmatprep.subr.mxu0 0.0
  %946 = vmatpush1.msra.mxu0 0.0
  %947 = vmatprep.subr.mxu0 0.0
  %948 = vmatpush1.msra.mxu0 0.0
  %949 = vmatprep.subr.mxu0 0.0
  %950 = vmatpush1.msra.mxu0 0.0
  %951 = vmatprep.subr.mxu0 0.0
  %952 = vmatpush1.msra.mxu0 0.0
  %953 = vmatprep.subr.mxu0 0.0
  %954 = vmatpush1.msra.mxu0 0.0
  %955 = vmatprep.subr.mxu0 0.0
  %956 = vmatpush1.msra.mxu0 0.0
  %957 = vmatprep.subr.mxu0 0.0
  %958 = vmatpush1.msra.mxu0 0.0
  %959 = vmatprep.subr.mxu0 0.0
  %960 = vmatpush1.msra.mxu0 %v924
  %961 = vmatprep.subr.mxu0 0.0
  %962 = vmatpush2.msra.mxu0 0.0
  %963 = vmatprep.subr.mxu0 0.0
  %964 = vmatpush2.msra.mxu0 0.0
  %965 = vmatprep.subr.mxu0 0.0
  %966 = vmatpush2.msra.mxu0 0.0
  %967 = vmatprep.subr.mxu0 0.0
  %968 = vmatpush2.msra.mxu0 0.0
  %969 = vmatprep.subr.mxu0 0.0
  %970 = vmatpush2.msra.mxu0 0.0
  %971 = vmatprep.subr.mxu0 0.0
  %972 = vmatpush2.msra.mxu0 0.0
  %973 = vmatprep.subr.mxu0 0.0
  %974 = vmatpush2.msra.mxu0 0.0
  %975 = vmatprep.subr.mxu0 0.0
  %976 = vmatpush2.msra.mxu0 0.0
  %977 = vmatprep.subr.mxu0 0.0
  %978 = vmatpush2.msra.mxu0 0.0
  %979 = vmatprep.subr.mxu0 0.0
  %980 = vmatpush2.msra.mxu0 0.0
  %981 = vmatprep.subr.mxu0 0.0
  %982 = vmatpush2.msra.mxu0 0.0
  %983 = vmatprep.subr.mxu0 0.0
  %984 = vmatpush2.msra.mxu0 0.0
  %985 = vmatprep.subr.mxu0 0.0
  %986 = vmatpush2.msra.mxu0 0.0
  %987 = vmatprep.subr.mxu0 0.0
  %988 = vmatpush2.msra.mxu0 0.0
  %989 = vmatprep.subr.mxu0 0.0
  %990 = vmatpush2.msra.mxu0 0.0
  %991 = vmatprep.subr.mxu0 0.0
  %992 = vmatpush2.msra.mxu0 0.0
  %993 = vmatprep.mubr.f32.mxu0 0.0
  %994 = vmatmul.mubr.f32.gmra.mxu0 %v927
  %v995 = vpop.f32.mrf.mxu0
  %v996 = vadd.f32 0.0, %v995
  %v997 = vpop.f32.mrf.mxu0
  %998 = vdwg.mxu0
  %v1000 = vsel %vm925, %v923, 0
  %1002 = vmatprep.subr.mxu0 0.0
  %1003 = vmatpush1.msra.mxu0 0.0
  %1004 = vmatprep.subr.mxu0 0.0
  %1005 = vmatpush1.msra.mxu0 0.0
  %1006 = vmatprep.subr.mxu0 0.0
  %1007 = vmatpush1.msra.mxu0 0.0
  %1008 = vmatprep.subr.mxu0 0.0
  %1009 = vmatpush1.msra.mxu0 0.0
  %1010 = vmatprep.subr.mxu0 0.0
  %1011 = vmatpush1.msra.mxu0 0.0
  %1012 = vmatprep.subr.mxu0 0.0
  %1013 = vmatpush1.msra.mxu0 0.0
  %1014 = vmatprep.subr.mxu0 0.0
  %1015 = vmatpush1.msra.mxu0 0.0
  %1016 = vmatprep.subr.mxu0 0.0
  %1017 = vmatpush1.msra.mxu0 0.0
  %1018 = vmatprep.subr.mxu0 0.0
  %1019 = vmatpush1.msra.mxu0 0.0
  %1020 = vmatprep.subr.mxu0 0.0
  %1021 = vmatpush1.msra.mxu0 0.0
  %1022 = vmatprep.subr.mxu0 0.0
  %1023 = vmatpush1.msra.mxu0 0.0
  %1024 = vmatprep.subr.mxu0 0.0
  %1025 = vmatpush1.msra.mxu0 0.0
  %1026 = vmatprep.subr.mxu0 0.0
  %1027 = vmatpush1.msra.mxu0 0.0
  %1028 = vmatprep.subr.mxu0 0.0
  %1029 = vmatpush1.msra.mxu0 0.0
  %1030 = vmatprep.subr.mxu0 0.0
  %1031 = vmatpush1.msra.mxu0 0.0
  %1032 = vmatprep.subr.mxu0 0.0
  %1033 = vmatpush1.msra.mxu0 %v924
  %1034 = vmatprep.subr.mxu0 0.0
  %1035 = vmatpush2.msra.mxu0 0.0
  %1036 = vmatprep.subr.mxu0 0.0
  %1037 = vmatpush2.msra.mxu0 0.0
  %1038 = vmatprep.subr.mxu0 0.0
  %1039 = vmatpush2.msra.mxu0 0.0
  %1040 = vmatprep.subr.mxu0 0.0
  %1041 = vmatpush2.msra.mxu0 0.0
  %1042 = vmatprep.subr.mxu0 0.0
  %1043 = vmatpush2.msra.mxu0 0.0
  %1044 = vmatprep.subr.mxu0 0.0
  %1045 = vmatpush2.msra.mxu0 0.0
  %1046 = vmatprep.subr.mxu0 0.0
  %1047 = vmatpush2.msra.mxu0 0.0
  %1048 = vmatprep.subr.mxu0 0.0
  %1049 = vmatpush2.msra.mxu0 0.0
  %1050 = vmatprep.subr.mxu0 0.0
  %1051 = vmatpush2.msra.mxu0 0.0
  %1052 = vmatprep.subr.mxu0 0.0
  %1053 = vmatpush2.msra.mxu0 0.0
  %1054 = vmatprep.subr.mxu0 0.0
  %1055 = vmatpush2.msra.mxu0 0.0
  %1056 = vmatprep.subr.mxu0 0.0
  %1057 = vmatpush2.msra.mxu0 0.0
  %1058 = vmatprep.subr.mxu0 0.0
  %1059 = vmatpush2.msra.mxu0 0.0
  %1060 = vmatprep.subr.mxu0 0.0
  %1061 = vmatpush2.msra.mxu0 0.0
  %1062 = vmatprep.subr.mxu0 0.0
  %1063 = vmatpush2.msra.mxu0 0.0
  %1064 = vmatprep.subr.mxu0 0.0
  %1065 = vmatpush2.msra.mxu0 0.0
  %1066 = vmatprep.mubr.f32.mxu0 0.0
  %1067 = vmatmul.mubr.f32.gmra.mxu0 %v1000
  %v1068 = vpop.f32.mrf.mxu0
  %v1069 = vadd.f32 0.0, %v1068
  %v1070 = vpop.f32.mrf.mxu0
  %1071 = vdwg.mxu0
  %v1072 = vld [vmem:[#allocation2] sm:$0x7f]
  %v1073 = vlaneseq
  %v1074 = vshrl.u32 %v1073, 7
  %v1075 = vsub.s32 0, %v1074
  %v1076 = vrot.slane %v996, %v1075
  %v1077 = vmul.f32 %v1072, %v1076
  %v1078 = vlaneseq
  %v1079 = vshrl.u32 %v1078, 7
  %v1080 = vsub.s32 0, %v1079
  %v1081 = vrot.slane %v1069, %v1080
  %v1082 = vadd.f32 %v1077, %v1081
  %vm1083 = vcmp.ge.f32.partialorder %v1082, 0.0
  %v1084 = vmul.f32 %v1082, 0.01
  %v1085 = vsel %vm1083, %v1082, %v1084
  %v1086 = vpack.c.bf16 %v1085, %v1085
  %vm1087 = vcmask 912384
  %vm1088 = vsmask.f32 3328
  %vm1089 = vmand %vm1087, %vm1088
  %v1090 = vld [vmem:[%s6] sm:$0xf]
  %v1091 = vsel %vm1089, %v1086, %v1090
  %1092 = vst [vmem:[%s6] sm:$0xf] %v1091
  %v1093 = vld [vmem:[%s370] sm:$0x7f]
  %v1094 = vmul.f32 %v1093, %v1076
  %v1095 = vadd.f32 %v1094, %v1081
  %vm1096 = vcmp.ge.f32.partialorder %v1095, 0.0
  %v1097 = vmul.f32 %v1095, 0.01
  %v1098 = vsel %vm1096, %v1095, %v1097
  %v1099 = vpack.c.bf16 %v1098, %v1098
  %s1100 = scalar_lea.vmem %s6, 4
  %v1101 = vld [vmem:[%s1100] sm:$0xf]
  %v1102 = vsel %vm1089, %v1099, %v1101
  %1103 = vst [vmem:[%s1100] sm:$0xf] %v1102
  %v1104 = vld [vmem:[%s497] sm:$0x7f]
  %v1105 = vmul.f32 %v1104, %v1076
  %v1106 = vadd.f32 %v1105, %v1081
  %vm1107 = vcmp.ge.f32.partialorder %v1106, 0.0
  %v1108 = vmul.f32 %v1106, 0.01
  %v1109 = vsel %vm1107, %v1106, %v1108
  %v1110 = vpack.c.bf16 %v1109, %v1109
  %s1111 = scalar_lea.vmem %s6, 8
  %v1112 = vld [vmem:[%s1111] sm:$0xf]
  %v1113 = vsel %vm1089, %v1110, %v1112
  %1114 = vst [vmem:[%s1111] sm:$0xf] %v1113
  %v1115 = vld [vmem:[%s733] sm:$0x7f]
  %v1116 = vmul.f32 %v1115, %v1076
  %v1117 = vadd.f32 %v1116, %v1081
  %vm1118 = vcmp.ge.f32.partialorder %v1117, 0.0
  %v1119 = vmul.f32 %v1117, 0.01
  %v1120 = vsel %vm1118, %v1117, %v1119
  %v1121 = vpack.c.bf16 %v1120, %v1120
  %s1122 = scalar_lea.vmem %s6, 12
  %v1123 = vld [vmem:[%s1122] sm:$0xf]
  %v1124 = vsel %vm1089, %v1121, %v1123
  %1125 = vst [vmem:[%s1122] sm:$0xf] %v1124
  // Predicated region
  $region26: #{vae_forward.8} parent=0 // pred_check
    _
  $region27: #{vae_forward.8} parent=0 // pred_check_branch
    %1127 = sbr.rel (0) target = $region29
  $region28: #{vae_forward.8} parent=0 // pred_region
    _
  $region29: #{vae_forward.8} parent=0 // pred_fallthru
    _
  // Predicated region
  $region30: #{vae_forward.8} parent=0 // pred_check
    _
  $region31: #{vae_forward.8} parent=0 // pred_check_branch
    %1129 = sbr.rel (0) target = $region33
  $region32: #{vae_forward.8} parent=0 // pred_region
    _
  $region33: #{vae_forward.8} parent=0 // pred_fallthru
    _

// kernel: vae_forward.9
$region0: #{vae_forward.9}
  #allocation0 [shape = 'u32[]', space=smem, size = 0x4, offset = 0x4, fixed_abs, tag = 'smem constant byte address 0x4 - core index']
  #allocation1 [shape = 'u32[144,128]{1,0:T(1,128)}', space=vmem, size = 0x12000, scoped, tag = 'internal scratch']
  #allocation2 [shape = 'f32[2,2,14,28]{3,2,1,0:T(8,128)}', space=vmem, size = 0x8000, scoped, tag = 'scratch operand']
  %s0 = inlined_call_operand.vmem [shape: bf16[2,1,15,112], index: 0, kind: input, shape index: {}]
  %s1 = inlined_call_operand.vmem [shape: bf16[3,112,28], index: 1, kind: input, shape index: {}]
  %s2 = inlined_call_operand.vmem [shape: f32[1,28], index: 2, kind: input, shape index: {}]
  %s3 = inlined_call_operand.vmem [shape: f32[28,1], index: 3, kind: input, shape index: {}]
  %s4 = inlined_call_operand.vmem [shape: f32[1,28], index: 4, kind: input, shape index: {}]
  %s5 = inlined_call_operand.vmem [shape: f32[2,1], index: 5, kind: input, shape index: {}]
  %s6 = inlined_call_operand.vmem [shape: f32[2,2,14,28], index: 6, kind: output, shape index: {}]
  %s7 = sld [smem:[#allocation0]]
  $region34: #{vae_forward.9} parent=0
    _
  %s9 = ssub.s32 1, %s7
  %s10 = scalar_select 0, %s9, %s7
  // Predicated region
  $region2: #{vae_forward.9} parent=0 // pred_check
    _
  $region3: #{vae_forward.9} parent=0 // pred_check_branch
    %12 = sbr.rel (0) target = $region5
  $region4: #{vae_forward.9} parent=0 // pred_region
    _
  $region5: #{vae_forward.9} parent=0 // pred_fallthru
    _
  // Predicated region
  $region6: #{vae_forward.9} parent=0 // pred_check
    _
  $region7: #{vae_forward.9} parent=0 // pred_check_branch
    %14 = sbr.rel (0) target = $region9
  $region8: #{vae_forward.9} parent=0 // pred_region
    _
  $region9: #{vae_forward.9} parent=0 // pred_fallthru
    _
  // Predicated region
  $region10: #{vae_forward.9} parent=0 // pred_check
    _
  $region11: #{vae_forward.9} parent=0 // pred_check_branch
    %16 = sbr.rel (0) target = $region13
  $region12: #{vae_forward.9} parent=0 // pred_region
    _
  $region13: #{vae_forward.9} parent=0 // pred_fallthru
    _
  // Predicated region
  $region14: #{vae_forward.9} parent=0 // pred_check
    _
  $region15: #{vae_forward.9} parent=0 // pred_check_branch
    %18 = sbr.rel (0) target = $region17
  $region16: #{vae_forward.9} parent=0 // pred_region
    _
  $region17: #{vae_forward.9} parent=0 // pred_fallthru
    _
  // Predicated region
  $region18: #{vae_forward.9} parent=0 // pred_check
    _
  $region19: #{vae_forward.9} parent=0 // pred_check_branch
    %20 = sbr.rel (0) target = $region21
  $region20: #{vae_forward.9} parent=0 // pred_region
    _
  $region21: #{vae_forward.9} parent=0 // pred_fallthru
    _
  // Predicated region
  $region22: #{vae_forward.9} parent=0 // pred_check
    _
  $region23: #{vae_forward.9} parent=0 // pred_check_branch
    %22 = sbr.rel (0) target = $region25
  $region24: #{vae_forward.9} parent=0 // pred_region
    _
  $region25: #{vae_forward.9} parent=0 // pred_fallthru
    _
  %v24 = vld [vmem:[%s0] sm:$0xf]
  %v25 = vld [vmem:[%s0 + $0x4] sm:$0x7]
  %v26 = vld [vmem:[%s1] sm:$0xf]
  %v27 = vld [vmem:[%s1 + $0x4] sm:$0xf]
  %v28 = vld [vmem:[%s1 + $0x8] sm:$0xf]
  %v29 = vld [vmem:[%s1 + $0xc] sm:$0xf]
  %v30 = vld [vmem:[%s1 + $0x10] sm:$0xf]
  %v31 = vld [vmem:[%s1 + $0x14] sm:$0xf]
  %v32 = vld [vmem:[%s1 + $0x18] sm:$0xf]
  %v33 = vld [vmem:[%s1 + $0x1c] sm:$0xf]
  %v34 = vld [vmem:[%s1 + $0x20] sm:$0xf]
  %v35 = vld [vmem:[%s1 + $0x24] sm:$0xf]
  %v36 = vld [vmem:[%s1 + $0x28] sm:$0xf]
  %v37 = vld [vmem:[%s1 + $0x2c] sm:$0xf]
  %v38 = vld [vmem:[%s1 + $0x30] sm:$0xf]
  %v39 = vld [vmem:[%s1 + $0x34] sm:$0xf]
  %v40 = vld [vmem:[%s2] sm:$0x1]
  %v42 = vlaneseq
  %v43 = vshrl.u32 %v42, 7
  %v44 = vsub.s32 0, %v43
  %v45 = vrot.slane %v40, %v44
  %v49 = vunpack.c.l.b16 %v24
  %v50 = vunpack.c.l.b16 %v25
  %v51 = vpack.c.b16 %v50, %v49
  %v66 = vunpack.c.l.b16 %v26
  %v67 = vunpack.c.l.b16 %v27
  %v68 = vunpack.c.l.b16 %v28
  %v69 = vunpack.c.l.b16 %v29
  %v70 = vunpack.c.l.b16 %v30
  %v71 = vunpack.c.l.b16 %v31
  %v72 = vunpack.c.l.b16 %v32
  %v73 = vunpack.c.l.b16 %v33
  %v74 = vunpack.c.l.b16 %v34
  %v75 = vunpack.c.l.b16 %v35
  %v76 = vunpack.c.l.b16 %v36
  %v77 = vunpack.c.l.b16 %v37
  %v78 = vunpack.c.l.b16 %v38
  %v79 = vunpack.c.l.b16 %v39
  %v80 = vpack.c.b16 %v67, %v66
  %v81 = vpack.c.b16 %v69, %v68
  %v82 = vpack.c.b16 %v71, %v70
  %v83 = vpack.c.b16 %v73, %v72
  %v84 = vpack.c.b16 %v75, %v74
  %v85 = vpack.c.b16 %v77, %v76
  %v86 = vpack.c.b16 %v79, %v78
  %vm94 = vcmask 916480
  %v96 = vsel %vm94, %v51, 0
  %98 = vmatprep.subr.bf16.mxu0 0
  %99 = vmatpush1.bf16.msra.mxu0 0
  %100 = vmatprep.subr.bf16.mxu0 0
  %101 = vmatpush1.bf16.msra.mxu0 %v86
  %102 = vmatprep.subr.bf16.mxu0 0
  %103 = vmatpush1.bf16.msra.mxu0 %v85
  %104 = vmatprep.subr.bf16.mxu0 0
  %105 = vmatpush1.bf16.msra.mxu0 %v84
  %106 = vmatprep.subr.bf16.mxu0 0
  %107 = vmatpush1.bf16.msra.mxu0 %v83
  %108 = vmatprep.subr.bf16.mxu0 0
  %109 = vmatpush1.bf16.msra.mxu0 %v82
  %110 = vmatprep.subr.bf16.mxu0 0
  %111 = vmatpush1.bf16.msra.mxu0 %v81
  %112 = vmatprep.subr.bf16.mxu0 0
  %113 = vmatpush1.bf16.msra.mxu0 %v80
  %114 = vmatprep.subr.bf16.mxu0 0
  %115 = vmatpush2.bf16.msra.mxu0 0
  %116 = vmatprep.subr.bf16.mxu0 0
  %117 = vmatpush2.bf16.msra.mxu0 0
  %118 = vmatprep.subr.bf16.mxu0 0
  %119 = vmatpush2.bf16.msra.mxu0 0
  %120 = vmatprep.subr.bf16.mxu0 0
  %121 = vmatpush2.bf16.msra.mxu0 0
  %122 = vmatprep.subr.bf16.mxu0 0
  %123 = vmatpush2.bf16.msra.mxu0 0
  %124 = vmatprep.subr.bf16.mxu0 0
  %125 = vmatpush2.bf16.msra.mxu0 0
  %126 = vmatprep.subr.bf16.mxu0 0
  %127 = vmatpush2.bf16.msra.mxu0 0
  %128 = vmatprep.subr.bf16.mxu0 0
  %129 = vmatpush2.bf16.msra.mxu0 0
  %130 = vmatprep.mubr.bf16.mxu0 0
  %131 = vmatmul.mubr.bf16.gmra.mxu0 %v96
  %v132 = vpop.f32.mrf.mxu0
  %v133 = vadd.f32 %v45, %v132
  %v134 = vpop.f32.mrf.mxu0
  %v135 = vpop.f32.mrf.mxu0
  %v136 = vadd.f32 %v45, %v135
  %v137 = vpop.f32.mrf.mxu0
  %138 = vdwg.mxu0
  %vm139 = vcmask 228352
  %140 = vst.msk [vmem:[#allocation2] sm:$0xff] %vm139, %v133
  %vm141 = vcmask 226304
  %142 = vst.msk [vmem:[#allocation2 + $0x8] sm:$0x3f] %vm141, %v136
  %v143 = vsel %vm139, %v133, 0.0
  %v144 = vsel %vm141, %v136, 0.0
  %v145 = vadd.f32 %v143, %v144
  %v146 = vrot.slane %v145, 4
  %v147 = vadd.f32 %v145, %v146
  %v148 = vrot.slane %v147, 2
  %v149 = vadd.f32 %v147, %v148
  %v150 = vrot.slane %v149, 1
  %v151 = vadd.f32 %v149, %v150
  %v152 = vadd.f32 %v151, 0.0
  %v153 = vmul.f32 %v133, %v133
  %v154 = vmul.f32 %v136, %v136
  %v155 = vsel %vm139, %v153, 0.0
  %v156 = vsel %vm141, %v154, 0.0
  %v157 = vadd.f32 %v155, %v156
  %v158 = vrot.slane %v157, 4
  %v159 = vadd.f32 %v157, %v158
  %v160 = vrot.slane %v159, 2
  %v161 = vadd.f32 %v159, %v160
  %v162 = vrot.slane %v161, 1
  %v163 = vadd.f32 %v161, %v162
  %v164 = vadd.f32 %v163, 0.0
  %v165 = vld [vmem:[%s0] sm:$0xf]
  %v166 = vld [vmem:[%s0 + $0x4] sm:$0xf]
  %s167 = scalar_lea.vmem %s1, 56
  %v168 = vld [vmem:[%s167] sm:$0xf]
  %v169 = vld [vmem:[%s167 + $0x4] sm:$0xf]
  %v170 = vld [vmem:[%s167 + $0x8] sm:$0xf]
  %v171 = vld [vmem:[%s167 + $0xc] sm:$0xf]
  %v172 = vld [vmem:[%s167 + $0x10] sm:$0xf]
  %v173 = vld [vmem:[%s167 + $0x14] sm:$0xf]
  %v174 = vld [vmem:[%s167 + $0x18] sm:$0xf]
  %v175 = vld [vmem:[%s167 + $0x1c] sm:$0xf]
  %v176 = vld [vmem:[%s167 + $0x20] sm:$0xf]
  %v177 = vld [vmem:[%s167 + $0x24] sm:$0xf]
  %v178 = vld [vmem:[%s167 + $0x28] sm:$0xf]
  %v179 = vld [vmem:[%s167 + $0x2c] sm:$0xf]
  %v180 = vld [vmem:[%s167 + $0x30] sm:$0xf]
  %v181 = vld [vmem:[%s167 + $0x34] sm:$0xf]
  %v182 = vld [vmem:[%s0 + $0x4] sm:$0x7]
  %s183 = scalar_lea.vmem %s1, 112
  %v184 = vld [vmem:[%s183] sm:$0xf]
  %v185 = vld [vmem:[%s183 + $0x4] sm:$0xf]
  %v186 = vld [vmem:[%s183 + $0x8] sm:$0xf]
  %v187 = vld [vmem:[%s183 + $0xc] sm:$0xf]
  %v188 = vld [vmem:[%s183 + $0x10] sm:$0xf]
  %v189 = vld [vmem:[%s183 + $0x14] sm:$0xf]
  %v190 = vld [vmem:[%s183 + $0x18] sm:$0xf]
  %v191 = vld [vmem:[%s183 + $0x1c] sm:$0xf]
  %v192 = vld [vmem:[%s183 + $0x20] sm:$0xf]
  %v193 = vld [vmem:[%s183 + $0x24] sm:$0xf]
  %v194 = vld [vmem:[%s183 + $0x28] sm:$0xf]
  %v195 = vld [vmem:[%s183 + $0x2c] sm:$0xf]
  %v196 = vld [vmem:[%s183 + $0x30] sm:$0xf]
  %v197 = vld [vmem:[%s183 + $0x34] sm:$0xf]
  %v200 = vunpack.c.l.b16 %v165
  %v201 = vunpack.c.l.b16 %v182
  %v202 = vpack.c.b16 %v201, %v200
  %v217 = vunpack.c.l.b16 %v184
  %v218 = vunpack.c.l.b16 %v185
  %v219 = vunpack.c.l.b16 %v186
  %v220 = vunpack.c.l.b16 %v187
  %v221 = vunpack.c.l.b16 %v188
  %v222 = vunpack.c.l.b16 %v189
  %v223 = vunpack.c.l.b16 %v190
  %v224 = vunpack.c.l.b16 %v191
  %v225 = vunpack.c.l.b16 %v192
  %v226 = vunpack.c.l.b16 %v193
  %v227 = vunpack.c.l.b16 %v194
  %v228 = vunpack.c.l.b16 %v195
  %v229 = vunpack.c.l.b16 %v196
  %v230 = vunpack.c.l.b16 %v197
  %v231 = vpack.c.b16 %v218, %v217
  %v232 = vpack.c.b16 %v220, %v219
  %v233 = vpack.c.b16 %v222, %v221
  %v234 = vpack.c.b16 %v224, %v223
  %v235 = vpack.c.b16 %v226, %v225
  %v236 = vpack.c.b16 %v228, %v227
  %v237 = vpack.c.b16 %v230, %v229
  %v246 = vsel %vm94, %v202, 0
  %248 = vmatprep.subr.bf16.mxu0 0
  %249 = vmatpush1.bf16.msra.mxu0 0
  %250 = vmatprep.subr.bf16.mxu0 0
  %251 = vmatpush1.bf16.msra.mxu0 %v237
  %252 = vmatprep.subr.bf16.mxu0 0
  %253 = vmatpush1.bf16.msra.mxu0 %v236
  %254 = vmatprep.subr.bf16.mxu0 0
  %255 = vmatpush1.bf16.msra.mxu0 %v235
  %256 = vmatprep.subr.bf16.mxu0 0
  %257 = vmatpush1.bf16.msra.mxu0 %v234
  %258 = vmatprep.subr.bf16.mxu0 0
  %259 = vmatpush1.bf16.msra.mxu0 %v233
  %260 = vmatprep.subr.bf16.mxu0 0
  %261 = vmatpush1.bf16.msra.mxu0 %v232
  %262 = vmatprep.subr.bf16.mxu0 0
  %263 = vmatpush1.bf16.msra.mxu0 %v231
  %264 = vmatprep.subr.bf16.mxu0 0
  %265 = vmatpush2.bf16.msra.mxu0 0
  %266 = vmatprep.subr.bf16.mxu0 0
  %267 = vmatpush2.bf16.msra.mxu0 0
  %268 = vmatprep.subr.bf16.mxu0 0
  %269 = vmatpush2.bf16.msra.mxu0 0
  %270 = vmatprep.subr.bf16.mxu0 0
  %271 = vmatpush2.bf16.msra.mxu0 0
  %272 = vmatprep.subr.bf16.mxu0 0
  %273 = vmatpush2.bf16.msra.mxu0 0
  %274 = vmatprep.subr.bf16.mxu0 0
  %275 = vmatpush2.bf16.msra.mxu0 0
  %276 = vmatprep.subr.bf16.mxu0 0
  %277 = vmatpush2.bf16.msra.mxu0 0
  %278 = vmatprep.subr.bf16.mxu0 0
  %279 = vmatpush2.bf16.msra.mxu0 0
  %280 = vmatprep.mubr.bf16.mxu0 0
  %281 = vmatmul.mubr.bf16.gmra.mxu0 %v246
  %v282 = vpop.f32.mrf.mxu0
  %v283 = vadd.f32 0.0, %v282
  %v284 = vpop.f32.mrf.mxu0
  %v285 = vpop.f32.mrf.mxu0
  %v286 = vadd.f32 0.0, %v285
  %v287 = vpop.f32.mrf.mxu0
  %288 = vdwg.mxu0
  %v290 = vunpack.c.l.b16 %v166
  %v291 = vpack.c.b16 %v290, %v200
  %v293 = vshrl.u32 %v291, 16
  %v295 = vshll.u32 %v291, 16
  %v297 = vrot.slane %v295, 1
  %v298 = vor.u32 %v293, %v297
  %v313 = vunpack.c.l.b16 %v168
  %v314 = vunpack.c.l.b16 %v169
  %v315 = vunpack.c.l.b16 %v170
  %v316 = vunpack.c.l.b16 %v171
  %v317 = vunpack.c.l.b16 %v172
  %v318 = vunpack.c.l.b16 %v173
  %v319 = vunpack.c.l.b16 %v174
  %v320 = vunpack.c.l.b16 %v175
  %v321 = vunpack.c.l.b16 %v176
  %v322 = vunpack.c.l.b16 %v177
  %v323 = vunpack.c.l.b16 %v178
  %v324 = vunpack.c.l.b16 %v179
  %v325 = vunpack.c.l.b16 %v180
  %v326 = vunpack.c.l.b16 %v181
  %v327 = vpack.c.b16 %v314, %v313
  %v328 = vpack.c.b16 %v316, %v315
  %v329 = vpack.c.b16 %v318, %v317
  %v330 = vpack.c.b16 %v320, %v319
  %v331 = vpack.c.b16 %v322, %v321
  %v332 = vpack.c.b16 %v324, %v323
  %v333 = vpack.c.b16 %v326, %v325
  %v342 = vsel %vm94, %v298, 0
  %344 = vmatprep.subr.bf16.mxu0 0
  %345 = vmatpush1.bf16.msra.mxu0 0
  %346 = vmatprep.subr.bf16.mxu0 0
  %347 = vmatpush1.bf16.msra.mxu0 %v333
  %348 = vmatprep.subr.bf16.mxu0 0
  %349 = vmatpush1.bf16.msra.mxu0 %v332
  %350 = vmatprep.subr.bf16.mxu0 0
  %351 = vmatpush1.bf16.msra.mxu0 %v331
  %352 = vmatprep.subr.bf16.mxu0 0
  %353 = vmatpush1.bf16.msra.mxu0 %v330
  %354 = vmatprep.subr.bf16.mxu0 0
  %355 = vmatpush1.bf16.msra.mxu0 %v329
  %356 = vmatprep.subr.bf16.mxu0 0
  %357 = vmatpush1.bf16.msra.mxu0 %v328
  %358 = vmatprep.subr.bf16.mxu0 0
  %359 = vmatpush1.bf16.msra.mxu0 %v327
  %360 = vmatprep.subr.bf16.mxu0 0
  %361 = vmatpush2.bf16.msra.mxu0 0
  %362 = vmatprep.subr.bf16.mxu0 0
  %363 = vmatpush2.bf16.msra.mxu0 0
  %364 = vmatprep.subr.bf16.mxu0 0
  %365 = vmatpush2.bf16.msra.mxu0 0
  %366 = vmatprep.subr.bf16.mxu0 0
  %367 = vmatpush2.bf16.msra.mxu0 0
  %368 = vmatprep.subr.bf16.mxu0 0
  %369 = vmatpush2.bf16.msra.mxu0 0
  %370 = vmatprep.subr.bf16.mxu0 0
  %371 = vmatpush2.bf16.msra.mxu0 0
  %372 = vmatprep.subr.bf16.mxu0 0
  %373 = vmatpush2.bf16.msra.mxu0 0
  %374 = vmatprep.subr.bf16.mxu0 0
  %375 = vmatpush2.bf16.msra.mxu0 0
  %376 = vmatprep.mubr.bf16.mxu0 0
  %377 = vmatmul.mubr.bf16.gmra.mxu0 %v342
  %v378 = vpop.f32.mrf.mxu0
  %v379 = vadd.f32 %v283, %v378
  %v380 = vpop.f32.mrf.mxu0
  %v381 = vpop.f32.mrf.mxu0
  %v382 = vadd.f32 %v286, %v381
  %v383 = vpop.f32.mrf.mxu0
  %384 = vdwg.mxu0
  %v385 = vld [vmem:[%s2] sm:$0x1]
  %v387 = vlaneseq
  %v388 = vshrl.u32 %v387, 7
  %v389 = vsub.s32 0, %v388
  %v390 = vrot.slane %v385, %v389
  %v392 = vadd.f32 %v379, %v390
  %v393 = vadd.f32 %v382, %v390
  %s394 = scalar_lea.vmem [#allocation2], 16
  %395 = vst.msk [vmem:[%s394] sm:$0xff] %vm139, %v392
  %396 = vst.msk [vmem:[%s394 + $0x8] sm:$0x3f] %vm141, %v393
  %v397 = vsel %vm139, %v392, 0.0
  %v398 = vsel %vm141, %v393, 0.0
  %v399 = vadd.f32 %v397, %v398
  %v400 = vrot.slane %v399, 4
  %v401 = vadd.f32 %v399, %v400
  %v402 = vrot.slane %v401, 2
  %v403 = vadd.f32 %v401, %v402
  %v404 = vrot.slane %v403, 1
  %v405 = vadd.f32 %v403, %v404
  %v406 = vadd.f32 %v152, %v405
  %v407 = vmul.f32 %v392, %v392
  %v408 = vmul.f32 %v393, %v393
  %v409 = vsel %vm139, %v407, 0.0
  %v410 = vsel %vm141, %v408, 0.0
  %v411 = vadd.f32 %v409, %v410
  %v412 = vrot.slane %v411, 4
  %v413 = vadd.f32 %v411, %v412
  %v414 = vrot.slane %v413, 2
  %v415 = vadd.f32 %v413, %v414
  %v416 = vrot.slane %v415, 1
  %v417 = vadd.f32 %v415, %v416
  %v418 = vadd.f32 %v164, %v417
  %s419 = scalar_lea.vmem %s0, 8
  %v420 = vld [vmem:[%s419] sm:$0xf]
  %v421 = vld [vmem:[%s419 + $0x4] sm:$0x7]
  %v422 = vld [vmem:[%s1] sm:$0xf]
  %v423 = vld [vmem:[%s1 + $0x4] sm:$0xf]
  %v424 = vld [vmem:[%s1 + $0x8] sm:$0xf]
  %v425 = vld [vmem:[%s1 + $0xc] sm:$0xf]
  %v426 = vld [vmem:[%s1 + $0x10] sm:$0xf]
  %v427 = vld [vmem:[%s1 + $0x14] sm:$0xf]
  %v428 = vld [vmem:[%s1 + $0x18] sm:$0xf]
  %v429 = vld [vmem:[%s1 + $0x1c] sm:$0xf]
  %v430 = vld [vmem:[%s1 + $0x20] sm:$0xf]
  %v431 = vld [vmem:[%s1 + $0x24] sm:$0xf]
  %v432 = vld [vmem:[%s1 + $0x28] sm:$0xf]
  %v433 = vld [vmem:[%s1 + $0x2c] sm:$0xf]
  %v434 = vld [vmem:[%s1 + $0x30] sm:$0xf]
  %v435 = vld [vmem:[%s1 + $0x34] sm:$0xf]
  %v436 = vld [vmem:[%s2] sm:$0x1]
  %v438 = vlaneseq
  %v439 = vshrl.u32 %v438, 7
  %v440 = vsub.s32 0, %v439
  %v441 = vrot.slane %v436, %v440
  %v445 = vunpack.c.l.b16 %v420
  %v446 = vunpack.c.l.b16 %v421
  %v447 = vpack.c.b16 %v446, %v445
  %v462 = vunpack.c.l.b16 %v422
  %v463 = vunpack.c.l.b16 %v423
  %v464 = vunpack.c.l.b16 %v424
  %v465 = vunpack.c.l.b16 %v425
  %v466 = vunpack.c.l.b16 %v426
  %v467 = vunpack.c.l.b16 %v427
  %v468 = vunpack.c.l.b16 %v428
  %v469 = vunpack.c.l.b16 %v429
  %v470 = vunpack.c.l.b16 %v430
  %v471 = vunpack.c.l.b16 %v431
  %v472 = vunpack.c.l.b16 %v432
  %v473 = vunpack.c.l.b16 %v433
  %v474 = vunpack.c.l.b16 %v434
  %v475 = vunpack.c.l.b16 %v435
  %v476 = vpack.c.b16 %v463, %v462
  %v477 = vpack.c.b16 %v465, %v464
  %v478 = vpack.c.b16 %v467, %v466
  %v479 = vpack.c.b16 %v469, %v468
  %v480 = vpack.c.b16 %v471, %v470
  %v481 = vpack.c.b16 %v473, %v472
  %v482 = vpack.c.b16 %v475, %v474
  %v491 = vsel %vm94, %v447, 0
  %493 = vmatprep.subr.bf16.mxu0 0
  %494 = vmatpush1.bf16.msra.mxu0 0
  %495 = vmatprep.subr.bf16.mxu0 0
  %496 = vmatpush1.bf16.msra.mxu0 %v482
  %497 = vmatprep.subr.bf16.mxu0 0
  %498 = vmatpush1.bf16.msra.mxu0 %v481
  %499 = vmatprep.subr.bf16.mxu0 0
  %500 = vmatpush1.bf16.msra.mxu0 %v480
  %501 = vmatprep.subr.bf16.mxu0 0
  %502 = vmatpush1.bf16.msra.mxu0 %v479
  %503 = vmatprep.subr.bf16.mxu0 0
  %504 = vmatpush1.bf16.msra.mxu0 %v478
  %505 = vmatprep.subr.bf16.mxu0 0
  %506 = vmatpush1.bf16.msra.mxu0 %v477
  %507 = vmatprep.subr.bf16.mxu0 0
  %508 = vmatpush1.bf16.msra.mxu0 %v476
  %509 = vmatprep.subr.bf16.mxu0 0
  %510 = vmatpush2.bf16.msra.mxu0 0
  %511 = vmatprep.subr.bf16.mxu0 0
  %512 = vmatpush2.bf16.msra.mxu0 0
  %513 = vmatprep.subr.bf16.mxu0 0
  %514 = vmatpush2.bf16.msra.mxu0 0
  %515 = vmatprep.subr.bf16.mxu0 0
  %516 = vmatpush2.bf16.msra.mxu0 0
  %517 = vmatprep.subr.bf16.mxu0 0
  %518 = vmatpush2.bf16.msra.mxu0 0
  %519 = vmatprep.subr.bf16.mxu0 0
  %520 = vmatpush2.bf16.msra.mxu0 0
  %521 = vmatprep.subr.bf16.mxu0 0
  %522 = vmatpush2.bf16.msra.mxu0 0
  %523 = vmatprep.subr.bf16.mxu0 0
  %524 = vmatpush2.bf16.msra.mxu0 0
  %525 = vmatprep.mubr.bf16.mxu0 0
  %526 = vmatmul.mubr.bf16.gmra.mxu0 %v491
  %v527 = vpop.f32.mrf.mxu0
  %v528 = vadd.f32 %v441, %v527
  %v529 = vpop.f32.mrf.mxu0
  %v530 = vpop.f32.mrf.mxu0
  %v531 = vadd.f32 %v441, %v530
  %v532 = vpop.f32.mrf.mxu0
  %533 = vdwg.mxu0
  %s534 = scalar_lea.vmem [#allocation2], 32
  %535 = vst.msk [vmem:[%s534] sm:$0xff] %vm139, %v528
  %536 = vst.msk [vmem:[%s534 + $0x8] sm:$0x3f] %vm141, %v531
  %v537 = vsel %vm139, %v528, 0.0
  %v538 = vsel %vm141, %v531, 0.0
  %v539 = vadd.f32 %v537, %v538
  %v540 = vrot.slane %v539, 4
  %v541 = vadd.f32 %v539, %v540
  %v542 = vrot.slane %v541, 2
  %v543 = vadd.f32 %v541, %v542
  %v544 = vrot.slane %v543, 1
  %v545 = vadd.f32 %v543, %v544
  %v546 = vadd.f32 %v406, %v545
  %v547 = vmul.f32 %v528, %v528
  %v548 = vmul.f32 %v531, %v531
  %v549 = vsel %vm139, %v547, 0.0
  %v550 = vsel %vm141, %v548, 0.0
  %v551 = vadd.f32 %v549, %v550
  %v552 = vrot.slane %v551, 4
  %v553 = vadd.f32 %v551, %v552
  %v554 = vrot.slane %v553, 2
  %v555 = vadd.f32 %v553, %v554
  %v556 = vrot.slane %v555, 1
  %v557 = vadd.f32 %v555, %v556
  %v558 = vadd.f32 %v418, %v557
  %v559 = vld [vmem:[%s419] sm:$0xf]
  %v560 = vld [vmem:[%s419 + $0x4] sm:$0xf]
  %v561 = vld [vmem:[%s167] sm:$0xf]
  %v562 = vld [vmem:[%s167 + $0x4] sm:$0xf]
  %v563 = vld [vmem:[%s167 + $0x8] sm:$0xf]
  %v564 = vld [vmem:[%s167 + $0xc] sm:$0xf]
  %v565 = vld [vmem:[%s167 + $0x10] sm:$0xf]
  %v566 = vld [vmem:[%s167 + $0x14] sm:$0xf]
  %v567 = vld [vmem:[%s167 + $0x18] sm:$0xf]
  %v568 = vld [vmem:[%s167 + $0x1c] sm:$0xf]
  %v569 = vld [vmem:[%s167 + $0x20] sm:$0xf]
  %v570 = vld [vmem:[%s167 + $0x24] sm:$0xf]
  %v571 = vld [vmem:[%s167 + $0x28] sm:$0xf]
  %v572 = vld [vmem:[%s167 + $0x2c] sm:$0xf]
  %v573 = vld [vmem:[%s167 + $0x30] sm:$0xf]
  %v574 = vld [vmem:[%s167 + $0x34] sm:$0xf]
  %v575 = vld [vmem:[%s419 + $0x4] sm:$0x7]
  %v576 = vld [vmem:[%s183] sm:$0xf]
  %v577 = vld [vmem:[%s183 + $0x4] sm:$0xf]
  %v578 = vld [vmem:[%s183 + $0x8] sm:$0xf]
  %v579 = vld [vmem:[%s183 + $0xc] sm:$0xf]
  %v580 = vld [vmem:[%s183 + $0x10] sm:$0xf]
  %v581 = vld [vmem:[%s183 + $0x14] sm:$0xf]
  %v582 = vld [vmem:[%s183 + $0x18] sm:$0xf]
  %v583 = vld [vmem:[%s183 + $0x1c] sm:$0xf]
  %v584 = vld [vmem:[%s183 + $0x20] sm:$0xf]
  %v585 = vld [vmem:[%s183 + $0x24] sm:$0xf]
  %v586 = vld [vmem:[%s183 + $0x28] sm:$0xf]
  %v587 = vld [vmem:[%s183 + $0x2c] sm:$0xf]
  %v588 = vld [vmem:[%s183 + $0x30] sm:$0xf]
  %v589 = vld [vmem:[%s183 + $0x34] sm:$0xf]
  %v592 = vunpack.c.l.b16 %v559
  %v593 = vunpack.c.l.b16 %v575
  %v594 = vpack.c.b16 %v593, %v592
  %v609 = vunpack.c.l.b16 %v576
  %v610 = vunpack.c.l.b16 %v577
  %v611 = vunpack.c.l.b16 %v578
  %v612 = vunpack.c.l.b16 %v579
  %v613 = vunpack.c.l.b16 %v580
  %v614 = vunpack.c.l.b16 %v581
  %v615 = vunpack.c.l.b16 %v582
  %v616 = vunpack.c.l.b16 %v583
  %v617 = vunpack.c.l.b16 %v584
  %v618 = vunpack.c.l.b16 %v585
  %v619 = vunpack.c.l.b16 %v586
  %v620 = vunpack.c.l.b16 %v587
  %v621 = vunpack.c.l.b16 %v588
  %v622 = vunpack.c.l.b16 %v589
  %v623 = vpack.c.b16 %v610, %v609
  %v624 = vpack.c.b16 %v612, %v611
  %v625 = vpack.c.b16 %v614, %v613
  %v626 = vpack.c.b16 %v616, %v615
  %v627 = vpack.c.b16 %v618, %v617
  %v628 = vpack.c.b16 %v620, %v619
  %v629 = vpack.c.b16 %v622, %v621
  %v638 = vsel %vm94, %v594, 0
  %640 = vmatprep.subr.bf16.mxu0 0
  %641 = vmatpush1.bf16.msra.mxu0 0
  %642 = vmatprep.subr.bf16.mxu0 0
  %643 = vmatpush1.bf16.msra.mxu0 %v629
  %644 = vmatprep.subr.bf16.mxu0 0
  %645 = vmatpush1.bf16.msra.mxu0 %v628
  %646 = vmatprep.subr.bf16.mxu0 0
  %647 = vmatpush1.bf16.msra.mxu0 %v627
  %648 = vmatprep.subr.bf16.mxu0 0
  %649 = vmatpush1.bf16.msra.mxu0 %v626
  %650 = vmatprep.subr.bf16.mxu0 0
  %651 = vmatpush1.bf16.msra.mxu0 %v625
  %652 = vmatprep.subr.bf16.mxu0 0
  %653 = vmatpush1.bf16.msra.mxu0 %v624
  %654 = vmatprep.subr.bf16.mxu0 0
  %655 = vmatpush1.bf16.msra.mxu0 %v623
  %656 = vmatprep.subr.bf16.mxu0 0
  %657 = vmatpush2.bf16.msra.mxu0 0
  %658 = vmatprep.subr.bf16.mxu0 0
  %659 = vmatpush2.bf16.msra.mxu0 0
  %660 = vmatprep.subr.bf16.mxu0 0
  %661 = vmatpush2.bf16.msra.mxu0 0
  %662 = vmatprep.subr.bf16.mxu0 0
  %663 = vmatpush2.bf16.msra.mxu0 0
  %664 = vmatprep.subr.bf16.mxu0 0
  %665 = vmatpush2.bf16.msra.mxu0 0
  %666 = vmatprep.subr.bf16.mxu0 0
  %667 = vmatpush2.bf16.msra.mxu0 0
  %668 = vmatprep.subr.bf16.mxu0 0
  %669 = vmatpush2.bf16.msra.mxu0 0
  %670 = vmatprep.subr.bf16.mxu0 0
  %671 = vmatpush2.bf16.msra.mxu0 0
  %672 = vmatprep.mubr.bf16.mxu0 0
  %673 = vmatmul.mubr.bf16.gmra.mxu0 %v638
  %v674 = vpop.f32.mrf.mxu0
  %v675 = vadd.f32 0.0, %v674
  %v676 = vpop.f32.mrf.mxu0
  %v677 = vpop.f32.mrf.mxu0
  %v678 = vadd.f32 0.0, %v677
  %v679 = vpop.f32.mrf.mxu0
  %680 = vdwg.mxu0
  %v682 = vunpack.c.l.b16 %v560
  %v683 = vpack.c.b16 %v682, %v592
  %v685 = vshrl.u32 %v683, 16
  %v687 = vshll.u32 %v683, 16
  %v689 = vrot.slane %v687, 1
  %v690 = vor.u32 %v685, %v689
  %v705 = vunpack.c.l.b16 %v561
  %v706 = vunpack.c.l.b16 %v562
  %v707 = vunpack.c.l.b16 %v563
  %v708 = vunpack.c.l.b16 %v564
  %v709 = vunpack.c.l.b16 %v565
  %v710 = vunpack.c.l.b16 %v566
  %v711 = vunpack.c.l.b16 %v567
  %v712 = vunpack.c.l.b16 %v568
  %v713 = vunpack.c.l.b16 %v569
  %v714 = vunpack.c.l.b16 %v570
  %v715 = vunpack.c.l.b16 %v571
  %v716 = vunpack.c.l.b16 %v572
  %v717 = vunpack.c.l.b16 %v573
  %v718 = vunpack.c.l.b16 %v574
  %v719 = vpack.c.b16 %v706, %v705
  %v720 = vpack.c.b16 %v708, %v707
  %v721 = vpack.c.b16 %v710, %v709
  %v722 = vpack.c.b16 %v712, %v711
  %v723 = vpack.c.b16 %v714, %v713
  %v724 = vpack.c.b16 %v716, %v715
  %v725 = vpack.c.b16 %v718, %v717
  %v734 = vsel %vm94, %v690, 0
  %736 = vmatprep.subr.bf16.mxu0 0
  %737 = vmatpush1.bf16.msra.mxu0 0
  %738 = vmatprep.subr.bf16.mxu0 0
  %739 = vmatpush1.bf16.msra.mxu0 %v725
  %740 = vmatprep.subr.bf16.mxu0 0
  %741 = vmatpush1.bf16.msra.mxu0 %v724
  %742 = vmatprep.subr.bf16.mxu0 0
  %743 = vmatpush1.bf16.msra.mxu0 %v723
  %744 = vmatprep.subr.bf16.mxu0 0
  %745 = vmatpush1.bf16.msra.mxu0 %v722
  %746 = vmatprep.subr.bf16.mxu0 0
  %747 = vmatpush1.bf16.msra.mxu0 %v721
  %748 = vmatprep.subr.bf16.mxu0 0
  %749 = vmatpush1.bf16.msra.mxu0 %v720
  %750 = vmatprep.subr.bf16.mxu0 0
  %751 = vmatpush1.bf16.msra.mxu0 %v719
  %752 = vmatprep.subr.bf16.mxu0 0
  %753 = vmatpush2.bf16.msra.mxu0 0
  %754 = vmatprep.subr.bf16.mxu0 0
  %755 = vmatpush2.bf16.msra.mxu0 0
  %756 = vmatprep.subr.bf16.mxu0 0
  %757 = vmatpush2.bf16.msra.mxu0 0
  %758 = vmatprep.subr.bf16.mxu0 0
  %759 = vmatpush2.bf16.msra.mxu0 0
  %760 = vmatprep.subr.bf16.mxu0 0
  %761 = vmatpush2.bf16.msra.mxu0 0
  %762 = vmatprep.subr.bf16.mxu0 0
  %763 = vmatpush2.bf16.msra.mxu0 0
  %764 = vmatprep.subr.bf16.mxu0 0
  %765 = vmatpush2.bf16.msra.mxu0 0
  %766 = vmatprep.subr.bf16.mxu0 0
  %767 = vmatpush2.bf16.msra.mxu0 0
  %768 = vmatprep.mubr.bf16.mxu0 0
  %769 = vmatmul.mubr.bf16.gmra.mxu0 %v734
  %v770 = vpop.f32.mrf.mxu0
  %v771 = vadd.f32 %v675, %v770
  %v772 = vpop.f32.mrf.mxu0
  %v773 = vpop.f32.mrf.mxu0
  %v774 = vadd.f32 %v678, %v773
  %v775 = vpop.f32.mrf.mxu0
  %776 = vdwg.mxu0
  %v777 = vld [vmem:[%s2] sm:$0x1]
  %v779 = vlaneseq
  %v780 = vshrl.u32 %v779, 7
  %v781 = vsub.s32 0, %v780
  %v782 = vrot.slane %v777, %v781
  %v784 = vadd.f32 %v771, %v782
  %v785 = vadd.f32 %v774, %v782
  %s786 = scalar_lea.vmem [#allocation2], 48
  %787 = vst.msk [vmem:[%s786] sm:$0xff] %vm139, %v784
  %788 = vst.msk [vmem:[%s786 + $0x8] sm:$0x3f] %vm141, %v785
  %v789 = vsel %vm139, %v784, 0.0
  %v790 = vsel %vm141, %v785, 0.0
  %v791 = vadd.f32 %v789, %v790
  %v792 = vrot.slane %v791, 4
  %v793 = vadd.f32 %v791, %v792
  %v794 = vrot.slane %v793, 2
  %v795 = vadd.f32 %v793, %v794
  %v796 = vrot.slane %v795, 1
  %v797 = vadd.f32 %v795, %v796
  %v798 = vadd.f32 %v546, %v797
  %v799 = vmul.f32 %v784, %v784
  %v800 = vmul.f32 %v785, %v785
  %v801 = vsel %vm139, %v799, 0.0
  %v802 = vsel %vm141, %v800, 0.0
  %v803 = vadd.f32 %v801, %v802
  %v804 = vrot.slane %v803, 4
  %v805 = vadd.f32 %v803, %v804
  %v806 = vrot.slane %v805, 2
  %v807 = vadd.f32 %v805, %v806
  %v808 = vrot.slane %v807, 1
  %v809 = vadd.f32 %v807, %v808
  %v810 = vadd.f32 %v558, %v809
  %v811 = vld [vmem:[%s3] sm:$0xff]
  %v812 = vld [vmem:[%s3 + $0x8] sm:$0xff]
  %v813 = vld [vmem:[%s3 + $0x10] sm:$0xff]
  %v814 = vld [vmem:[%s3 + $0x18] sm:$0xf]
  %v816 = vsel %vm139, %v798, 0
  %vm818 = vcmask 1043456
  %v820 = vsel %vm818, %v814, 0
  %822 = vmatprep.subr.mxu0 0.0
  %823 = vmatpush1.msra.mxu0 0.0
  %824 = vmatprep.subr.mxu0 0.0
  %825 = vmatpush1.msra.mxu0 0.0
  %826 = vmatprep.subr.mxu0 0.0
  %827 = vmatpush1.msra.mxu0 0.0
  %828 = vmatprep.subr.mxu0 0.0
  %829 = vmatpush1.msra.mxu0 0.0
  %830 = vmatprep.subr.mxu0 0.0
  %831 = vmatpush1.msra.mxu0 0.0
  %832 = vmatprep.subr.mxu0 0.0
  %833 = vmatpush1.msra.mxu0 0.0
  %834 = vmatprep.subr.mxu0 0.0
  %835 = vmatpush1.msra.mxu0 0.0
  %836 = vmatprep.subr.mxu0 0.0
  %837 = vmatpush1.msra.mxu0 0.0
  %838 = vmatprep.subr.mxu0 0.0
  %839 = vmatpush1.msra.mxu0 0.0
  %840 = vmatprep.subr.mxu0 0.0
  %841 = vmatpush1.msra.mxu0 0.0
  %842 = vmatprep.subr.mxu0 0.0
  %843 = vmatpush1.msra.mxu0 0.0
  %844 = vmatprep.subr.mxu0 0.0
  %845 = vmatpush1.msra.mxu0 0.0
  %846 = vmatprep.subr.mxu0 0.0
  %847 = vmatpush1.msra.mxu0 %v820
  %848 = vmatprep.subr.mxu0 0.0
  %849 = vmatpush1.msra.mxu0 %v813
  %850 = vmatprep.subr.mxu0 0.0
  %851 = vmatpush1.msra.mxu0 %v812
  %852 = vmatprep.subr.mxu0 0.0
  %853 = vmatpush1.msra.mxu0 %v811
  %854 = vmatprep.subr.mxu0 0.0
  %855 = vmatpush2.msra.mxu0 0.0
  %856 = vmatprep.subr.mxu0 0.0
  %857 = vmatpush2.msra.mxu0 0.0
  %858 = vmatprep.subr.mxu0 0.0
  %859 = vmatpush2.msra.mxu0 0.0
  %860 = vmatprep.subr.mxu0 0.0
  %861 = vmatpush2.msra.mxu0 0.0
  %862 = vmatprep.subr.mxu0 0.0
  %863 = vmatpush2.msra.mxu0 0.0
  %864 = vmatprep.subr.mxu0 0.0
  %865 = vmatpush2.msra.mxu0 0.0
  %866 = vmatprep.subr.mxu0 0.0
  %867 = vmatpush2.msra.mxu0 0.0
  %868 = vmatprep.subr.mxu0 0.0
  %869 = vmatpush2.msra.mxu0 0.0
  %870 = vmatprep.subr.mxu0 0.0
  %871 = vmatpush2.msra.mxu0 0.0
  %872 = vmatprep.subr.mxu0 0.0
  %873 = vmatpush2.msra.mxu0 0.0
  %874 = vmatprep.subr.mxu0 0.0
  %875 = vmatpush2.msra.mxu0 0.0
  %876 = vmatprep.subr.mxu0 0.0
  %877 = vmatpush2.msra.mxu0 0.0
  %878 = vmatprep.subr.mxu0 0.0
  %879 = vmatpush2.msra.mxu0 0.0
  %880 = vmatprep.subr.mxu0 0.0
  %881 = vmatpush2.msra.mxu0 0.0
  %882 = vmatprep.subr.mxu0 0.0
  %883 = vmatpush2.msra.mxu0 0.0
  %884 = vmatprep.subr.mxu0 0.0
  %885 = vmatpush2.msra.mxu0 0.0
  %886 = vmatprep.mubr.f32.mxu0 0.0
  %887 = vmatmul.mubr.f32.gmra.mxu0 %v816
  %v888 = vpop.f32.mrf.mxu0
  %v889 = vadd.f32 0.0, %v888
  %v890 = vpop.f32.mrf.mxu0
  %891 = vdwg.mxu0
  %v893 = vsel %vm139, %v810, 0
  %895 = vmatprep.subr.mxu0 0.0
  %896 = vmatpush1.msra.mxu0 0.0
  %897 = vmatprep.subr.mxu0 0.0
  %898 = vmatpush1.msra.mxu0 0.0
  %899 = vmatprep.subr.mxu0 0.0
  %900 = vmatpush1.msra.mxu0 0.0
  %901 = vmatprep.subr.mxu0 0.0
  %902 = vmatpush1.msra.mxu0 0.0
  %903 = vmatprep.subr.mxu0 0.0
  %904 = vmatpush1.msra.mxu0 0.0
  %905 = vmatprep.subr.mxu0 0.0
  %906 = vmatpush1.msra.mxu0 0.0
  %907 = vmatprep.subr.mxu0 0.0
  %908 = vmatpush1.msra.mxu0 0.0
  %909 = vmatprep.subr.mxu0 0.0
  %910 = vmatpush1.msra.mxu0 0.0
  %911 = vmatprep.subr.mxu0 0.0
  %912 = vmatpush1.msra.mxu0 0.0
  %913 = vmatprep.subr.mxu0 0.0
  %914 = vmatpush1.msra.mxu0 0.0
  %915 = vmatprep.subr.mxu0 0.0
  %916 = vmatpush1.msra.mxu0 0.0
  %917 = vmatprep.subr.mxu0 0.0
  %918 = vmatpush1.msra.mxu0 0.0
  %919 = vmatprep.subr.mxu0 0.0
  %920 = vmatpush1.msra.mxu0 %v820
  %921 = vmatprep.subr.mxu0 0.0
  %922 = vmatpush1.msra.mxu0 %v813
  %923 = vmatprep.subr.mxu0 0.0
  %924 = vmatpush1.msra.mxu0 %v812
  %925 = vmatprep.subr.mxu0 0.0
  %926 = vmatpush1.msra.mxu0 %v811
  %927 = vmatprep.subr.mxu0 0.0
  %928 = vmatpush2.msra.mxu0 0.0
  %929 = vmatprep.subr.mxu0 0.0
  %930 = vmatpush2.msra.mxu0 0.0
  %931 = vmatprep.subr.mxu0 0.0
  %932 = vmatpush2.msra.mxu0 0.0
  %933 = vmatprep.subr.mxu0 0.0
  %934 = vmatpush2.msra.mxu0 0.0
  %935 = vmatprep.subr.mxu0 0.0
  %936 = vmatpush2.msra.mxu0 0.0
  %937 = vmatprep.subr.mxu0 0.0
  %938 = vmatpush2.msra.mxu0 0.0
  %939 = vmatprep.subr.mxu0 0.0
  %940 = vmatpush2.msra.mxu0 0.0
  %941 = vmatprep.subr.mxu0 0.0
  %942 = vmatpush2.msra.mxu0 0.0
  %943 = vmatprep.subr.mxu0 0.0
  %944 = vmatpush2.msra.mxu0 0.0
  %945 = vmatprep.subr.mxu0 0.0
  %946 = vmatpush2.msra.mxu0 0.0
  %947 = vmatprep.subr.mxu0 0.0
  %948 = vmatpush2.msra.mxu0 0.0
  %949 = vmatprep.subr.mxu0 0.0
  %950 = vmatpush2.msra.mxu0 0.0
  %951 = vmatprep.subr.mxu0 0.0
  %952 = vmatpush2.msra.mxu0 0.0
  %953 = vmatprep.subr.mxu0 0.0
  %954 = vmatpush2.msra.mxu0 0.0
  %955 = vmatprep.subr.mxu0 0.0
  %956 = vmatpush2.msra.mxu0 0.0
  %957 = vmatprep.subr.mxu0 0.0
  %958 = vmatpush2.msra.mxu0 0.0
  %959 = vmatprep.mubr.f32.mxu0 0.0
  %960 = vmatmul.mubr.f32.gmra.mxu0 %v893
  %v961 = vpop.f32.mrf.mxu0
  %v962 = vadd.f32 0.0, %v961
  %v963 = vpop.f32.mrf.mxu0
  %964 = vdwg.mxu0
  %v965 = vmul.f32 %v889, 0.0006377551
  %v966 = vmul.f32 %v962, 0.0006377551
  %v967 = vmul.f32 %v965, %v965
  %v968 = vsub.f32 %v966, %v967
  %v969 = vmax.f32 %v968, 0.0
  %v970 = vld [vmem:[%s5] sm:$0x1]
  %v971 = vld [vmem:[%s5 + $0x1] sm:$0x1]
  %v972 = vadd.f32 %v969, 1e-05
  %v973 = vrsqrt.pop %v972
  %v974 = vmul.f32 %v970, %v973
  %v975 = vmul.f32 %v965, %v974
  %v976 = vsub.f32 %v971, %v975
  %v977 = vld [vmem:[%s4] sm:$0x1]
  %vm978 = vcmask 7168
  %v980 = vsel %vm978, %v974, 0
  %vm982 = vcmask 1040384
  %v984 = vsel %vm982, %v977, 0
  %986 = vmatprep.subr.mxu0 0.0
  %987 = vmatpush1.msra.mxu0 0.0
  %988 = vmatprep.subr.mxu0 0.0
  %989 = vmatpush1.msra.mxu0 0.0
  %990 = vmatprep.subr.mxu0 0.0
  %991 = vmatpush1.msra.mxu0 0.0
  %992 = vmatprep.subr.mxu0 0.0
  %993 = vmatpush1.msra.mxu0 0.0
  %994 = vmatprep.subr.mxu0 0.0
  %995 = vmatpush1.msra.mxu0 0.0
  %996 = vmatprep.subr.mxu0 0.0
  %997 = vmatpush1.msra.mxu0 0.0
  %998 = vmatprep.subr.mxu0 0.0
  %999 = vmatpush1.msra.mxu0 0.0
  %1000 = vmatprep.subr.mxu0 0.0
  %1001 = vmatpush1.msra.mxu0 0.0
  %1002 = vmatprep.subr.mxu0 0.0
  %1003 = vmatpush1.msra.mxu0 0.0
  %1004 = vmatprep.subr.mxu0 0.0
  %1005 = vmatpush1.msra.mxu0 0.0
  %1006 = vmatprep.subr.mxu0 0.0
  %1007 = vmatpush1.msra.mxu0 0.0
  %1008 = vmatprep.subr.mxu0 0.0
  %1009 = vmatpush1.msra.mxu0 0.0
  %1010 = vmatprep.subr.mxu0 0.0
  %1011 = vmatpush1.msra.mxu0 0.0
  %1012 = vmatprep.subr.mxu0 0.0
  %1013 = vmatpush1.msra.mxu0 0.0
  %1014 = vmatprep.subr.mxu0 0.0
  %1015 = vmatpush1.msra.mxu0 0.0
  %1016 = vmatprep.subr.mxu0 0.0
  %1017 = vmatpush1.msra.mxu0 %v984
  %1018 = vmatprep.subr.mxu0 0.0
  %1019 = vmatpush2.msra.mxu0 0.0
  %1020 = vmatprep.subr.mxu0 0.0
  %1021 = vmatpush2.msra.mxu0 0.0
  %1022 = vmatprep.subr.mxu0 0.0
  %1023 = vmatpush2.msra.mxu0 0.0
  %1024 = vmatprep.subr.mxu0 0.0
  %1025 = vmatpush2.msra.mxu0 0.0
  %1026 = vmatprep.subr.mxu0 0.0
  %1027 = vmatpush2.msra.mxu0 0.0
  %1028 = vmatprep.subr.mxu0 0.0
  %1029 = vmatpush2.msra.mxu0 0.0
  %1030 = vmatprep.subr.mxu0 0.0
  %1031 = vmatpush2.msra.mxu0 0.0
  %1032 = vmatprep.subr.mxu0 0.0
  %1033 = vmatpush2.msra.mxu0 0.0
  %1034 = vmatprep.subr.mxu0 0.0
  %1035 = vmatpush2.msra.mxu0 0.0
  %1036 = vmatprep.subr.mxu0 0.0
  %1037 = vmatpush2.msra.mxu0 0.0
  %1038 = vmatprep.subr.mxu0 0.0
  %1039 = vmatpush2.msra.mxu0 0.0
  %1040 = vmatprep.subr.mxu0 0.0
  %1041 = vmatpush2.msra.mxu0 0.0
  %1042 = vmatprep.subr.mxu0 0.0
  %1043 = vmatpush2.msra.mxu0 0.0
  %1044 = vmatprep.subr.mxu0 0.0
  %1045 = vmatpush2.msra.mxu0 0.0
  %1046 = vmatprep.subr.mxu0 0.0
  %1047 = vmatpush2.msra.mxu0 0.0
  %1048 = vmatprep.subr.mxu0 0.0
  %1049 = vmatpush2.msra.mxu0 0.0
  %1050 = vmatprep.mubr.f32.mxu0 0.0
  %1051 = vmatmul.mubr.f32.gmra.mxu0 %v980
  %v1052 = vpop.f32.mrf.mxu0
  %v1053 = vadd.f32 0.0, %v1052
  %v1054 = vpop.f32.mrf.mxu0
  %1055 = vdwg.mxu0
  %v1057 = vsel %vm978, %v976, 0
  %1059 = vmatprep.subr.mxu0 0.0
  %1060 = vmatpush1.msra.mxu0 0.0
  %1061 = vmatprep.subr.mxu0 0.0
  %1062 = vmatpush1.msra.mxu0 0.0
  %1063 = vmatprep.subr.mxu0 0.0
  %1064 = vmatpush1.msra.mxu0 0.0
  %1065 = vmatprep.subr.mxu0 0.0
  %1066 = vmatpush1.msra.mxu0 0.0
  %1067 = vmatprep.subr.mxu0 0.0
  %1068 = vmatpush1.msra.mxu0 0.0
  %1069 = vmatprep.subr.mxu0 0.0
  %1070 = vmatpush1.msra.mxu0 0.0
  %1071 = vmatprep.subr.mxu0 0.0
  %1072 = vmatpush1.msra.mxu0 0.0
  %1073 = vmatprep.subr.mxu0 0.0
  %1074 = vmatpush1.msra.mxu0 0.0
  %1075 = vmatprep.subr.mxu0 0.0
  %1076 = vmatpush1.msra.mxu0 0.0
  %1077 = vmatprep.subr.mxu0 0.0
  %1078 = vmatpush1.msra.mxu0 0.0
  %1079 = vmatprep.subr.mxu0 0.0
  %1080 = vmatpush1.msra.mxu0 0.0
  %1081 = vmatprep.subr.mxu0 0.0
  %1082 = vmatpush1.msra.mxu0 0.0
  %1083 = vmatprep.subr.mxu0 0.0
  %1084 = vmatpush1.msra.mxu0 0.0
  %1085 = vmatprep.subr.mxu0 0.0
  %1086 = vmatpush1.msra.mxu0 0.0
  %1087 = vmatprep.subr.mxu0 0.0
  %1088 = vmatpush1.msra.mxu0 0.0
  %1089 = vmatprep.subr.mxu0 0.0
  %1090 = vmatpush1.msra.mxu0 %v984
  %1091 = vmatprep.subr.mxu0 0.0
  %1092 = vmatpush2.msra.mxu0 0.0
  %1093 = vmatprep.subr.mxu0 0.0
  %1094 = vmatpush2.msra.mxu0 0.0
  %1095 = vmatprep.subr.mxu0 0.0
  %1096 = vmatpush2.msra.mxu0 0.0
  %1097 = vmatprep.subr.mxu0 0.0
  %1098 = vmatpush2.msra.mxu0 0.0
  %1099 = vmatprep.subr.mxu0 0.0
  %1100 = vmatpush2.msra.mxu0 0.0
  %1101 = vmatprep.subr.mxu0 0.0
  %1102 = vmatpush2.msra.mxu0 0.0
  %1103 = vmatprep.subr.mxu0 0.0
  %1104 = vmatpush2.msra.mxu0 0.0
  %1105 = vmatprep.subr.mxu0 0.0
  %1106 = vmatpush2.msra.mxu0 0.0
  %1107 = vmatprep.subr.mxu0 0.0
  %1108 = vmatpush2.msra.mxu0 0.0
  %1109 = vmatprep.subr.mxu0 0.0
  %1110 = vmatpush2.msra.mxu0 0.0
  %1111 = vmatprep.subr.mxu0 0.0
  %1112 = vmatpush2.msra.mxu0 0.0
  %1113 = vmatprep.subr.mxu0 0.0
  %1114 = vmatpush2.msra.mxu0 0.0
  %1115 = vmatprep.subr.mxu0 0.0
  %1116 = vmatpush2.msra.mxu0 0.0
  %1117 = vmatprep.subr.mxu0 0.0
  %1118 = vmatpush2.msra.mxu0 0.0
  %1119 = vmatprep.subr.mxu0 0.0
  %1120 = vmatpush2.msra.mxu0 0.0
  %1121 = vmatprep.subr.mxu0 0.0
  %1122 = vmatpush2.msra.mxu0 0.0
  %1123 = vmatprep.mubr.f32.mxu0 0.0
  %1124 = vmatmul.mubr.f32.gmra.mxu0 %v1057
  %v1125 = vpop.f32.mrf.mxu0
  %v1126 = vadd.f32 0.0, %v1125
  %v1127 = vpop.f32.mrf.mxu0
  %1128 = vdwg.mxu0
  %v1129 = vld [vmem:[#allocation2] sm:$0xff]
  %v1130 = vld [vmem:[#allocation2 + $0x8] sm:$0x3f]
  %v1131 = vlaneseq
  %v1132 = vshrl.u32 %v1131, 7
  %v1133 = vsub.s32 0, %v1132
  %v1134 = vrot.slane %v1053, %v1133
  %v1135 = vmul.f32 %v1129, %v1134
  %v1136 = vmul.f32 %v1130, %v1134
  %v1137 = vlaneseq
  %v1138 = vshrl.u32 %v1137, 7
  %v1139 = vsub.s32 0, %v1138
  %v1140 = vrot.slane %v1126, %v1139
  %v1141 = vadd.f32 %v1135, %v1140
  %v1142 = vadd.f32 %v1136, %v1140
  %v1143 = vxor.u32 %v1141, 2147483648
  %v1144 = vxor.u32 %v1142, 2147483648
  %v1145 = vmul.f32 %v1143, 1.442695
  %v1146 = vpow.pop %v1145
  %v1147 = vmul.f32 %v1144, 1.442695
  %v1148 = vpow.pop %v1147
  %v1149 = vadd.f32 %v1146, 1.0
  %v1150 = vadd.f32 %v1148, 1.0
  %v1151 = vrcp.pop %v1149
  %v1152 = vmul.f32 1.0, %v1151
  %v1153 = vrcp.pop %v1150
  %v1154 = vmul.f32 1.0, %v1153
  %1155 = vst.msk [vmem:[%s6] sm:$0xff] %vm139, %v1152
  %1156 = vst.msk [vmem:[%s6 + $0x8] sm:$0x3f] %vm141, %v1154
  %v1157 = vld [vmem:[%s394] sm:$0xff]
  %v1158 = vld [vmem:[%s394 + $0x8] sm:$0x3f]
  %v1159 = vmul.f32 %v1157, %v1134
  %v1160 = vmul.f32 %v1158, %v1134
  %v1161 = vadd.f32 %v1159, %v1140
  %v1162 = vadd.f32 %v1160, %v1140
  %v1163 = vxor.u32 %v1161, 2147483648
  %v1164 = vxor.u32 %v1162, 2147483648
  %v1165 = vmul.f32 %v1163, 1.442695
  %v1166 = vpow.pop %v1165
  %v1167 = vmul.f32 %v1164, 1.442695
  %v1168 = vpow.pop %v1167
  %v1169 = vadd.f32 %v1166, 1.0
  %v1170 = vadd.f32 %v1168, 1.0
  %v1171 = vrcp.pop %v1169
  %v1172 = vmul.f32 1.0, %v1171
  %v1173 = vrcp.pop %v1170
  %v1174 = vmul.f32 1.0, %v1173
  %s1175 = scalar_lea.vmem %s6, 16
  %1176 = vst.msk [vmem:[%s1175] sm:$0xff] %vm139, %v1172
  %1177 = vst.msk [vmem:[%s1175 + $0x8] sm:$0x3f] %vm141, %v1174
  %v1178 = vld [vmem:[%s534] sm:$0xff]
  %v1179 = vld [vmem:[%s534 + $0x8] sm:$0x3f]
  %v1180 = vmul.f32 %v1178, %v1134
  %v1181 = vmul.f32 %v1179, %v1134
  %v1182 = vadd.f32 %v1180, %v1140
  %v1183 = vadd.f32 %v1181, %v1140
  %v1184 = vxor.u32 %v1182, 2147483648
  %v1185 = vxor.u32 %v1183, 2147483648
  %v1186 = vmul.f32 %v1184, 1.442695
  %v1187 = vpow.pop %v1186
  %v1188 = vmul.f32 %v1185, 1.442695
  %v1189 = vpow.pop %v1188
  %v1190 = vadd.f32 %v1187, 1.0
  %v1191 = vadd.f32 %v1189, 1.0
  %v1192 = vrcp.pop %v1190
  %v1193 = vmul.f32 1.0, %v1192
  %v1194 = vrcp.pop %v1191
  %v1195 = vmul.f32 1.0, %v1194
  %s1196 = scalar_lea.vmem %s6, 32
  %1197 = vst.msk [vmem:[%s1196] sm:$0xff] %vm139, %v1193
  %1198 = vst.msk [vmem:[%s1196 + $0x8] sm:$0x3f] %vm141, %v1195
  %v1199 = vld [vmem:[%s786] sm:$0xff]
  %v1200 = vld [vmem:[%s786 + $0x8] sm:$0x3f]
  %v1201 = vmul.f32 %v1199, %v1134
  %v1202 = vmul.f32 %v1200, %v1134
  %v1203 = vadd.f32 %v1201, %v1140
  %v1204 = vadd.f32 %v1202, %v1140
  %v1205 = vxor.u32 %v1203, 2147483648
  %v1206 = vxor.u32 %v1204, 2147483648
  %v1207 = vmul.f32 %v1205, 1.442695
  %v1208 = vpow.pop %v1207
  %v1209 = vmul.f32 %v1206, 1.442695
  %v1210 = vpow.pop %v1209
  %v1211 = vadd.f32 %v1208, 1.0
  %v1212 = vadd.f32 %v1210, 1.0
  %v1213 = vrcp.pop %v1211
  %v1214 = vmul.f32 1.0, %v1213
  %v1215 = vrcp.pop %v1212
  %v1216 = vmul.f32 1.0, %v1215
  %s1217 = scalar_lea.vmem %s6, 48
  %1218 = vst.msk [vmem:[%s1217] sm:$0xff] %vm139, %v1214
  %1219 = vst.msk [vmem:[%s1217 + $0x8] sm:$0x3f] %vm141, %v1216
  // Predicated region
  $region26: #{vae_forward.9} parent=0 // pred_check
    _
  $region27: #{vae_forward.9} parent=0 // pred_check_branch
    %1221 = sbr.rel (0) target = $region29
  $region28: #{vae_forward.9} parent=0 // pred_region
    _
  $region29: #{vae_forward.9} parent=0 // pred_fallthru
    _
  // Predicated region
  $region30: #{vae_forward.9} parent=0 // pred_check
    _
  $region31: #{vae_forward.9} parent=0 // pred_check_branch
    %1223 = sbr.rel (0) target = $region33
  $region32: #{vae_forward.9} parent=0 // pred_region
    _
  $region33: #{vae_forward.9} parent=0 // pred_fallthru
    _

</llo_original>
